<compile_context>
chip_gen: v7x
topology: tpu7x:2x2x1
jax: 0.10.0
libtpu: 0.0.40
codegen_flags: <defaults>
</compile_context>

<pallas_src>
import jax
import jax.numpy as jnp
from jax import lax
from jax.experimental import pallas as pl
from jax.experimental.pallas import tpu as pltpu

M_PHYS = 1024      # physical memory slots (padded for clean (8,128) tiling)
M_LOGICAL = 1000   # reference memory_size (ring wraps here; pad slots never valid)


# --------------------------------------------------------------------------
# Kernel 1: surprise[t] = ||k_t - k_{t-1}||  (VPU/XLU only; no HBM transpose)
# --------------------------------------------------------------------------

def _surprise_kernel(k_ref, o_ref):
    k = k_ref[...].astype(jnp.float32)                  # [S, Hk]
    prev = pltpu.roll(k, shift=1, axis=0)                # prev[t] = k[t-1] (sublane roll)
    row = lax.broadcasted_iota(jnp.int32, k.shape, 0)
    diff = jnp.where(row > 0, k - prev, 0.0)             # surprise[0] = 0
    o_ref[...] = jnp.sqrt(jnp.sum(diff * diff, axis=1, keepdims=True))   # [S, 1]


def surprise_pallas(k_comb):
    """k_comb: [B, S, Hk] (native dtype) -> surprises [B, S] f32 (one batched call)."""
    B, S, Hk = k_comb.shape
    out = pl.pallas_call(
        _surprise_kernel,
        grid=(B,),
        in_specs=[pl.BlockSpec((None, S, Hk), lambda b: (b, 0, 0))],
        out_specs=pl.BlockSpec((None, S, 1), lambda b: (b, 0, 0)),
        out_shape=jax.ShapeDtypeStruct((B, S, 1), jnp.float32),
        compiler_params=pltpu.CompilerParams(dimension_semantics=("parallel",)),
    )(k_comb)
    return out[:, :, 0]


# --------------------------------------------------------------------------
# Kernel 2: per-event mean keys / values  (W @ K and W @ V fused, MXU)
# --------------------------------------------------------------------------

def _segment_mean_kernel(w_ref, k_ref, v_ref, ok_ref, ov_ref):
    w = w_ref[...]                                        # [S, S] f32 membership weights
    ok_ref[...] = jnp.dot(w, k_ref[...].astype(jnp.float32),
                          preferred_element_type=jnp.float32)
    ov_ref[...] = jnp.dot(w, v_ref[...].astype(jnp.float32),
                          preferred_element_type=jnp.float32)


def segment_means_pallas(w, keys, values):
    """w: [B,S,S] f32; keys: [B,S,Hk]; values: [B,S,Hv] -> event means (one batched call)."""
    B, S, Hk = keys.shape
    Hv = values.shape[-1]
    # TODO(synk): for production S (>= 2048) tile over output rows (grid=(B, S//256), bf16 W)
    #             or replace the dense SxS membership matmul with scalar-prefetched segment
    #             ids + in-kernel segment sums (O(S*H) HBM/FLOPs instead of O(S^2*H)).
    return pl.pallas_call(
        _segment_mean_kernel,
        grid=(B,),
        in_specs=[pl.BlockSpec((None, S, S), lambda b: (b, 0, 0)),
                  pl.BlockSpec((None, S, Hk), lambda b: (b, 0, 0)),
                  pl.BlockSpec((None, S, Hv), lambda b: (b, 0, 0))],
        out_specs=(pl.BlockSpec((None, S, Hk), lambda b: (b, 0, 0)),
                   pl.BlockSpec((None, S, Hv), lambda b: (b, 0, 0))),
        out_shape=(jax.ShapeDtypeStruct((B, S, Hk), jnp.float32),
                   jax.ShapeDtypeStruct((B, S, Hv), jnp.float32)),
        compiler_params=pltpu.CompilerParams(dimension_semantics=("parallel",)),
    )(w, keys, values)


# --------------------------------------------------------------------------
# Kernel 3 (fused): ring-buffer write of new events + cosine scoring vs. all slots.
# Memory slab stays VMEM-resident across the whole batch grid (constant block index);
# per-slot key norms are cached in VMEM scratch and refreshed only for written rows.
# --------------------------------------------------------------------------

def _mem_update_score_kernel(
    ptr_ref, nb_ref, vcnt_ref,                  # SMEM scalar-prefetch: [B] int32 each
    repk_ref, repv_ref, repp_ref, q_ref,        # per-batch-item blocks
    memk_in, memv_in, memp_in,                  # old memory state (resident input blocks)
    memk_out, memv_out, memp_out, sims_ref,     # new memory (resident) + per-item sims
    norm_sc,                                     # VMEM scratch: cached slot L2 norms [M, 1]
):
    b = pl.program_id(0)
    S = repk_ref.shape[0]
    M = memk_out.shape[0]

    # Bring the slab into the resident output block once; build the norm cache.
    @pl.when(b == 0)
    def _():
        memk_out[...] = memk_in[...]
        memv_out[...] = memv_in[...]
        memp_out[...] = memp_in[...]
        mk0 = memk_out[...].astype(jnp.float32)
        norm_sc[...] = jnp.sqrt(jnp.sum(mk0 * mk0, axis=1, keepdims=True))

    ptr = ptr_ref[b]      # ring write pointer for this batch item
    nb = nb_ref[b]        # number of events produced by this item
    vcnt = vcnt_ref[b]    # number of valid slots AFTER this item's writes

    # Ring-buffer write of the <= S new event representatives (contiguous row stores).
    def _write(e, carry):
        @pl.when(e < nb)
        def _():
            idx = (ptr + e) % M_LOGICAL
            rk = repk_ref[pl.ds(e, 1), :]                                   # [1, Hk]
            memk_out[pl.ds(idx, 1), :] = rk.astype(memk_out.dtype)
            memv_out[pl.ds(idx, 1), :] = repv_ref[pl.ds(e, 1), :].astype(memv_out.dtype)
            memp_out[pl.ds(idx, 1), :] = repp_ref[pl.ds(e, 1), :]
            rkf = rk.astype(jnp.float32)
            norm_sc[pl.ds(idx, 1), :] = jnp.sqrt(jnp.sum(rkf * rkf, axis=1, keepdims=True))
        return carry

    lax.fori_loop(0, S, _write, 0, unroll=True)

    # Cosine similarity of the query against every slot: MXU matmul [M,Hk] @ [Hk,1].
    q = q_ref[...].astype(jnp.float32)                            # [Hk, 1]
    qn = jnp.sqrt(jnp.sum(q * q))
    mk = memk_out[...].astype(jnp.float32)                        # [M, Hk]
    dots = jnp.dot(mk, q, preferred_element_type=jnp.float32)     # [M, 1]
    denom = jnp.maximum(norm_sc[...], 1e-8) * jnp.maximum(qn, 1e-8)
    sims = dots * pl.reciprocal(denom, approx=True)               # EUP reciprocal
    slot = lax.broadcasted_iota(jnp.int32, (M, 1), 0)
    sims_ref[...] = jnp.where(slot < vcnt, sims, -1e30)


def mem_update_and_score_pallas(mem_k, mem_v, mem_p, rep_k, rep_v, rep_p,
                                query_col, ptr_starts, nb, valid_counts):
    M, Hk = mem_k.shape
    Hv = mem_v.shape[-1]
    B, S, _ = rep_k.shape
    grid_spec = pltpu.PrefetchScalarGridSpec(
        num_scalar_prefetch=3,
        grid=(B,),
        in_specs=[
            pl.BlockSpec((None, S, Hk), lambda b, *_: (b, 0, 0)),   # rep_k
            pl.BlockSpec((None, S, Hv), lambda b, *_: (b, 0, 0)),   # rep_v
            pl.BlockSpec((None, S, 1),  lambda b, *_: (b, 0, 0)),   # rep_p
            pl.BlockSpec((None, Hk, 1), lambda b, *_: (b, 0, 0)),   # query column
            pl.BlockSpec((M, Hk),       lambda b, *_: (0, 0)),      # mem_k (resident)
            pl.BlockSpec((M, Hv),       lambda b, *_: (0, 0)),      # mem_v (resident)
            pl.BlockSpec((M, 1),        lambda b, *_: (0, 0)),      # mem_p (resident)
        ],
        out_specs=(
            pl.BlockSpec((M, Hk),       lambda b, *_: (0, 0)),      # new mem_k (resident)
            pl.BlockSpec((M, Hv),       lambda b, *_: (0, 0)),      # new mem_v (resident)
            pl.BlockSpec((M, 1),        lambda b, *_: (0, 0)),      # new mem_p (resident)
            pl.BlockSpec((None, M, 1),  lambda b, *_: (b, 0, 0)),   # sims per batch item
        ),
        scratch_shapes=[pltpu.VMEM((M, 1), jnp.float32)],
    )
    out_shape = (
        jax.ShapeDtypeStruct((M, Hk), mem_k.dtype),
        jax.ShapeDtypeStruct((M, Hv), mem_v.dtype),
        jax.ShapeDtypeStruct((M, 1), jnp.float32),
        jax.ShapeDtypeStruct((B, M, 1), jnp.float32),
    )
    return pl.pallas_call(
        _mem_update_score_kernel,
        grid_spec=grid_spec,
        out_shape=out_shape,
        compiler_params=pltpu.CompilerParams(dimension_semantics=("arbitrary",)),
    )(ptr_starts, nb, valid_counts, rep_k, rep_v, rep_p, query_col,
      mem_k, mem_v, mem_p)


# --------------------------------------------------------------------------
# Jitted forward core (device-resident state, no host syncs, no retraces)
# --------------------------------------------------------------------------

def _make_forward_core(k_retr, gamma, window):

    def core(state, k, v, attention_mask, positions_q):
        mem_k, mem_v, mem_p, total, hist, hist_cnt = state
        B, nh, S, hd_k = k.shape
        hd_v = v.shape[-1]
        Hk = nh * hd_k
        Hv = nh * hd_v

        k_comb = jnp.transpose(k, (0, 2, 1, 3)).reshape(B, S, Hk)    # native dtype
        v_comb = jnp.transpose(v, (0, 2, 1, 3)).reshape(B, S, Hv)
        query = k_comb[:, -1, :].astype(jnp.float32)                  # [B, Hk]

        # (1) surprise -- Pallas, batched over B
        surprises = surprise_pallas(k_comb)                           # [B, S] f32

        # (2) rolling surprise window -> per-item threshold (sequential over batch, tiny)
        def hist_step(carry, s_row):
            h, cnt = carry
            if S >= window:
                h_new = s_row[S - window:]
            else:
                h_new = jnp.concatenate([h[S:], s_row])               # fixed-size ring
            cnt_new = jnp.minimum(cnt + S, window)
            valid = jnp.arange(window) >= (window - cnt_new)
            cnt_f = cnt_new.astype(jnp.float32)
            mean = jnp.sum(jnp.where(valid, h_new, 0.0)) / jnp.maximum(cnt_f, 1.0)
            var = (jnp.sum(jnp.where(valid, (h_new - mean) ** 2, 0.0))
                   / jnp.maximum(cnt_f - 1.0, 1.0))                   # unbiased, NaN-safe
            thr = mean + gamma * jnp.sqrt(var)
            return (h_new, cnt_new), thr

        (hist_new, cnt_new), thresholds = lax.scan(hist_step, (hist, hist_cnt), surprises)

        # (3) static-shape event segmentation (boundary where surprise > threshold)
        is_b = surprises > thresholds[:, None]
        ib = is_b.astype(jnp.int32)
        seg_id = jnp.cumsum(ib, axis=1) - ib                          # exclusive cumsum
        nb = jnp.sum(ib, axis=1).astype(jnp.int32)                    # events per item
        covered = seg_id < nb[:, None]                                # tail after last boundary dropped
        onehot = (seg_id[:, None, :] == jnp.arange(S)[None, :, None]) & covered[:, None, :]
        counts = jnp.sum(onehot, axis=2)
        w = onehot.astype(jnp.float32) / jnp.maximum(counts, 1)[..., None].astype(jnp.float32)

        # (4) per-event mean keys/values -- Pallas; mean positions in XLA (tiny)
        rep_k, rep_v = segment_means_pallas(w, k_comb, v_comb)        # [B,S,Hk], [B,S,Hv]
        rep_p = jnp.einsum("bes,bs->be", w, positions_q)[..., None]   # [B, S, 1]

        # (5) fused ring-buffer update + cosine scoring (single kernel, slab VMEM-resident)
        cum_incl = jnp.cumsum(nb)
        cum_excl = cum_incl - nb
        ptr_starts = ((total + cum_excl) % M_LOGICAL).astype(jnp.int32)
        valid_counts = jnp.minimum(total + cum_incl, M_LOGICAL).astype(jnp.int32)
        new_mem_k, new_mem_v, new_mem_p, sims = mem_update_and_score_pallas(
            mem_k, mem_v, mem_p, rep_k, rep_v, rep_p,
            query[..., None], ptr_starts, nb, valid_counts)
        new_total = total + jnp.sum(nb)

        # (6) top-k retrieval (row gathers on the row-major memory) + augmentation
        # TODO(synk): the reference also adds the +/-1 temporal-contiguity neighbors of the
        #             top hit and stores variable-length value spans; this static-shape port
        #             stores per-event mean values and does plain top-k.
        _, top_idx = lax.top_k(sims[:, :, 0], k_retr)                 # [B, k]
        retr_k = jnp.take(new_mem_k, top_idx, axis=0).astype(jnp.float32)   # [B, k, Hk]
        retr_v = jnp.take(new_mem_v, top_idx, axis=0).astype(jnp.float32)   # [B, k, Hv]
        retr_p = jnp.take(new_mem_p[:, 0], top_idx, axis=0)                 # [B, k]

        retr_k_heads = jnp.transpose(retr_k.reshape(B, k_retr, nh, hd_k), (0, 2, 1, 3))
        retr_v_heads = jnp.transpose(retr_v.reshape(B, k_retr, nh, hd_v), (0, 2, 1, 3))
        k_out = jnp.concatenate([retr_k_heads.astype(k.dtype), k], axis=2)
        v_out = jnp.concatenate([retr_v_heads.astype(v.dtype), v], axis=2)
        mask_out = jnp.concatenate(
            [jnp.ones((B, k_retr), attention_mask.dtype), attention_mask], axis=1)
        positions_k = jnp.concatenate([positions_q, retr_p], axis=1)

        new_state = (new_mem_k, new_mem_v, new_mem_p, new_total, hist_new, cnt_new)
        return new_state, k_out, v_out, mask_out, positions_k

    # TODO(synk): for production, jit with donate_argnums=(0,) (and alias the memory
    #             slabs through pallas_call) so state buffers are updated in place.
    return jax.jit(core)


# --------------------------------------------------------------------------
# EpisodicMemory module
# --------------------------------------------------------------------------

class EpisodicMemory:
    """Static-shape JAX/Pallas port of the PyTorch EpisodicMemory module."""

    def __init__(self, num_heads: int, head_dim: int, differential: bool = False,
                 memory_dtype=jnp.float32):
        self.num_heads = num_heads
        self.head_dim = head_dim
        self.differential = differential
        self.multiplier = 2 if differential else 1
        self.memory_size = M_LOGICAL
        self.k = 10
        self.surprise_gamma = 1.0
        self.surprise_window = 100

        hk = num_heads * head_dim * self.multiplier
        hv = num_heads * head_dim
        # Device-resident state (no learned params in this module), row-major memory:
        self._state = (
            jnp.zeros((M_PHYS, hk), memory_dtype),            # event-mean keys   [M, Hk]
            jnp.zeros((M_PHYS, hv), memory_dtype),            # event-mean values [M, Hv]
            jnp.zeros((M_PHYS, 1), jnp.float32),              # event mean positions
            jnp.zeros((), jnp.int32),                         # total events written (ptr = total % 1000)
            jnp.zeros((self.surprise_window,), jnp.float32),  # surprise history ring
            jnp.zeros((), jnp.int32),                         # valid history count
        )
        self._fwd = _make_forward_core(self.k, self.surprise_gamma, self.surprise_window)

    def forward(self, inputs, q, k, v, attention_mask, token_indices, seq_len_q):
        B = inputs.shape[0]
        if token_indices is not None:
            # TODO(synk): reference indexes an (undefined) `self.positions` table; token
            #             indices are used directly as float positions here.
            positions_q = token_indices.astype(jnp.float32)
        else:
            positions_q = jnp.broadcast_to(
                jnp.arange(seq_len_q, dtype=jnp.float32)[None, :], (B, seq_len_q))

        new_state, k_out, v_out, mask_out, positions_k = self._fwd(
            self._state, k, v, attention_mask, positions_q)
        self._state = new_state
        seq_len_k = int(k_out.shape[2])
        return (inputs, q, k_out, v_out, mask_out, token_indices, seq_len_k, positions_k)

    __call__ = forward


# --------------------------------------------------------------------------
# demo
# --------------------------------------------------------------------------

if __name__ == "__main__":
    key = jax.random.PRNGKey(0)
    B, nh, S, hd = 2, 4, 8, 8
    H = nh * hd
    k1, k2, k3, k4 = jax.random.split(key, 4)
    inputs = jax.random.normal(k1, (B, S, H), jnp.float32)
    q = jax.random.normal(k2, (B, nh, S, hd), jnp.float32)
    kk = jax.random.normal(k3, (B, nh, S, hd), jnp.float32)
    v = jax.random.normal(k4, (B, nh, S, hd), jnp.float32)
    attention_mask = jnp.ones((B, S), jnp.float32)

    mem = EpisodicMemory(num_heads=nh, head_dim=hd, differential=False)
    out = mem.forward(inputs, q, kk, v, attention_mask, None, S)
    (inp_o, q_o, k_o, v_o, mask_o, tok_o, seq_len_k, pos_k) = out

    jax.block_until_ready((inp_o, q_o, k_o, v_o, mask_o, pos_k))
    assert q_o.shape == (B, nh, S, hd)
    assert k_o.shape == (B, nh, mem.k + S, hd)
    assert v_o.shape == (B, nh, mem.k + S, hd)
    assert mask_o.shape == (B, mem.k + S)
    assert pos_k.shape == (B, S + mem.k)
    assert seq_len_k == mem.k + S
    assert bool(jnp.all(jnp.isfinite(k_o))) and bool(jnp.all(jnp.isfinite(v_o)))
    print("KERNEL_OK")
</pallas_src>

<mosaic_0001>
module attributes {stable_mosaic.version = 11 : i64} {
  func.func @_surprise_kernel(%arg0: i32, %arg1: memref<1x8x32xf32, #tpu.memory_space<vmem>>, %arg2: memref<1x8x1xf32, #tpu.memory_space<vmem>>) attributes {dimension_semantics = [#tpu.dimension_semantics<parallel>], iteration_bounds = array<i64: 2>, scalar_prefetch = 0 : i64, scratch_operands = 0 : i64, tpu.core_type = #tpu.core_type<tc>, window_params = [{transform_indices = @transform_0, window_bounds = array<i64: 1, 8, 32>}, {transform_indices = @transform_1, window_bounds = array<i64: 1, 8, 1>}]} {
    %c0 = arith.constant 0 : index
    %c0_0 = arith.constant 0 : index
    %c0_1 = arith.constant 0 : index
    %0 = vector.load %arg1[%c0, %c0_0, %c0_1] : memref<1x8x32xf32, #tpu.memory_space<vmem>>, vector<1x8x32xf32>
    %1 = vector.shape_cast %0 : vector<1x8x32xf32> to vector<8x32xf32>
    %c1_i32 = arith.constant 1 : i32
    %2 = tpu.dynamic_rotate %1 by %c1_i32 dim 0 : vector<8x32xf32>, i32 -> vector<8x32xf32>
    %3 = tpu.iota {dimensions = array<i32: 0>} : vector<8x32xi32>
    %c0_i32 = arith.constant 0 : i32
    %4 = vector.broadcast %c0_i32 : i32 to vector<8x32xi32>
    %5 = arith.cmpi sgt, %3, %4 : vector<8x32xi32>
    %6 = arith.subf %1, %2 : vector<8x32xf32>
    %cst = arith.constant 0.000000e+00 : f32
    %7 = vector.broadcast %cst : f32 to vector<8x32xf32>
    %8 = arith.select %5, %6, %7 : vector<8x32xi1>, vector<8x32xf32>
    %9 = arith.mulf %8, %8 : vector<8x32xf32>
    %cst_2 = arith.constant dense<0.000000e+00> : vector<8xf32>
    %10 = vector.multi_reduction <add>, %9, %cst_2 [1] : vector<8x32xf32> to vector<8xf32>
    %11 = vector.shape_cast %10 : vector<8xf32> to vector<8x1xf32>
    %12 = math.sqrt %11 : vector<8x1xf32>
    %c0_3 = arith.constant 0 : index
    %c0_4 = arith.constant 0 : index
    %c0_5 = arith.constant 0 : index
    %13 = vector.load %arg2[%c0_3, %c0_4, %c0_5] : memref<1x8x1xf32, #tpu.memory_space<vmem>>, vector<1x8x1xf32>
    %14 = vector.shape_cast %13 : vector<1x8x1xf32> to vector<8x1xf32>
    %15 = vector.shape_cast %12 : vector<8x1xf32> to vector<1x8x1xf32>
    tpu.vector_store %arg2[%c0_3, %c0_4, %c0_5], %15 {strides = array<i32>} : memref<1x8x1xf32, #tpu.memory_space<vmem>>, vector<1x8x1xf32>,
    return
  }
  func.func @transform_0(%arg0: i32) -> (i32, i32, i32) {
    %c0_i32 = arith.constant 0 : i32
    %c0_i32_0 = arith.constant 0 : i32
    %c0_i32_1 = arith.constant 0 : i32
    return %arg0, %c0_i32, %c0_i32_0 : i32, i32, i32
  }
  func.func @transform_1(%arg0: i32) -> (i32, i32, i32) {
    %c0_i32 = arith.constant 0 : i32
    %c0_i32_0 = arith.constant 0 : i32
    %c0_i32_1 = arith.constant 0 : i32
    return %arg0, %c0_i32, %c0_i32_0 : i32, i32, i32
  }
}

module attributes {stable_mosaic.version = 11 : i64} {
  func.func @_segment_mean_kernel(%arg0: i32, %arg1: memref<1x8x8xf32, #tpu.memory_space<vmem>>, %arg2: memref<1x8x32xf32, #tpu.memory_space<vmem>>, %arg3: memref<1x8x32xf32, #tpu.memory_space<vmem>>, %arg4: memref<1x8x32xf32, #tpu.memory_space<vmem>>, %arg5: memref<1x8x32xf32, #tpu.memory_space<vmem>>) attributes {dimension_semantics = [#tpu.dimension_semantics<parallel>], iteration_bounds = array<i64: 2>, scalar_prefetch = 0 : i64, scratch_operands = 0 : i64, tpu.core_type = #tpu.core_type<tc>, window_params = [{transform_indices = @transform_0, window_bounds = array<i64: 1, 8, 8>}, {transform_indices = @transform_1, window_bounds = array<i64: 1, 8, 32>}, {transform_indices = @transform_2, window_bounds = array<i64: 1, 8, 32>}, {transform_indices = @transform_3, window_bounds = array<i64: 1, 8, 32>}, {transform_indices = @transform_4, window_bounds = array<i64: 1, 8, 32>}]} {
    %c0 = arith.constant 0 : index
    %c0_0 = arith.constant 0 : index
    %c0_1 = arith.constant 0 : index
    %0 = vector.load %arg1[%c0, %c0_0, %c0_1] : memref<1x8x8xf32, #tpu.memory_space<vmem>>, vector<1x8x8xf32>
    %1 = vector.shape_cast %0 : vector<1x8x8xf32> to vector<8x8xf32>
    %c0_2 = arith.constant 0 : index
    %c0_3 = arith.constant 0 : index
    %c0_4 = arith.constant 0 : index
    %2 = vector.load %arg2[%c0_2, %c0_3, %c0_4] : memref<1x8x32xf32, #tpu.memory_space<vmem>>, vector<1x8x32xf32>
    %3 = vector.shape_cast %2 : vector<1x8x32xf32> to vector<8x32xf32>
    %cst = arith.constant dense<0.000000e+00> : vector<8x32xf32>
    %4 = tpu.matmul %1, %3, %cst {dimension_numbers = #tpu.dot_dimension_numbers<[1], [0], [0], [1], [0, 0, 1, 1], [], []>} : vector<8x8xf32>, vector<8x32xf32>, vector<8x32xf32> -> vector<8x32xf32>
    %c0_5 = arith.constant 0 : index
    %c0_6 = arith.constant 0 : index
    %c0_7 = arith.constant 0 : index
    %5 = vector.load %arg4[%c0_5, %c0_6, %c0_7] : memref<1x8x32xf32, #tpu.memory_space<vmem>>, vector<1x8x32xf32>
    %6 = vector.shape_cast %5 : vector<1x8x32xf32> to vector<8x32xf32>
    %7 = vector.shape_cast %4 : vector<8x32xf32> to vector<1x8x32xf32>
    tpu.vector_store %arg4[%c0_5, %c0_6, %c0_7], %7 {strides = array<i32>} : memref<1x8x32xf32, #tpu.memory_space<vmem>>, vector<1x8x32xf32>,
    %c0_8 = arith.constant 0 : index
    %c0_9 = arith.constant 0 : index
    %c0_10 = arith.constant 0 : index
    %8 = vector.load %arg3[%c0_8, %c0_9, %c0_10] : memref<1x8x32xf32, #tpu.memory_space<vmem>>, vector<1x8x32xf32>
    %9 = vector.shape_cast %8 : vector<1x8x32xf32> to vector<8x32xf32>
    %cst_11 = arith.constant dense<0.000000e+00> : vector<8x32xf32>
    %10 = tpu.matmul %1, %9, %cst_11 {dimension_numbers = #tpu.dot_dimension_numbers<[1], [0], [0], [1], [0, 0, 1, 1], [], []>} : vector<8x8xf32>, vector<8x32xf32>, vector<8x32xf32> -> vector<8x32xf32>
    %c0_12 = arith.constant 0 : index
    %c0_13 = arith.constant 0 : index
    %c0_14 = arith.constant 0 : index
    %11 = vector.load %arg5[%c0_12, %c0_13, %c0_14] : memref<1x8x32xf32, #tpu.memory_space<vmem>>, vector<1x8x32xf32>
    %12 = vector.shape_cast %11 : vector<1x8x32xf32> to vector<8x32xf32>
    %13 = vector.shape_cast %10 : vector<8x32xf32> to vector<1x8x32xf32>
    tpu.vector_store %arg5[%c0_12, %c0_13, %c0_14], %13 {strides = array<i32>} : memref<1x8x32xf32, #tpu.memory_space<vmem>>, vector<1x8x32xf32>,
    return
  }
  func.func @transform_0(%arg0: i32) -> (i32, i32, i32) {
    %c0_i32 = arith.constant 0 : i32
    %c0_i32_0 = arith.constant 0 : i32
    %c0_i32_1 = arith.constant 0 : i32
    return %arg0, %c0_i32, %c0_i32_0 : i32, i32, i32
  }
  func.func @transform_1(%arg0: i32) -> (i32, i32, i32) {
    %c0_i32 = arith.constant 0 : i32
    %c0_i32_0 = arith.constant 0 : i32
    %c0_i32_1 = arith.constant 0 : i32
    return %arg0, %c0_i32, %c0_i32_0 : i32, i32, i32
  }
  func.func @transform_2(%arg0: i32) -> (i32, i32, i32) {
    %c0_i32 = arith.constant 0 : i32
    %c0_i32_0 = arith.constant 0 : i32
    %c0_i32_1 = arith.constant 0 : i32
    return %arg0, %c0_i32, %c0_i32_0 : i32, i32, i32
  }
  func.func @transform_3(%arg0: i32) -> (i32, i32, i32) {
    %c0_i32 = arith.constant 0 : i32
    %c0_i32_0 = arith.constant 0 : i32
    %c0_i32_1 = arith.constant 0 : i32
    return %arg0, %c0_i32, %c0_i32_0 : i32, i32, i32
  }
  func.func @transform_4(%arg0: i32) -> (i32, i32, i32) {
    %c0_i32 = arith.constant 0 : i32
    %c0_i32_0 = arith.constant 0 : i32
    %c0_i32_1 = arith.constant 0 : i32
    return %arg0, %c0_i32, %c0_i32_0 : i32, i32, i32
  }
}

module attributes {stable_mosaic.version = 11 : i64} {
  func.func @_mem_update_score_kernel(%arg0: i32, %arg1: memref<2xi32, #tpu.memory_space<smem>>, %arg2: memref<2xi32, #tpu.memory_space<smem>>, %arg3: memref<2xi32, #tpu.memory_space<smem>>, %arg4: memref<1x8x32xf32, #tpu.memory_space<vmem>>, %arg5: memref<1x8x32xf32, #tpu.memory_space<vmem>>, %arg6: memref<1x8x1xf32, #tpu.memory_space<vmem>>, %arg7: memref<1x32x1xf32, #tpu.memory_space<vmem>>, %arg8: memref<1024x32xf32, #tpu.memory_space<vmem>>, %arg9: memref<1024x32xf32, #tpu.memory_space<vmem>>, %arg10: memref<1024x1xf32, #tpu.memory_space<vmem>>, %arg11: memref<1024x32xf32, #tpu.memory_space<vmem>>, %arg12: memref<1024x32xf32, #tpu.memory_space<vmem>>, %arg13: memref<1024x1xf32, #tpu.memory_space<vmem>>, %arg14: memref<1x1024x1xf32, #tpu.memory_space<vmem>>, %arg15: memref<1024x1xf32, #tpu.memory_space<vmem>>) attributes {dimension_semantics = [#tpu.dimension_semantics<arbitrary>], iteration_bounds = array<i64: 2>, scalar_prefetch = 3 : i64, scratch_operands = 1 : i64, tpu.core_type = #tpu.core_type<tc>, window_params = [{transform_indices = @transform_0, window_bounds = array<i64: 1, 8, 32>}, {transform_indices = @transform_1, window_bounds = array<i64: 1, 8, 32>}, {transform_indices = @transform_2, window_bounds = array<i64: 1, 8, 1>}, {transform_indices = @transform_3, window_bounds = array<i64: 1, 32, 1>}, {pipeline_mode = #tpu.pipeline_mode<synchronous>, transform_indices = @transform_4, window_bounds = array<i64: 1024, 32>}, {pipeline_mode = #tpu.pipeline_mode<synchronous>, transform_indices = @transform_5, window_bounds = array<i64: 1024, 32>}, {pipeline_mode = #tpu.pipeline_mode<synchronous>, transform_indices = @transform_6, window_bounds = array<i64: 1024, 1>}, {pipeline_mode = #tpu.pipeline_mode<synchronous>, transform_indices = @transform_7, window_bounds = array<i64: 1024, 32>}, {pipeline_mode = #tpu.pipeline_mode<synchronous>, transform_indices = @transform_8, window_bounds = array<i64: 1024, 32>}, {pipeline_mode = #tpu.pipeline_mode<synchronous>, transform_indices = @transform_9, window_bounds = array<i64: 1024, 1>}, {transform_indices = @transform_10, window_bounds = array<i64: 1, 1024, 1>}]} {
    %c0_i32 = arith.constant 0 : i32
    %0 = arith.cmpi eq, %arg0, %c0_i32 : i32
    %1 = arith.extui %0 : i1 to i32
    %c0_i32_0 = arith.constant 0 : i32
    %2 = arith.cmpi ne, %1, %c0_i32_0 : i32
    scf.if %2 {
      %c0_23 = arith.constant 0 : index
      %c0_24 = arith.constant 0 : index
      %59 = vector.load %arg8[%c0_23, %c0_24] : memref<1024x32xf32, #tpu.memory_space<vmem>>, vector<1024x32xf32>
      %c0_25 = arith.constant 0 : index
      %c0_26 = arith.constant 0 : index
      %60 = vector.load %arg11[%c0_25, %c0_26] : memref<1024x32xf32, #tpu.memory_space<vmem>>, vector<1024x32xf32>
      tpu.vector_store %arg11[%c0_25, %c0_26], %59 {strides = array<i32>} : memref<1024x32xf32, #tpu.memory_space<vmem>>, vector<1024x32xf32>,
      %c0_27 = arith.constant 0 : index
      %c0_28 = arith.constant 0 : index
      %61 = vector.load %arg9[%c0_27, %c0_28] : memref<1024x32xf32, #tpu.memory_space<vmem>>, vector<1024x32xf32>
      %c0_29 = arith.constant 0 : index
      %c0_30 = arith.constant 0 : index
      %62 = vector.load %arg12[%c0_29, %c0_30] : memref<1024x32xf32, #tpu.memory_space<vmem>>, vector<1024x32xf32>
      tpu.vector_store %arg12[%c0_29, %c0_30], %61 {strides = array<i32>} : memref<1024x32xf32, #tpu.memory_space<vmem>>, vector<1024x32xf32>,
      %c0_31 = arith.constant 0 : index
      %c0_32 = arith.constant 0 : index
      %63 = vector.load %arg10[%c0_31, %c0_32] : memref<1024x1xf32, #tpu.memory_space<vmem>>, vector<1024x1xf32>
      %c0_33 = arith.constant 0 : index
      %c0_34 = arith.constant 0 : index
      %64 = vector.load %arg13[%c0_33, %c0_34] : memref<1024x1xf32, #tpu.memory_space<vmem>>, vector<1024x1xf32>
      tpu.vector_store %arg13[%c0_33, %c0_34], %63 {strides = array<i32>} : memref<1024x1xf32, #tpu.memory_space<vmem>>, vector<1024x1xf32>,
      %c0_35 = arith.constant 0 : index
      %c0_36 = arith.constant 0 : index
      %65 = vector.load %arg11[%c0_35, %c0_36] : memref<1024x32xf32, #tpu.memory_space<vmem>>, vector<1024x32xf32>
      %66 = arith.mulf %65, %65 : vector<1024x32xf32>
      %cst_37 = arith.constant dense<0.000000e+00> : vector<1024xf32>
      %67 = vector.multi_reduction <add>, %66, %cst_37 [1] : vector<1024x32xf32> to vector<1024xf32>
      %68 = vector.shape_cast %67 : vector<1024xf32> to vector<1024x1xf32>
      %69 = math.sqrt %68 : vector<1024x1xf32>
      %c0_38 = arith.constant 0 : index
      %c0_39 = arith.constant 0 : index
      %70 = vector.load %arg15[%c0_38, %c0_39] : memref<1024x1xf32, #tpu.memory_space<vmem>>, vector<1024x1xf32>
      tpu.vector_store %arg15[%c0_38, %c0_39], %69 {strides = array<i32>} : memref<1024x1xf32, #tpu.memory_space<vmem>>, vector<1024x1xf32>,
    } else {
    }
    %3 = arith.index_cast %arg0 : i32 to index
    %4 = memref.load %arg1[%3] : memref<2xi32, #tpu.memory_space<smem>>
    %5 = arith.index_cast %arg0 : i32 to index
    %6 = memref.load %arg2[%5] : memref<2xi32, #tpu.memory_space<smem>>
    %7 = arith.index_cast %arg0 : i32 to index
    %8 = memref.load %arg3[%7] : memref<2xi32, #tpu.memory_space<smem>>
    %c0_i32_1 = arith.constant 0 : i32
    %9 = arith.cmpi slt, %c0_i32_1, %6 : i32
    %10 = arith.extui %9 : i1 to i32
    %c0_i32_2 = arith.constant 0 : i32
    %11 = arith.cmpi ne, %10, %c0_i32_2 : i32
    scf.if %11 {
      %59 = arith.addi %4, %c0_i32_1 : i32
      %c1000_i32 = arith.constant 1000 : i32
      %c0_i32_23 = arith.constant 0 : i32
      %60 = arith.cmpi eq, %c1000_i32, %c0_i32_23 : i32
      %c1_i32_24 = arith.constant 1 : i32
      %61 = arith.select %60, %c1_i32_24, %c1000_i32 : i32
      %62 = arith.remsi %59, %61 : i32
      %c0_i32_25 = arith.constant 0 : i32
      %63 = arith.cmpi ne, %62, %c0_i32_25 : i32
      %c0_i32_26 = arith.constant 0 : i32
      %64 = arith.cmpi slt, %62, %c0_i32_26 : i32
      %c0_i32_27 = arith.constant 0 : i32
      %65 = arith.cmpi slt, %61, %c0_i32_27 : i32
      %66 = arith.xori %64, %65 : i1
      %67 = arith.andi %66, %63 : i1
      %68 = arith.addi %62, %61 : i32
      %69 = arith.select %67, %68, %62 : i32
      %c0_28 = arith.constant 0 : index
      %70 = arith.index_cast %c0_i32_1 : i32 to index
      %c0_29 = arith.constant 0 : index
      %71 = vector.load %arg4[%c0_28, %70, %c0_29] : memref<1x8x32xf32, #tpu.memory_space<vmem>>, vector<1x1x32xf32>
      %72 = vector.shape_cast %71 : vector<1x1x32xf32> to vector<1x32xf32>
      %73 = arith.index_cast %69 : i32 to index
      %c0_30 = arith.constant 0 : index
      %74 = vector.load %arg11[%73, %c0_30] : memref<1024x32xf32, #tpu.memory_space<vmem>>, vector<1x32xf32>
      tpu.vector_store %arg11[%73, %c0_30], %72 {strides = array<i32>} : memref<1024x32xf32, #tpu.memory_space<vmem>>, vector<1x32xf32>,
      %c0_31 = arith.constant 0 : index
      %75 = arith.index_cast %c0_i32_1 : i32 to index
      %c0_32 = arith.constant 0 : index
      %76 = vector.load %arg5[%c0_31, %75, %c0_32] : memref<1x8x32xf32, #tpu.memory_space<vmem>>, vector<1x1x32xf32>
      %77 = vector.shape_cast %76 : vector<1x1x32xf32> to vector<1x32xf32>
      %78 = arith.index_cast %69 : i32 to index
      %c0_33 = arith.constant 0 : index
      %79 = vector.load %arg12[%78, %c0_33] : memref<1024x32xf32, #tpu.memory_space<vmem>>, vector<1x32xf32>
      tpu.vector_store %arg12[%78, %c0_33], %77 {strides = array<i32>} : memref<1024x32xf32, #tpu.memory_space<vmem>>, vector<1x32xf32>,
      %c0_34 = arith.constant 0 : index
      %80 = arith.index_cast %c0_i32_1 : i32 to index
      %c0_35 = arith.constant 0 : index
      %81 = vector.load %arg6[%c0_34, %80, %c0_35] : memref<1x8x1xf32, #tpu.memory_space<vmem>>, vector<1x1x1xf32>
      %82 = vector.shape_cast %81 : vector<1x1x1xf32> to vector<1x1xf32>
      %83 = arith.index_cast %69 : i32 to index
      %c0_36 = arith.constant 0 : index
      %84 = vector.load %arg13[%83, %c0_36] : memref<1024x1xf32, #tpu.memory_space<vmem>>, vector<1x1xf32>
      tpu.vector_store %arg13[%83, %c0_36], %82 {strides = array<i32>} : memref<1024x1xf32, #tpu.memory_space<vmem>>, vector<1x1xf32>,
      %85 = arith.mulf %72, %72 : vector<1x32xf32>
      %cst_37 = arith.constant dense<0.000000e+00> : vector<1xf32>
      %86 = vector.multi_reduction <add>, %85, %cst_37 [1] : vector<1x32xf32> to vector<1xf32>
      %87 = vector.shape_cast %86 : vector<1xf32> to vector<1x1xf32>
      %88 = math.sqrt %87 : vector<1x1xf32>
      %89 = arith.index_cast %69 : i32 to index
      %c0_38 = arith.constant 0 : index
      %90 = vector.load %arg15[%89, %c0_38] : memref<1024x1xf32, #tpu.memory_space<vmem>>, vector<1x1xf32>
      tpu.vector_store %arg15[%89, %c0_38], %88 {strides = array<i32>} : memref<1024x1xf32, #tpu.memory_space<vmem>>, vector<1x1xf32>,
    } else {
    }
    %c1_i32 = arith.constant 1 : i32
    %12 = arith.cmpi slt, %c1_i32, %6 : i32
    %13 = arith.extui %12 : i1 to i32
    %c0_i32_3 = arith.constant 0 : i32
    %14 = arith.cmpi ne, %13, %c0_i32_3 : i32
    scf.if %14 {
      %59 = arith.addi %4, %c1_i32 : i32
      %c1000_i32 = arith.constant 1000 : i32
      %c0_i32_23 = arith.constant 0 : i32
      %60 = arith.cmpi eq, %c1000_i32, %c0_i32_23 : i32
      %c1_i32_24 = arith.constant 1 : i32
      %61 = arith.select %60, %c1_i32_24, %c1000_i32 : i32
      %62 = arith.remsi %59, %61 : i32
      %c0_i32_25 = arith.constant 0 : i32
      %63 = arith.cmpi ne, %62, %c0_i32_25 : i32
      %c0_i32_26 = arith.constant 0 : i32
      %64 = arith.cmpi slt, %62, %c0_i32_26 : i32
      %c0_i32_27 = arith.constant 0 : i32
      %65 = arith.cmpi slt, %61, %c0_i32_27 : i32
      %66 = arith.xori %64, %65 : i1
      %67 = arith.andi %66, %63 : i1
      %68 = arith.addi %62, %61 : i32
      %69 = arith.select %67, %68, %62 : i32
      %c0_28 = arith.constant 0 : index
      %70 = arith.index_cast %c1_i32 : i32 to index
      %c0_29 = arith.constant 0 : index
      %71 = vector.load %arg4[%c0_28, %70, %c0_29] : memref<1x8x32xf32, #tpu.memory_space<vmem>>, vector<1x1x32xf32>
      %72 = vector.shape_cast %71 : vector<1x1x32xf32> to vector<1x32xf32>
      %73 = arith.index_cast %69 : i32 to index
      %c0_30 = arith.constant 0 : index
      %74 = vector.load %arg11[%73, %c0_30] : memref<1024x32xf32, #tpu.memory_space<vmem>>, vector<1x32xf32>
      tpu.vector_store %arg11[%73, %c0_30], %72 {strides = array<i32>} : memref<1024x32xf32, #tpu.memory_space<vmem>>, vector<1x32xf32>,
      %c0_31 = arith.constant 0 : index
      %75 = arith.index_cast %c1_i32 : i32 to index
      %c0_32 = arith.constant 0 : index
      %76 = vector.load %arg5[%c0_31, %75, %c0_32] : memref<1x8x32xf32, #tpu.memory_space<vmem>>, vector<1x1x32xf32>
      %77 = vector.shape_cast %76 : vector<1x1x32xf32> to vector<1x32xf32>
      %78 = arith.index_cast %69 : i32 to index
      %c0_33 = arith.constant 0 : index
      %79 = vector.load %arg12[%78, %c0_33] : memref<1024x32xf32, #tpu.memory_space<vmem>>, vector<1x32xf32>
      tpu.vector_store %arg12[%78, %c0_33], %77 {strides = array<i32>} : memref<1024x32xf32, #tpu.memory_space<vmem>>, vector<1x32xf32>,
      %c0_34 = arith.constant 0 : index
      %80 = arith.index_cast %c1_i32 : i32 to index
      %c0_35 = arith.constant 0 : index
      %81 = vector.load %arg6[%c0_34, %80, %c0_35] : memref<1x8x1xf32, #tpu.memory_space<vmem>>, vector<1x1x1xf32>
      %82 = vector.shape_cast %81 : vector<1x1x1xf32> to vector<1x1xf32>
      %83 = arith.index_cast %69 : i32 to index
      %c0_36 = arith.constant 0 : index
      %84 = vector.load %arg13[%83, %c0_36] : memref<1024x1xf32, #tpu.memory_space<vmem>>, vector<1x1xf32>
      tpu.vector_store %arg13[%83, %c0_36], %82 {strides = array<i32>} : memref<1024x1xf32, #tpu.memory_space<vmem>>, vector<1x1xf32>,
      %85 = arith.mulf %72, %72 : vector<1x32xf32>
      %cst_37 = arith.constant dense<0.000000e+00> : vector<1xf32>
      %86 = vector.multi_reduction <add>, %85, %cst_37 [1] : vector<1x32xf32> to vector<1xf32>
      %87 = vector.shape_cast %86 : vector<1xf32> to vector<1x1xf32>
      %88 = math.sqrt %87 : vector<1x1xf32>
      %89 = arith.index_cast %69 : i32 to index
      %c0_38 = arith.constant 0 : index
      %90 = vector.load %arg15[%89, %c0_38] : memref<1024x1xf32, #tpu.memory_space<vmem>>, vector<1x1xf32>
      tpu.vector_store %arg15[%89, %c0_38], %88 {strides = array<i32>} : memref<1024x1xf32, #tpu.memory_space<vmem>>, vector<1x1xf32>,
    } else {
    }
    %c2_i32 = arith.constant 2 : i32
    %15 = arith.cmpi slt, %c2_i32, %6 : i32
    %16 = arith.extui %15 : i1 to i32
    %c0_i32_4 = arith.constant 0 : i32
    %17 = arith.cmpi ne, %16, %c0_i32_4 : i32
    scf.if %17 {
      %59 = arith.addi %4, %c2_i32 : i32
      %c1000_i32 = arith.constant 1000 : i32
      %c0_i32_23 = arith.constant 0 : i32
      %60 = arith.cmpi eq, %c1000_i32, %c0_i32_23 : i32
      %c1_i32_24 = arith.constant 1 : i32
      %61 = arith.select %60, %c1_i32_24, %c1000_i32 : i32
      %62 = arith.remsi %59, %61 : i32
      %c0_i32_25 = arith.constant 0 : i32
      %63 = arith.cmpi ne, %62, %c0_i32_25 : i32
      %c0_i32_26 = arith.constant 0 : i32
      %64 = arith.cmpi slt, %62, %c0_i32_26 : i32
      %c0_i32_27 = arith.constant 0 : i32
      %65 = arith.cmpi slt, %61, %c0_i32_27 : i32
      %66 = arith.xori %64, %65 : i1
      %67 = arith.andi %66, %63 : i1
      %68 = arith.addi %62, %61 : i32
      %69 = arith.select %67, %68, %62 : i32
      %c0_28 = arith.constant 0 : index
      %70 = arith.index_cast %c2_i32 : i32 to index
      %c0_29 = arith.constant 0 : index
      %71 = vector.load %arg4[%c0_28, %70, %c0_29] : memref<1x8x32xf32, #tpu.memory_space<vmem>>, vector<1x1x32xf32>
      %72 = vector.shape_cast %71 : vector<1x1x32xf32> to vector<1x32xf32>
      %73 = arith.index_cast %69 : i32 to index
      %c0_30 = arith.constant 0 : index
      %74 = vector.load %arg11[%73, %c0_30] : memref<1024x32xf32, #tpu.memory_space<vmem>>, vector<1x32xf32>
      tpu.vector_store %arg11[%73, %c0_30], %72 {strides = array<i32>} : memref<1024x32xf32, #tpu.memory_space<vmem>>, vector<1x32xf32>,
      %c0_31 = arith.constant 0 : index
      %75 = arith.index_cast %c2_i32 : i32 to index
      %c0_32 = arith.constant 0 : index
      %76 = vector.load %arg5[%c0_31, %75, %c0_32] : memref<1x8x32xf32, #tpu.memory_space<vmem>>, vector<1x1x32xf32>
      %77 = vector.shape_cast %76 : vector<1x1x32xf32> to vector<1x32xf32>
      %78 = arith.index_cast %69 : i32 to index
      %c0_33 = arith.constant 0 : index
      %79 = vector.load %arg12[%78, %c0_33] : memref<1024x32xf32, #tpu.memory_space<vmem>>, vector<1x32xf32>
      tpu.vector_store %arg12[%78, %c0_33], %77 {strides = array<i32>} : memref<1024x32xf32, #tpu.memory_space<vmem>>, vector<1x32xf32>,
      %c0_34 = arith.constant 0 : index
      %80 = arith.index_cast %c2_i32 : i32 to index
      %c0_35 = arith.constant 0 : index
      %81 = vector.load %arg6[%c0_34, %80, %c0_35] : memref<1x8x1xf32, #tpu.memory_space<vmem>>, vector<1x1x1xf32>
      %82 = vector.shape_cast %81 : vector<1x1x1xf32> to vector<1x1xf32>
      %83 = arith.index_cast %69 : i32 to index
      %c0_36 = arith.constant 0 : index
      %84 = vector.load %arg13[%83, %c0_36] : memref<1024x1xf32, #tpu.memory_space<vmem>>, vector<1x1xf32>
      tpu.vector_store %arg13[%83, %c0_36], %82 {strides = array<i32>} : memref<1024x1xf32, #tpu.memory_space<vmem>>, vector<1x1xf32>,
      %85 = arith.mulf %72, %72 : vector<1x32xf32>
      %cst_37 = arith.constant dense<0.000000e+00> : vector<1xf32>
      %86 = vector.multi_reduction <add>, %85, %cst_37 [1] : vector<1x32xf32> to vector<1xf32>
      %87 = vector.shape_cast %86 : vector<1xf32> to vector<1x1xf32>
      %88 = math.sqrt %87 : vector<1x1xf32>
      %89 = arith.index_cast %69 : i32 to index
      %c0_38 = arith.constant 0 : index
      %90 = vector.load %arg15[%89, %c0_38] : memref<1024x1xf32, #tpu.memory_space<vmem>>, vector<1x1xf32>
      tpu.vector_store %arg15[%89, %c0_38], %88 {strides = array<i32>} : memref<1024x1xf32, #tpu.memory_space<vmem>>, vector<1x1xf32>,
    } else {
    }
    %c3_i32 = arith.constant 3 : i32
    %18 = arith.cmpi slt, %c3_i32, %6 : i32
    %19 = arith.extui %18 : i1 to i32
    %c0_i32_5 = arith.constant 0 : i32
    %20 = arith.cmpi ne, %19, %c0_i32_5 : i32
    scf.if %20 {
      %59 = arith.addi %4, %c3_i32 : i32
      %c1000_i32 = arith.constant 1000 : i32
      %c0_i32_23 = arith.constant 0 : i32
      %60 = arith.cmpi eq, %c1000_i32, %c0_i32_23 : i32
      %c1_i32_24 = arith.constant 1 : i32
      %61 = arith.select %60, %c1_i32_24, %c1000_i32 : i32
      %62 = arith.remsi %59, %61 : i32
      %c0_i32_25 = arith.constant 0 : i32
      %63 = arith.cmpi ne, %62, %c0_i32_25 : i32
      %c0_i32_26 = arith.constant 0 : i32
      %64 = arith.cmpi slt, %62, %c0_i32_26 : i32
      %c0_i32_27 = arith.constant 0 : i32
      %65 = arith.cmpi slt, %61, %c0_i32_27 : i32
      %66 = arith.xori %64, %65 : i1
      %67 = arith.andi %66, %63 : i1
      %68 = arith.addi %62, %61 : i32
      %69 = arith.select %67, %68, %62 : i32
      %c0_28 = arith.constant 0 : index
      %70 = arith.index_cast %c3_i32 : i32 to index
      %c0_29 = arith.constant 0 : index
      %71 = vector.load %arg4[%c0_28, %70, %c0_29] : memref<1x8x32xf32, #tpu.memory_space<vmem>>, vector<1x1x32xf32>
      %72 = vector.shape_cast %71 : vector<1x1x32xf32> to vector<1x32xf32>
      %73 = arith.index_cast %69 : i32 to index
      %c0_30 = arith.constant 0 : index
      %74 = vector.load %arg11[%73, %c0_30] : memref<1024x32xf32, #tpu.memory_space<vmem>>, vector<1x32xf32>
      tpu.vector_store %arg11[%73, %c0_30], %72 {strides = array<i32>} : memref<1024x32xf32, #tpu.memory_space<vmem>>, vector<1x32xf32>,
      %c0_31 = arith.constant 0 : index
      %75 = arith.index_cast %c3_i32 : i32 to index
      %c0_32 = arith.constant 0 : index
      %76 = vector.load %arg5[%c0_31, %75, %c0_32] : memref<1x8x32xf32, #tpu.memory_space<vmem>>, vector<1x1x32xf32>
      %77 = vector.shape_cast %76 : vector<1x1x32xf32> to vector<1x32xf32>
      %78 = arith.index_cast %69 : i32 to index
      %c0_33 = arith.constant 0 : index
      %79 = vector.load %arg12[%78, %c0_33] : memref<1024x32xf32, #tpu.memory_space<vmem>>, vector<1x32xf32>
      tpu.vector_store %arg12[%78, %c0_33], %77 {strides = array<i32>} : memref<1024x32xf32, #tpu.memory_space<vmem>>, vector<1x32xf32>,
      %c0_34 = arith.constant 0 : index
      %80 = arith.index_cast %c3_i32 : i32 to index
      %c0_35 = arith.constant 0 : index
      %81 = vector.load %arg6[%c0_34, %80, %c0_35] : memref<1x8x1xf32, #tpu.memory_space<vmem>>, vector<1x1x1xf32>
      %82 = vector.shape_cast %81 : vector<1x1x1xf32> to vector<1x1xf32>
      %83 = arith.index_cast %69 : i32 to index
      %c0_36 = arith.constant 0 : index
      %84 = vector.load %arg13[%83, %c0_36] : memref<1024x1xf32, #tpu.memory_space<vmem>>, vector<1x1xf32>
      tpu.vector_store %arg13[%83, %c0_36], %82 {strides = array<i32>} : memref<1024x1xf32, #tpu.memory_space<vmem>>, vector<1x1xf32>,
      %85 = arith.mulf %72, %72 : vector<1x32xf32>
      %cst_37 = arith.constant dense<0.000000e+00> : vector<1xf32>
      %86 = vector.multi_reduction <add>, %85, %cst_37 [1] : vector<1x32xf32> to vector<1xf32>
      %87 = vector.shape_cast %86 : vector<1xf32> to vector<1x1xf32>
      %88 = math.sqrt %87 : vector<1x1xf32>
      %89 = arith.index_cast %69 : i32 to index
      %c0_38 = arith.constant 0 : index
      %90 = vector.load %arg15[%89, %c0_38] : memref<1024x1xf32, #tpu.memory_space<vmem>>, vector<1x1xf32>
      tpu.vector_store %arg15[%89, %c0_38], %88 {strides = array<i32>} : memref<1024x1xf32, #tpu.memory_space<vmem>>, vector<1x1xf32>,
    } else {
    }
    %c4_i32 = arith.constant 4 : i32
    %21 = arith.cmpi slt, %c4_i32, %6 : i32
    %22 = arith.extui %21 : i1 to i32
    %c0_i32_6 = arith.constant 0 : i32
    %23 = arith.cmpi ne, %22, %c0_i32_6 : i32
    scf.if %23 {
      %59 = arith.addi %4, %c4_i32 : i32
      %c1000_i32 = arith.constant 1000 : i32
      %c0_i32_23 = arith.constant 0 : i32
      %60 = arith.cmpi eq, %c1000_i32, %c0_i32_23 : i32
      %c1_i32_24 = arith.constant 1 : i32
      %61 = arith.select %60, %c1_i32_24, %c1000_i32 : i32
      %62 = arith.remsi %59, %61 : i32
      %c0_i32_25 = arith.constant 0 : i32
      %63 = arith.cmpi ne, %62, %c0_i32_25 : i32
      %c0_i32_26 = arith.constant 0 : i32
      %64 = arith.cmpi slt, %62, %c0_i32_26 : i32
      %c0_i32_27 = arith.constant 0 : i32
      %65 = arith.cmpi slt, %61, %c0_i32_27 : i32
      %66 = arith.xori %64, %65 : i1
      %67 = arith.andi %66, %63 : i1
      %68 = arith.addi %62, %61 : i32
      %69 = arith.select %67, %68, %62 : i32
      %c0_28 = arith.constant 0 : index
      %70 = arith.index_cast %c4_i32 : i32 to index
      %c0_29 = arith.constant 0 : index
      %71 = vector.load %arg4[%c0_28, %70, %c0_29] : memref<1x8x32xf32, #tpu.memory_space<vmem>>, vector<1x1x32xf32>
      %72 = vector.shape_cast %71 : vector<1x1x32xf32> to vector<1x32xf32>
      %73 = arith.index_cast %69 : i32 to index
      %c0_30 = arith.constant 0 : index
      %74 = vector.load %arg11[%73, %c0_30] : memref<1024x32xf32, #tpu.memory_space<vmem>>, vector<1x32xf32>
      tpu.vector_store %arg11[%73, %c0_30], %72 {strides = array<i32>} : memref<1024x32xf32, #tpu.memory_space<vmem>>, vector<1x32xf32>,
      %c0_31 = arith.constant 0 : index
      %75 = arith.index_cast %c4_i32 : i32 to index
      %c0_32 = arith.constant 0 : index
      %76 = vector.load %arg5[%c0_31, %75, %c0_32] : memref<1x8x32xf32, #tpu.memory_space<vmem>>, vector<1x1x32xf32>
      %77 = vector.shape_cast %76 : vector<1x1x32xf32> to vector<1x32xf32>
      %78 = arith.index_cast %69 : i32 to index
      %c0_33 = arith.constant 0 : index
      %79 = vector.load %arg12[%78, %c0_33] : memref<1024x32xf32, #tpu.memory_space<vmem>>, vector<1x32xf32>
      tpu.vector_store %arg12[%78, %c0_33], %77 {strides = array<i32>} : memref<1024x32xf32, #tpu.memory_space<vmem>>, vector<1x32xf32>,
      %c0_34 = arith.constant 0 : index
      %80 = arith.index_cast %c4_i32 : i32 to index
      %c0_35 = arith.constant 0 : index
      %81 = vector.load %arg6[%c0_34, %80, %c0_35] : memref<1x8x1xf32, #tpu.memory_space<vmem>>, vector<1x1x1xf32>
      %82 = vector.shape_cast %81 : vector<1x1x1xf32> to vector<1x1xf32>
      %83 = arith.index_cast %69 : i32 to index
      %c0_36 = arith.constant 0 : index
      %84 = vector.load %arg13[%83, %c0_36] : memref<1024x1xf32, #tpu.memory_space<vmem>>, vector<1x1xf32>
      tpu.vector_store %arg13[%83, %c0_36], %82 {strides = array<i32>} : memref<1024x1xf32, #tpu.memory_space<vmem>>, vector<1x1xf32>,
      %85 = arith.mulf %72, %72 : vector<1x32xf32>
      %cst_37 = arith.constant dense<0.000000e+00> : vector<1xf32>
      %86 = vector.multi_reduction <add>, %85, %cst_37 [1] : vector<1x32xf32> to vector<1xf32>
      %87 = vector.shape_cast %86 : vector<1xf32> to vector<1x1xf32>
      %88 = math.sqrt %87 : vector<1x1xf32>
      %89 = arith.index_cast %69 : i32 to index
      %c0_38 = arith.constant 0 : index
      %90 = vector.load %arg15[%89, %c0_38] : memref<1024x1xf32, #tpu.memory_space<vmem>>, vector<1x1xf32>
      tpu.vector_store %arg15[%89, %c0_38], %88 {strides = array<i32>} : memref<1024x1xf32, #tpu.memory_space<vmem>>, vector<1x1xf32>,
    } else {
    }
    %c5_i32 = arith.constant 5 : i32
    %24 = arith.cmpi slt, %c5_i32, %6 : i32
    %25 = arith.extui %24 : i1 to i32
    %c0_i32_7 = arith.constant 0 : i32
    %26 = arith.cmpi ne, %25, %c0_i32_7 : i32
    scf.if %26 {
      %59 = arith.addi %4, %c5_i32 : i32
      %c1000_i32 = arith.constant 1000 : i32
      %c0_i32_23 = arith.constant 0 : i32
      %60 = arith.cmpi eq, %c1000_i32, %c0_i32_23 : i32
      %c1_i32_24 = arith.constant 1 : i32
      %61 = arith.select %60, %c1_i32_24, %c1000_i32 : i32
      %62 = arith.remsi %59, %61 : i32
      %c0_i32_25 = arith.constant 0 : i32
      %63 = arith.cmpi ne, %62, %c0_i32_25 : i32
      %c0_i32_26 = arith.constant 0 : i32
      %64 = arith.cmpi slt, %62, %c0_i32_26 : i32
      %c0_i32_27 = arith.constant 0 : i32
      %65 = arith.cmpi slt, %61, %c0_i32_27 : i32
      %66 = arith.xori %64, %65 : i1
      %67 = arith.andi %66, %63 : i1
      %68 = arith.addi %62, %61 : i32
      %69 = arith.select %67, %68, %62 : i32
      %c0_28 = arith.constant 0 : index
      %70 = arith.index_cast %c5_i32 : i32 to index
      %c0_29 = arith.constant 0 : index
      %71 = vector.load %arg4[%c0_28, %70, %c0_29] : memref<1x8x32xf32, #tpu.memory_space<vmem>>, vector<1x1x32xf32>
      %72 = vector.shape_cast %71 : vector<1x1x32xf32> to vector<1x32xf32>
      %73 = arith.index_cast %69 : i32 to index
      %c0_30 = arith.constant 0 : index
      %74 = vector.load %arg11[%73, %c0_30] : memref<1024x32xf32, #tpu.memory_space<vmem>>, vector<1x32xf32>
      tpu.vector_store %arg11[%73, %c0_30], %72 {strides = array<i32>} : memref<1024x32xf32, #tpu.memory_space<vmem>>, vector<1x32xf32>,
      %c0_31 = arith.constant 0 : index
      %75 = arith.index_cast %c5_i32 : i32 to index
      %c0_32 = arith.constant 0 : index
      %76 = vector.load %arg5[%c0_31, %75, %c0_32] : memref<1x8x32xf32, #tpu.memory_space<vmem>>, vector<1x1x32xf32>
      %77 = vector.shape_cast %76 : vector<1x1x32xf32> to vector<1x32xf32>
      %78 = arith.index_cast %69 : i32 to index
      %c0_33 = arith.constant 0 : index
      %79 = vector.load %arg12[%78, %c0_33] : memref<1024x32xf32, #tpu.memory_space<vmem>>, vector<1x32xf32>
      tpu.vector_store %arg12[%78, %c0_33], %77 {strides = array<i32>} : memref<1024x32xf32, #tpu.memory_space<vmem>>, vector<1x32xf32>,
      %c0_34 = arith.constant 0 : index
      %80 = arith.index_cast %c5_i32 : i32 to index
      %c0_35 = arith.constant 0 : index
      %81 = vector.load %arg6[%c0_34, %80, %c0_35] : memref<1x8x1xf32, #tpu.memory_space<vmem>>, vector<1x1x1xf32>
      %82 = vector.shape_cast %81 : vector<1x1x1xf32> to vector<1x1xf32>
      %83 = arith.index_cast %69 : i32 to index
      %c0_36 = arith.constant 0 : index
      %84 = vector.load %arg13[%83, %c0_36] : memref<1024x1xf32, #tpu.memory_space<vmem>>, vector<1x1xf32>
      tpu.vector_store %arg13[%83, %c0_36], %82 {strides = array<i32>} : memref<1024x1xf32, #tpu.memory_space<vmem>>, vector<1x1xf32>,
      %85 = arith.mulf %72, %72 : vector<1x32xf32>
      %cst_37 = arith.constant dense<0.000000e+00> : vector<1xf32>
      %86 = vector.multi_reduction <add>, %85, %cst_37 [1] : vector<1x32xf32> to vector<1xf32>
      %87 = vector.shape_cast %86 : vector<1xf32> to vector<1x1xf32>
      %88 = math.sqrt %87 : vector<1x1xf32>
      %89 = arith.index_cast %69 : i32 to index
      %c0_38 = arith.constant 0 : index
      %90 = vector.load %arg15[%89, %c0_38] : memref<1024x1xf32, #tpu.memory_space<vmem>>, vector<1x1xf32>
      tpu.vector_store %arg15[%89, %c0_38], %88 {strides = array<i32>} : memref<1024x1xf32, #tpu.memory_space<vmem>>, vector<1x1xf32>,
    } else {
    }
    %c6_i32 = arith.constant 6 : i32
    %27 = arith.cmpi slt, %c6_i32, %6 : i32
    %28 = arith.extui %27 : i1 to i32
    %c0_i32_8 = arith.constant 0 : i32
    %29 = arith.cmpi ne, %28, %c0_i32_8 : i32
    scf.if %29 {
      %59 = arith.addi %4, %c6_i32 : i32
      %c1000_i32 = arith.constant 1000 : i32
      %c0_i32_23 = arith.constant 0 : i32
      %60 = arith.cmpi eq, %c1000_i32, %c0_i32_23 : i32
      %c1_i32_24 = arith.constant 1 : i32
      %61 = arith.select %60, %c1_i32_24, %c1000_i32 : i32
      %62 = arith.remsi %59, %61 : i32
      %c0_i32_25 = arith.constant 0 : i32
      %63 = arith.cmpi ne, %62, %c0_i32_25 : i32
      %c0_i32_26 = arith.constant 0 : i32
      %64 = arith.cmpi slt, %62, %c0_i32_26 : i32
      %c0_i32_27 = arith.constant 0 : i32
      %65 = arith.cmpi slt, %61, %c0_i32_27 : i32
      %66 = arith.xori %64, %65 : i1
      %67 = arith.andi %66, %63 : i1
      %68 = arith.addi %62, %61 : i32
      %69 = arith.select %67, %68, %62 : i32
      %c0_28 = arith.constant 0 : index
      %70 = arith.index_cast %c6_i32 : i32 to index
      %c0_29 = arith.constant 0 : index
      %71 = vector.load %arg4[%c0_28, %70, %c0_29] : memref<1x8x32xf32, #tpu.memory_space<vmem>>, vector<1x1x32xf32>
      %72 = vector.shape_cast %71 : vector<1x1x32xf32> to vector<1x32xf32>
      %73 = arith.index_cast %69 : i32 to index
      %c0_30 = arith.constant 0 : index
      %74 = vector.load %arg11[%73, %c0_30] : memref<1024x32xf32, #tpu.memory_space<vmem>>, vector<1x32xf32>
      tpu.vector_store %arg11[%73, %c0_30], %72 {strides = array<i32>} : memref<1024x32xf32, #tpu.memory_space<vmem>>, vector<1x32xf32>,
      %c0_31 = arith.constant 0 : index
      %75 = arith.index_cast %c6_i32 : i32 to index
      %c0_32 = arith.constant 0 : index
      %76 = vector.load %arg5[%c0_31, %75, %c0_32] : memref<1x8x32xf32, #tpu.memory_space<vmem>>, vector<1x1x32xf32>
      %77 = vector.shape_cast %76 : vector<1x1x32xf32> to vector<1x32xf32>
      %78 = arith.index_cast %69 : i32 to index
      %c0_33 = arith.constant 0 : index
      %79 = vector.load %arg12[%78, %c0_33] : memref<1024x32xf32, #tpu.memory_space<vmem>>, vector<1x32xf32>
      tpu.vector_store %arg12[%78, %c0_33], %77 {strides = array<i32>} : memref<1024x32xf32, #tpu.memory_space<vmem>>, vector<1x32xf32>,
      %c0_34 = arith.constant 0 : index
      %80 = arith.index_cast %c6_i32 : i32 to index
      %c0_35 = arith.constant 0 : index
      %81 = vector.load %arg6[%c0_34, %80, %c0_35] : memref<1x8x1xf32, #tpu.memory_space<vmem>>, vector<1x1x1xf32>
      %82 = vector.shape_cast %81 : vector<1x1x1xf32> to vector<1x1xf32>
      %83 = arith.index_cast %69 : i32 to index
      %c0_36 = arith.constant 0 : index
      %84 = vector.load %arg13[%83, %c0_36] : memref<1024x1xf32, #tpu.memory_space<vmem>>, vector<1x1xf32>
      tpu.vector_store %arg13[%83, %c0_36], %82 {strides = array<i32>} : memref<1024x1xf32, #tpu.memory_space<vmem>>, vector<1x1xf32>,
      %85 = arith.mulf %72, %72 : vector<1x32xf32>
      %cst_37 = arith.constant dense<0.000000e+00> : vector<1xf32>
      %86 = vector.multi_reduction <add>, %85, %cst_37 [1] : vector<1x32xf32> to vector<1xf32>
      %87 = vector.shape_cast %86 : vector<1xf32> to vector<1x1xf32>
      %88 = math.sqrt %87 : vector<1x1xf32>
      %89 = arith.index_cast %69 : i32 to index
      %c0_38 = arith.constant 0 : index
      %90 = vector.load %arg15[%89, %c0_38] : memref<1024x1xf32, #tpu.memory_space<vmem>>, vector<1x1xf32>
      tpu.vector_store %arg15[%89, %c0_38], %88 {strides = array<i32>} : memref<1024x1xf32, #tpu.memory_space<vmem>>, vector<1x1xf32>,
    } else {
    }
    %c7_i32 = arith.constant 7 : i32
    %30 = arith.cmpi slt, %c7_i32, %6 : i32
    %31 = arith.extui %30 : i1 to i32
    %c0_i32_9 = arith.constant 0 : i32
    %32 = arith.cmpi ne, %31, %c0_i32_9 : i32
    scf.if %32 {
      %59 = arith.addi %4, %c7_i32 : i32
      %c1000_i32 = arith.constant 1000 : i32
      %c0_i32_23 = arith.constant 0 : i32
      %60 = arith.cmpi eq, %c1000_i32, %c0_i32_23 : i32
      %c1_i32_24 = arith.constant 1 : i32
      %61 = arith.select %60, %c1_i32_24, %c1000_i32 : i32
      %62 = arith.remsi %59, %61 : i32
      %c0_i32_25 = arith.constant 0 : i32
      %63 = arith.cmpi ne, %62, %c0_i32_25 : i32
      %c0_i32_26 = arith.constant 0 : i32
      %64 = arith.cmpi slt, %62, %c0_i32_26 : i32
      %c0_i32_27 = arith.constant 0 : i32
      %65 = arith.cmpi slt, %61, %c0_i32_27 : i32
      %66 = arith.xori %64, %65 : i1
      %67 = arith.andi %66, %63 : i1
      %68 = arith.addi %62, %61 : i32
      %69 = arith.select %67, %68, %62 : i32
      %c0_28 = arith.constant 0 : index
      %70 = arith.index_cast %c7_i32 : i32 to index
      %c0_29 = arith.constant 0 : index
      %71 = vector.load %arg4[%c0_28, %70, %c0_29] : memref<1x8x32xf32, #tpu.memory_space<vmem>>, vector<1x1x32xf32>
      %72 = vector.shape_cast %71 : vector<1x1x32xf32> to vector<1x32xf32>
      %73 = arith.index_cast %69 : i32 to index
      %c0_30 = arith.constant 0 : index
      %74 = vector.load %arg11[%73, %c0_30] : memref<1024x32xf32, #tpu.memory_space<vmem>>, vector<1x32xf32>
      tpu.vector_store %arg11[%73, %c0_30], %72 {strides = array<i32>} : memref<1024x32xf32, #tpu.memory_space<vmem>>, vector<1x32xf32>,
      %c0_31 = arith.constant 0 : index
      %75 = arith.index_cast %c7_i32 : i32 to index
      %c0_32 = arith.constant 0 : index
      %76 = vector.load %arg5[%c0_31, %75, %c0_32] : memref<1x8x32xf32, #tpu.memory_space<vmem>>, vector<1x1x32xf32>
      %77 = vector.shape_cast %76 : vector<1x1x32xf32> to vector<1x32xf32>
      %78 = arith.index_cast %69 : i32 to index
      %c0_33 = arith.constant 0 : index
      %79 = vector.load %arg12[%78, %c0_33] : memref<1024x32xf32, #tpu.memory_space<vmem>>, vector<1x32xf32>
      tpu.vector_store %arg12[%78, %c0_33], %77 {strides = array<i32>} : memref<1024x32xf32, #tpu.memory_space<vmem>>, vector<1x32xf32>,
      %c0_34 = arith.constant 0 : index
      %80 = arith.index_cast %c7_i32 : i32 to index
      %c0_35 = arith.constant 0 : index
      %81 = vector.load %arg6[%c0_34, %80, %c0_35] : memref<1x8x1xf32, #tpu.memory_space<vmem>>, vector<1x1x1xf32>
      %82 = vector.shape_cast %81 : vector<1x1x1xf32> to vector<1x1xf32>
      %83 = arith.index_cast %69 : i32 to index
      %c0_36 = arith.constant 0 : index
      %84 = vector.load %arg13[%83, %c0_36] : memref<1024x1xf32, #tpu.memory_space<vmem>>, vector<1x1xf32>
      tpu.vector_store %arg13[%83, %c0_36], %82 {strides = array<i32>} : memref<1024x1xf32, #tpu.memory_space<vmem>>, vector<1x1xf32>,
      %85 = arith.mulf %72, %72 : vector<1x32xf32>
      %cst_37 = arith.constant dense<0.000000e+00> : vector<1xf32>
      %86 = vector.multi_reduction <add>, %85, %cst_37 [1] : vector<1x32xf32> to vector<1xf32>
      %87 = vector.shape_cast %86 : vector<1xf32> to vector<1x1xf32>
      %88 = math.sqrt %87 : vector<1x1xf32>
      %89 = arith.index_cast %69 : i32 to index
      %c0_38 = arith.constant 0 : index
      %90 = vector.load %arg15[%89, %c0_38] : memref<1024x1xf32, #tpu.memory_space<vmem>>, vector<1x1xf32>
      tpu.vector_store %arg15[%89, %c0_38], %88 {strides = array<i32>} : memref<1024x1xf32, #tpu.memory_space<vmem>>, vector<1x1xf32>,
    } else {
    }
    %c8_i32 = arith.constant 8 : i32
    %c0 = arith.constant 0 : index
    %c0_10 = arith.constant 0 : index
    %c0_11 = arith.constant 0 : index
    %33 = vector.load %arg7[%c0, %c0_10, %c0_11] : memref<1x32x1xf32, #tpu.memory_space<vmem>>, vector<1x32x1xf32>
    %34 = vector.shape_cast %33 : vector<1x32x1xf32> to vector<32x1xf32>
    %35 = arith.mulf %34, %34 : vector<32x1xf32>
    %36 = vector.shape_cast %35 : vector<32x1xf32> to vector<1x32x1xf32>
    %cst = arith.constant dense<0.000000e+00> : vector<1xf32>
    %37 = vector.multi_reduction <add>, %36, %cst [1, 2] : vector<1x32x1xf32> to vector<1xf32>
    %38 = vector.shape_cast %37 : vector<1xf32> to vector<1x1x1xf32>
    %39 = vector.extract %38[0, 0, 0] : f32 from vector<1x1x1xf32>
    %40 = math.sqrt %39 : f32
    %c0_12 = arith.constant 0 : index
    %c0_13 = arith.constant 0 : index
    %41 = vector.load %arg11[%c0_12, %c0_13] : memref<1024x32xf32, #tpu.memory_space<vmem>>, vector<1024x32xf32>
    %cst_14 = arith.constant dense<0.000000e+00> : vector<1024x1xf32>
    %42 = tpu.matmul %41, %34, %cst_14 {dimension_numbers = #tpu.dot_dimension_numbers<[1], [0], [0], [1], [0, 0, 1, 1], [], []>} : vector<1024x32xf32>, vector<32x1xf32>, vector<1024x1xf32> -> vector<1024x1xf32>
    %c0_15 = arith.constant 0 : index
    %c0_16 = arith.constant 0 : index
    %43 = vector.load %arg15[%c0_15, %c0_16] : memref<1024x1xf32, #tpu.memory_space<vmem>>, vector<1024x1xf32>
    %cst_17 = arith.constant 9.99999993E-9 : f32
    %44 = vector.broadcast %cst_17 : f32 to vector<1024x1xf32>
    %45 = arith.maximumf %43, %44 : vector<1024x1xf32>
    %cst_18 = arith.constant 9.99999993E-9 : f32
    %46 = arith.maximumf %40, %cst_18 : f32
    %47 = vector.broadcast %46 : f32 to vector<1024x1xf32>
    %48 = arith.mulf %45, %47 : vector<1024x1xf32>
    %49 = tpu.reciprocal %48 {approx = true} : vector<1024x1xf32> -> vector<1024x1xf32>
    %50 = arith.mulf %42, %49 : vector<1024x1xf32>
    %51 = tpu.iota {dimensions = array<i32: 0>} : vector<1024x1xi32>
    %52 = vector.broadcast %8 : i32 to vector<1024x1xi32>
    %53 = arith.cmpi slt, %51, %52 : vector<1024x1xi32>
    %cst_19 = arith.constant -1.000000e+30 : f32
    %54 = vector.broadcast %cst_19 : f32 to vector<1024x1xf32>
    %55 = arith.select %53, %50, %54 : vector<1024x1xi1>, vector<1024x1xf32>
    %c0_20 = arith.constant 0 : index
    %c0_21 = arith.constant 0 : index
    %c0_22 = arith.constant 0 : index
    %56 = vector.load %arg14[%c0_20, %c0_21, %c0_22] : memref<1x1024x1xf32, #tpu.memory_space<vmem>>, vector<1x1024x1xf32>
    %57 = vector.shape_cast %56 : vector<1x1024x1xf32> to vector<1024x1xf32>
    %58 = vector.shape_cast %55 : vector<1024x1xf32> to vector<1x1024x1xf32>
    tpu.vector_store %arg14[%c0_20, %c0_21, %c0_22], %58 {strides = array<i32>} : memref<1x1024x1xf32, #tpu.memory_space<vmem>>, vector<1x1024x1xf32>,
    return
  }
  func.func @transform_0(%arg0: i32, %arg1: memref<2xi32, #tpu.memory_space<smem>>, %arg2: memref<2xi32, #tpu.memory_space<smem>>, %arg3: memref<2xi32, #tpu.memory_space<smem>>) -> (i32, i32, i32) {
    %c0_i32 = arith.constant 0 : i32
    %c0_i32_0 = arith.constant 0 : i32
    %c0_i32_1 = arith.constant 0 : i32
    return %arg0, %c0_i32, %c0_i32_0 : i32, i32, i32
  }
  func.func @transform_1(%arg0: i32, %arg1: memref<2xi32, #tpu.memory_space<smem>>, %arg2: memref<2xi32, #tpu.memory_space<smem>>, %arg3: memref<2xi32, #tpu.memory_space<smem>>) -> (i32, i32, i32) {
    %c0_i32 = arith.constant 0 : i32
    %c0_i32_0 = arith.constant 0 : i32
    %c0_i32_1 = arith.constant 0 : i32
    return %arg0, %c0_i32, %c0_i32_0 : i32, i32, i32
  }
  func.func @transform_2(%arg0: i32, %arg1: memref<2xi32, #tpu.memory_space<smem>>, %arg2: memref<2xi32, #tpu.memory_space<smem>>, %arg3: memref<2xi32, #tpu.memory_space<smem>>) -> (i32, i32, i32) {
    %c0_i32 = arith.constant 0 : i32
    %c0_i32_0 = arith.constant 0 : i32
    %c0_i32_1 = arith.constant 0 : i32
    return %arg0, %c0_i32, %c0_i32_0 : i32, i32, i32
  }
  func.func @transform_3(%arg0: i32, %arg1: memref<2xi32, #tpu.memory_space<smem>>, %arg2: memref<2xi32, #tpu.memory_space<smem>>, %arg3: memref<2xi32, #tpu.memory_space<smem>>) -> (i32, i32, i32) {
    %c0_i32 = arith.constant 0 : i32
    %c0_i32_0 = arith.constant 0 : i32
    %c0_i32_1 = arith.constant 0 : i32
    return %arg0, %c0_i32, %c0_i32_0 : i32, i32, i32
  }
  func.func @transform_4(%arg0: i32, %arg1: memref<2xi32, #tpu.memory_space<smem>>, %arg2: memref<2xi32, #tpu.memory_space<smem>>, %arg3: memref<2xi32, #tpu.memory_space<smem>>) -> (i32, i32) {
    %c0_i32 = arith.constant 0 : i32
    %c0_i32_0 = arith.constant 0 : i32
    %c0_i32_1 = arith.constant 0 : i32
    return %c0_i32, %c0_i32_0 : i32, i32
  }
  func.func @transform_5(%arg0: i32, %arg1: memref<2xi32, #tpu.memory_space<smem>>, %arg2: memref<2xi32, #tpu.memory_space<smem>>, %arg3: memref<2xi32, #tpu.memory_space<smem>>) -> (i32, i32) {
    %c0_i32 = arith.constant 0 : i32
    %c0_i32_0 = arith.constant 0 : i32
    %c0_i32_1 = arith.constant 0 : i32
    return %c0_i32, %c0_i32_0 : i32, i32
  }
  func.func @transform_6(%arg0: i32, %arg1: memref<2xi32, #tpu.memory_space<smem>>, %arg2: memref<2xi32, #tpu.memory_space<smem>>, %arg3: memref<2xi32, #tpu.memory_space<smem>>) -> (i32, i32) {
    %c0_i32 = arith.constant 0 : i32
    %c0_i32_0 = arith.constant 0 : i32
    %c0_i32_1 = arith.constant 0 : i32
    return %c0_i32, %c0_i32_0 : i32, i32
  }
  func.func @transform_7(%arg0: i32, %arg1: memref<2xi32, #tpu.memory_space<smem>>, %arg2: memref<2xi32, #tpu.memory_space<smem>>, %arg3: memref<2xi32, #tpu.memory_space<smem>>) -> (i32, i32) {
    %c0_i32 = arith.constant 0 : i32
    %c0_i32_0 = arith.constant 0 : i32
    %c0_i32_1 = arith.constant 0 : i32
    return %c0_i32, %c0_i32_0 : i32, i32
  }
  func.func @transform_8(%arg0: i32, %arg1: memref<2xi32, #tpu.memory_space<smem>>, %arg2: memref<2xi32, #tpu.memory_space<smem>>, %arg3: memref<2xi32, #tpu.memory_space<smem>>) -> (i32, i32) {
    %c0_i32 = arith.constant 0 : i32
    %c0_i32_0 = arith.constant 0 : i32
    %c0_i32_1 = arith.constant 0 : i32
    return %c0_i32, %c0_i32_0 : i32, i32
  }
  func.func @transform_9(%arg0: i32, %arg1: memref<2xi32, #tpu.memory_space<smem>>, %arg2: memref<2xi32, #tpu.memory_space<smem>>, %arg3: memref<2xi32, #tpu.memory_space<smem>>) -> (i32, i32) {
    %c0_i32 = arith.constant 0 : i32
    %c0_i32_0 = arith.constant 0 : i32
    %c0_i32_1 = arith.constant 0 : i32
    return %c0_i32, %c0_i32_0 : i32, i32
  }
  func.func @transform_10(%arg0: i32, %arg1: memref<2xi32, #tpu.memory_space<smem>>, %arg2: memref<2xi32, #tpu.memory_space<smem>>, %arg3: memref<2xi32, #tpu.memory_space<smem>>) -> (i32, i32, i32) {
    %c0_i32 = arith.constant 0 : i32
    %c0_i32_0 = arith.constant 0 : i32
    %c0_i32_1 = arith.constant 0 : i32
    return %arg0, %c0_i32, %c0_i32_0 : i32, i32, i32
  }
}

</mosaic_0001>

<llo_original>
// kernel: custom-call.7
$region0: #{custom-call.7}
  %s0 = inlined_call_operand.vmem [shape: f32[2], index: 0, kind: output, shape index: {}]

// kernel: core.3
$region0: #{core.3}
  #allocation0 [shape = 'u32[]', space=smem, size = 0x4, offset = 0x4, fixed_abs, tag = 'smem constant byte address 0x4 - core index']
  #allocation1 [shape = 'u32[144,128]{1,0:T(1,128)}', space=vmem, size = 0x12000, scoped, tag = 'internal scratch']
  %s0 = inlined_call_operand.vmem [shape: f32[2,8,32], index: 0, kind: input, shape index: {}]
  %s1 = inlined_call_operand.vmem [shape: f32[2,8,1], index: 1, kind: output, shape index: {}]
  %s2 = sld [smem:[#allocation0]]
  $region37: #{core.3} parent=0
    _
  %s4 = ssub.s32 1, %s2
  %s5 = scalar_select 0, %s4, %s2
  loop: start=0, step=1, limit=4
  $region2: #{core.3} parent=0 // loop_pre_header
    _
  $region3: #{core.3} parent=0 // loop_header
    %s7 = sphi 0, %s11
    %p8 = scmp.ge.s32.totalorder %s7, 4
    %s17 = sphi 0, %s19
    %s20 = sphi 0, %s17
    %s21 = sphi 0, %s20
    %s37 = sphi 0, %s21
    %s43 = sphi 0, %s45
    %s46 = sphi 0, %s43
    %s47 = sphi 0, %s46
    %s63 = sphi 0, %s47
  $region4: #{core.3} parent=0 // loop_header_branch
    %10 = sbr.rel (%p8) target = $region8
  $region5: #{core.3} parent=0 // loop_body
    %s12 = ssub.s32 %s7, 1
    %s13 = ssub.s32 %s7, 2
    %s14 = sadd.s32 %s7, 1
    %s15 = ssub.s32 %s7, %s14
    %p16 = scmp.eq.s32.totalorder %s15, 0
    %s18 = sadd.s32 %s17, 1
    %s19 = scalar_select %p16, %s17, %s18
    %p22 = pneg %p16
    %p23 = scmp.eq.s32.totalorder %s7, 1
    %p24 = por %p22, %p23
    %p25 = scmp.ne.s32.totalorder %s17, %s20
    %p26 = scmp.eq.s32.totalorder %s7, 0
    %p27 = por %p25, %p26
    %p28 = scmp.ne.s32.totalorder %s17, %s20
    %p29 = scmp.eq.s32.totalorder %s12, 1
    %p30 = por %p28, %p29
    %p31 = scmp.ne.s32.totalorder %s20, %s21
    %p32 = scmp.eq.s32.totalorder %s12, 0
    %p33 = por %p31, %p32
    %p34 = scmp.ne.s32.totalorder %s20, %s21
    %p35 = scmp.eq.s32.totalorder %s13, 1
    %p36 = por %p34, %p35
    %p38 = scmp.ne.s32.totalorder %s21, %s37
    %p39 = scmp.eq.s32.totalorder %s13, 0
    %p40 = por %p38, %p39
    %s41 = ssub.s32 %s7, %s14
    %p42 = scmp.eq.s32.totalorder %s41, 0
    %s44 = sadd.s32 %s43, 1
    %s45 = scalar_select %p42, %s43, %s44
    %p48 = pneg %p42
    %p49 = scmp.eq.s32.totalorder %s7, 1
    %p50 = por %p48, %p49
    %p51 = scmp.ne.s32.totalorder %s43, %s46
    %p52 = scmp.eq.s32.totalorder %s7, 0
    %p53 = por %p51, %p52
    %p54 = scmp.ne.s32.totalorder %s43, %s46
    %p55 = scmp.eq.s32.totalorder %s12, 1
    %p56 = por %p54, %p55
    %p57 = scmp.ne.s32.totalorder %s46, %s47
    %p58 = scmp.eq.s32.totalorder %s12, 0
    %p59 = por %p57, %p58
    %p60 = scmp.ne.s32.totalorder %s46, %s47
    %p61 = scmp.eq.s32.totalorder %s13, 1
    %p62 = por %p60, %p61
    %p64 = scmp.ne.s32.totalorder %s47, %s63
    %p65 = scmp.eq.s32.totalorder %s13, 0
    %p66 = por %p64, %p65
    %p67 = scmp.le.s32.totalorder 1, %s7
    %p68 = scmp.lt.s32.totalorder %s7, 3
    %p69 = pnand %p67, %p68
    %p70 = pneg %p69
    // Predicated region
    $region9: #{core.3} parent=5 // pred_check
      _
    $region10: #{core.3} parent=5 // pred_check_branch
      %72 = sbr.rel (%p69) target = $region12
    $region11: #{core.3} parent=5 // pred_region
      %s73 = ssub.s32 %s7, 1
    $region12: #{core.3} parent=5 // pred_fallthru
      _
    %p74 = scmp.lt.s32.totalorder %s7, 2
    // Predicated region
    $region13: #{core.3} parent=5 // pred_check
      %p75 = pneg %p74
    $region14: #{core.3} parent=5 // pred_check_branch
      %77 = sbr.rel (%p75) target = $region16
    $region15: #{core.3} parent=5 // pred_region
      // Predicated region
      $region17: #{core.3} parent=15 // pred_check
        %p78 = pneg %p27
      $region18: #{core.3} parent=15 // pred_check_branch
        %80 = sbr.rel (%p78) target = $region20
      $region19: #{core.3} parent=15 // pred_region
        %p81 = scmp.lt.s32.totalorder %s7, 1
        %s82 = scalar_select %p81, %s7, 1
        %s83 = smul.addr %s82, 8
        %s84 = scalar_lea.vmem %s0, %s83
      $region20: #{core.3} parent=15 // pred_fallthru
        _
    $region16: #{core.3} parent=5 // pred_fallthru
      _
    %p85 = scmp.le.s32.totalorder 1, %s7
    %p86 = scmp.lt.s32.totalorder %s7, 3
    %p87 = pnand %p85, %p86
    %p88 = pneg %p87
    // Predicated region
    $region21: #{core.3} parent=5 // pred_check
      _
    $region22: #{core.3} parent=5 // pred_check_branch
      %90 = sbr.rel (%p87) target = $region24
    $region23: #{core.3} parent=5 // pred_region
      %s91 = ssub.s32 %s7, 1
      %p92 = scmp.lt.s32.totalorder %s12, 1
      %s93 = scalar_select %p92, %s12, 1
      %s94 = smul.addr %s93, 8
      %s95 = scalar_lea.vmem %s0, %s94
      %p96 = pneg %p33
      %p97 = pneg %p30
      %p98 = pneg %p59
      %p99 = pneg %p56
      %p100 = scmp.lt.s32.totalorder %s12, 1
      %s101 = scalar_select %p100, %s12, 1
      %s102 = smul.addr %s101, 8
      %s103 = scalar_lea.vmem %s1, %s102
      %p104 = scmp.lt.s32.totalorder %s12, 1
      %s105 = scalar_select %p104, %s12, 1
      %s106 = smul.addr %s105, 8
      %s107 = scalar_lea.vmem %s0, %s106
      %p108 = scmp.lt.s32.totalorder %s12, 1
      %s109 = scalar_select %p108, %s12, 1
      %s110 = smul.addr %s109, 8
      %s111 = scalar_lea.vmem %s1, %s110
      %v112 = vld [vmem:[%s107] sm:$0xff]
      %v113 = vrot.slane %v112, 7
      %v114 = vlaneseq
      %v115 = vshrl.u32 %v114, 7
      %vm116 = vcmp.gt.s32.totalorder %v115, 0
      %v117 = vsub.f32 %v112, %v113
      %v118 = vsel %vm116, %v117, 0.0
      %v119 = vmul.f32 %v118, %v118
      %vm120 = vcmask 261120
      %v121 = vsel %vm120, %v119, 0.0
      %122 = vadd.xlane.f32.xlu0 %v121
      %v123 = vpop.xlane.xlu0 %122
      %v124 = vrsqrt.pop %v123
      %v125 = vmul.f32 %v123, %v124
      %vm126 = vcmp.eq.f32.partialorder %v123, inf
      %v127 = vsel %vm126, %v123, %v125
      %vm128 = vcmp.eq.f32.partialorder %v123, 0.0
      %v129 = vand.u32 %v123, 2147483648
      %v130 = vsel %vm128, %v129, %v127
      %vm131 = vcmask 7168
      %132 = vst.msk [vmem:[%s111] sm:$0xff] %vm131, %v130
      %p133 = scmp.lt.s32.totalorder %s12, 1
      %s134 = scalar_select %p133, %s12, 1
      %s135 = smul.addr %s134, 8
      %s136 = scalar_lea.vmem %s1, %s135
      // Predicated region
      $region25: #{core.3} parent=23 // pred_check
        %p137 = pneg %p56
      $region26: #{core.3} parent=23 // pred_check_branch
        %139 = sbr.rel (%p137) target = $region28
      $region27: #{core.3} parent=23 // pred_region
        _
      $region28: #{core.3} parent=23 // pred_fallthru
        _
    $region24: #{core.3} parent=5 // pred_fallthru
      _
    %p140 = scmp.le.s32.totalorder 2, %s7
    // Predicated region
    $region29: #{core.3} parent=5 // pred_check
      %p141 = pneg %p140
    $region30: #{core.3} parent=5 // pred_check_branch
      %143 = sbr.rel (%p141) target = $region32
    $region31: #{core.3} parent=5 // pred_region
      %s144 = ssub.s32 %s7, 2
      // Predicated region
      $region33: #{core.3} parent=31 // pred_check
        %p145 = pneg %p62
      $region34: #{core.3} parent=31 // pred_check_branch
        %147 = sbr.rel (%p145) target = $region36
      $region35: #{core.3} parent=31 // pred_region
        %p148 = scmp.lt.s32.totalorder %s13, 1
        %s149 = scalar_select %p148, %s13, 1
        %s150 = smul.addr %s149, 8
        %s151 = scalar_lea.vmem %s1, %s150
      $region36: #{core.3} parent=31 // pred_fallthru
        _
    $region32: #{core.3} parent=5 // pred_fallthru
      _
  $region6: #{core.3} parent=0 // loop_footer
    %s11 = sadd.s32 1, %s7
  $region7: #{core.3} parent=0 // loop_footer_branch
    %6 = sbr.rel target = $region3
  $region8: #{core.3} parent=0 // loop_exit
    _

// kernel: custom-call
$region0: #{custom-call}
  #allocation0 [shape = 'u32[8,128]{1,0}', space=vmem, size = 0x1000, scoped, tag = 'scratch']
  #allocation1 [shape = 'u32[8,128]{1,0}', space=vmem, size = 0x1000, scoped, tag = 'scratch']
  #allocation2 [shape = 'u32[8,128]{1,0}', space=vmem, size = 0x1000, scoped, tag = 'scratch']
  #allocation3 [shape = 'u32[8,128]{1,0}', space=vmem, size = 0x1000, scoped, tag = 'scratch']
  #allocation4 [shape = 'u32[8,128]{1,0}', space=vmem, size = 0x1000, scoped, tag = 'scratch']
  #allocation5 [shape = 'u32[8,128]{1,0}', space=vmem, size = 0x1000, scoped, tag = 'scratch']
  #allocation6 [shape = 'u32[8,128]{1,0}', space=vmem, size = 0x1000, scoped, tag = 'scratch']
  %s0 = inlined_call_operand.vmem [shape: f32[2,1024], index: 0, kind: input, shape index: {}]
  %s1 = inlined_call_operand.hbm [shape: f32[2,10], index: 1, kind: output, shape index: {0}]
  %s2 = inlined_call_operand.vmem [shape: s32[2,10], index: 2, kind: output, shape index: {1}]
  %3 = xla_tuple %s1, %s2
  %4 = xla_tuple 2147483648, 2147483647
  $region1: #{custom-call} parent=0
    #allocation7 [shape = 'u8[4096]{0}', space=vmem, size = 0x1000, scoped, tag = 'operand span for operand 1']
    #allocation8 [shape = 'u8[1024]{0}', space=vmem, size = 0x400, scoped, tag = 'packed  for operand 1']
    #allocation9 [shape = 's32[1]{0}', space=sflag, size = 0x4, scoped, tag = 'scoped memory for custom-call']
    #allocation10 [shape = 'u8[4096]{0}', space=vmem, size = 0x1000, scoped, tag = 'operand span for operand 2']
    #allocation11 [shape = 'u8[1024]{0}', space=vmem, size = 0x400, scoped, tag = 'packed  for operand 2']
    #allocation12 [shape = 'f32[16,2]{1,0:T(8,128)}', space=vmem, size = 0x2000, scoped, tag = 'scoped memory for custom-call']
    #allocation13 [shape = 'f32[16,2]{1,0:T(8,128)}', space=vmem, size = 0x2000, scoped, tag = 'scoped memory for custom-call']
    #allocation14 [shape = 's32[16,2]{1,0:T(8,128)}', space=vmem, size = 0x2000, scoped, tag = 'scoped memory for custom-call']
    #allocation15 [shape = 's32[16,2]{1,0:T(8,128)}', space=vmem, size = 0x2000, scoped, tag = 'scoped memory for custom-call']
    %5 = vsyncpa [#allocation9], 0
    %6 = xla_tuple [#allocation7], [#allocation10]
    %7 = vst [vmem:[#allocation12] sm:$0xff] 2147483648
    %s8 = scalar_lea.vmem [#allocation12], 8
    %9 = vst [vmem:[%s8] sm:$0xff] 2147483648
    %10 = vst [vmem:[#allocation14] sm:$0xff] 2147483647
    %s11 = scalar_lea.vmem [#allocation14], 8
    %12 = vst [vmem:[%s11] sm:$0xff] 2147483647
    %13 = xla_tuple [#allocation12], [#allocation14]
    %14 = xla_tuple [#allocation13], [#allocation15]
    $region2: #{custom-call} parent=1
      #allocation16 [shape = 'u8[8192]{0}', space=vmem, size = 0x2000, scoped, tag = 'operand span for operand 0']
      #allocation17 [shape = 's32[2048]{0}', space=vmem, size = 0x2000, scoped, tag = 'scoped memory for custom-call']
      // Predicated region
      $region3: #{custom-call} parent=2 // pred_check
        _
      $region4: #{custom-call} parent=2 // pred_check_branch
        %16 = sbr.rel (0) target = $region6
      $region5: #{custom-call} parent=2 // pred_region
        // Predicated region
        $region7: #{custom-call} parent=5 // pred_check
          _
        $region8: #{custom-call} parent=5 // pred_check_branch
          %18 = sbr.rel (0) target = $region10
        $region9: #{custom-call} parent=5 // pred_region
          // Predicated region
          $region11: #{custom-call} parent=9 // pred_check
            _
          $region12: #{custom-call} parent=9 // pred_check_branch
            %20 = sbr.rel (0) target = $region14
          $region13: #{custom-call} parent=9 // pred_region
            loop: start=0, step=1, limit=1
            $region15: #{custom-call} parent=13 // loop_pre_header
              _
            $region16: #{custom-call} parent=13 // loop_header
              %s22 = sphi 0, %s26
              %p23 = scmp.ge.s32.totalorder %s22, 1
              %s27 = sphi %s0, %s0
              %s28 = sphi [#allocation16], [#allocation16]
            $region17: #{custom-call} parent=13 // loop_header_branch
              %25 = sbr.rel (%p23) target = $region21
            $region18: #{custom-call} parent=13 // loop_body
              %v29 = vld [vmem:[%s27] sm:$0xff]
              %30 = vst [vmem:[%s28] sm:$0xff] %v29
              %v31 = vld [vmem:[%s27 + $0x8] sm:$0xff]
              %32 = vst [vmem:[%s28 + $0x8] sm:$0xff] %v31
            $region19: #{custom-call} parent=13 // loop_footer
              %s26 = sadd.s32 1, %s22
            $region20: #{custom-call} parent=13 // loop_footer_branch
              %21 = sbr.rel target = $region16
            $region21: #{custom-call} parent=13 // loop_exit
              _
          $region14: #{custom-call} parent=9 // pred_fallthru
            _
          // Predicated region
          $region22: #{custom-call} parent=9 // pred_check
            _
          $region23: #{custom-call} parent=9 // pred_check_branch
            %34 = sbr.rel target = $region25
          $region24: #{custom-call} parent=9 // pred_region
            _
          $region25: #{custom-call} parent=9 // pred_fallthru
            _
        $region10: #{custom-call} parent=5 // pred_fallthru
          _
        %35 = vnop
      $region6: #{custom-call} parent=2 // pred_fallthru
        _
      // Predicated region
      $region26: #{custom-call} parent=2 // pred_check
        _
      $region27: #{custom-call} parent=2 // pred_check_branch
        %37 = sbr.rel (0) target = $region29
      $region28: #{custom-call} parent=2 // pred_region
        _
      $region29: #{custom-call} parent=2 // pred_fallthru
        _
      %v38 = vlaneseq
      %v39 = vand.u32 %v38, 127
      %v40 = vlaneseq
      %v41 = vshrl.u32 %v40, 7
      %v42 = vshrl.u32 %v41, 1
      %v43 = vand.u32 %v41, 1
      %v44 = vmul.u32 %v42, 128
      %v45 = vadd.s32 %v39, %v44
      %v47 = vld [vmem:[#allocation16] sm:$0xff]
      %vm48 = vcmp.lt.s32.totalorder %v47, 0
      %v49 = vsub.s32 2147483647, %v47
      %v50 = vsel %vm48, %v49, %v47
      %vm52 = vcmp.lt.s32.totalorder %v45, 1024
      %v53 = vsel %vm52, %v50, 2147483648
      %54 = vst [vmem:[#allocation16] sm:$0xff] %v53
      %s55 = scalar_lea.vmem [#allocation16], 8
      %v56 = vld [vmem:[%s55] sm:$0xff]
      %vm57 = vcmp.lt.s32.totalorder %v56, 0
      %v58 = vsub.s32 2147483647, %v56
      %v59 = vsel %vm57, %v58, %v56
      %v60 = vadd.s32 %v45, 512
      %vm61 = vcmp.lt.s32.totalorder %v60, 1024
      %v62 = vsel %vm61, %v59, 2147483648
      %63 = vst [vmem:[%s55] sm:$0xff] %v62
      %v64 = vlaneseq
      %v65 = vand.u32 %v64, 127
      %v66 = vlaneseq
      %v67 = vshrl.u32 %v66, 7
      %v68 = vshrl.u32 %v67, 1
      %v69 = vand.u32 %v67, 1
      %v70 = vmul.u32 %v68, 128
      %v71 = vadd.s32 %v65, %v70
      %74 = vst [vmem:[#allocation17] sm:$0xff] %v71
      %v75 = vadd.s32 %v71, 512
      %s76 = scalar_lea.vmem [#allocation17], 8
      %77 = vst [vmem:[%s76] sm:$0xff] %v75
      %78 = xla_tuple [#allocation16], [#allocation17]
      %79 = vst [vmem:[#allocation13] sm:$0xff] 2147483648
      %s80 = scalar_lea.vmem [#allocation13], 8
      %81 = vst [vmem:[%s80] sm:$0xff] 2147483648
      %82 = vst [vmem:[#allocation15] sm:$0xff] 2147483647
      %s83 = scalar_lea.vmem [#allocation15], 8
      %84 = vst [vmem:[%s83] sm:$0xff] 2147483647
      %85 = xla_tuple [#allocation13], [#allocation15]
      loop: start=0, step=1, limit=10
      $region30: #{custom-call} parent=2 // loop_pre_header
        _
      $region31: #{custom-call} parent=2 // loop_header
        %s87 = sphi 0, %s91
        %p88 = scmp.ge.s32.totalorder %s87, 10
      $region32: #{custom-call} parent=2 // loop_header_branch
        %90 = sbr.rel (%p88) target = $region36
      $region33: #{custom-call} parent=2 // loop_body
        %v92 = vld [vmem:[#allocation16] sm:$0xff]
        %v93 = vld [vmem:[#allocation17] sm:$0xff]
        %94 = xla_tuple %v92, %v93
        %s95 = scalar_lea.vmem [#allocation16], 8
        %v96 = vld [vmem:[%s95] sm:$0xff]
        %s97 = scalar_lea.vmem [#allocation17], 8
        %v98 = vld [vmem:[%s97] sm:$0xff]
        %99 = xla_tuple %v96, %v98
        %vm100 = vcmp.gt.s32.totalorder %v96, %v92
        %vm101 = vcmp.eq.s32.totalorder %v96, %v92
        %vm102 = vcmp.lt.s32.totalorder %v98, %v93
        %vm103 = vmand %vm101, %vm102
        %vm104 = vmor %vm100, %vm103
        %v105 = vsel %vm104, %v96, %v92
        %v106 = vsel %vm104, %v98, %v93
        %107 = xla_tuple %v105, %v106
        %v108 = vrot.slane %v105, 2
        %v109 = vrot.slane %v106, 2
        %110 = xla_tuple %v108, %v109
        %vm111 = vcmp.gt.s32.totalorder %v108, %v105
        %vm112 = vcmp.eq.s32.totalorder %v108, %v105
        %vm113 = vcmp.lt.s32.totalorder %v109, %v106
        %vm114 = vmand %vm112, %vm113
        %vm115 = vmor %vm111, %vm114
        %v116 = vsel %vm115, %v108, %v105
        %v117 = vsel %vm115, %v109, %v106
        %118 = xla_tuple %v116, %v117
        %v119 = vrot.slane %v116, 2
        %v120 = vrot.slane %v117, 2
        %121 = xla_tuple %v119, %v120
        %vm122 = vcmp.gt.s32.totalorder %v119, %v116
        %vm123 = vcmp.eq.s32.totalorder %v119, %v116
        %vm124 = vcmp.lt.s32.totalorder %v120, %v117
        %vm125 = vmand %vm123, %vm124
        %vm126 = vmor %vm122, %vm125
        %v127 = vsel %vm126, %v119, %v116
        %v128 = vsel %vm126, %v120, %v117
        %129 = xla_tuple %v127, %v128
        %v130 = vrot.slane %v127, 2
        %v131 = vrot.slane %v128, 2
        %132 = xla_tuple %v130, %v131
        %vm133 = vcmp.gt.s32.totalorder %v130, %v127
        %vm134 = vcmp.eq.s32.totalorder %v130, %v127
        %vm135 = vcmp.lt.s32.totalorder %v131, %v128
        %vm136 = vmand %vm134, %vm135
        %vm137 = vmor %vm133, %vm136
        %v138 = vsel %vm137, %v130, %v127
        %v139 = vsel %vm137, %v131, %v128
        %140 = xla_tuple %v138, %v139
        %141 = vxpose.xlu0.b32.start [1/16] %v138, 128
        %142 = vxpose.xlu0.b32.cont [2/16] %v138, 128
        %143 = vxpose.xlu0.b32.cont [3/16] %v138, 128
        %144 = vxpose.xlu0.b32.cont [4/16] %v138, 128
        %145 = vxpose.xlu0.b32.cont [5/16] %v138, 128
        %146 = vxpose.xlu0.b32.cont [6/16] %v138, 128
        %147 = vxpose.xlu0.b32.cont [7/16] %v138, 128
        %148 = vxpose.xlu0.b32.cont [8/16] %v138, 128
        %149 = vxpose.xlu0.b32.cont [9/16] %v138, 128
        %150 = vxpose.xlu0.b32.cont [10/16] %v138, 128
        %151 = vxpose.xlu0.b32.cont [11/16] %v138, 128
        %152 = vxpose.xlu0.b32.cont [12/16] %v138, 128
        %153 = vxpose.xlu0.b32.cont [13/16] %v138, 128
        %154 = vxpose.xlu0.b32.cont [14/16] %v138, 128
        %155 = vxpose.xlu0.b32.cont [15/16] %v138, 128
        %156 = vxpose.xlu0.b32.end [16/16] %v138, 128
        %v157 = vpop.trf.xlu0
        %v158 = vpop.trf.xlu0
        %v159 = vpop.trf.xlu0
        %v160 = vpop.trf.xlu0
        %v161 = vpop.trf.xlu0
        %v162 = vpop.trf.xlu0
        %v163 = vpop.trf.xlu0
        %v164 = vpop.trf.xlu0
        %v165 = vpop.trf.xlu0
        %v166 = vpop.trf.xlu0
        %v167 = vpop.trf.xlu0
        %v168 = vpop.trf.xlu0
        %v169 = vpop.trf.xlu0
        %v170 = vpop.trf.xlu0
        %v171 = vpop.trf.xlu0
        %v172 = vpop.trf.xlu0
        %173 = vxpose.xlu0.b32.start [1/16] %v139, 128
        %174 = vxpose.xlu0.b32.cont [2/16] %v139, 128
        %175 = vxpose.xlu0.b32.cont [3/16] %v139, 128
        %176 = vxpose.xlu0.b32.cont [4/16] %v139, 128
        %177 = vxpose.xlu0.b32.cont [5/16] %v139, 128
        %178 = vxpose.xlu0.b32.cont [6/16] %v139, 128
        %179 = vxpose.xlu0.b32.cont [7/16] %v139, 128
        %180 = vxpose.xlu0.b32.cont [8/16] %v139, 128
        %181 = vxpose.xlu0.b32.cont [9/16] %v139, 128
        %182 = vxpose.xlu0.b32.cont [10/16] %v139, 128
        %183 = vxpose.xlu0.b32.cont [11/16] %v139, 128
        %184 = vxpose.xlu0.b32.cont [12/16] %v139, 128
        %185 = vxpose.xlu0.b32.cont [13/16] %v139, 128
        %186 = vxpose.xlu0.b32.cont [14/16] %v139, 128
        %187 = vxpose.xlu0.b32.cont [15/16] %v139, 128
        %188 = vxpose.xlu0.b32.end [16/16] %v139, 128
        %v189 = vpop.trf.xlu0
        %v190 = vpop.trf.xlu0
        %v191 = vpop.trf.xlu0
        %v192 = vpop.trf.xlu0
        %v193 = vpop.trf.xlu0
        %v194 = vpop.trf.xlu0
        %v195 = vpop.trf.xlu0
        %v196 = vpop.trf.xlu0
        %v197 = vpop.trf.xlu0
        %v198 = vpop.trf.xlu0
        %v199 = vpop.trf.xlu0
        %v200 = vpop.trf.xlu0
        %v201 = vpop.trf.xlu0
        %v202 = vpop.trf.xlu0
        %v203 = vpop.trf.xlu0
        %v204 = vpop.trf.xlu0
        %205 = xla_tuple %v157, %v189
        %206 = xla_tuple %v158, %v190
        %vm207 = vcmp.gt.s32.totalorder %v158, %v157
        %vm208 = vcmp.eq.s32.totalorder %v158, %v157
        %vm209 = vcmp.lt.s32.totalorder %v190, %v189
        %vm210 = vmand %vm208, %vm209
        %vm211 = vmor %vm207, %vm210
        %v212 = vsel %vm211, %v158, %v157
        %v213 = vsel %vm211, %v190, %v189
        %214 = xla_tuple %v212, %v213
        %215 = xla_tuple %v159, %v191
        %vm216 = vcmp.gt.s32.totalorder %v159, %v212
        %vm217 = vcmp.eq.s32.totalorder %v159, %v212
        %vm218 = vcmp.lt.s32.totalorder %v191, %v213
        %vm219 = vmand %vm217, %vm218
        %vm220 = vmor %vm216, %vm219
        %v221 = vsel %vm220, %v159, %v212
        %v222 = vsel %vm220, %v191, %v213
        %223 = xla_tuple %v221, %v222
        %224 = xla_tuple %v160, %v192
        %vm225 = vcmp.gt.s32.totalorder %v160, %v221
        %vm226 = vcmp.eq.s32.totalorder %v160, %v221
        %vm227 = vcmp.lt.s32.totalorder %v192, %v222
        %vm228 = vmand %vm226, %vm227
        %vm229 = vmor %vm225, %vm228
        %v230 = vsel %vm229, %v160, %v221
        %v231 = vsel %vm229, %v192, %v222
        %232 = xla_tuple %v230, %v231
        %233 = xla_tuple %v161, %v193
        %vm234 = vcmp.gt.s32.totalorder %v161, %v230
        %vm235 = vcmp.eq.s32.totalorder %v161, %v230
        %vm236 = vcmp.lt.s32.totalorder %v193, %v231
        %vm237 = vmand %vm235, %vm236
        %vm238 = vmor %vm234, %vm237
        %v239 = vsel %vm238, %v161, %v230
        %v240 = vsel %vm238, %v193, %v231
        %241 = xla_tuple %v239, %v240
        %242 = xla_tuple %v162, %v194
        %vm243 = vcmp.gt.s32.totalorder %v162, %v239
        %vm244 = vcmp.eq.s32.totalorder %v162, %v239
        %vm245 = vcmp.lt.s32.totalorder %v194, %v240
        %vm246 = vmand %vm244, %vm245
        %vm247 = vmor %vm243, %vm246
        %v248 = vsel %vm247, %v162, %v239
        %v249 = vsel %vm247, %v194, %v240
        %250 = xla_tuple %v248, %v249
        %251 = xla_tuple %v163, %v195
        %vm252 = vcmp.gt.s32.totalorder %v163, %v248
        %vm253 = vcmp.eq.s32.totalorder %v163, %v248
        %vm254 = vcmp.lt.s32.totalorder %v195, %v249
        %vm255 = vmand %vm253, %vm254
        %vm256 = vmor %vm252, %vm255
        %v257 = vsel %vm256, %v163, %v248
        %v258 = vsel %vm256, %v195, %v249
        %259 = xla_tuple %v257, %v258
        %260 = xla_tuple %v164, %v196
        %vm261 = vcmp.gt.s32.totalorder %v164, %v257
        %vm262 = vcmp.eq.s32.totalorder %v164, %v257
        %vm263 = vcmp.lt.s32.totalorder %v196, %v258
        %vm264 = vmand %vm262, %vm263
        %vm265 = vmor %vm261, %vm264
        %v266 = vsel %vm265, %v164, %v257
        %v267 = vsel %vm265, %v196, %v258
        %268 = xla_tuple %v266, %v267
        %269 = xla_tuple %v165, %v197
        %vm270 = vcmp.gt.s32.totalorder %v165, %v266
        %vm271 = vcmp.eq.s32.totalorder %v165, %v266
        %vm272 = vcmp.lt.s32.totalorder %v197, %v267
        %vm273 = vmand %vm271, %vm272
        %vm274 = vmor %vm270, %vm273
        %v275 = vsel %vm274, %v165, %v266
        %v276 = vsel %vm274, %v197, %v267
        %277 = xla_tuple %v275, %v276
        %278 = xla_tuple %v166, %v198
        %vm279 = vcmp.gt.s32.totalorder %v166, %v275
        %vm280 = vcmp.eq.s32.totalorder %v166, %v275
        %vm281 = vcmp.lt.s32.totalorder %v198, %v276
        %vm282 = vmand %vm280, %vm281
        %vm283 = vmor %vm279, %vm282
        %v284 = vsel %vm283, %v166, %v275
        %v285 = vsel %vm283, %v198, %v276
        %286 = xla_tuple %v284, %v285
        %287 = xla_tuple %v167, %v199
        %vm288 = vcmp.gt.s32.totalorder %v167, %v284
        %vm289 = vcmp.eq.s32.totalorder %v167, %v284
        %vm290 = vcmp.lt.s32.totalorder %v199, %v285
        %vm291 = vmand %vm289, %vm290
        %vm292 = vmor %vm288, %vm291
        %v293 = vsel %vm292, %v167, %v284
        %v294 = vsel %vm292, %v199, %v285
        %295 = xla_tuple %v293, %v294
        %296 = xla_tuple %v168, %v200
        %vm297 = vcmp.gt.s32.totalorder %v168, %v293
        %vm298 = vcmp.eq.s32.totalorder %v168, %v293
        %vm299 = vcmp.lt.s32.totalorder %v200, %v294
        %vm300 = vmand %vm298, %vm299
        %vm301 = vmor %vm297, %vm300
        %v302 = vsel %vm301, %v168, %v293
        %v303 = vsel %vm301, %v200, %v294
        %304 = xla_tuple %v302, %v303
        %305 = xla_tuple %v169, %v201
        %vm306 = vcmp.gt.s32.totalorder %v169, %v302
        %vm307 = vcmp.eq.s32.totalorder %v169, %v302
        %vm308 = vcmp.lt.s32.totalorder %v201, %v303
        %vm309 = vmand %vm307, %vm308
        %vm310 = vmor %vm306, %vm309
        %v311 = vsel %vm310, %v169, %v302
        %v312 = vsel %vm310, %v201, %v303
        %313 = xla_tuple %v311, %v312
        %314 = xla_tuple %v170, %v202
        %vm315 = vcmp.gt.s32.totalorder %v170, %v311
        %vm316 = vcmp.eq.s32.totalorder %v170, %v311
        %vm317 = vcmp.lt.s32.totalorder %v202, %v312
        %vm318 = vmand %vm316, %vm317
        %vm319 = vmor %vm315, %vm318
        %v320 = vsel %vm319, %v170, %v311
        %v321 = vsel %vm319, %v202, %v312
        %322 = xla_tuple %v320, %v321
        %323 = xla_tuple %v171, %v203
        %vm324 = vcmp.gt.s32.totalorder %v171, %v320
        %vm325 = vcmp.eq.s32.totalorder %v171, %v320
        %vm326 = vcmp.lt.s32.totalorder %v203, %v321
        %vm327 = vmand %vm325, %vm326
        %vm328 = vmor %vm324, %vm327
        %v329 = vsel %vm328, %v171, %v320
        %v330 = vsel %vm328, %v203, %v321
        %331 = xla_tuple %v329, %v330
        %332 = xla_tuple %v172, %v204
        %vm333 = vcmp.gt.s32.totalorder %v172, %v329
        %vm334 = vcmp.eq.s32.totalorder %v172, %v329
        %vm335 = vcmp.lt.s32.totalorder %v204, %v330
        %vm336 = vmand %vm334, %vm335
        %vm337 = vmor %vm333, %vm336
        %v338 = vsel %vm337, %v172, %v329
        %v339 = vsel %vm337, %v204, %v330
        %340 = xla_tuple %v338, %v339
        %v341 = vrot.slane %v338, 1
        %v342 = vrot.slane %v339, 1
        %343 = xla_tuple %v341, %v342
        %vm344 = vcmp.gt.s32.totalorder %v341, %v338
        %vm345 = vcmp.eq.s32.totalorder %v341, %v338
        %vm346 = vcmp.lt.s32.totalorder %v342, %v339
        %vm347 = vmand %vm345, %vm346
        %vm348 = vmor %vm344, %vm347
        %v349 = vsel %vm348, %v341, %v338
        %v350 = vsel %vm348, %v342, %v339
        %351 = xla_tuple %v349, %v350
        %v352 = vrot.slane %v349, 1
        %v353 = vrot.slane %v350, 1
        %354 = xla_tuple %v352, %v353
        %vm355 = vcmp.gt.s32.totalorder %v352, %v349
        %vm356 = vcmp.eq.s32.totalorder %v352, %v349
        %vm357 = vcmp.lt.s32.totalorder %v353, %v350
        %vm358 = vmand %vm356, %vm357
        %vm359 = vmor %vm355, %vm358
        %v360 = vsel %vm359, %v352, %v349
        %v361 = vsel %vm359, %v353, %v350
        %362 = xla_tuple %v360, %v361
        %v363 = vrot.slane %v360, 1
        %v364 = vrot.slane %v361, 1
        %365 = xla_tuple %v363, %v364
        %vm366 = vcmp.gt.s32.totalorder %v363, %v360
        %vm367 = vcmp.eq.s32.totalorder %v363, %v360
        %vm368 = vcmp.lt.s32.totalorder %v364, %v361
        %vm369 = vmand %vm367, %vm368
        %vm370 = vmor %vm366, %vm369
        %v371 = vsel %vm370, %v363, %v360
        %v372 = vsel %vm370, %v364, %v361
        %373 = xla_tuple %v371, %v372
        %v374 = vrot.slane %v371, 1
        %v375 = vrot.slane %v372, 1
        %376 = xla_tuple %v374, %v375
        %vm377 = vcmp.gt.s32.totalorder %v374, %v371
        %vm378 = vcmp.eq.s32.totalorder %v374, %v371
        %vm379 = vcmp.lt.s32.totalorder %v375, %v372
        %vm380 = vmand %vm378, %vm379
        %vm381 = vmor %vm377, %vm380
        %v382 = vsel %vm381, %v374, %v371
        %v383 = vsel %vm381, %v375, %v372
        %384 = xla_tuple %v382, %v383
        %v385 = vrot.slane %v382, 1
        %v386 = vrot.slane %v383, 1
        %387 = xla_tuple %v385, %v386
        %vm388 = vcmp.gt.s32.totalorder %v385, %v382
        %vm389 = vcmp.eq.s32.totalorder %v385, %v382
        %vm390 = vcmp.lt.s32.totalorder %v386, %v383
        %vm391 = vmand %vm389, %vm390
        %vm392 = vmor %vm388, %vm391
        %v393 = vsel %vm392, %v385, %v382
        %v394 = vsel %vm392, %v386, %v383
        %395 = xla_tuple %v393, %v394
        %v396 = vrot.slane %v393, 1
        %v397 = vrot.slane %v394, 1
        %398 = xla_tuple %v396, %v397
        %vm399 = vcmp.gt.s32.totalorder %v396, %v393
        %vm400 = vcmp.eq.s32.totalorder %v396, %v393
        %vm401 = vcmp.lt.s32.totalorder %v397, %v394
        %vm402 = vmand %vm400, %vm401
        %vm403 = vmor %vm399, %vm402
        %v404 = vsel %vm403, %v396, %v393
        %v405 = vsel %vm403, %v397, %v394
        %406 = xla_tuple %v404, %v405
        %v407 = vrot.slane %v404, 1
        %v408 = vrot.slane %v405, 1
        %409 = xla_tuple %v407, %v408
        %vm410 = vcmp.gt.s32.totalorder %v407, %v404
        %vm411 = vcmp.eq.s32.totalorder %v407, %v404
        %vm412 = vcmp.lt.s32.totalorder %v408, %v405
        %vm413 = vmand %vm411, %vm412
        %vm414 = vmor %vm410, %vm413
        %v415 = vsel %vm414, %v407, %v404
        %v416 = vsel %vm414, %v408, %v405
        %417 = xla_tuple %v415, %v416
        %s418 = scalar_lea.vmem [#allocation13], %s87
        %419 = vst [vmem:[%s418] sm:$0x1] %v415
        %s420 = scalar_lea.vmem [#allocation15], %s87
        %421 = vst [vmem:[%s420] sm:$0x1] %v416
        %422 = xla_tuple %419, %421
        %423 = vxpose.xlu0.b32.start [1/16] %v416, 128
        %424 = vxpose.xlu0.b32.cont [2/16] 0.0, 128
        %425 = vxpose.xlu0.b32.cont [3/16] 0.0, 128
        %426 = vxpose.xlu0.b32.cont [4/16] 0.0, 128
        %427 = vxpose.xlu0.b32.cont [5/16] 0.0, 128
        %428 = vxpose.xlu0.b32.cont [6/16] 0.0, 128
        %429 = vxpose.xlu0.b32.cont [7/16] 0.0, 128
        %430 = vxpose.xlu0.b32.cont [8/16] 0.0, 128
        %431 = vxpose.xlu0.b32.cont [9/16] 0.0, 128
        %432 = vxpose.xlu0.b32.cont [10/16] 0.0, 128
        %433 = vxpose.xlu0.b32.cont [11/16] 0.0, 128
        %434 = vxpose.xlu0.b32.cont [12/16] 0.0, 128
        %435 = vxpose.xlu0.b32.cont [13/16] 0.0, 128
        %436 = vxpose.xlu0.b32.cont [14/16] 0.0, 128
        %437 = vxpose.xlu0.b32.cont [15/16] 0.0, 128
        %438 = vxpose.xlu0.b32.end [16/16] 0.0, 128
        %v439 = vpop.trf.xlu0
        %v440 = vpop.trf.xlu0
        %v441 = vpop.trf.xlu0
        %v442 = vpop.trf.xlu0
        %v443 = vpop.trf.xlu0
        %v444 = vpop.trf.xlu0
        %v445 = vpop.trf.xlu0
        %v446 = vpop.trf.xlu0
        %v447 = vpop.trf.xlu0
        %v448 = vpop.trf.xlu0
        %v449 = vpop.trf.xlu0
        %v450 = vpop.trf.xlu0
        %v451 = vpop.trf.xlu0
        %v452 = vpop.trf.xlu0
        %v453 = vpop.trf.xlu0
        %v454 = vpop.trf.xlu0
        %s455 = vtos %v439
        %s456 = sshrl.u32 %s455, 9
        %p457 = scmp.lt.s32.totalorder %s455, 0
        %s458 = ssub.s32 0, %s455
        %s459 = scalar_select %p457, %s458, %s455
        %s460 = sand.u32 %s459, 511
        %s461 = ssub.s32 0, %s460
        %s462 = scalar_select %p457, %s461, %s460
        %s463 = sshrl.u32 %s462, 7
        %s464 = smul.u32 %s463, 256
        %s465 = sand.u32 %s462, 127
        %s466 = sadd.s32 %s464, %s465
        %v467 = vlaneseq
        %v468 = vstv %s466
        %vm470 = vcmp.eq.s32.totalorder %v467, %v468
        %s471 = smul.addr %s456, 8
        %s472 = scalar_lea.vmem [#allocation16], %s471
        %473 = vst.msk [vmem:[%s472] sm:$0xff] %vm470, 2147483648
        %s474 = smul.addr %s456, 8
        %s475 = scalar_lea.vmem [#allocation17], %s474
        %476 = vst.msk [vmem:[%s475] sm:$0xff] %vm470, 2147483647
        %477 = xla_tuple %473, %476
        %v478 = vrot.slane %v439, 1
        %s479 = vtos %v478
        %s480 = sshrl.u32 %s479, 9
        %p481 = scmp.lt.s32.totalorder %s479, 0
        %s482 = ssub.s32 0, %s479
        %s483 = scalar_select %p481, %s482, %s479
        %s484 = sand.u32 %s483, 511
        %s485 = ssub.s32 0, %s484
        %s486 = scalar_select %p481, %s485, %s484
        %s487 = sshrl.u32 %s486, 7
        %s488 = smul.u32 %s487, 256
        %s489 = sand.u32 %s486, 127
        %s490 = sadd.s32 %s488, %s489
        %v491 = vlaneseq
        %v492 = vstv %s490
        %v493 = vadd.s32 %v492, 128
        %vm494 = vcmp.eq.s32.totalorder %v491, %v493
        %s495 = smul.addr %s480, 8
        %s496 = scalar_lea.vmem [#allocation16], %s495
        %497 = vst.msk [vmem:[%s496] sm:$0xff] %vm494, 2147483648
        %s498 = smul.addr %s480, 8
        %s499 = scalar_lea.vmem [#allocation17], %s498
        %500 = vst.msk [vmem:[%s499] sm:$0xff] %vm494, 2147483647
        %501 = xla_tuple %497, %500
        %v502 = vrot.slane %v478, 1
      $region34: #{custom-call} parent=2 // loop_footer
        %s91 = sadd.s32 1, %s87
      $region35: #{custom-call} parent=2 // loop_footer_branch
        %86 = sbr.rel target = $region31
      $region36: #{custom-call} parent=2 // loop_exit
        _
      %s503 = scalar_lea.vmem [#allocation13], 8
      %s504 = scalar_lea.vmem [#allocation13], 7
      %v505 = vld [vmem:[%s504] ss:$-1 sm:$0xff]
      %s506 = scalar_lea.vmem %s503, 7 [#allocation13]
      %v507 = vld [vmem:[%s506] ss:$-1 sm:$0xff]
      %508 = vst [vmem:[#allocation13] sm:$0xff] %v507
      %509 = vst [vmem:[%s503] sm:$0xff] %v505
      %s510 = scalar_lea.vmem [#allocation15], 8
      %s511 = scalar_lea.vmem [#allocation15], 7
      %v512 = vld [vmem:[%s511] ss:$-1 sm:$0xff]
      %s513 = scalar_lea.vmem %s510, 7 [#allocation15]
      %v514 = vld [vmem:[%s513] ss:$-1 sm:$0xff]
      %515 = vst [vmem:[#allocation15] sm:$0xff] %v514
      %516 = vst [vmem:[%s510] sm:$0xff] %v512
      %517 = xla_tuple %509, %516
      %v518 = vld [vmem:[#allocation12] sm:$0xff]
      %v519 = vld [vmem:[#allocation14] sm:$0xff]
      %520 = xla_tuple %v518, %v519
      %v521 = vld [vmem:[#allocation13] sm:$0xff]
      %v522 = vld [vmem:[#allocation15] sm:$0xff]
      %523 = xla_tuple %v521, %v522
      %vm524 = vcmp.gt.s32.totalorder %v518, %v521
      %vm525 = vcmp.eq.s32.totalorder %v518, %v521
      %vm526 = vcmp.lt.s32.totalorder %v519, %v522
      %vm527 = vmand %vm525, %vm526
      %vm528 = vmor %vm524, %vm527
      %v529 = vsel %vm528, %v518, %v521
      %530 = vst [vmem:[#allocation12] sm:$0xff] %v529
      %v531 = vsel %vm528, %v521, %v518
      %532 = vst [vmem:[#allocation13] sm:$0xff] %v531
      %v533 = vsel %vm528, %v519, %v522
      %534 = vst [vmem:[#allocation14] sm:$0xff] %v533
      %v535 = vsel %vm528, %v522, %v519
      %536 = vst [vmem:[#allocation15] sm:$0xff] %v535
      %537 = xla_tuple %532, %536
      %s538 = scalar_lea.vmem [#allocation12], 8
      %v539 = vld [vmem:[%s538] sm:$0xff]
      %s540 = scalar_lea.vmem [#allocation14], 8
      %v541 = vld [vmem:[%s540] sm:$0xff]
      %542 = xla_tuple %v539, %v541
      %s543 = scalar_lea.vmem [#allocation13], 8
      %v544 = vld [vmem:[%s543] sm:$0xff]
      %s545 = scalar_lea.vmem [#allocation15], 8
      %v546 = vld [vmem:[%s545] sm:$0xff]
      %547 = xla_tuple %v544, %v546
      %vm548 = vcmp.gt.s32.totalorder %v539, %v544
      %vm549 = vcmp.eq.s32.totalorder %v539, %v544
      %vm550 = vcmp.lt.s32.totalorder %v541, %v546
      %vm551 = vmand %vm549, %vm550
      %vm552 = vmor %vm548, %vm551
      %s553 = scalar_lea.vmem [#allocation12], 8
      %v554 = vsel %vm552, %v539, %v544
      %555 = vst [vmem:[%s553] sm:$0xff] %v554
      %s556 = scalar_lea.vmem [#allocation13], 8
      %v557 = vsel %vm552, %v544, %v539
      %558 = vst [vmem:[%s556] sm:$0xff] %v557
      %s559 = scalar_lea.vmem [#allocation14], 8
      %v560 = vsel %vm552, %v541, %v546
      %561 = vst [vmem:[%s559] sm:$0xff] %v560
      %s562 = scalar_lea.vmem [#allocation15], 8
      %v563 = vsel %vm552, %v546, %v541
      %564 = vst [vmem:[%s562] sm:$0xff] %v563
      %565 = xla_tuple %558, %564
      %s566 = scalar_lea.vmem [#allocation12], 8
      %s567 = scalar_lea.vmem [#allocation14], 8
      %568 = xla_tuple %s566, %s567
      %v569 = vld [vmem:[#allocation12] sm:$0xff]
      %v570 = vld [vmem:[#allocation14] sm:$0xff]
      %571 = xla_tuple %v569, %v570
      %v572 = vld [vmem:[%s566] sm:$0xff]
      %v573 = vld [vmem:[%s567] sm:$0xff]
      %574 = xla_tuple %v572, %v573
      %vm575 = vcmp.gt.s32.totalorder %v569, %v572
      %vm576 = vcmp.eq.s32.totalorder %v569, %v572
      %vm577 = vcmp.lt.s32.totalorder %v570, %v573
      %vm578 = vmand %vm576, %vm577
      %vm579 = vmor %vm575, %vm578
      %v580 = vsel %vm579, %v569, %v572
      %581 = vst [vmem:[#allocation12] sm:$0xff] %v580
      %v582 = vsel %vm579, %v572, %v569
      %583 = vst [vmem:[%s566] sm:$0xff] %v582
      %v584 = vsel %vm579, %v570, %v573
      %585 = vst [vmem:[#allocation14] sm:$0xff] %v584
      %v586 = vsel %vm579, %v573, %v570
      %587 = vst [vmem:[%s567] sm:$0xff] %v586
      %588 = xla_tuple %583, %587
      %589 = xla_tuple [#allocation12], [#allocation14]
      %v590 = vld [vmem:[#allocation12] sm:$0xff]
      %v591 = vld [vmem:[#allocation14] sm:$0xff]
      %592 = xla_tuple %v590, %v591
      %v594 = vunpack.c.l.s4 839939668
      %v595 = vunpack.c.0.s8 %v594
      %v596 = vlaneseq
      %v597 = vshrl.u32 %v596, 7
      %v598 = vsub.s32 %v595, %v597
      %v599 = vrot.slane %v590, %v598
      %v601 = vunpack.c.l.s4 839939668
      %v602 = vunpack.c.0.s8 %v601
      %v603 = vlaneseq
      %v604 = vshrl.u32 %v603, 7
      %v605 = vsub.s32 %v602, %v604
      %v606 = vrot.slane %v591, %v605
      %607 = xla_tuple %v599, %v606
      %vm608 = vcmp.gt.s32.totalorder %v590, %v599
      %vm609 = vcmp.eq.s32.totalorder %v590, %v599
      %vm610 = vcmp.lt.s32.totalorder %v591, %v606
      %vm611 = vmand %vm609, %vm610
      %vm612 = vmor %vm608, %vm611
      %v613 = vlaneseq
      %v614 = vshrl.u32 %v613, 7
      %v615 = vand.u32 %v614, 4
      %vm616 = vcmp.ne.s32.totalorder %v615, 0
      %vm617 = vmxor %vm612, %vm616
      %v618 = vsel %vm617, %v590, %v599
      %v619 = vsel %vm617, %v591, %v606
      %620 = xla_tuple %v618, %v619
      %v622 = vunpack.c.l.s4 1417023538
      %v623 = vunpack.c.0.s8 %v622
      %v624 = vlaneseq
      %v625 = vshrl.u32 %v624, 7
      %v626 = vsub.s32 %v623, %v625
      %v627 = vrot.slane %v618, %v626
      %v629 = vunpack.c.l.s4 1417023538
      %v630 = vunpack.c.0.s8 %v629
      %v631 = vlaneseq
      %v632 = vshrl.u32 %v631, 7
      %v633 = vsub.s32 %v630, %v632
      %v634 = vrot.slane %v619, %v633
      %635 = xla_tuple %v627, %v634
      %vm636 = vcmp.gt.s32.totalorder %v618, %v627
      %vm637 = vcmp.eq.s32.totalorder %v618, %v627
      %vm638 = vcmp.lt.s32.totalorder %v619, %v634
      %vm639 = vmand %vm637, %vm638
      %vm640 = vmor %vm636, %vm639
      %v641 = vlaneseq
      %v642 = vshrl.u32 %v641, 7
      %v643 = vand.u32 %v642, 2
      %vm644 = vcmp.ne.s32.totalorder %v643, 0
      %vm645 = vmxor %vm640, %vm644
      %v646 = vsel %vm645, %v618, %v627
      %v647 = vsel %vm645, %v619, %v634
      %648 = xla_tuple %v646, %v647
      %v650 = vunpack.c.l.s4 1732584193
      %v651 = vunpack.c.0.s8 %v650
      %v652 = vlaneseq
      %v653 = vshrl.u32 %v652, 7
      %v654 = vsub.s32 %v651, %v653
      %v655 = vrot.slane %v646, %v654
      %v657 = vunpack.c.l.s4 1732584193
      %v658 = vunpack.c.0.s8 %v657
      %v659 = vlaneseq
      %v660 = vshrl.u32 %v659, 7
      %v661 = vsub.s32 %v658, %v660
      %v662 = vrot.slane %v647, %v661
      %663 = xla_tuple %v655, %v662
      %vm664 = vcmp.gt.s32.totalorder %v646, %v655
      %vm665 = vcmp.eq.s32.totalorder %v646, %v655
      %vm666 = vcmp.lt.s32.totalorder %v647, %v662
      %vm667 = vmand %vm665, %vm666
      %vm668 = vmor %vm664, %vm667
      %v669 = vlaneseq
      %v670 = vshrl.u32 %v669, 7
      %v671 = vand.u32 %v670, 1
      %vm672 = vcmp.ne.s32.totalorder %v671, 0
      %vm673 = vmxor %vm668, %vm672
      %v674 = vsel %vm673, %v646, %v655
      %v675 = vsel %vm673, %v647, %v662
      %676 = xla_tuple %v674, %v675
      %677 = vst [vmem:[#allocation12] sm:$0xff] %v674
      %678 = vst [vmem:[#allocation14] sm:$0xff] %v675
      %679 = xla_tuple %677, %678
      %v680 = vld [vmem:[#allocation12] sm:$0xff]
      %v681 = vld [vmem:[#allocation14] sm:$0xff]
      %682 = xla_tuple %v680, %v681
      %v684 = vunpack.c.l.s4 839939668
      %v685 = vunpack.c.0.s8 %v684
      %v686 = vlaneseq
      %v687 = vshrl.u32 %v686, 7
      %v688 = vsub.s32 %v685, %v687
      %v689 = vrot.slane %v680, %v688
      %v691 = vunpack.c.l.s4 839939668
      %v692 = vunpack.c.0.s8 %v691
      %v693 = vlaneseq
      %v694 = vshrl.u32 %v693, 7
      %v695 = vsub.s32 %v692, %v694
      %v696 = vrot.slane %v681, %v695
      %697 = xla_tuple %v689, %v696
      %vm698 = vcmp.gt.s32.totalorder %v680, %v689
      %vm699 = vcmp.eq.s32.totalorder %v680, %v689
      %vm700 = vcmp.lt.s32.totalorder %v681, %v696
      %vm701 = vmand %vm699, %vm700
      %vm702 = vmor %vm698, %vm701
      %v703 = vlaneseq
      %v704 = vshrl.u32 %v703, 7
      %v705 = vand.u32 %v704, 4
      %vm706 = vcmp.ne.s32.totalorder %v705, 0
      %vm707 = vmxor %vm702, %vm706
      %v708 = vsel %vm707, %v680, %v689
      %v709 = vsel %vm707, %v681, %v696
      %710 = xla_tuple %v708, %v709
      %v712 = vunpack.c.l.s4 1417023538
      %v713 = vunpack.c.0.s8 %v712
      %v714 = vlaneseq
      %v715 = vshrl.u32 %v714, 7
      %v716 = vsub.s32 %v713, %v715
      %v717 = vrot.slane %v708, %v716
      %v719 = vunpack.c.l.s4 1417023538
      %v720 = vunpack.c.0.s8 %v719
      %v721 = vlaneseq
      %v722 = vshrl.u32 %v721, 7
      %v723 = vsub.s32 %v720, %v722
      %v724 = vrot.slane %v709, %v723
      %725 = xla_tuple %v717, %v724
      %vm726 = vcmp.gt.s32.totalorder %v708, %v717
      %vm727 = vcmp.eq.s32.totalorder %v708, %v717
      %vm728 = vcmp.lt.s32.totalorder %v709, %v724
      %vm729 = vmand %vm727, %vm728
      %vm730 = vmor %vm726, %vm729
      %v731 = vlaneseq
      %v732 = vshrl.u32 %v731, 7
      %v733 = vand.u32 %v732, 2
      %vm734 = vcmp.ne.s32.totalorder %v733, 0
      %vm735 = vmxor %vm730, %vm734
      %v736 = vsel %vm735, %v708, %v717
      %v737 = vsel %vm735, %v709, %v724
      %738 = xla_tuple %v736, %v737
      %v740 = vunpack.c.l.s4 1732584193
      %v741 = vunpack.c.0.s8 %v740
      %v742 = vlaneseq
      %v743 = vshrl.u32 %v742, 7
      %v744 = vsub.s32 %v741, %v743
      %v745 = vrot.slane %v736, %v744
      %v747 = vunpack.c.l.s4 1732584193
      %v748 = vunpack.c.0.s8 %v747
      %v749 = vlaneseq
      %v750 = vshrl.u32 %v749, 7
      %v751 = vsub.s32 %v748, %v750
      %v752 = vrot.slane %v737, %v751
      %753 = xla_tuple %v745, %v752
      %vm754 = vcmp.gt.s32.totalorder %v736, %v745
      %vm755 = vcmp.eq.s32.totalorder %v736, %v745
      %vm756 = vcmp.lt.s32.totalorder %v737, %v752
      %vm757 = vmand %vm755, %vm756
      %vm758 = vmor %vm754, %vm757
      %v759 = vlaneseq
      %v760 = vshrl.u32 %v759, 7
      %v761 = vand.u32 %v760, 1
      %vm762 = vcmp.ne.s32.totalorder %v761, 0
      %vm763 = vmxor %vm758, %vm762
      %v764 = vsel %vm763, %v736, %v745
      %v765 = vsel %vm763, %v737, %v752
      %766 = xla_tuple %v764, %v765
      %767 = vst [vmem:[#allocation12] sm:$0xff] %v764
      %768 = vst [vmem:[#allocation14] sm:$0xff] %v765
      %769 = xla_tuple %767, %768
      %770 = xla_tuple %s566, %s567
      %v771 = vld [vmem:[%s566] sm:$0xff]
      %v772 = vld [vmem:[%s567] sm:$0xff]
      %773 = xla_tuple %v771, %v772
      %v775 = vunpack.c.l.s4 839939668
      %v776 = vunpack.c.0.s8 %v775
      %v777 = vlaneseq
      %v778 = vshrl.u32 %v777, 7
      %v779 = vsub.s32 %v776, %v778
      %v780 = vrot.slane %v771, %v779
      %v782 = vunpack.c.l.s4 839939668
      %v783 = vunpack.c.0.s8 %v782
      %v784 = vlaneseq
      %v785 = vshrl.u32 %v784, 7
      %v786 = vsub.s32 %v783, %v785
      %v787 = vrot.slane %v772, %v786
      %788 = xla_tuple %v780, %v787
      %vm789 = vcmp.gt.s32.totalorder %v771, %v780
      %vm790 = vcmp.eq.s32.totalorder %v771, %v780
      %vm791 = vcmp.lt.s32.totalorder %v772, %v787
      %vm792 = vmand %vm790, %vm791
      %vm793 = vmor %vm789, %vm792
      %v794 = vlaneseq
      %v795 = vshrl.u32 %v794, 7
      %v796 = vand.u32 %v795, 4
      %vm797 = vcmp.ne.s32.totalorder %v796, 0
      %vm798 = vmxor %vm793, %vm797
      %v799 = vsel %vm798, %v771, %v780
      %v800 = vsel %vm798, %v772, %v787
      %801 = xla_tuple %v799, %v800
      %v803 = vunpack.c.l.s4 1417023538
      %v804 = vunpack.c.0.s8 %v803
      %v805 = vlaneseq
      %v806 = vshrl.u32 %v805, 7
      %v807 = vsub.s32 %v804, %v806
      %v808 = vrot.slane %v799, %v807
      %v810 = vunpack.c.l.s4 1417023538
      %v811 = vunpack.c.0.s8 %v810
      %v812 = vlaneseq
      %v813 = vshrl.u32 %v812, 7
      %v814 = vsub.s32 %v811, %v813
      %v815 = vrot.slane %v800, %v814
      %816 = xla_tuple %v808, %v815
      %vm817 = vcmp.gt.s32.totalorder %v799, %v808
      %vm818 = vcmp.eq.s32.totalorder %v799, %v808
      %vm819 = vcmp.lt.s32.totalorder %v800, %v815
      %vm820 = vmand %vm818, %vm819
      %vm821 = vmor %vm817, %vm820
      %v822 = vlaneseq
      %v823 = vshrl.u32 %v822, 7
      %v824 = vand.u32 %v823, 2
      %vm825 = vcmp.ne.s32.totalorder %v824, 0
      %vm826 = vmxor %vm821, %vm825
      %v827 = vsel %vm826, %v799, %v808
      %v828 = vsel %vm826, %v800, %v815
      %829 = xla_tuple %v827, %v828
      %v831 = vunpack.c.l.s4 1732584193
      %v832 = vunpack.c.0.s8 %v831
      %v833 = vlaneseq
      %v834 = vshrl.u32 %v833, 7
      %v835 = vsub.s32 %v832, %v834
      %v836 = vrot.slane %v827, %v835
      %v838 = vunpack.c.l.s4 1732584193
      %v839 = vunpack.c.0.s8 %v838
      %v840 = vlaneseq
      %v841 = vshrl.u32 %v840, 7
      %v842 = vsub.s32 %v839, %v841
      %v843 = vrot.slane %v828, %v842
      %844 = xla_tuple %v836, %v843
      %vm845 = vcmp.gt.s32.totalorder %v827, %v836
      %vm846 = vcmp.eq.s32.totalorder %v827, %v836
      %vm847 = vcmp.lt.s32.totalorder %v828, %v843
      %vm848 = vmand %vm846, %vm847
      %vm849 = vmor %vm845, %vm848
      %v850 = vlaneseq
      %v851 = vshrl.u32 %v850, 7
      %v852 = vand.u32 %v851, 1
      %vm853 = vcmp.ne.s32.totalorder %v852, 0
      %vm854 = vmxor %vm849, %vm853
      %v855 = vsel %vm854, %v827, %v836
      %v856 = vsel %vm854, %v828, %v843
      %857 = xla_tuple %v855, %v856
      %858 = vst [vmem:[%s566] sm:$0xff] %v855
      %859 = vst [vmem:[%s567] sm:$0xff] %v856
      %860 = xla_tuple %858, %859
      %v861 = vld [vmem:[%s566] sm:$0xff]
      %v862 = vld [vmem:[%s567] sm:$0xff]
      %863 = xla_tuple %v861, %v862
      %v865 = vunpack.c.l.s4 839939668
      %v866 = vunpack.c.0.s8 %v865
      %v867 = vlaneseq
      %v868 = vshrl.u32 %v867, 7
      %v869 = vsub.s32 %v866, %v868
      %v870 = vrot.slane %v861, %v869
      %v872 = vunpack.c.l.s4 839939668
      %v873 = vunpack.c.0.s8 %v872
      %v874 = vlaneseq
      %v875 = vshrl.u32 %v874, 7
      %v876 = vsub.s32 %v873, %v875
      %v877 = vrot.slane %v862, %v876
      %878 = xla_tuple %v870, %v877
      %vm879 = vcmp.gt.s32.totalorder %v861, %v870
      %vm880 = vcmp.eq.s32.totalorder %v861, %v870
      %vm881 = vcmp.lt.s32.totalorder %v862, %v877
      %vm882 = vmand %vm880, %vm881
      %vm883 = vmor %vm879, %vm882
      %v884 = vlaneseq
      %v885 = vshrl.u32 %v884, 7
      %v886 = vand.u32 %v885, 4
      %vm887 = vcmp.ne.s32.totalorder %v886, 0
      %vm888 = vmxor %vm883, %vm887
      %v889 = vsel %vm888, %v861, %v870
      %v890 = vsel %vm888, %v862, %v877
      %891 = xla_tuple %v889, %v890
      %v893 = vunpack.c.l.s4 1417023538
      %v894 = vunpack.c.0.s8 %v893
      %v895 = vlaneseq
      %v896 = vshrl.u32 %v895, 7
      %v897 = vsub.s32 %v894, %v896
      %v898 = vrot.slane %v889, %v897
      %v900 = vunpack.c.l.s4 1417023538
      %v901 = vunpack.c.0.s8 %v900
      %v902 = vlaneseq
      %v903 = vshrl.u32 %v902, 7
      %v904 = vsub.s32 %v901, %v903
      %v905 = vrot.slane %v890, %v904
      %906 = xla_tuple %v898, %v905
      %vm907 = vcmp.gt.s32.totalorder %v889, %v898
      %vm908 = vcmp.eq.s32.totalorder %v889, %v898
      %vm909 = vcmp.lt.s32.totalorder %v890, %v905
      %vm910 = vmand %vm908, %vm909
      %vm911 = vmor %vm907, %vm910
      %v912 = vlaneseq
      %v913 = vshrl.u32 %v912, 7
      %v914 = vand.u32 %v913, 2
      %vm915 = vcmp.ne.s32.totalorder %v914, 0
      %vm916 = vmxor %vm911, %vm915
      %v917 = vsel %vm916, %v889, %v898
      %v918 = vsel %vm916, %v890, %v905
      %919 = xla_tuple %v917, %v918
      %v921 = vunpack.c.l.s4 1732584193
      %v922 = vunpack.c.0.s8 %v921
      %v923 = vlaneseq
      %v924 = vshrl.u32 %v923, 7
      %v925 = vsub.s32 %v922, %v924
      %v926 = vrot.slane %v917, %v925
      %v928 = vunpack.c.l.s4 1732584193
      %v929 = vunpack.c.0.s8 %v928
      %v930 = vlaneseq
      %v931 = vshrl.u32 %v930, 7
      %v932 = vsub.s32 %v929, %v931
      %v933 = vrot.slane %v918, %v932
      %934 = xla_tuple %v926, %v933
      %vm935 = vcmp.gt.s32.totalorder %v917, %v926
      %vm936 = vcmp.eq.s32.totalorder %v917, %v926
      %vm937 = vcmp.lt.s32.totalorder %v918, %v933
      %vm938 = vmand %vm936, %vm937
      %vm939 = vmor %vm935, %vm938
      %v940 = vlaneseq
      %v941 = vshrl.u32 %v940, 7
      %v942 = vand.u32 %v941, 1
      %vm943 = vcmp.ne.s32.totalorder %v942, 0
      %vm944 = vmxor %vm939, %vm943
      %v945 = vsel %vm944, %v917, %v926
      %v946 = vsel %vm944, %v918, %v933
      %947 = xla_tuple %v945, %v946
      %948 = vst [vmem:[%s566] sm:$0xff] %v945
      %949 = vst [vmem:[%s567] sm:$0xff] %v946
      %950 = xla_tuple %948, %949
      %s951 = scalar_lea.vmem [#allocation13], 8
      %s952 = scalar_lea.vmem [#allocation15], 8
      %953 = xla_tuple %s951, %s952
      %v954 = vld [vmem:[#allocation13] sm:$0xff]
      %v955 = vld [vmem:[#allocation15] sm:$0xff]
      %956 = xla_tuple %v954, %v955
      %v957 = vld [vmem:[%s951] sm:$0xff]
      %v958 = vld [vmem:[%s952] sm:$0xff]
      %959 = xla_tuple %v957, %v958
      %vm960 = vcmp.gt.s32.totalorder %v954, %v957
      %vm961 = vcmp.eq.s32.totalorder %v954, %v957
      %vm962 = vcmp.lt.s32.totalorder %v955, %v958
      %vm963 = vmand %vm961, %vm962
      %vm964 = vmor %vm960, %vm963
      %v965 = vsel %vm964, %v954, %v957
      %966 = vst [vmem:[#allocation13] sm:$0xff] %v965
      %v967 = vsel %vm964, %v957, %v954
      %968 = vst [vmem:[%s951] sm:$0xff] %v967
      %v969 = vsel %vm964, %v955, %v958
      %970 = vst [vmem:[#allocation15] sm:$0xff] %v969
      %v971 = vsel %vm964, %v958, %v955
      %972 = vst [vmem:[%s952] sm:$0xff] %v971
      %973 = xla_tuple %968, %972
      %974 = xla_tuple [#allocation13], [#allocation15]
      %v975 = vld [vmem:[#allocation13] sm:$0xff]
      %v976 = vld [vmem:[#allocation15] sm:$0xff]
      %977 = xla_tuple %v975, %v976
      %v979 = vunpack.c.l.s4 839939668
      %v980 = vunpack.c.0.s8 %v979
      %v981 = vlaneseq
      %v982 = vshrl.u32 %v981, 7
      %v983 = vsub.s32 %v980, %v982
      %v984 = vrot.slane %v975, %v983
      %v986 = vunpack.c.l.s4 839939668
      %v987 = vunpack.c.0.s8 %v986
      %v988 = vlaneseq
      %v989 = vshrl.u32 %v988, 7
      %v990 = vsub.s32 %v987, %v989
      %v991 = vrot.slane %v976, %v990
      %992 = xla_tuple %v984, %v991
      %vm993 = vcmp.gt.s32.totalorder %v975, %v984
      %vm994 = vcmp.eq.s32.totalorder %v975, %v984
      %vm995 = vcmp.lt.s32.totalorder %v976, %v991
      %vm996 = vmand %vm994, %vm995
      %vm997 = vmor %vm993, %vm996
      %v998 = vlaneseq
      %v999 = vshrl.u32 %v998, 7
      %v1000 = vand.u32 %v999, 4
      %vm1001 = vcmp.ne.s32.totalorder %v1000, 0
      %vm1002 = vmxor %vm997, %vm1001
      %v1003 = vsel %vm1002, %v975, %v984
      %v1004 = vsel %vm1002, %v976, %v991
      %1005 = xla_tuple %v1003, %v1004
      %v1007 = vunpack.c.l.s4 1417023538
      %v1008 = vunpack.c.0.s8 %v1007
      %v1009 = vlaneseq
      %v1010 = vshrl.u32 %v1009, 7
      %v1011 = vsub.s32 %v1008, %v1010
      %v1012 = vrot.slane %v1003, %v1011
      %v1014 = vunpack.c.l.s4 1417023538
      %v1015 = vunpack.c.0.s8 %v1014
      %v1016 = vlaneseq
      %v1017 = vshrl.u32 %v1016, 7
      %v1018 = vsub.s32 %v1015, %v1017
      %v1019 = vrot.slane %v1004, %v1018
      %1020 = xla_tuple %v1012, %v1019
      %vm1021 = vcmp.gt.s32.totalorder %v1003, %v1012
      %vm1022 = vcmp.eq.s32.totalorder %v1003, %v1012
      %vm1023 = vcmp.lt.s32.totalorder %v1004, %v1019
      %vm1024 = vmand %vm1022, %vm1023
      %vm1025 = vmor %vm1021, %vm1024
      %v1026 = vlaneseq
      %v1027 = vshrl.u32 %v1026, 7
      %v1028 = vand.u32 %v1027, 2
      %vm1029 = vcmp.ne.s32.totalorder %v1028, 0
      %vm1030 = vmxor %vm1025, %vm1029
      %v1031 = vsel %vm1030, %v1003, %v1012
      %v1032 = vsel %vm1030, %v1004, %v1019
      %1033 = xla_tuple %v1031, %v1032
      %v1035 = vunpack.c.l.s4 1732584193
      %v1036 = vunpack.c.0.s8 %v1035
      %v1037 = vlaneseq
      %v1038 = vshrl.u32 %v1037, 7
      %v1039 = vsub.s32 %v1036, %v1038
      %v1040 = vrot.slane %v1031, %v1039
      %v1042 = vunpack.c.l.s4 1732584193
      %v1043 = vunpack.c.0.s8 %v1042
      %v1044 = vlaneseq
      %v1045 = vshrl.u32 %v1044, 7
      %v1046 = vsub.s32 %v1043, %v1045
      %v1047 = vrot.slane %v1032, %v1046
      %1048 = xla_tuple %v1040, %v1047
      %vm1049 = vcmp.gt.s32.totalorder %v1031, %v1040
      %vm1050 = vcmp.eq.s32.totalorder %v1031, %v1040
      %vm1051 = vcmp.lt.s32.totalorder %v1032, %v1047
      %vm1052 = vmand %vm1050, %vm1051
      %vm1053 = vmor %vm1049, %vm1052
      %v1054 = vlaneseq
      %v1055 = vshrl.u32 %v1054, 7
      %v1056 = vand.u32 %v1055, 1
      %vm1057 = vcmp.ne.s32.totalorder %v1056, 0
      %vm1058 = vmxor %vm1053, %vm1057
      %v1059 = vsel %vm1058, %v1031, %v1040
      %v1060 = vsel %vm1058, %v1032, %v1047
      %1061 = xla_tuple %v1059, %v1060
      %1062 = vst [vmem:[#allocation13] sm:$0xff] %v1059
      %1063 = vst [vmem:[#allocation15] sm:$0xff] %v1060
      %1064 = xla_tuple %1062, %1063
      %v1065 = vld [vmem:[#allocation13] sm:$0xff]
      %v1066 = vld [vmem:[#allocation15] sm:$0xff]
      %1067 = xla_tuple %v1065, %v1066
      %v1069 = vunpack.c.l.s4 839939668
      %v1070 = vunpack.c.0.s8 %v1069
      %v1071 = vlaneseq
      %v1072 = vshrl.u32 %v1071, 7
      %v1073 = vsub.s32 %v1070, %v1072
      %v1074 = vrot.slane %v1065, %v1073
      %v1076 = vunpack.c.l.s4 839939668
      %v1077 = vunpack.c.0.s8 %v1076
      %v1078 = vlaneseq
      %v1079 = vshrl.u32 %v1078, 7
      %v1080 = vsub.s32 %v1077, %v1079
      %v1081 = vrot.slane %v1066, %v1080
      %1082 = xla_tuple %v1074, %v1081
      %vm1083 = vcmp.gt.s32.totalorder %v1065, %v1074
      %vm1084 = vcmp.eq.s32.totalorder %v1065, %v1074
      %vm1085 = vcmp.lt.s32.totalorder %v1066, %v1081
      %vm1086 = vmand %vm1084, %vm1085
      %vm1087 = vmor %vm1083, %vm1086
      %v1088 = vlaneseq
      %v1089 = vshrl.u32 %v1088, 7
      %v1090 = vand.u32 %v1089, 4
      %vm1091 = vcmp.ne.s32.totalorder %v1090, 0
      %vm1092 = vmxor %vm1087, %vm1091
      %v1093 = vsel %vm1092, %v1065, %v1074
      %v1094 = vsel %vm1092, %v1066, %v1081
      %1095 = xla_tuple %v1093, %v1094
      %v1097 = vunpack.c.l.s4 1417023538
      %v1098 = vunpack.c.0.s8 %v1097
      %v1099 = vlaneseq
      %v1100 = vshrl.u32 %v1099, 7
      %v1101 = vsub.s32 %v1098, %v1100
      %v1102 = vrot.slane %v1093, %v1101
      %v1104 = vunpack.c.l.s4 1417023538
      %v1105 = vunpack.c.0.s8 %v1104
      %v1106 = vlaneseq
      %v1107 = vshrl.u32 %v1106, 7
      %v1108 = vsub.s32 %v1105, %v1107
      %v1109 = vrot.slane %v1094, %v1108
      %1110 = xla_tuple %v1102, %v1109
      %vm1111 = vcmp.gt.s32.totalorder %v1093, %v1102
      %vm1112 = vcmp.eq.s32.totalorder %v1093, %v1102
      %vm1113 = vcmp.lt.s32.totalorder %v1094, %v1109
      %vm1114 = vmand %vm1112, %vm1113
      %vm1115 = vmor %vm1111, %vm1114
      %v1116 = vlaneseq
      %v1117 = vshrl.u32 %v1116, 7
      %v1118 = vand.u32 %v1117, 2
      %vm1119 = vcmp.ne.s32.totalorder %v1118, 0
      %vm1120 = vmxor %vm1115, %vm1119
      %v1121 = vsel %vm1120, %v1093, %v1102
      %v1122 = vsel %vm1120, %v1094, %v1109
      %1123 = xla_tuple %v1121, %v1122
      %v1125 = vunpack.c.l.s4 1732584193
      %v1126 = vunpack.c.0.s8 %v1125
      %v1127 = vlaneseq
      %v1128 = vshrl.u32 %v1127, 7
      %v1129 = vsub.s32 %v1126, %v1128
      %v1130 = vrot.slane %v1121, %v1129
      %v1132 = vunpack.c.l.s4 1732584193
      %v1133 = vunpack.c.0.s8 %v1132
      %v1134 = vlaneseq
      %v1135 = vshrl.u32 %v1134, 7
      %v1136 = vsub.s32 %v1133, %v1135
      %v1137 = vrot.slane %v1122, %v1136
      %1138 = xla_tuple %v1130, %v1137
      %vm1139 = vcmp.gt.s32.totalorder %v1121, %v1130
      %vm1140 = vcmp.eq.s32.totalorder %v1121, %v1130
      %vm1141 = vcmp.lt.s32.totalorder %v1122, %v1137
      %vm1142 = vmand %vm1140, %vm1141
      %vm1143 = vmor %vm1139, %vm1142
      %v1144 = vlaneseq
      %v1145 = vshrl.u32 %v1144, 7
      %v1146 = vand.u32 %v1145, 1
      %vm1147 = vcmp.ne.s32.totalorder %v1146, 0
      %vm1148 = vmxor %vm1143, %vm1147
      %v1149 = vsel %vm1148, %v1121, %v1130
      %v1150 = vsel %vm1148, %v1122, %v1137
      %1151 = xla_tuple %v1149, %v1150
      %1152 = vst [vmem:[#allocation13] sm:$0xff] %v1149
      %1153 = vst [vmem:[#allocation15] sm:$0xff] %v1150
      %1154 = xla_tuple %1152, %1153
      %1155 = xla_tuple %s951, %s952
      %v1156 = vld [vmem:[%s951] sm:$0xff]
      %v1157 = vld [vmem:[%s952] sm:$0xff]
      %1158 = xla_tuple %v1156, %v1157
      %v1160 = vunpack.c.l.s4 839939668
      %v1161 = vunpack.c.0.s8 %v1160
      %v1162 = vlaneseq
      %v1163 = vshrl.u32 %v1162, 7
      %v1164 = vsub.s32 %v1161, %v1163
      %v1165 = vrot.slane %v1156, %v1164
      %v1167 = vunpack.c.l.s4 839939668
      %v1168 = vunpack.c.0.s8 %v1167
      %v1169 = vlaneseq
      %v1170 = vshrl.u32 %v1169, 7
      %v1171 = vsub.s32 %v1168, %v1170
      %v1172 = vrot.slane %v1157, %v1171
      %1173 = xla_tuple %v1165, %v1172
      %vm1174 = vcmp.gt.s32.totalorder %v1156, %v1165
      %vm1175 = vcmp.eq.s32.totalorder %v1156, %v1165
      %vm1176 = vcmp.lt.s32.totalorder %v1157, %v1172
      %vm1177 = vmand %vm1175, %vm1176
      %vm1178 = vmor %vm1174, %vm1177
      %v1179 = vlaneseq
      %v1180 = vshrl.u32 %v1179, 7
      %v1181 = vand.u32 %v1180, 4
      %vm1182 = vcmp.ne.s32.totalorder %v1181, 0
      %vm1183 = vmxor %vm1178, %vm1182
      %v1184 = vsel %vm1183, %v1156, %v1165
      %v1185 = vsel %vm1183, %v1157, %v1172
      %1186 = xla_tuple %v1184, %v1185
      %v1188 = vunpack.c.l.s4 1417023538
      %v1189 = vunpack.c.0.s8 %v1188
      %v1190 = vlaneseq
      %v1191 = vshrl.u32 %v1190, 7
      %v1192 = vsub.s32 %v1189, %v1191
      %v1193 = vrot.slane %v1184, %v1192
      %v1195 = vunpack.c.l.s4 1417023538
      %v1196 = vunpack.c.0.s8 %v1195
      %v1197 = vlaneseq
      %v1198 = vshrl.u32 %v1197, 7
      %v1199 = vsub.s32 %v1196, %v1198
      %v1200 = vrot.slane %v1185, %v1199
      %1201 = xla_tuple %v1193, %v1200
      %vm1202 = vcmp.gt.s32.totalorder %v1184, %v1193
      %vm1203 = vcmp.eq.s32.totalorder %v1184, %v1193
      %vm1204 = vcmp.lt.s32.totalorder %v1185, %v1200
      %vm1205 = vmand %vm1203, %vm1204
      %vm1206 = vmor %vm1202, %vm1205
      %v1207 = vlaneseq
      %v1208 = vshrl.u32 %v1207, 7
      %v1209 = vand.u32 %v1208, 2
      %vm1210 = vcmp.ne.s32.totalorder %v1209, 0
      %vm1211 = vmxor %vm1206, %vm1210
      %v1212 = vsel %vm1211, %v1184, %v1193
      %v1213 = vsel %vm1211, %v1185, %v1200
      %1214 = xla_tuple %v1212, %v1213
      %v1216 = vunpack.c.l.s4 1732584193
      %v1217 = vunpack.c.0.s8 %v1216
      %v1218 = vlaneseq
      %v1219 = vshrl.u32 %v1218, 7
      %v1220 = vsub.s32 %v1217, %v1219
      %v1221 = vrot.slane %v1212, %v1220
      %v1223 = vunpack.c.l.s4 1732584193
      %v1224 = vunpack.c.0.s8 %v1223
      %v1225 = vlaneseq
      %v1226 = vshrl.u32 %v1225, 7
      %v1227 = vsub.s32 %v1224, %v1226
      %v1228 = vrot.slane %v1213, %v1227
      %1229 = xla_tuple %v1221, %v1228
      %vm1230 = vcmp.gt.s32.totalorder %v1212, %v1221
      %vm1231 = vcmp.eq.s32.totalorder %v1212, %v1221
      %vm1232 = vcmp.lt.s32.totalorder %v1213, %v1228
      %vm1233 = vmand %vm1231, %vm1232
      %vm1234 = vmor %vm1230, %vm1233
      %v1235 = vlaneseq
      %v1236 = vshrl.u32 %v1235, 7
      %v1237 = vand.u32 %v1236, 1
      %vm1238 = vcmp.ne.s32.totalorder %v1237, 0
      %vm1239 = vmxor %vm1234, %vm1238
      %v1240 = vsel %vm1239, %v1212, %v1221
      %v1241 = vsel %vm1239, %v1213, %v1228
      %1242 = xla_tuple %v1240, %v1241
      %1243 = vst [vmem:[%s951] sm:$0xff] %v1240
      %1244 = vst [vmem:[%s952] sm:$0xff] %v1241
      %1245 = xla_tuple %1243, %1244
      %v1246 = vld [vmem:[%s951] sm:$0xff]
      %v1247 = vld [vmem:[%s952] sm:$0xff]
      %1248 = xla_tuple %v1246, %v1247
      %v1250 = vunpack.c.l.s4 839939668
      %v1251 = vunpack.c.0.s8 %v1250
      %v1252 = vlaneseq
      %v1253 = vshrl.u32 %v1252, 7
      %v1254 = vsub.s32 %v1251, %v1253
      %v1255 = vrot.slane %v1246, %v1254
      %v1257 = vunpack.c.l.s4 839939668
      %v1258 = vunpack.c.0.s8 %v1257
      %v1259 = vlaneseq
      %v1260 = vshrl.u32 %v1259, 7
      %v1261 = vsub.s32 %v1258, %v1260
      %v1262 = vrot.slane %v1247, %v1261
      %1263 = xla_tuple %v1255, %v1262
      %vm1264 = vcmp.gt.s32.totalorder %v1246, %v1255
      %vm1265 = vcmp.eq.s32.totalorder %v1246, %v1255
      %vm1266 = vcmp.lt.s32.totalorder %v1247, %v1262
      %vm1267 = vmand %vm1265, %vm1266
      %vm1268 = vmor %vm1264, %vm1267
      %v1269 = vlaneseq
      %v1270 = vshrl.u32 %v1269, 7
      %v1271 = vand.u32 %v1270, 4
      %vm1272 = vcmp.ne.s32.totalorder %v1271, 0
      %vm1273 = vmxor %vm1268, %vm1272
      %v1274 = vsel %vm1273, %v1246, %v1255
      %v1275 = vsel %vm1273, %v1247, %v1262
      %1276 = xla_tuple %v1274, %v1275
      %v1278 = vunpack.c.l.s4 1417023538
      %v1279 = vunpack.c.0.s8 %v1278
      %v1280 = vlaneseq
      %v1281 = vshrl.u32 %v1280, 7
      %v1282 = vsub.s32 %v1279, %v1281
      %v1283 = vrot.slane %v1274, %v1282
      %v1285 = vunpack.c.l.s4 1417023538
      %v1286 = vunpack.c.0.s8 %v1285
      %v1287 = vlaneseq
      %v1288 = vshrl.u32 %v1287, 7
      %v1289 = vsub.s32 %v1286, %v1288
      %v1290 = vrot.slane %v1275, %v1289
      %1291 = xla_tuple %v1283, %v1290
      %vm1292 = vcmp.gt.s32.totalorder %v1274, %v1283
      %vm1293 = vcmp.eq.s32.totalorder %v1274, %v1283
      %vm1294 = vcmp.lt.s32.totalorder %v1275, %v1290
      %vm1295 = vmand %vm1293, %vm1294
      %vm1296 = vmor %vm1292, %vm1295
      %v1297 = vlaneseq
      %v1298 = vshrl.u32 %v1297, 7
      %v1299 = vand.u32 %v1298, 2
      %vm1300 = vcmp.ne.s32.totalorder %v1299, 0
      %vm1301 = vmxor %vm1296, %vm1300
      %v1302 = vsel %vm1301, %v1274, %v1283
      %v1303 = vsel %vm1301, %v1275, %v1290
      %1304 = xla_tuple %v1302, %v1303
      %v1306 = vunpack.c.l.s4 1732584193
      %v1307 = vunpack.c.0.s8 %v1306
      %v1308 = vlaneseq
      %v1309 = vshrl.u32 %v1308, 7
      %v1310 = vsub.s32 %v1307, %v1309
      %v1311 = vrot.slane %v1302, %v1310
      %v1313 = vunpack.c.l.s4 1732584193
      %v1314 = vunpack.c.0.s8 %v1313
      %v1315 = vlaneseq
      %v1316 = vshrl.u32 %v1315, 7
      %v1317 = vsub.s32 %v1314, %v1316
      %v1318 = vrot.slane %v1303, %v1317
      %1319 = xla_tuple %v1311, %v1318
      %vm1320 = vcmp.gt.s32.totalorder %v1302, %v1311
      %vm1321 = vcmp.eq.s32.totalorder %v1302, %v1311
      %vm1322 = vcmp.lt.s32.totalorder %v1303, %v1318
      %vm1323 = vmand %vm1321, %vm1322
      %vm1324 = vmor %vm1320, %vm1323
      %v1325 = vlaneseq
      %v1326 = vshrl.u32 %v1325, 7
      %v1327 = vand.u32 %v1326, 1
      %vm1328 = vcmp.ne.s32.totalorder %v1327, 0
      %vm1329 = vmxor %vm1324, %vm1328
      %v1330 = vsel %vm1329, %v1302, %v1311
      %v1331 = vsel %vm1329, %v1303, %v1318
      %1332 = xla_tuple %v1330, %v1331
      %1333 = vst [vmem:[%s951] sm:$0xff] %v1330
      %1334 = vst [vmem:[%s952] sm:$0xff] %v1331
      %1335 = xla_tuple %1333, %1334
    %v1336 = vld [vmem:[#allocation12] sm:$0xff]
    %vm1337 = vcmp.lt.s32.totalorder %v1336, 0
    %v1338 = vsub.s32 2147483647, %v1336
    %v1339 = vsel %vm1337, %v1338, %v1336
    %1340 = vst [vmem:[#allocation12] sm:$0xff] %v1339
    %s1341 = scalar_lea.vmem [#allocation12], 8
    %v1342 = vld [vmem:[%s1341] sm:$0xff]
    %vm1343 = vcmp.lt.s32.totalorder %v1342, 0
    %v1344 = vsub.s32 2147483647, %v1342
    %v1345 = vsel %vm1343, %v1344, %v1342
    %1346 = vst [vmem:[%s1341] sm:$0xff] %v1345
    %v1347 = vld [vmem:[#allocation12] sm:$0xff]
    %s1348 = scalar_lea.vmem [#allocation12], 8
    %v1349 = vld [vmem:[%s1348] sm:$0xff]
    %1350 = vxpose.xlu0.b32.start [1/2] (short) %v1347, 128
    %1351 = vxpose.xlu0.b32.end [2/2] (short) %v1349, 128
    %v1352 = vpop.trf.xlu0
    %v1353 = vpop.trf.xlu0
    %v1354 = vpop.trf.xlu0
    %v1355 = vpop.trf.xlu0
    %v1356 = vpop.trf.xlu0
    %v1357 = vpop.trf.xlu0
    %v1358 = vpop.trf.xlu0
    %v1359 = vpop.trf.xlu0
    %v1360 = vpop.trf.xlu0
    %v1361 = vpop.trf.xlu0
    %v1362 = vpop.trf.xlu0
    %v1363 = vpop.trf.xlu0
    %v1364 = vpop.trf.xlu0
    %v1365 = vpop.trf.xlu0
    %v1366 = vpop.trf.xlu0
    %v1367 = vpop.trf.xlu0
    %1368 = vst [vmem:[#allocation7] sm:$0xff] %v1352
    %v1369 = vld [vmem:[#allocation14] sm:$0xff]
    %s1370 = scalar_lea.vmem [#allocation14], 8
    %v1371 = vld [vmem:[%s1370] sm:$0xff]
    %1372 = vxpose.xlu0.b32.start [1/2] (short) %v1369, 128
    %1373 = vxpose.xlu0.b32.end [2/2] (short) %v1371, 128
    %v1374 = vpop.trf.xlu0
    %v1375 = vpop.trf.xlu0
    %v1376 = vpop.trf.xlu0
    %v1377 = vpop.trf.xlu0
    %v1378 = vpop.trf.xlu0
    %v1379 = vpop.trf.xlu0
    %v1380 = vpop.trf.xlu0
    %v1381 = vpop.trf.xlu0
    %v1382 = vpop.trf.xlu0
    %v1383 = vpop.trf.xlu0
    %v1384 = vpop.trf.xlu0
    %v1385 = vpop.trf.xlu0
    %v1386 = vpop.trf.xlu0
    %v1387 = vpop.trf.xlu0
    %v1388 = vpop.trf.xlu0
    %v1389 = vpop.trf.xlu0
    %1390 = vst [vmem:[#allocation10] sm:$0xff] %v1374
    %s1392 = sshllo.u32 0, 2
    %v1394 = vld [vmem:[#allocation7] sm:%s1392]
    %s1395 = sshllo.u32 0, 2
    %1396 = vst [vmem:[#allocation8] sm:%s1395] %v1394
    %s1398 = sshllo.u32 0, 2
    %v1400 = vld [vmem:[#allocation10] sm:%s1398]
    %s1401 = sshllo.u32 0, 2
    %1402 = vst [vmem:[#allocation11] sm:%s1401] %v1400
    %s1404 = ssub.s32 32, 32
    %1405 = vsyncadd [#allocation9], %s1404
    %s1407 = sshll.u32 [#allocation8], 4
    %s1408 = int_to_ptr.vmem [resolvable:$true] %s1407
    %1410 = dma.vmem_to_hbm [thread:$0]  %s1408, 32, %s1, [#allocation9]
    // Predicated region
    $region37: #{custom-call} parent=1 // pred_check
      _
    $region38: #{custom-call} parent=1 // pred_check_branch
      %1412 = sbr.rel (0) target = $region40
    $region39: #{custom-call} parent=1 // pred_region
      // Predicated region
      $region41: #{custom-call} parent=39 // pred_check
        _
      $region42: #{custom-call} parent=39 // pred_check_branch
        %1414 = sbr.rel target = $region44
      $region43: #{custom-call} parent=39 // pred_region
        // Predicated region
        $region56: #{custom-call} parent=43 // pred_check
          _
        $region57: #{custom-call} parent=43 // pred_check_branch
          %1429 = sbr.rel (0) target = $region59
        $region58: #{custom-call} parent=43 // pred_region
          loop: start=0, step=1, limit=1
          $region60: #{custom-call} parent=58 // loop_pre_header
            _
          $region61: #{custom-call} parent=58 // loop_header
            %s1432 = sphi 0, %s1436
            %p1433 = scmp.ge.s32.totalorder %s1432, 1
            %s1437 = sphi [#allocation11], [#allocation11]
            %s1438 = sphi %s2, %s2
          $region62: #{custom-call} parent=58 // loop_header_branch
            %1435 = sbr.rel (%p1433) target = $region66
          $region63: #{custom-call} parent=58 // loop_body
            %v1439 = vld [vmem:[%s1437] sm:$0x3]
            %1440 = vst [vmem:[%s1438] sm:$0x3] %v1439
          $region64: #{custom-call} parent=58 // loop_footer
            %s1436 = sadd.s32 1, %s1432
          $region65: #{custom-call} parent=58 // loop_footer_branch
            %1431 = sbr.rel target = $region61
          $region66: #{custom-call} parent=58 // loop_exit
            _
        $region59: #{custom-call} parent=43 // pred_fallthru
          _
      $region44: #{custom-call} parent=39 // pred_fallthru
        _
      // Predicated region
      $region45: #{custom-call} parent=39 // pred_check
        _
      $region46: #{custom-call} parent=39 // pred_check_branch
        %1416 = sbr.rel (0) target = $region48
      $region47: #{custom-call} parent=39 // pred_region
        loop: start=0, step=1, limit=1
        $region49: #{custom-call} parent=47 // loop_pre_header
          _
        $region50: #{custom-call} parent=47 // loop_header
          %s1419 = sphi 0, %s1423
          %p1420 = scmp.ge.s32.totalorder %s1419, 1
          %s1424 = sphi [#allocation11], [#allocation11]
          %s1425 = sphi %s2, %s2
        $region51: #{custom-call} parent=47 // loop_header_branch
          %1422 = sbr.rel (%p1420) target = $region55
        $region52: #{custom-call} parent=47 // loop_body
          %v1426 = vld [vmem:[%s1424] sm:$0x3]
          %1427 = vst [vmem:[%s1425] sm:$0x3] %v1426
        $region53: #{custom-call} parent=47 // loop_footer
          %s1423 = sadd.s32 1, %s1419
        $region54: #{custom-call} parent=47 // loop_footer_branch
          %1418 = sbr.rel target = $region50
        $region55: #{custom-call} parent=47 // loop_exit
          _
      $region48: #{custom-call} parent=39 // pred_fallthru
        _
    $region40: #{custom-call} parent=1 // pred_fallthru
      _
    %1441 = vnop
    %1442 = dma.done [#allocation9], 32
    %1443 = vsyncpa [#allocation9], 1

// kernel: core.4
$region0: #{core.4}
  #allocation0 [shape = 'u32[]', space=smem, size = 0x4, offset = 0x4, fixed_abs, tag = 'smem constant byte address 0x4 - core index']
  #allocation1 [shape = 'u32[144,128]{1,0:T(1,128)}', space=vmem, size = 0x12000, scoped, tag = 'internal scratch']
  %s0 = inlined_call_operand.vmem [shape: f32[2,8,8], index: 0, kind: input, shape index: {}]
  %s1 = inlined_call_operand.vmem [shape: f32[2,8,32], index: 1, kind: input, shape index: {}]
  %s2 = inlined_call_operand.vmem [shape: f32[2,8,32], index: 2, kind: input, shape index: {}]
  %s3 = inlined_call_operand.vmem [shape: f32[2,8,32], index: 3, kind: output, shape index: {0}]
  %s4 = inlined_call_operand.vmem [shape: f32[2,8,32], index: 4, kind: output, shape index: {1}]
  %5 = xla_tuple %s3, %s4
  %s6 = sld [smem:[#allocation0]]
  $region53: #{core.4} parent=0
    _
  %s8 = ssub.s32 1, %s6
  %s9 = scalar_select 0, %s8, %s6
  loop: start=0, step=1, limit=4
  $region2: #{core.4} parent=0 // loop_pre_header
    _
  $region3: #{core.4} parent=0 // loop_header
    %s11 = sphi 0, %s15
    %p12 = scmp.ge.s32.totalorder %s11, 4
    %s21 = sphi 0, %s23
    %s24 = sphi 0, %s21
    %s25 = sphi 0, %s24
    %s41 = sphi 0, %s25
    %s47 = sphi 0, %s49
    %s50 = sphi 0, %s47
    %s51 = sphi 0, %s50
    %s67 = sphi 0, %s51
    %s73 = sphi 0, %s75
    %s76 = sphi 0, %s73
    %s77 = sphi 0, %s76
    %s93 = sphi 0, %s77
    %s99 = sphi 0, %s101
    %s102 = sphi 0, %s99
    %s103 = sphi 0, %s102
    %s119 = sphi 0, %s103
    %s125 = sphi 0, %s127
    %s128 = sphi 0, %s125
    %s129 = sphi 0, %s128
    %s145 = sphi 0, %s129
  $region4: #{core.4} parent=0 // loop_header_branch
    %14 = sbr.rel (%p12) target = $region8
  $region5: #{core.4} parent=0 // loop_body
    %s16 = ssub.s32 %s11, 1
    %s17 = ssub.s32 %s11, 2
    %s18 = sadd.s32 %s11, 1
    %s19 = ssub.s32 %s11, %s18
    %p20 = scmp.eq.s32.totalorder %s19, 0
    %s22 = sadd.s32 %s21, 1
    %s23 = scalar_select %p20, %s21, %s22
    %p26 = pneg %p20
    %p27 = scmp.eq.s32.totalorder %s11, 1
    %p28 = por %p26, %p27
    %p29 = scmp.ne.s32.totalorder %s21, %s24
    %p30 = scmp.eq.s32.totalorder %s11, 0
    %p31 = por %p29, %p30
    %p32 = scmp.ne.s32.totalorder %s21, %s24
    %p33 = scmp.eq.s32.totalorder %s16, 1
    %p34 = por %p32, %p33
    %p35 = scmp.ne.s32.totalorder %s24, %s25
    %p36 = scmp.eq.s32.totalorder %s16, 0
    %p37 = por %p35, %p36
    %p38 = scmp.ne.s32.totalorder %s24, %s25
    %p39 = scmp.eq.s32.totalorder %s17, 1
    %p40 = por %p38, %p39
    %p42 = scmp.ne.s32.totalorder %s25, %s41
    %p43 = scmp.eq.s32.totalorder %s17, 0
    %p44 = por %p42, %p43
    %s45 = ssub.s32 %s11, %s18
    %p46 = scmp.eq.s32.totalorder %s45, 0
    %s48 = sadd.s32 %s47, 1
    %s49 = scalar_select %p46, %s47, %s48
    %p52 = pneg %p46
    %p53 = scmp.eq.s32.totalorder %s11, 1
    %p54 = por %p52, %p53
    %p55 = scmp.ne.s32.totalorder %s47, %s50
    %p56 = scmp.eq.s32.totalorder %s11, 0
    %p57 = por %p55, %p56
    %p58 = scmp.ne.s32.totalorder %s47, %s50
    %p59 = scmp.eq.s32.totalorder %s16, 1
    %p60 = por %p58, %p59
    %p61 = scmp.ne.s32.totalorder %s50, %s51
    %p62 = scmp.eq.s32.totalorder %s16, 0
    %p63 = por %p61, %p62
    %p64 = scmp.ne.s32.totalorder %s50, %s51
    %p65 = scmp.eq.s32.totalorder %s17, 1
    %p66 = por %p64, %p65
    %p68 = scmp.ne.s32.totalorder %s51, %s67
    %p69 = scmp.eq.s32.totalorder %s17, 0
    %p70 = por %p68, %p69
    %s71 = ssub.s32 %s11, %s18
    %p72 = scmp.eq.s32.totalorder %s71, 0
    %s74 = sadd.s32 %s73, 1
    %s75 = scalar_select %p72, %s73, %s74
    %p78 = pneg %p72
    %p79 = scmp.eq.s32.totalorder %s11, 1
    %p80 = por %p78, %p79
    %p81 = scmp.ne.s32.totalorder %s73, %s76
    %p82 = scmp.eq.s32.totalorder %s11, 0
    %p83 = por %p81, %p82
    %p84 = scmp.ne.s32.totalorder %s73, %s76
    %p85 = scmp.eq.s32.totalorder %s16, 1
    %p86 = por %p84, %p85
    %p87 = scmp.ne.s32.totalorder %s76, %s77
    %p88 = scmp.eq.s32.totalorder %s16, 0
    %p89 = por %p87, %p88
    %p90 = scmp.ne.s32.totalorder %s76, %s77
    %p91 = scmp.eq.s32.totalorder %s17, 1
    %p92 = por %p90, %p91
    %p94 = scmp.ne.s32.totalorder %s77, %s93
    %p95 = scmp.eq.s32.totalorder %s17, 0
    %p96 = por %p94, %p95
    %s97 = ssub.s32 %s11, %s18
    %p98 = scmp.eq.s32.totalorder %s97, 0
    %s100 = sadd.s32 %s99, 1
    %s101 = scalar_select %p98, %s99, %s100
    %p104 = pneg %p98
    %p105 = scmp.eq.s32.totalorder %s11, 1
    %p106 = por %p104, %p105
    %p107 = scmp.ne.s32.totalorder %s99, %s102
    %p108 = scmp.eq.s32.totalorder %s11, 0
    %p109 = por %p107, %p108
    %p110 = scmp.ne.s32.totalorder %s99, %s102
    %p111 = scmp.eq.s32.totalorder %s16, 1
    %p112 = por %p110, %p111
    %p113 = scmp.ne.s32.totalorder %s102, %s103
    %p114 = scmp.eq.s32.totalorder %s16, 0
    %p115 = por %p113, %p114
    %p116 = scmp.ne.s32.totalorder %s102, %s103
    %p117 = scmp.eq.s32.totalorder %s17, 1
    %p118 = por %p116, %p117
    %p120 = scmp.ne.s32.totalorder %s103, %s119
    %p121 = scmp.eq.s32.totalorder %s17, 0
    %p122 = por %p120, %p121
    %s123 = ssub.s32 %s11, %s18
    %p124 = scmp.eq.s32.totalorder %s123, 0
    %s126 = sadd.s32 %s125, 1
    %s127 = scalar_select %p124, %s125, %s126
    %p130 = pneg %p124
    %p131 = scmp.eq.s32.totalorder %s11, 1
    %p132 = por %p130, %p131
    %p133 = scmp.ne.s32.totalorder %s125, %s128
    %p134 = scmp.eq.s32.totalorder %s11, 0
    %p135 = por %p133, %p134
    %p136 = scmp.ne.s32.totalorder %s125, %s128
    %p137 = scmp.eq.s32.totalorder %s16, 1
    %p138 = por %p136, %p137
    %p139 = scmp.ne.s32.totalorder %s128, %s129
    %p140 = scmp.eq.s32.totalorder %s16, 0
    %p141 = por %p139, %p140
    %p142 = scmp.ne.s32.totalorder %s128, %s129
    %p143 = scmp.eq.s32.totalorder %s17, 1
    %p144 = por %p142, %p143
    %p146 = scmp.ne.s32.totalorder %s129, %s145
    %p147 = scmp.eq.s32.totalorder %s17, 0
    %p148 = por %p146, %p147
    %p149 = scmp.le.s32.totalorder 1, %s11
    %p150 = scmp.lt.s32.totalorder %s11, 3
    %p151 = pnand %p149, %p150
    %p152 = pneg %p151
    // Predicated region
    $region9: #{core.4} parent=5 // pred_check
      _
    $region10: #{core.4} parent=5 // pred_check_branch
      %154 = sbr.rel (%p151) target = $region12
    $region11: #{core.4} parent=5 // pred_region
      %s155 = ssub.s32 %s11, 1
    $region12: #{core.4} parent=5 // pred_fallthru
      _
    %p156 = scmp.lt.s32.totalorder %s11, 2
    // Predicated region
    $region13: #{core.4} parent=5 // pred_check
      %p157 = pneg %p156
    $region14: #{core.4} parent=5 // pred_check_branch
      %159 = sbr.rel (%p157) target = $region16
    $region15: #{core.4} parent=5 // pred_region
      // Predicated region
      $region17: #{core.4} parent=15 // pred_check
        %p160 = pneg %p31
      $region18: #{core.4} parent=15 // pred_check_branch
        %162 = sbr.rel (%p160) target = $region20
      $region19: #{core.4} parent=15 // pred_region
        %p163 = scmp.lt.s32.totalorder %s11, 1
        %s164 = scalar_select %p163, %s11, 1
        %s165 = smul.addr %s164, 8
        %s166 = scalar_lea.vmem %s0, %s165
      $region20: #{core.4} parent=15 // pred_fallthru
        _
      // Predicated region
      $region21: #{core.4} parent=15 // pred_check
        %p167 = pneg %p57
      $region22: #{core.4} parent=15 // pred_check_branch
        %169 = sbr.rel (%p167) target = $region24
      $region23: #{core.4} parent=15 // pred_region
        %p170 = scmp.lt.s32.totalorder %s11, 1
        %s171 = scalar_select %p170, %s11, 1
        %s172 = smul.addr %s171, 8
        %s173 = scalar_lea.vmem %s1, %s172
      $region24: #{core.4} parent=15 // pred_fallthru
        _
      // Predicated region
      $region25: #{core.4} parent=15 // pred_check
        %p174 = pneg %p83
      $region26: #{core.4} parent=15 // pred_check_branch
        %176 = sbr.rel (%p174) target = $region28
      $region27: #{core.4} parent=15 // pred_region
        %p177 = scmp.lt.s32.totalorder %s11, 1
        %s178 = scalar_select %p177, %s11, 1
        %s179 = smul.addr %s178, 8
        %s180 = scalar_lea.vmem %s2, %s179
      $region28: #{core.4} parent=15 // pred_fallthru
        _
    $region16: #{core.4} parent=5 // pred_fallthru
      _
    %p181 = scmp.le.s32.totalorder 1, %s11
    %p182 = scmp.lt.s32.totalorder %s11, 3
    %p183 = pnand %p181, %p182
    %p184 = pneg %p183
    // Predicated region
    $region29: #{core.4} parent=5 // pred_check
      _
    $region30: #{core.4} parent=5 // pred_check_branch
      %186 = sbr.rel (%p183) target = $region32
    $region31: #{core.4} parent=5 // pred_region
      %s187 = ssub.s32 %s11, 1
      %p188 = scmp.lt.s32.totalorder %s16, 1
      %s189 = scalar_select %p188, %s16, 1
      %s190 = smul.addr %s189, 8
      %s191 = scalar_lea.vmem %s0, %s190
      %p192 = pneg %p37
      %p193 = pneg %p34
      %p194 = scmp.lt.s32.totalorder %s16, 1
      %s195 = scalar_select %p194, %s16, 1
      %s196 = smul.addr %s195, 8
      %s197 = scalar_lea.vmem %s1, %s196
      %p198 = pneg %p63
      %p199 = pneg %p60
      %p200 = scmp.lt.s32.totalorder %s16, 1
      %s201 = scalar_select %p200, %s16, 1
      %s202 = smul.addr %s201, 8
      %s203 = scalar_lea.vmem %s2, %s202
      %p204 = pneg %p89
      %p205 = pneg %p86
      %p206 = pneg %p115
      %p207 = pneg %p112
      %p208 = scmp.lt.s32.totalorder %s16, 1
      %s209 = scalar_select %p208, %s16, 1
      %s210 = smul.addr %s209, 8
      %s211 = scalar_lea.vmem %s3, %s210
      %p212 = pneg %p141
      %p213 = pneg %p138
      %p214 = scmp.lt.s32.totalorder %s16, 1
      %s215 = scalar_select %p214, %s16, 1
      %s216 = smul.addr %s215, 8
      %s217 = scalar_lea.vmem %s4, %s216
      %p218 = scmp.lt.s32.totalorder %s16, 1
      %s219 = scalar_select %p218, %s16, 1
      %s220 = smul.addr %s219, 8
      %s221 = scalar_lea.vmem %s0, %s220
      %p222 = scmp.lt.s32.totalorder %s16, 1
      %s223 = scalar_select %p222, %s16, 1
      %s224 = smul.addr %s223, 8
      %s225 = scalar_lea.vmem %s1, %s224
      %p226 = scmp.lt.s32.totalorder %s16, 1
      %s227 = scalar_select %p226, %s16, 1
      %s228 = smul.addr %s227, 8
      %s229 = scalar_lea.vmem %s2, %s228
      %p230 = scmp.lt.s32.totalorder %s16, 1
      %s231 = scalar_select %p230, %s16, 1
      %s232 = smul.addr %s231, 8
      %s233 = scalar_lea.vmem %s3, %s232
      %p234 = scmp.lt.s32.totalorder %s16, 1
      %s235 = scalar_select %p234, %s16, 1
      %s236 = smul.addr %s235, 8
      %s237 = scalar_lea.vmem %s4, %s236
      %v238 = vld [vmem:[%s221] sm:$0xff]
      %v239 = vld [vmem:[%s225] sm:$0xff]
      %vm240 = vcmask 64512
      %v242 = vsel %vm240, %v238, 0
      %244 = vmatprep.subr.mxu0 0.0
      %245 = vmatpush1.msra.mxu0 %v239
      %246 = vmatprep.subr.mxu0 0.0
      %247 = vmatpush1.msra.mxu0 0.0
      %248 = vmatprep.subr.mxu0 0.0
      %249 = vmatpush1.msra.mxu0 0.0
      %250 = vmatprep.subr.mxu0 0.0
      %251 = vmatpush1.msra.mxu0 0.0
      %252 = vmatprep.subr.mxu0 0.0
      %253 = vmatpush1.msra.mxu0 0.0
      %254 = vmatprep.subr.mxu0 0.0
      %255 = vmatpush1.msra.mxu0 0.0
      %256 = vmatprep.subr.mxu0 0.0
      %257 = vmatpush1.msra.mxu0 0.0
      %258 = vmatprep.subr.mxu0 0.0
      %259 = vmatpush1.msra.mxu0 0.0
      %260 = vmatprep.subr.mxu0 0.0
      %261 = vmatpush1.msra.mxu0 0.0
      %262 = vmatprep.subr.mxu0 0.0
      %263 = vmatpush1.msra.mxu0 0.0
      %264 = vmatprep.subr.mxu0 0.0
      %265 = vmatpush1.msra.mxu0 0.0
      %266 = vmatprep.subr.mxu0 0.0
      %267 = vmatpush1.msra.mxu0 0.0
      %268 = vmatprep.subr.mxu0 0.0
      %269 = vmatpush1.msra.mxu0 0.0
      %270 = vmatprep.subr.mxu0 0.0
      %271 = vmatpush1.msra.mxu0 0.0
      %272 = vmatprep.subr.mxu0 0.0
      %273 = vmatpush1.msra.mxu0 0.0
      %274 = vmatprep.subr.mxu0 0.0
      %275 = vmatpush1.msra.mxu0 0.0
      %276 = vmatprep.subr.mxu0 0.0
      %277 = vmatpush1.msra.mxu0 0.0
      %278 = vmatprep.subr.mxu0 0.0
      %279 = vmatpush1.msra.mxu0 0.0
      %280 = vmatprep.subr.mxu0 0.0
      %281 = vmatpush1.msra.mxu0 0.0
      %282 = vmatprep.subr.mxu0 0.0
      %283 = vmatpush1.msra.mxu0 0.0
      %284 = vmatprep.subr.mxu0 0.0
      %285 = vmatpush1.msra.mxu0 0.0
      %286 = vmatprep.subr.mxu0 0.0
      %287 = vmatpush1.msra.mxu0 0.0
      %288 = vmatprep.subr.mxu0 0.0
      %289 = vmatpush1.msra.mxu0 0.0
      %290 = vmatprep.subr.mxu0 0.0
      %291 = vmatpush1.msra.mxu0 0.0
      %292 = vmatprep.subr.mxu0 0.0
      %293 = vmatpush1.msra.mxu0 0.0
      %294 = vmatprep.subr.mxu0 0.0
      %295 = vmatpush1.msra.mxu0 0.0
      %296 = vmatprep.subr.mxu0 0.0
      %297 = vmatpush1.msra.mxu0 0.0
      %298 = vmatprep.subr.mxu0 0.0
      %299 = vmatpush1.msra.mxu0 0.0
      %300 = vmatprep.subr.mxu0 0.0
      %301 = vmatpush1.msra.mxu0 0.0
      %302 = vmatprep.subr.mxu0 0.0
      %303 = vmatpush1.msra.mxu0 0.0
      %304 = vmatprep.subr.mxu0 0.0
      %305 = vmatpush1.msra.mxu0 0.0
      %306 = vmatprep.subr.mxu0 0.0
      %307 = vmatpush1.msra.mxu0 0.0
      %308 = vmatprep.mubr.f32.mxu0 0.0
      %309 = vmatmul.mubr.f32.gmra.mrb[0].mxu0 %v242
      %v310 = vpop.f32.mrb[0].mxu0
      %v311 = vadd.f32 0.0, %v310
      %v312 = vpop.f32.mrb[0].mxu0
      %313 = vdwg.mxu0
      %vm314 = vcmask 261120
      %315 = vst.msk [vmem:[%s233] sm:$0xff] %vm314, %v311
      %v316 = vld [vmem:[%s229] sm:$0xff]
      %317 = vmatprep.subr.mxu0 0.0
      %318 = vmatpush1.msra.mxu0 %v316
      %319 = vmatprep.subr.mxu0 0.0
      %320 = vmatpush1.msra.mxu0 0.0
      %321 = vmatprep.subr.mxu0 0.0
      %322 = vmatpush1.msra.mxu0 0.0
      %323 = vmatprep.subr.mxu0 0.0
      %324 = vmatpush1.msra.mxu0 0.0
      %325 = vmatprep.subr.mxu0 0.0
      %326 = vmatpush1.msra.mxu0 0.0
      %327 = vmatprep.subr.mxu0 0.0
      %328 = vmatpush1.msra.mxu0 0.0
      %329 = vmatprep.subr.mxu0 0.0
      %330 = vmatpush1.msra.mxu0 0.0
      %331 = vmatprep.subr.mxu0 0.0
      %332 = vmatpush1.msra.mxu0 0.0
      %333 = vmatprep.subr.mxu0 0.0
      %334 = vmatpush1.msra.mxu0 0.0
      %335 = vmatprep.subr.mxu0 0.0
      %336 = vmatpush1.msra.mxu0 0.0
      %337 = vmatprep.subr.mxu0 0.0
      %338 = vmatpush1.msra.mxu0 0.0
      %339 = vmatprep.subr.mxu0 0.0
      %340 = vmatpush1.msra.mxu0 0.0
      %341 = vmatprep.subr.mxu0 0.0
      %342 = vmatpush1.msra.mxu0 0.0
      %343 = vmatprep.subr.mxu0 0.0
      %344 = vmatpush1.msra.mxu0 0.0
      %345 = vmatprep.subr.mxu0 0.0
      %346 = vmatpush1.msra.mxu0 0.0
      %347 = vmatprep.subr.mxu0 0.0
      %348 = vmatpush1.msra.mxu0 0.0
      %349 = vmatprep.subr.mxu0 0.0
      %350 = vmatpush1.msra.mxu0 0.0
      %351 = vmatprep.subr.mxu0 0.0
      %352 = vmatpush1.msra.mxu0 0.0
      %353 = vmatprep.subr.mxu0 0.0
      %354 = vmatpush1.msra.mxu0 0.0
      %355 = vmatprep.subr.mxu0 0.0
      %356 = vmatpush1.msra.mxu0 0.0
      %357 = vmatprep.subr.mxu0 0.0
      %358 = vmatpush1.msra.mxu0 0.0
      %359 = vmatprep.subr.mxu0 0.0
      %360 = vmatpush1.msra.mxu0 0.0
      %361 = vmatprep.subr.mxu0 0.0
      %362 = vmatpush1.msra.mxu0 0.0
      %363 = vmatprep.subr.mxu0 0.0
      %364 = vmatpush1.msra.mxu0 0.0
      %365 = vmatprep.subr.mxu0 0.0
      %366 = vmatpush1.msra.mxu0 0.0
      %367 = vmatprep.subr.mxu0 0.0
      %368 = vmatpush1.msra.mxu0 0.0
      %369 = vmatprep.subr.mxu0 0.0
      %370 = vmatpush1.msra.mxu0 0.0
      %371 = vmatprep.subr.mxu0 0.0
      %372 = vmatpush1.msra.mxu0 0.0
      %373 = vmatprep.subr.mxu0 0.0
      %374 = vmatpush1.msra.mxu0 0.0
      %375 = vmatprep.subr.mxu0 0.0
      %376 = vmatpush1.msra.mxu0 0.0
      %377 = vmatprep.subr.mxu0 0.0
      %378 = vmatpush1.msra.mxu0 0.0
      %379 = vmatprep.subr.mxu0 0.0
      %380 = vmatpush1.msra.mxu0 0.0
      %381 = vmatprep.mubr.f32.mxu0 0.0
      %382 = vmatmul.mubr.f32.gmra.mrb[0].mxu0 %v242
      %v383 = vpop.f32.mrb[0].mxu0
      %v384 = vadd.f32 0.0, %v383
      %v385 = vpop.f32.mrb[0].mxu0
      %386 = vdwg.mxu0
      %387 = vst.msk [vmem:[%s237] sm:$0xff] %vm314, %v384
      %p388 = scmp.lt.s32.totalorder %s16, 1
      %s389 = scalar_select %p388, %s16, 1
      %s390 = smul.addr %s389, 8
      %s391 = scalar_lea.vmem %s3, %s390
      %p392 = scmp.lt.s32.totalorder %s16, 1
      %s393 = scalar_select %p392, %s16, 1
      %s394 = smul.addr %s393, 8
      %s395 = scalar_lea.vmem %s4, %s394
      // Predicated region
      $region33: #{core.4} parent=31 // pred_check
        %p396 = pneg %p112
      $region34: #{core.4} parent=31 // pred_check_branch
        %398 = sbr.rel (%p396) target = $region36
      $region35: #{core.4} parent=31 // pred_region
        _
      $region36: #{core.4} parent=31 // pred_fallthru
        _
      // Predicated region
      $region37: #{core.4} parent=31 // pred_check
        %p399 = pneg %p138
      $region38: #{core.4} parent=31 // pred_check_branch
        %401 = sbr.rel (%p399) target = $region40
      $region39: #{core.4} parent=31 // pred_region
        _
      $region40: #{core.4} parent=31 // pred_fallthru
        _
    $region32: #{core.4} parent=5 // pred_fallthru
      _
    %p402 = scmp.le.s32.totalorder 2, %s11
    // Predicated region
    $region41: #{core.4} parent=5 // pred_check
      %p403 = pneg %p402
    $region42: #{core.4} parent=5 // pred_check_branch
      %405 = sbr.rel (%p403) target = $region44
    $region43: #{core.4} parent=5 // pred_region
      %s406 = ssub.s32 %s11, 2
      // Predicated region
      $region45: #{core.4} parent=43 // pred_check
        %p407 = pneg %p118
      $region46: #{core.4} parent=43 // pred_check_branch
        %409 = sbr.rel (%p407) target = $region48
      $region47: #{core.4} parent=43 // pred_region
        %p410 = scmp.lt.s32.totalorder %s17, 1
        %s411 = scalar_select %p410, %s17, 1
        %s412 = smul.addr %s411, 8
        %s413 = scalar_lea.vmem %s3, %s412
      $region48: #{core.4} parent=43 // pred_fallthru
        _
      // Predicated region
      $region49: #{core.4} parent=43 // pred_check
        %p414 = pneg %p144
      $region50: #{core.4} parent=43 // pred_check_branch
        %416 = sbr.rel (%p414) target = $region52
      $region51: #{core.4} parent=43 // pred_region
        %p417 = scmp.lt.s32.totalorder %s17, 1
        %s418 = scalar_select %p417, %s17, 1
        %s419 = smul.addr %s418, 8
        %s420 = scalar_lea.vmem %s4, %s419
      $region52: #{core.4} parent=43 // pred_fallthru
        _
    $region44: #{core.4} parent=5 // pred_fallthru
      _
  $region6: #{core.4} parent=0 // loop_footer
    %s15 = sadd.s32 1, %s11
  $region7: #{core.4} parent=0 // loop_footer_branch
    %10 = sbr.rel target = $region3
  $region8: #{core.4} parent=0 // loop_exit
    _

// kernel: core.5
$region0: #{core.5}
  #allocation0 [shape = 'u32[]', space=smem, size = 0x4, offset = 0x4, fixed_abs, tag = 'smem constant byte address 0x4 - core index']
  #allocation1 [shape = 'u32[144,128]{1,0:T(1,128)}', space=vmem, size = 0x12000, scoped, tag = 'internal scratch']
  #allocation2 [shape = 'f32[1024,1]{1,0:T(8,128)}', space=vmem, size = 0x80000, scoped, tag = 'scratch operand']
  #allocation3 [shape = 's32[1]{0}', space=sflag, size = 0x4, scoped, tag = 'scoped memory for core.5']
  #allocation4 [shape = 'u8[512]{0}', space=smem, size = 0x200, scoped, tag = 'prefetched SMEM operand 0']
  #allocation5 [shape = 'u8[512]{0}', space=smem, size = 0x200, scoped, tag = 'prefetched SMEM operand 1']
  #allocation6 [shape = 'u8[512]{0}', space=smem, size = 0x200, scoped, tag = 'prefetched SMEM operand 2']
  %s0 = inlined_call_operand.vmem [shape: s32[2], index: 0, kind: input, shape index: {}]
  %s1 = inlined_call_operand.vmem [shape: s32[2], index: 1, kind: input, shape index: {}]
  %s2 = inlined_call_operand.vmem [shape: s32[2], index: 2, kind: input, shape index: {}]
  %s3 = inlined_call_operand.vmem [shape: f32[2,8,32], index: 3, kind: input, shape index: {}]
  %s4 = inlined_call_operand.vmem [shape: f32[2,8,32], index: 4, kind: input, shape index: {}]
  %s5 = inlined_call_operand.vmem [shape: f32[2,8,1], index: 5, kind: input, shape index: {}]
  %s6 = inlined_call_operand.vmem [shape: f32[2,32,1], index: 6, kind: input, shape index: {}]
  %s7 = inlined_call_operand.vmem [shape: f32[1024,32], index: 7, kind: input, shape index: {}]
  %s8 = inlined_call_operand.vmem [shape: f32[1024,32], index: 8, kind: input, shape index: {}]
  %s9 = inlined_call_operand.vmem [shape: f32[1024,1], index: 9, kind: input, shape index: {}]
  %s10 = inlined_call_operand.vmem [shape: f32[1024,32], index: 10, kind: output, shape index: {0}]
  %s11 = inlined_call_operand.vmem [shape: f32[1024,32], index: 11, kind: output, shape index: {1}]
  %s12 = inlined_call_operand.vmem [shape: f32[1024,1], index: 12, kind: output, shape index: {2}]
  %s13 = inlined_call_operand.vmem [shape: f32[2,1024,1], index: 13, kind: output, shape index: {3}]
  %14 = xla_tuple %s10, %s11, %s12, %s13
  %s15 = sld [smem:[#allocation0]]
  $region121: #{core.5} parent=0
    _
  %s17 = ssub.s32 1, %s15
  %s18 = scalar_select 0, %s17, %s15
  %s19 = sshll.u32 %s0, 4
  %s20 = int_to_ptr.vmem [resolvable:$true] %s19
  %22 = dma.vmem_to_smem %s20, 16, [#allocation4], [#allocation3]
  %s23 = sshll.u32 %s1, 4
  %s24 = int_to_ptr.vmem [resolvable:$true] %s23
  %26 = dma.vmem_to_smem %s24, 16, [#allocation5], [#allocation3]
  %s27 = sshll.u32 %s2, 4
  %s28 = int_to_ptr.vmem [resolvable:$true] %s27
  %30 = dma.vmem_to_smem %s28, 16, [#allocation6], [#allocation3]
  %31 = dma.done [#allocation3], 48
  %32 = sfence
  loop: start=0, step=1, limit=4
  $region2: #{core.5} parent=0 // loop_pre_header
    _
  $region3: #{core.5} parent=0 // loop_header
    %s34 = sphi 0, %s38
    %p35 = scmp.ge.s32.totalorder %s34, 4
    %s44 = sphi 0, %s46
    %s47 = sphi 0, %s44
    %s48 = sphi 0, %s47
    %s64 = sphi 0, %s48
    %s70 = sphi 0, %s72
    %s73 = sphi 0, %s70
    %s74 = sphi 0, %s73
    %s90 = sphi 0, %s74
    %s96 = sphi 0, %s98
    %s99 = sphi 0, %s96
    %s100 = sphi 0, %s99
    %s116 = sphi 0, %s100
    %s122 = sphi 0, %s124
    %s125 = sphi 0, %s122
    %s126 = sphi 0, %s125
    %s142 = sphi 0, %s126
    %s146 = sphi 0, %s146
    %s148 = sphi 0, %s146
    %s149 = sphi 0, %s148
    %s163 = sphi 0, %s149
    %s167 = sphi 0, %s167
    %s169 = sphi 0, %s167
    %s170 = sphi 0, %s169
    %s184 = sphi 0, %s170
    %s188 = sphi 0, %s188
    %s190 = sphi 0, %s188
    %s191 = sphi 0, %s190
    %s205 = sphi 0, %s191
    %s209 = sphi 0, %s209
    %s211 = sphi 0, %s209
    %s212 = sphi 0, %s211
    %s226 = sphi 0, %s212
    %s230 = sphi 0, %s230
    %s232 = sphi 0, %s230
    %s233 = sphi 0, %s232
    %s247 = sphi 0, %s233
    %s251 = sphi 0, %s251
    %s253 = sphi 0, %s251
    %s254 = sphi 0, %s253
    %s268 = sphi 0, %s254
    %s274 = sphi 0, %s276
    %s277 = sphi 0, %s274
    %s278 = sphi 0, %s277
    %s294 = sphi 0, %s278
  $region4: #{core.5} parent=0 // loop_header_branch
    %37 = sbr.rel (%p35) target = $region8
  $region5: #{core.5} parent=0 // loop_body
    %s39 = ssub.s32 %s34, 1
    %s40 = ssub.s32 %s34, 2
    %s41 = sadd.s32 %s34, 1
    %s42 = ssub.s32 %s34, %s41
    %p43 = scmp.eq.s32.totalorder %s42, 0
    %s45 = sadd.s32 %s44, 1
    %s46 = scalar_select %p43, %s44, %s45
    %p49 = pneg %p43
    %p50 = scmp.eq.s32.totalorder %s34, 1
    %p51 = por %p49, %p50
    %p52 = scmp.ne.s32.totalorder %s44, %s47
    %p53 = scmp.eq.s32.totalorder %s34, 0
    %p54 = por %p52, %p53
    %p55 = scmp.ne.s32.totalorder %s44, %s47
    %p56 = scmp.eq.s32.totalorder %s39, 1
    %p57 = por %p55, %p56
    %p58 = scmp.ne.s32.totalorder %s47, %s48
    %p59 = scmp.eq.s32.totalorder %s39, 0
    %p60 = por %p58, %p59
    %p61 = scmp.ne.s32.totalorder %s47, %s48
    %p62 = scmp.eq.s32.totalorder %s40, 1
    %p63 = por %p61, %p62
    %p65 = scmp.ne.s32.totalorder %s48, %s64
    %p66 = scmp.eq.s32.totalorder %s40, 0
    %p67 = por %p65, %p66
    %s68 = ssub.s32 %s34, %s41
    %p69 = scmp.eq.s32.totalorder %s68, 0
    %s71 = sadd.s32 %s70, 1
    %s72 = scalar_select %p69, %s70, %s71
    %p75 = pneg %p69
    %p76 = scmp.eq.s32.totalorder %s34, 1
    %p77 = por %p75, %p76
    %p78 = scmp.ne.s32.totalorder %s70, %s73
    %p79 = scmp.eq.s32.totalorder %s34, 0
    %p80 = por %p78, %p79
    %p81 = scmp.ne.s32.totalorder %s70, %s73
    %p82 = scmp.eq.s32.totalorder %s39, 1
    %p83 = por %p81, %p82
    %p84 = scmp.ne.s32.totalorder %s73, %s74
    %p85 = scmp.eq.s32.totalorder %s39, 0
    %p86 = por %p84, %p85
    %p87 = scmp.ne.s32.totalorder %s73, %s74
    %p88 = scmp.eq.s32.totalorder %s40, 1
    %p89 = por %p87, %p88
    %p91 = scmp.ne.s32.totalorder %s74, %s90
    %p92 = scmp.eq.s32.totalorder %s40, 0
    %p93 = por %p91, %p92
    %s94 = ssub.s32 %s34, %s41
    %p95 = scmp.eq.s32.totalorder %s94, 0
    %s97 = sadd.s32 %s96, 1
    %s98 = scalar_select %p95, %s96, %s97
    %p101 = pneg %p95
    %p102 = scmp.eq.s32.totalorder %s34, 1
    %p103 = por %p101, %p102
    %p104 = scmp.ne.s32.totalorder %s96, %s99
    %p105 = scmp.eq.s32.totalorder %s34, 0
    %p106 = por %p104, %p105
    %p107 = scmp.ne.s32.totalorder %s96, %s99
    %p108 = scmp.eq.s32.totalorder %s39, 1
    %p109 = por %p107, %p108
    %p110 = scmp.ne.s32.totalorder %s99, %s100
    %p111 = scmp.eq.s32.totalorder %s39, 0
    %p112 = por %p110, %p111
    %p113 = scmp.ne.s32.totalorder %s99, %s100
    %p114 = scmp.eq.s32.totalorder %s40, 1
    %p115 = por %p113, %p114
    %p117 = scmp.ne.s32.totalorder %s100, %s116
    %p118 = scmp.eq.s32.totalorder %s40, 0
    %p119 = por %p117, %p118
    %s120 = ssub.s32 %s34, %s41
    %p121 = scmp.eq.s32.totalorder %s120, 0
    %s123 = sadd.s32 %s122, 1
    %s124 = scalar_select %p121, %s122, %s123
    %p127 = pneg %p121
    %p128 = scmp.eq.s32.totalorder %s34, 1
    %p129 = por %p127, %p128
    %p130 = scmp.ne.s32.totalorder %s122, %s125
    %p131 = scmp.eq.s32.totalorder %s34, 0
    %p132 = por %p130, %p131
    %p133 = scmp.ne.s32.totalorder %s122, %s125
    %p134 = scmp.eq.s32.totalorder %s39, 1
    %p135 = por %p133, %p134
    %p136 = scmp.ne.s32.totalorder %s125, %s126
    %p137 = scmp.eq.s32.totalorder %s39, 0
    %p138 = por %p136, %p137
    %p139 = scmp.ne.s32.totalorder %s125, %s126
    %p140 = scmp.eq.s32.totalorder %s40, 1
    %p141 = por %p139, %p140
    %p143 = scmp.ne.s32.totalorder %s126, %s142
    %p144 = scmp.eq.s32.totalorder %s40, 0
    %p145 = por %p143, %p144
    %s147 = sadd.s32 %s146, 1
    %p150 = scmp.eq.s32.totalorder %s34, 1
    %p151 = scmp.ne.s32.totalorder %s146, %s148
    %p152 = scmp.eq.s32.totalorder %s34, 0
    %p153 = por %p151, %p152
    %p154 = scmp.ne.s32.totalorder %s146, %s148
    %p155 = scmp.eq.s32.totalorder %s39, 1
    %p156 = por %p154, %p155
    %p157 = scmp.ne.s32.totalorder %s148, %s149
    %p158 = scmp.eq.s32.totalorder %s39, 0
    %p159 = por %p157, %p158
    %p160 = scmp.ne.s32.totalorder %s148, %s149
    %p161 = scmp.eq.s32.totalorder %s40, 1
    %p162 = por %p160, %p161
    %p164 = scmp.ne.s32.totalorder %s149, %s163
    %p165 = scmp.eq.s32.totalorder %s40, 0
    %p166 = por %p164, %p165
    %s168 = sadd.s32 %s167, 1
    %p171 = scmp.eq.s32.totalorder %s34, 1
    %p172 = scmp.ne.s32.totalorder %s167, %s169
    %p173 = scmp.eq.s32.totalorder %s34, 0
    %p174 = por %p172, %p173
    %p175 = scmp.ne.s32.totalorder %s167, %s169
    %p176 = scmp.eq.s32.totalorder %s39, 1
    %p177 = por %p175, %p176
    %p178 = scmp.ne.s32.totalorder %s169, %s170
    %p179 = scmp.eq.s32.totalorder %s39, 0
    %p180 = por %p178, %p179
    %p181 = scmp.ne.s32.totalorder %s169, %s170
    %p182 = scmp.eq.s32.totalorder %s40, 1
    %p183 = por %p181, %p182
    %p185 = scmp.ne.s32.totalorder %s170, %s184
    %p186 = scmp.eq.s32.totalorder %s40, 0
    %p187 = por %p185, %p186
    %s189 = sadd.s32 %s188, 1
    %p192 = scmp.eq.s32.totalorder %s34, 1
    %p193 = scmp.ne.s32.totalorder %s188, %s190
    %p194 = scmp.eq.s32.totalorder %s34, 0
    %p195 = por %p193, %p194
    %p196 = scmp.ne.s32.totalorder %s188, %s190
    %p197 = scmp.eq.s32.totalorder %s39, 1
    %p198 = por %p196, %p197
    %p199 = scmp.ne.s32.totalorder %s190, %s191
    %p200 = scmp.eq.s32.totalorder %s39, 0
    %p201 = por %p199, %p200
    %p202 = scmp.ne.s32.totalorder %s190, %s191
    %p203 = scmp.eq.s32.totalorder %s40, 1
    %p204 = por %p202, %p203
    %p206 = scmp.ne.s32.totalorder %s191, %s205
    %p207 = scmp.eq.s32.totalorder %s40, 0
    %p208 = por %p206, %p207
    %s210 = sadd.s32 %s209, 1
    %p213 = scmp.eq.s32.totalorder %s34, 1
    %p214 = scmp.ne.s32.totalorder %s209, %s211
    %p215 = scmp.eq.s32.totalorder %s34, 0
    %p216 = por %p214, %p215
    %p217 = scmp.ne.s32.totalorder %s209, %s211
    %p218 = scmp.eq.s32.totalorder %s39, 1
    %p219 = por %p217, %p218
    %p220 = scmp.ne.s32.totalorder %s211, %s212
    %p221 = scmp.eq.s32.totalorder %s39, 0
    %p222 = por %p220, %p221
    %p223 = scmp.ne.s32.totalorder %s211, %s212
    %p224 = scmp.eq.s32.totalorder %s40, 1
    %p225 = por %p223, %p224
    %p227 = scmp.ne.s32.totalorder %s212, %s226
    %p228 = scmp.eq.s32.totalorder %s40, 0
    %p229 = por %p227, %p228
    %s231 = sadd.s32 %s230, 1
    %p234 = scmp.eq.s32.totalorder %s34, 1
    %p235 = scmp.ne.s32.totalorder %s230, %s232
    %p236 = scmp.eq.s32.totalorder %s34, 0
    %p237 = por %p235, %p236
    %p238 = scmp.ne.s32.totalorder %s230, %s232
    %p239 = scmp.eq.s32.totalorder %s39, 1
    %p240 = por %p238, %p239
    %p241 = scmp.ne.s32.totalorder %s232, %s233
    %p242 = scmp.eq.s32.totalorder %s39, 0
    %p243 = por %p241, %p242
    %p244 = scmp.ne.s32.totalorder %s232, %s233
    %p245 = scmp.eq.s32.totalorder %s40, 1
    %p246 = por %p244, %p245
    %p248 = scmp.ne.s32.totalorder %s233, %s247
    %p249 = scmp.eq.s32.totalorder %s40, 0
    %p250 = por %p248, %p249
    %s252 = sadd.s32 %s251, 1
    %p255 = scmp.eq.s32.totalorder %s34, 1
    %p256 = scmp.ne.s32.totalorder %s251, %s253
    %p257 = scmp.eq.s32.totalorder %s34, 0
    %p258 = por %p256, %p257
    %p259 = scmp.ne.s32.totalorder %s251, %s253
    %p260 = scmp.eq.s32.totalorder %s39, 1
    %p261 = por %p259, %p260
    %p262 = scmp.ne.s32.totalorder %s253, %s254
    %p263 = scmp.eq.s32.totalorder %s39, 0
    %p264 = por %p262, %p263
    %p265 = scmp.ne.s32.totalorder %s253, %s254
    %p266 = scmp.eq.s32.totalorder %s40, 1
    %p267 = por %p265, %p266
    %p269 = scmp.ne.s32.totalorder %s254, %s268
    %p270 = scmp.eq.s32.totalorder %s40, 0
    %p271 = por %p269, %p270
    %s272 = ssub.s32 %s34, %s41
    %p273 = scmp.eq.s32.totalorder %s272, 0
    %s275 = sadd.s32 %s274, 1
    %s276 = scalar_select %p273, %s274, %s275
    %p279 = pneg %p273
    %p280 = scmp.eq.s32.totalorder %s34, 1
    %p281 = por %p279, %p280
    %p282 = scmp.ne.s32.totalorder %s274, %s277
    %p283 = scmp.eq.s32.totalorder %s34, 0
    %p284 = por %p282, %p283
    %p285 = scmp.ne.s32.totalorder %s274, %s277
    %p286 = scmp.eq.s32.totalorder %s39, 1
    %p287 = por %p285, %p286
    %p288 = scmp.ne.s32.totalorder %s277, %s278
    %p289 = scmp.eq.s32.totalorder %s39, 0
    %p290 = por %p288, %p289
    %p291 = scmp.ne.s32.totalorder %s277, %s278
    %p292 = scmp.eq.s32.totalorder %s40, 1
    %p293 = por %p291, %p292
    %p295 = scmp.ne.s32.totalorder %s278, %s294
    %p296 = scmp.eq.s32.totalorder %s40, 0
    %p297 = por %p295, %p296
    %p298 = scmp.le.s32.totalorder 1, %s34
    %p299 = scmp.lt.s32.totalorder %s34, 3
    %p300 = pnand %p298, %p299
    %p301 = pneg %p300
    // Predicated region
    $region9: #{core.5} parent=5 // pred_check
      _
    $region10: #{core.5} parent=5 // pred_check_branch
      %303 = sbr.rel (%p300) target = $region12
    $region11: #{core.5} parent=5 // pred_region
      %s304 = ssub.s32 %s34, 1
      // Predicated region
      $region13: #{core.5} parent=11 // pred_check
        %p305 = pneg %p159
      $region14: #{core.5} parent=11 // pred_check_branch
        %307 = sbr.rel (%p305) target = $region16
      $region15: #{core.5} parent=11 // pred_region
        _
      $region16: #{core.5} parent=11 // pred_fallthru
        _
      // Predicated region
      $region17: #{core.5} parent=11 // pred_check
        %p308 = pneg %p180
      $region18: #{core.5} parent=11 // pred_check_branch
        %310 = sbr.rel (%p308) target = $region20
      $region19: #{core.5} parent=11 // pred_region
        _
      $region20: #{core.5} parent=11 // pred_fallthru
        _
      // Predicated region
      $region21: #{core.5} parent=11 // pred_check
        %p311 = pneg %p201
      $region22: #{core.5} parent=11 // pred_check_branch
        %313 = sbr.rel (%p311) target = $region24
      $region23: #{core.5} parent=11 // pred_region
        _
      $region24: #{core.5} parent=11 // pred_fallthru
        _
    $region12: #{core.5} parent=5 // pred_fallthru
      _
    %p314 = scmp.lt.s32.totalorder %s34, 2
    // Predicated region
    $region25: #{core.5} parent=5 // pred_check
      %p315 = pneg %p314
    $region26: #{core.5} parent=5 // pred_check_branch
      %317 = sbr.rel (%p315) target = $region28
    $region27: #{core.5} parent=5 // pred_region
      // Predicated region
      $region29: #{core.5} parent=27 // pred_check
        %p318 = pneg %p54
      $region30: #{core.5} parent=27 // pred_check_branch
        %320 = sbr.rel (%p318) target = $region32
      $region31: #{core.5} parent=27 // pred_region
        %p321 = scmp.lt.s32.totalorder %s34, 1
        %s322 = scalar_select %p321, %s34, 1
        %s323 = smul.addr %s322, 8
        %s324 = scalar_lea.vmem %s3, %s323
      $region32: #{core.5} parent=27 // pred_fallthru
        _
      // Predicated region
      $region33: #{core.5} parent=27 // pred_check
        %p325 = pneg %p80
      $region34: #{core.5} parent=27 // pred_check_branch
        %327 = sbr.rel (%p325) target = $region36
      $region35: #{core.5} parent=27 // pred_region
        %p328 = scmp.lt.s32.totalorder %s34, 1
        %s329 = scalar_select %p328, %s34, 1
        %s330 = smul.addr %s329, 8
        %s331 = scalar_lea.vmem %s4, %s330
      $region36: #{core.5} parent=27 // pred_fallthru
        _
      // Predicated region
      $region37: #{core.5} parent=27 // pred_check
        %p332 = pneg %p106
      $region38: #{core.5} parent=27 // pred_check_branch
        %334 = sbr.rel (%p332) target = $region40
      $region39: #{core.5} parent=27 // pred_region
        %p335 = scmp.lt.s32.totalorder %s34, 1
        %s336 = scalar_select %p335, %s34, 1
        %s337 = smul.addr %s336, 8
        %s338 = scalar_lea.vmem %s5, %s337
      $region40: #{core.5} parent=27 // pred_fallthru
        _
      // Predicated region
      $region41: #{core.5} parent=27 // pred_check
        %p339 = pneg %p132
      $region42: #{core.5} parent=27 // pred_check_branch
        %341 = sbr.rel (%p339) target = $region44
      $region43: #{core.5} parent=27 // pred_region
        %p342 = scmp.lt.s32.totalorder %s34, 1
        %s343 = scalar_select %p342, %s34, 1
        %s344 = smul.addr %s343, 4
        %s345 = smul.addr %s344, 8
        %s346 = scalar_lea.vmem %s6, %s345
      $region44: #{core.5} parent=27 // pred_fallthru
        _
    $region28: #{core.5} parent=5 // pred_fallthru
      _
    %p347 = scmp.le.s32.totalorder 1, %s34
    %p348 = scmp.lt.s32.totalorder %s34, 3
    %p349 = pnand %p347, %p348
    %p350 = pneg %p349
    // Predicated region
    $region45: #{core.5} parent=5 // pred_check
      _
    $region46: #{core.5} parent=5 // pred_check_branch
      %352 = sbr.rel (%p349) target = $region48
    $region47: #{core.5} parent=5 // pred_region
      %s353 = ssub.s32 %s34, 1
      %p354 = scmp.lt.s32.totalorder %s39, 1
      %s355 = scalar_select %p354, %s39, 1
      %s356 = smul.addr %s355, 8
      %s357 = scalar_lea.vmem %s3, %s356
      %p358 = pneg %p60
      %p359 = pneg %p57
      %p360 = scmp.lt.s32.totalorder %s39, 1
      %s361 = scalar_select %p360, %s39, 1
      %s362 = smul.addr %s361, 8
      %s363 = scalar_lea.vmem %s4, %s362
      %p364 = pneg %p86
      %p365 = pneg %p83
      %p366 = scmp.lt.s32.totalorder %s39, 1
      %s367 = scalar_select %p366, %s39, 1
      %s368 = smul.addr %s367, 8
      %s369 = scalar_lea.vmem %s5, %s368
      %p370 = pneg %p112
      %p371 = pneg %p109
      %p372 = scmp.lt.s32.totalorder %s39, 1
      %s373 = scalar_select %p372, %s39, 1
      %s374 = smul.addr %s373, 4
      %s375 = smul.addr %s374, 8
      %s376 = scalar_lea.vmem %s6, %s375
      %p377 = pneg %p138
      %p378 = pneg %p135
      %p379 = pneg %p159
      %p380 = pneg %p156
      %p381 = pneg %p180
      %p382 = pneg %p177
      %p383 = pneg %p201
      %p384 = pneg %p198
      %p385 = pneg %p222
      %p386 = pneg %p219
      %p387 = pneg %p243
      %p388 = pneg %p240
      %p389 = pneg %p264
      %p390 = pneg %p261
      %p391 = pneg %p290
      %p392 = pneg %p287
      %p393 = scmp.lt.s32.totalorder %s39, 1
      %s394 = scalar_select %p393, %s39, 1
      %s395 = smul.addr %s394, 128
      %s396 = smul.addr %s395, 8
      %s397 = scalar_lea.vmem %s13, %s396
      %p398 = scmp.lt.s32.totalorder %s39, 1
      %s399 = scalar_select %p398, %s39, 1
      %s400 = smul.addr %s399, 8
      %s401 = scalar_lea.vmem %s3, %s400
      %p402 = scmp.lt.s32.totalorder %s39, 1
      %s403 = scalar_select %p402, %s39, 1
      %s404 = smul.addr %s403, 8
      %s405 = scalar_lea.vmem %s4, %s404
      %p406 = scmp.lt.s32.totalorder %s39, 1
      %s407 = scalar_select %p406, %s39, 1
      %s408 = smul.addr %s407, 8
      %s409 = scalar_lea.vmem %s5, %s408
      %p410 = scmp.lt.s32.totalorder %s39, 1
      %s411 = scalar_select %p410, %s39, 1
      %s412 = smul.addr %s411, 4
      %s413 = smul.addr %s412, 8
      %s414 = scalar_lea.vmem %s6, %s413
      %p415 = scmp.lt.s32.totalorder %s39, 1
      %s416 = scalar_select %p415, %s39, 1
      %s417 = smul.addr %s416, 128
      %s418 = smul.addr %s417, 8
      %s419 = scalar_lea.vmem %s13, %s418
      %p420 = scmp.eq.s32.totalorder %s39, 0
      // Predicated region
      $region49: #{core.5} parent=47 // pred_check
        %p421 = pneg %p420
      $region50: #{core.5} parent=47 // pred_check_branch
        %423 = sbr.rel (%p421) target = $region52
      $region51: #{core.5} parent=47 // pred_region
        %v424 = vld [vmem:[%s7] sm:$0xff]
        %v425 = vld [vmem:[%s7 + $0x8] sm:$0xff]
        %v426 = vld [vmem:[%s7 + $0x10] sm:$0xff]
        %v427 = vld [vmem:[%s7 + $0x18] sm:$0xff]
        %v428 = vld [vmem:[%s7 + $0x20] sm:$0xff]
        %v429 = vld [vmem:[%s7 + $0x28] sm:$0xff]
        %v430 = vld [vmem:[%s7 + $0x30] sm:$0xff]
        %v431 = vld [vmem:[%s7 + $0x38] sm:$0xff]
        %v432 = vld [vmem:[%s7 + $0x40] sm:$0xff]
        %v433 = vld [vmem:[%s7 + $0x48] sm:$0xff]
        %v434 = vld [vmem:[%s7 + $0x50] sm:$0xff]
        %v435 = vld [vmem:[%s7 + $0x58] sm:$0xff]
        %v436 = vld [vmem:[%s7 + $0x60] sm:$0xff]
        %v437 = vld [vmem:[%s7 + $0x68] sm:$0xff]
        %v438 = vld [vmem:[%s7 + $0x70] sm:$0xff]
        %v439 = vld [vmem:[%s7 + $0x78] sm:$0xff]
        %v440 = vld [vmem:[%s7 + $0x80] sm:$0xff]
        %v441 = vld [vmem:[%s7 + $0x88] sm:$0xff]
        %v442 = vld [vmem:[%s7 + $0x90] sm:$0xff]
        %v443 = vld [vmem:[%s7 + $0x98] sm:$0xff]
        %v444 = vld [vmem:[%s7 + $0xa0] sm:$0xff]
        %v445 = vld [vmem:[%s7 + $0xa8] sm:$0xff]
        %v446 = vld [vmem:[%s7 + $0xb0] sm:$0xff]
        %v447 = vld [vmem:[%s7 + $0xb8] sm:$0xff]
        %v448 = vld [vmem:[%s7 + $0xc0] sm:$0xff]
        %v449 = vld [vmem:[%s7 + $0xc8] sm:$0xff]
        %v450 = vld [vmem:[%s7 + $0xd0] sm:$0xff]
        %v451 = vld [vmem:[%s7 + $0xd8] sm:$0xff]
        %v452 = vld [vmem:[%s7 + $0xe0] sm:$0xff]
        %v453 = vld [vmem:[%s7 + $0xe8] sm:$0xff]
        %v454 = vld [vmem:[%s7 + $0xf0] sm:$0xff]
        %v455 = vld [vmem:[%s7 + $0xf8] sm:$0xff]
        %v456 = vld [vmem:[%s7 + $0x100] sm:$0xff]
        %v457 = vld [vmem:[%s7 + $0x108] sm:$0xff]
        %v458 = vld [vmem:[%s7 + $0x110] sm:$0xff]
        %v459 = vld [vmem:[%s7 + $0x118] sm:$0xff]
        %v460 = vld [vmem:[%s7 + $0x120] sm:$0xff]
        %v461 = vld [vmem:[%s7 + $0x128] sm:$0xff]
        %v462 = vld [vmem:[%s7 + $0x130] sm:$0xff]
        %v463 = vld [vmem:[%s7 + $0x138] sm:$0xff]
        %v464 = vld [vmem:[%s7 + $0x140] sm:$0xff]
        %v465 = vld [vmem:[%s7 + $0x148] sm:$0xff]
        %v466 = vld [vmem:[%s7 + $0x150] sm:$0xff]
        %v467 = vld [vmem:[%s7 + $0x158] sm:$0xff]
        %v468 = vld [vmem:[%s7 + $0x160] sm:$0xff]
        %v469 = vld [vmem:[%s7 + $0x168] sm:$0xff]
        %v470 = vld [vmem:[%s7 + $0x170] sm:$0xff]
        %v471 = vld [vmem:[%s7 + $0x178] sm:$0xff]
        %v472 = vld [vmem:[%s7 + $0x180] sm:$0xff]
        %v473 = vld [vmem:[%s7 + $0x188] sm:$0xff]
        %v474 = vld [vmem:[%s7 + $0x190] sm:$0xff]
        %v475 = vld [vmem:[%s7 + $0x198] sm:$0xff]
        %v476 = vld [vmem:[%s7 + $0x1a0] sm:$0xff]
        %v477 = vld [vmem:[%s7 + $0x1a8] sm:$0xff]
        %v478 = vld [vmem:[%s7 + $0x1b0] sm:$0xff]
        %v479 = vld [vmem:[%s7 + $0x1b8] sm:$0xff]
        %v480 = vld [vmem:[%s7 + $0x1c0] sm:$0xff]
        %v481 = vld [vmem:[%s7 + $0x1c8] sm:$0xff]
        %v482 = vld [vmem:[%s7 + $0x1d0] sm:$0xff]
        %v483 = vld [vmem:[%s7 + $0x1d8] sm:$0xff]
        %v484 = vld [vmem:[%s7 + $0x1e0] sm:$0xff]
        %v485 = vld [vmem:[%s7 + $0x1e8] sm:$0xff]
        %v486 = vld [vmem:[%s7 + $0x1f0] sm:$0xff]
        %v487 = vld [vmem:[%s7 + $0x1f8] sm:$0xff]
        %v488 = vld [vmem:[%s7 + $0x200] sm:$0xff]
        %v489 = vld [vmem:[%s7 + $0x208] sm:$0xff]
        %v490 = vld [vmem:[%s7 + $0x210] sm:$0xff]
        %v491 = vld [vmem:[%s7 + $0x218] sm:$0xff]
        %v492 = vld [vmem:[%s7 + $0x220] sm:$0xff]
        %v493 = vld [vmem:[%s7 + $0x228] sm:$0xff]
        %v494 = vld [vmem:[%s7 + $0x230] sm:$0xff]
        %v495 = vld [vmem:[%s7 + $0x238] sm:$0xff]
        %v496 = vld [vmem:[%s7 + $0x240] sm:$0xff]
        %v497 = vld [vmem:[%s7 + $0x248] sm:$0xff]
        %v498 = vld [vmem:[%s7 + $0x250] sm:$0xff]
        %v499 = vld [vmem:[%s7 + $0x258] sm:$0xff]
        %v500 = vld [vmem:[%s7 + $0x260] sm:$0xff]
        %v501 = vld [vmem:[%s7 + $0x268] sm:$0xff]
        %v502 = vld [vmem:[%s7 + $0x270] sm:$0xff]
        %v503 = vld [vmem:[%s7 + $0x278] sm:$0xff]
        %v504 = vld [vmem:[%s7 + $0x280] sm:$0xff]
        %v505 = vld [vmem:[%s7 + $0x288] sm:$0xff]
        %v506 = vld [vmem:[%s7 + $0x290] sm:$0xff]
        %v507 = vld [vmem:[%s7 + $0x298] sm:$0xff]
        %v508 = vld [vmem:[%s7 + $0x2a0] sm:$0xff]
        %v509 = vld [vmem:[%s7 + $0x2a8] sm:$0xff]
        %v510 = vld [vmem:[%s7 + $0x2b0] sm:$0xff]
        %v511 = vld [vmem:[%s7 + $0x2b8] sm:$0xff]
        %v512 = vld [vmem:[%s7 + $0x2c0] sm:$0xff]
        %v513 = vld [vmem:[%s7 + $0x2c8] sm:$0xff]
        %v514 = vld [vmem:[%s7 + $0x2d0] sm:$0xff]
        %v515 = vld [vmem:[%s7 + $0x2d8] sm:$0xff]
        %v516 = vld [vmem:[%s7 + $0x2e0] sm:$0xff]
        %v517 = vld [vmem:[%s7 + $0x2e8] sm:$0xff]
        %v518 = vld [vmem:[%s7 + $0x2f0] sm:$0xff]
        %v519 = vld [vmem:[%s7 + $0x2f8] sm:$0xff]
        %v520 = vld [vmem:[%s7 + $0x300] sm:$0xff]
        %v521 = vld [vmem:[%s7 + $0x308] sm:$0xff]
        %v522 = vld [vmem:[%s7 + $0x310] sm:$0xff]
        %v523 = vld [vmem:[%s7 + $0x318] sm:$0xff]
        %v524 = vld [vmem:[%s7 + $0x320] sm:$0xff]
        %v525 = vld [vmem:[%s7 + $0x328] sm:$0xff]
        %v526 = vld [vmem:[%s7 + $0x330] sm:$0xff]
        %v527 = vld [vmem:[%s7 + $0x338] sm:$0xff]
        %v528 = vld [vmem:[%s7 + $0x340] sm:$0xff]
        %v529 = vld [vmem:[%s7 + $0x348] sm:$0xff]
        %v530 = vld [vmem:[%s7 + $0x350] sm:$0xff]
        %v531 = vld [vmem:[%s7 + $0x358] sm:$0xff]
        %v532 = vld [vmem:[%s7 + $0x360] sm:$0xff]
        %v533 = vld [vmem:[%s7 + $0x368] sm:$0xff]
        %v534 = vld [vmem:[%s7 + $0x370] sm:$0xff]
        %v535 = vld [vmem:[%s7 + $0x378] sm:$0xff]
        %v536 = vld [vmem:[%s7 + $0x380] sm:$0xff]
        %v537 = vld [vmem:[%s7 + $0x388] sm:$0xff]
        %v538 = vld [vmem:[%s7 + $0x390] sm:$0xff]
        %v539 = vld [vmem:[%s7 + $0x398] sm:$0xff]
        %v540 = vld [vmem:[%s7 + $0x3a0] sm:$0xff]
        %v541 = vld [vmem:[%s7 + $0x3a8] sm:$0xff]
        %v542 = vld [vmem:[%s7 + $0x3b0] sm:$0xff]
        %v543 = vld [vmem:[%s7 + $0x3b8] sm:$0xff]
        %v544 = vld [vmem:[%s7 + $0x3c0] sm:$0xff]
        %v545 = vld [vmem:[%s7 + $0x3c8] sm:$0xff]
        %v546 = vld [vmem:[%s7 + $0x3d0] sm:$0xff]
        %v547 = vld [vmem:[%s7 + $0x3d8] sm:$0xff]
        %v548 = vld [vmem:[%s7 + $0x3e0] sm:$0xff]
        %v549 = vld [vmem:[%s7 + $0x3e8] sm:$0xff]
        %v550 = vld [vmem:[%s7 + $0x3f0] sm:$0xff]
        %v551 = vld [vmem:[%s7 + $0x3f8] sm:$0xff]
        %vm552 = vcmask 261120
        %553 = vst.msk [vmem:[%s10] sm:$0xff] %vm552, %v424
        %554 = vst.msk [vmem:[%s10 + $0x8] sm:$0xff] %vm552, %v425
        %555 = vst.msk [vmem:[%s10 + $0x10] sm:$0xff] %vm552, %v426
        %556 = vst.msk [vmem:[%s10 + $0x18] sm:$0xff] %vm552, %v427
        %557 = vst.msk [vmem:[%s10 + $0x20] sm:$0xff] %vm552, %v428
        %558 = vst.msk [vmem:[%s10 + $0x28] sm:$0xff] %vm552, %v429
        %559 = vst.msk [vmem:[%s10 + $0x30] sm:$0xff] %vm552, %v430
        %560 = vst.msk [vmem:[%s10 + $0x38] sm:$0xff] %vm552, %v431
        %561 = vst.msk [vmem:[%s10 + $0x40] sm:$0xff] %vm552, %v432
        %562 = vst.msk [vmem:[%s10 + $0x48] sm:$0xff] %vm552, %v433
        %563 = vst.msk [vmem:[%s10 + $0x50] sm:$0xff] %vm552, %v434
        %564 = vst.msk [vmem:[%s10 + $0x58] sm:$0xff] %vm552, %v435
        %565 = vst.msk [vmem:[%s10 + $0x60] sm:$0xff] %vm552, %v436
        %566 = vst.msk [vmem:[%s10 + $0x68] sm:$0xff] %vm552, %v437
        %567 = vst.msk [vmem:[%s10 + $0x70] sm:$0xff] %vm552, %v438
        %568 = vst.msk [vmem:[%s10 + $0x78] sm:$0xff] %vm552, %v439
        %569 = vst.msk [vmem:[%s10 + $0x80] sm:$0xff] %vm552, %v440
        %570 = vst.msk [vmem:[%s10 + $0x88] sm:$0xff] %vm552, %v441
        %571 = vst.msk [vmem:[%s10 + $0x90] sm:$0xff] %vm552, %v442
        %572 = vst.msk [vmem:[%s10 + $0x98] sm:$0xff] %vm552, %v443
        %573 = vst.msk [vmem:[%s10 + $0xa0] sm:$0xff] %vm552, %v444
        %574 = vst.msk [vmem:[%s10 + $0xa8] sm:$0xff] %vm552, %v445
        %575 = vst.msk [vmem:[%s10 + $0xb0] sm:$0xff] %vm552, %v446
        %576 = vst.msk [vmem:[%s10 + $0xb8] sm:$0xff] %vm552, %v447
        %577 = vst.msk [vmem:[%s10 + $0xc0] sm:$0xff] %vm552, %v448
        %578 = vst.msk [vmem:[%s10 + $0xc8] sm:$0xff] %vm552, %v449
        %579 = vst.msk [vmem:[%s10 + $0xd0] sm:$0xff] %vm552, %v450
        %580 = vst.msk [vmem:[%s10 + $0xd8] sm:$0xff] %vm552, %v451
        %581 = vst.msk [vmem:[%s10 + $0xe0] sm:$0xff] %vm552, %v452
        %582 = vst.msk [vmem:[%s10 + $0xe8] sm:$0xff] %vm552, %v453
        %583 = vst.msk [vmem:[%s10 + $0xf0] sm:$0xff] %vm552, %v454
        %584 = vst.msk [vmem:[%s10 + $0xf8] sm:$0xff] %vm552, %v455
        %585 = vst.msk [vmem:[%s10 + $0x100] sm:$0xff] %vm552, %v456
        %586 = vst.msk [vmem:[%s10 + $0x108] sm:$0xff] %vm552, %v457
        %587 = vst.msk [vmem:[%s10 + $0x110] sm:$0xff] %vm552, %v458
        %588 = vst.msk [vmem:[%s10 + $0x118] sm:$0xff] %vm552, %v459
        %589 = vst.msk [vmem:[%s10 + $0x120] sm:$0xff] %vm552, %v460
        %590 = vst.msk [vmem:[%s10 + $0x128] sm:$0xff] %vm552, %v461
        %591 = vst.msk [vmem:[%s10 + $0x130] sm:$0xff] %vm552, %v462
        %592 = vst.msk [vmem:[%s10 + $0x138] sm:$0xff] %vm552, %v463
        %593 = vst.msk [vmem:[%s10 + $0x140] sm:$0xff] %vm552, %v464
        %594 = vst.msk [vmem:[%s10 + $0x148] sm:$0xff] %vm552, %v465
        %595 = vst.msk [vmem:[%s10 + $0x150] sm:$0xff] %vm552, %v466
        %596 = vst.msk [vmem:[%s10 + $0x158] sm:$0xff] %vm552, %v467
        %597 = vst.msk [vmem:[%s10 + $0x160] sm:$0xff] %vm552, %v468
        %598 = vst.msk [vmem:[%s10 + $0x168] sm:$0xff] %vm552, %v469
        %599 = vst.msk [vmem:[%s10 + $0x170] sm:$0xff] %vm552, %v470
        %600 = vst.msk [vmem:[%s10 + $0x178] sm:$0xff] %vm552, %v471
        %601 = vst.msk [vmem:[%s10 + $0x180] sm:$0xff] %vm552, %v472
        %602 = vst.msk [vmem:[%s10 + $0x188] sm:$0xff] %vm552, %v473
        %603 = vst.msk [vmem:[%s10 + $0x190] sm:$0xff] %vm552, %v474
        %604 = vst.msk [vmem:[%s10 + $0x198] sm:$0xff] %vm552, %v475
        %605 = vst.msk [vmem:[%s10 + $0x1a0] sm:$0xff] %vm552, %v476
        %606 = vst.msk [vmem:[%s10 + $0x1a8] sm:$0xff] %vm552, %v477
        %607 = vst.msk [vmem:[%s10 + $0x1b0] sm:$0xff] %vm552, %v478
        %608 = vst.msk [vmem:[%s10 + $0x1b8] sm:$0xff] %vm552, %v479
        %609 = vst.msk [vmem:[%s10 + $0x1c0] sm:$0xff] %vm552, %v480
        %610 = vst.msk [vmem:[%s10 + $0x1c8] sm:$0xff] %vm552, %v481
        %611 = vst.msk [vmem:[%s10 + $0x1d0] sm:$0xff] %vm552, %v482
        %612 = vst.msk [vmem:[%s10 + $0x1d8] sm:$0xff] %vm552, %v483
        %613 = vst.msk [vmem:[%s10 + $0x1e0] sm:$0xff] %vm552, %v484
        %614 = vst.msk [vmem:[%s10 + $0x1e8] sm:$0xff] %vm552, %v485
        %615 = vst.msk [vmem:[%s10 + $0x1f0] sm:$0xff] %vm552, %v486
        %616 = vst.msk [vmem:[%s10 + $0x1f8] sm:$0xff] %vm552, %v487
        %617 = vst.msk [vmem:[%s10 + $0x200] sm:$0xff] %vm552, %v488
        %618 = vst.msk [vmem:[%s10 + $0x208] sm:$0xff] %vm552, %v489
        %619 = vst.msk [vmem:[%s10 + $0x210] sm:$0xff] %vm552, %v490
        %620 = vst.msk [vmem:[%s10 + $0x218] sm:$0xff] %vm552, %v491
        %621 = vst.msk [vmem:[%s10 + $0x220] sm:$0xff] %vm552, %v492
        %622 = vst.msk [vmem:[%s10 + $0x228] sm:$0xff] %vm552, %v493
        %623 = vst.msk [vmem:[%s10 + $0x230] sm:$0xff] %vm552, %v494
        %624 = vst.msk [vmem:[%s10 + $0x238] sm:$0xff] %vm552, %v495
        %625 = vst.msk [vmem:[%s10 + $0x240] sm:$0xff] %vm552, %v496
        %626 = vst.msk [vmem:[%s10 + $0x248] sm:$0xff] %vm552, %v497
        %627 = vst.msk [vmem:[%s10 + $0x250] sm:$0xff] %vm552, %v498
        %628 = vst.msk [vmem:[%s10 + $0x258] sm:$0xff] %vm552, %v499
        %629 = vst.msk [vmem:[%s10 + $0x260] sm:$0xff] %vm552, %v500
        %630 = vst.msk [vmem:[%s10 + $0x268] sm:$0xff] %vm552, %v501
        %631 = vst.msk [vmem:[%s10 + $0x270] sm:$0xff] %vm552, %v502
        %632 = vst.msk [vmem:[%s10 + $0x278] sm:$0xff] %vm552, %v503
        %633 = vst.msk [vmem:[%s10 + $0x280] sm:$0xff] %vm552, %v504
        %634 = vst.msk [vmem:[%s10 + $0x288] sm:$0xff] %vm552, %v505
        %635 = vst.msk [vmem:[%s10 + $0x290] sm:$0xff] %vm552, %v506
        %636 = vst.msk [vmem:[%s10 + $0x298] sm:$0xff] %vm552, %v507
        %637 = vst.msk [vmem:[%s10 + $0x2a0] sm:$0xff] %vm552, %v508
        %638 = vst.msk [vmem:[%s10 + $0x2a8] sm:$0xff] %vm552, %v509
        %639 = vst.msk [vmem:[%s10 + $0x2b0] sm:$0xff] %vm552, %v510
        %640 = vst.msk [vmem:[%s10 + $0x2b8] sm:$0xff] %vm552, %v511
        %641 = vst.msk [vmem:[%s10 + $0x2c0] sm:$0xff] %vm552, %v512
        %642 = vst.msk [vmem:[%s10 + $0x2c8] sm:$0xff] %vm552, %v513
        %643 = vst.msk [vmem:[%s10 + $0x2d0] sm:$0xff] %vm552, %v514
        %644 = vst.msk [vmem:[%s10 + $0x2d8] sm:$0xff] %vm552, %v515
        %645 = vst.msk [vmem:[%s10 + $0x2e0] sm:$0xff] %vm552, %v516
        %646 = vst.msk [vmem:[%s10 + $0x2e8] sm:$0xff] %vm552, %v517
        %647 = vst.msk [vmem:[%s10 + $0x2f0] sm:$0xff] %vm552, %v518
        %648 = vst.msk [vmem:[%s10 + $0x2f8] sm:$0xff] %vm552, %v519
        %649 = vst.msk [vmem:[%s10 + $0x300] sm:$0xff] %vm552, %v520
        %650 = vst.msk [vmem:[%s10 + $0x308] sm:$0xff] %vm552, %v521
        %651 = vst.msk [vmem:[%s10 + $0x310] sm:$0xff] %vm552, %v522
        %652 = vst.msk [vmem:[%s10 + $0x318] sm:$0xff] %vm552, %v523
        %653 = vst.msk [vmem:[%s10 + $0x320] sm:$0xff] %vm552, %v524
        %654 = vst.msk [vmem:[%s10 + $0x328] sm:$0xff] %vm552, %v525
        %655 = vst.msk [vmem:[%s10 + $0x330] sm:$0xff] %vm552, %v526
        %656 = vst.msk [vmem:[%s10 + $0x338] sm:$0xff] %vm552, %v527
        %657 = vst.msk [vmem:[%s10 + $0x340] sm:$0xff] %vm552, %v528
        %658 = vst.msk [vmem:[%s10 + $0x348] sm:$0xff] %vm552, %v529
        %659 = vst.msk [vmem:[%s10 + $0x350] sm:$0xff] %vm552, %v530
        %660 = vst.msk [vmem:[%s10 + $0x358] sm:$0xff] %vm552, %v531
        %661 = vst.msk [vmem:[%s10 + $0x360] sm:$0xff] %vm552, %v532
        %662 = vst.msk [vmem:[%s10 + $0x368] sm:$0xff] %vm552, %v533
        %663 = vst.msk [vmem:[%s10 + $0x370] sm:$0xff] %vm552, %v534
        %664 = vst.msk [vmem:[%s10 + $0x378] sm:$0xff] %vm552, %v535
        %665 = vst.msk [vmem:[%s10 + $0x380] sm:$0xff] %vm552, %v536
        %666 = vst.msk [vmem:[%s10 + $0x388] sm:$0xff] %vm552, %v537
        %667 = vst.msk [vmem:[%s10 + $0x390] sm:$0xff] %vm552, %v538
        %668 = vst.msk [vmem:[%s10 + $0x398] sm:$0xff] %vm552, %v539
        %669 = vst.msk [vmem:[%s10 + $0x3a0] sm:$0xff] %vm552, %v540
        %670 = vst.msk [vmem:[%s10 + $0x3a8] sm:$0xff] %vm552, %v541
        %671 = vst.msk [vmem:[%s10 + $0x3b0] sm:$0xff] %vm552, %v542
        %672 = vst.msk [vmem:[%s10 + $0x3b8] sm:$0xff] %vm552, %v543
        %673 = vst.msk [vmem:[%s10 + $0x3c0] sm:$0xff] %vm552, %v544
        %674 = vst.msk [vmem:[%s10 + $0x3c8] sm:$0xff] %vm552, %v545
        %675 = vst.msk [vmem:[%s10 + $0x3d0] sm:$0xff] %vm552, %v546
        %676 = vst.msk [vmem:[%s10 + $0x3d8] sm:$0xff] %vm552, %v547
        %677 = vst.msk [vmem:[%s10 + $0x3e0] sm:$0xff] %vm552, %v548
        %678 = vst.msk [vmem:[%s10 + $0x3e8] sm:$0xff] %vm552, %v549
        %679 = vst.msk [vmem:[%s10 + $0x3f0] sm:$0xff] %vm552, %v550
        %680 = vst.msk [vmem:[%s10 + $0x3f8] sm:$0xff] %vm552, %v551
        %v681 = vld [vmem:[%s8] sm:$0xff]
        %v682 = vld [vmem:[%s8 + $0x8] sm:$0xff]
        %v683 = vld [vmem:[%s8 + $0x10] sm:$0xff]
        %v684 = vld [vmem:[%s8 + $0x18] sm:$0xff]
        %v685 = vld [vmem:[%s8 + $0x20] sm:$0xff]
        %v686 = vld [vmem:[%s8 + $0x28] sm:$0xff]
        %v687 = vld [vmem:[%s8 + $0x30] sm:$0xff]
        %v688 = vld [vmem:[%s8 + $0x38] sm:$0xff]
        %v689 = vld [vmem:[%s8 + $0x40] sm:$0xff]
        %v690 = vld [vmem:[%s8 + $0x48] sm:$0xff]
        %v691 = vld [vmem:[%s8 + $0x50] sm:$0xff]
        %v692 = vld [vmem:[%s8 + $0x58] sm:$0xff]
        %v693 = vld [vmem:[%s8 + $0x60] sm:$0xff]
        %v694 = vld [vmem:[%s8 + $0x68] sm:$0xff]
        %v695 = vld [vmem:[%s8 + $0x70] sm:$0xff]
        %v696 = vld [vmem:[%s8 + $0x78] sm:$0xff]
        %v697 = vld [vmem:[%s8 + $0x80] sm:$0xff]
        %v698 = vld [vmem:[%s8 + $0x88] sm:$0xff]
        %v699 = vld [vmem:[%s8 + $0x90] sm:$0xff]
        %v700 = vld [vmem:[%s8 + $0x98] sm:$0xff]
        %v701 = vld [vmem:[%s8 + $0xa0] sm:$0xff]
        %v702 = vld [vmem:[%s8 + $0xa8] sm:$0xff]
        %v703 = vld [vmem:[%s8 + $0xb0] sm:$0xff]
        %v704 = vld [vmem:[%s8 + $0xb8] sm:$0xff]
        %v705 = vld [vmem:[%s8 + $0xc0] sm:$0xff]
        %v706 = vld [vmem:[%s8 + $0xc8] sm:$0xff]
        %v707 = vld [vmem:[%s8 + $0xd0] sm:$0xff]
        %v708 = vld [vmem:[%s8 + $0xd8] sm:$0xff]
        %v709 = vld [vmem:[%s8 + $0xe0] sm:$0xff]
        %v710 = vld [vmem:[%s8 + $0xe8] sm:$0xff]
        %v711 = vld [vmem:[%s8 + $0xf0] sm:$0xff]
        %v712 = vld [vmem:[%s8 + $0xf8] sm:$0xff]
        %v713 = vld [vmem:[%s8 + $0x100] sm:$0xff]
        %v714 = vld [vmem:[%s8 + $0x108] sm:$0xff]
        %v715 = vld [vmem:[%s8 + $0x110] sm:$0xff]
        %v716 = vld [vmem:[%s8 + $0x118] sm:$0xff]
        %v717 = vld [vmem:[%s8 + $0x120] sm:$0xff]
        %v718 = vld [vmem:[%s8 + $0x128] sm:$0xff]
        %v719 = vld [vmem:[%s8 + $0x130] sm:$0xff]
        %v720 = vld [vmem:[%s8 + $0x138] sm:$0xff]
        %v721 = vld [vmem:[%s8 + $0x140] sm:$0xff]
        %v722 = vld [vmem:[%s8 + $0x148] sm:$0xff]
        %v723 = vld [vmem:[%s8 + $0x150] sm:$0xff]
        %v724 = vld [vmem:[%s8 + $0x158] sm:$0xff]
        %v725 = vld [vmem:[%s8 + $0x160] sm:$0xff]
        %v726 = vld [vmem:[%s8 + $0x168] sm:$0xff]
        %v727 = vld [vmem:[%s8 + $0x170] sm:$0xff]
        %v728 = vld [vmem:[%s8 + $0x178] sm:$0xff]
        %v729 = vld [vmem:[%s8 + $0x180] sm:$0xff]
        %v730 = vld [vmem:[%s8 + $0x188] sm:$0xff]
        %v731 = vld [vmem:[%s8 + $0x190] sm:$0xff]
        %v732 = vld [vmem:[%s8 + $0x198] sm:$0xff]
        %v733 = vld [vmem:[%s8 + $0x1a0] sm:$0xff]
        %v734 = vld [vmem:[%s8 + $0x1a8] sm:$0xff]
        %v735 = vld [vmem:[%s8 + $0x1b0] sm:$0xff]
        %v736 = vld [vmem:[%s8 + $0x1b8] sm:$0xff]
        %v737 = vld [vmem:[%s8 + $0x1c0] sm:$0xff]
        %v738 = vld [vmem:[%s8 + $0x1c8] sm:$0xff]
        %v739 = vld [vmem:[%s8 + $0x1d0] sm:$0xff]
        %v740 = vld [vmem:[%s8 + $0x1d8] sm:$0xff]
        %v741 = vld [vmem:[%s8 + $0x1e0] sm:$0xff]
        %v742 = vld [vmem:[%s8 + $0x1e8] sm:$0xff]
        %v743 = vld [vmem:[%s8 + $0x1f0] sm:$0xff]
        %v744 = vld [vmem:[%s8 + $0x1f8] sm:$0xff]
        %v745 = vld [vmem:[%s8 + $0x200] sm:$0xff]
        %v746 = vld [vmem:[%s8 + $0x208] sm:$0xff]
        %v747 = vld [vmem:[%s8 + $0x210] sm:$0xff]
        %v748 = vld [vmem:[%s8 + $0x218] sm:$0xff]
        %v749 = vld [vmem:[%s8 + $0x220] sm:$0xff]
        %v750 = vld [vmem:[%s8 + $0x228] sm:$0xff]
        %v751 = vld [vmem:[%s8 + $0x230] sm:$0xff]
        %v752 = vld [vmem:[%s8 + $0x238] sm:$0xff]
        %v753 = vld [vmem:[%s8 + $0x240] sm:$0xff]
        %v754 = vld [vmem:[%s8 + $0x248] sm:$0xff]
        %v755 = vld [vmem:[%s8 + $0x250] sm:$0xff]
        %v756 = vld [vmem:[%s8 + $0x258] sm:$0xff]
        %v757 = vld [vmem:[%s8 + $0x260] sm:$0xff]
        %v758 = vld [vmem:[%s8 + $0x268] sm:$0xff]
        %v759 = vld [vmem:[%s8 + $0x270] sm:$0xff]
        %v760 = vld [vmem:[%s8 + $0x278] sm:$0xff]
        %v761 = vld [vmem:[%s8 + $0x280] sm:$0xff]
        %v762 = vld [vmem:[%s8 + $0x288] sm:$0xff]
        %v763 = vld [vmem:[%s8 + $0x290] sm:$0xff]
        %v764 = vld [vmem:[%s8 + $0x298] sm:$0xff]
        %v765 = vld [vmem:[%s8 + $0x2a0] sm:$0xff]
        %v766 = vld [vmem:[%s8 + $0x2a8] sm:$0xff]
        %v767 = vld [vmem:[%s8 + $0x2b0] sm:$0xff]
        %v768 = vld [vmem:[%s8 + $0x2b8] sm:$0xff]
        %v769 = vld [vmem:[%s8 + $0x2c0] sm:$0xff]
        %v770 = vld [vmem:[%s8 + $0x2c8] sm:$0xff]
        %v771 = vld [vmem:[%s8 + $0x2d0] sm:$0xff]
        %v772 = vld [vmem:[%s8 + $0x2d8] sm:$0xff]
        %v773 = vld [vmem:[%s8 + $0x2e0] sm:$0xff]
        %v774 = vld [vmem:[%s8 + $0x2e8] sm:$0xff]
        %v775 = vld [vmem:[%s8 + $0x2f0] sm:$0xff]
        %v776 = vld [vmem:[%s8 + $0x2f8] sm:$0xff]
        %v777 = vld [vmem:[%s8 + $0x300] sm:$0xff]
        %v778 = vld [vmem:[%s8 + $0x308] sm:$0xff]
        %v779 = vld [vmem:[%s8 + $0x310] sm:$0xff]
        %v780 = vld [vmem:[%s8 + $0x318] sm:$0xff]
        %v781 = vld [vmem:[%s8 + $0x320] sm:$0xff]
        %v782 = vld [vmem:[%s8 + $0x328] sm:$0xff]
        %v783 = vld [vmem:[%s8 + $0x330] sm:$0xff]
        %v784 = vld [vmem:[%s8 + $0x338] sm:$0xff]
        %v785 = vld [vmem:[%s8 + $0x340] sm:$0xff]
        %v786 = vld [vmem:[%s8 + $0x348] sm:$0xff]
        %v787 = vld [vmem:[%s8 + $0x350] sm:$0xff]
        %v788 = vld [vmem:[%s8 + $0x358] sm:$0xff]
        %v789 = vld [vmem:[%s8 + $0x360] sm:$0xff]
        %v790 = vld [vmem:[%s8 + $0x368] sm:$0xff]
        %v791 = vld [vmem:[%s8 + $0x370] sm:$0xff]
        %v792 = vld [vmem:[%s8 + $0x378] sm:$0xff]
        %v793 = vld [vmem:[%s8 + $0x380] sm:$0xff]
        %v794 = vld [vmem:[%s8 + $0x388] sm:$0xff]
        %v795 = vld [vmem:[%s8 + $0x390] sm:$0xff]
        %v796 = vld [vmem:[%s8 + $0x398] sm:$0xff]
        %v797 = vld [vmem:[%s8 + $0x3a0] sm:$0xff]
        %v798 = vld [vmem:[%s8 + $0x3a8] sm:$0xff]
        %v799 = vld [vmem:[%s8 + $0x3b0] sm:$0xff]
        %v800 = vld [vmem:[%s8 + $0x3b8] sm:$0xff]
        %v801 = vld [vmem:[%s8 + $0x3c0] sm:$0xff]
        %v802 = vld [vmem:[%s8 + $0x3c8] sm:$0xff]
        %v803 = vld [vmem:[%s8 + $0x3d0] sm:$0xff]
        %v804 = vld [vmem:[%s8 + $0x3d8] sm:$0xff]
        %v805 = vld [vmem:[%s8 + $0x3e0] sm:$0xff]
        %v806 = vld [vmem:[%s8 + $0x3e8] sm:$0xff]
        %v807 = vld [vmem:[%s8 + $0x3f0] sm:$0xff]
        %v808 = vld [vmem:[%s8 + $0x3f8] sm:$0xff]
        %809 = vst.msk [vmem:[%s11] sm:$0xff] %vm552, %v681
        %810 = vst.msk [vmem:[%s11 + $0x8] sm:$0xff] %vm552, %v682
        %811 = vst.msk [vmem:[%s11 + $0x10] sm:$0xff] %vm552, %v683
        %812 = vst.msk [vmem:[%s11 + $0x18] sm:$0xff] %vm552, %v684
        %813 = vst.msk [vmem:[%s11 + $0x20] sm:$0xff] %vm552, %v685
        %814 = vst.msk [vmem:[%s11 + $0x28] sm:$0xff] %vm552, %v686
        %815 = vst.msk [vmem:[%s11 + $0x30] sm:$0xff] %vm552, %v687
        %816 = vst.msk [vmem:[%s11 + $0x38] sm:$0xff] %vm552, %v688
        %817 = vst.msk [vmem:[%s11 + $0x40] sm:$0xff] %vm552, %v689
        %818 = vst.msk [vmem:[%s11 + $0x48] sm:$0xff] %vm552, %v690
        %819 = vst.msk [vmem:[%s11 + $0x50] sm:$0xff] %vm552, %v691
        %820 = vst.msk [vmem:[%s11 + $0x58] sm:$0xff] %vm552, %v692
        %821 = vst.msk [vmem:[%s11 + $0x60] sm:$0xff] %vm552, %v693
        %822 = vst.msk [vmem:[%s11 + $0x68] sm:$0xff] %vm552, %v694
        %823 = vst.msk [vmem:[%s11 + $0x70] sm:$0xff] %vm552, %v695
        %824 = vst.msk [vmem:[%s11 + $0x78] sm:$0xff] %vm552, %v696
        %825 = vst.msk [vmem:[%s11 + $0x80] sm:$0xff] %vm552, %v697
        %826 = vst.msk [vmem:[%s11 + $0x88] sm:$0xff] %vm552, %v698
        %827 = vst.msk [vmem:[%s11 + $0x90] sm:$0xff] %vm552, %v699
        %828 = vst.msk [vmem:[%s11 + $0x98] sm:$0xff] %vm552, %v700
        %829 = vst.msk [vmem:[%s11 + $0xa0] sm:$0xff] %vm552, %v701
        %830 = vst.msk [vmem:[%s11 + $0xa8] sm:$0xff] %vm552, %v702
        %831 = vst.msk [vmem:[%s11 + $0xb0] sm:$0xff] %vm552, %v703
        %832 = vst.msk [vmem:[%s11 + $0xb8] sm:$0xff] %vm552, %v704
        %833 = vst.msk [vmem:[%s11 + $0xc0] sm:$0xff] %vm552, %v705
        %834 = vst.msk [vmem:[%s11 + $0xc8] sm:$0xff] %vm552, %v706
        %835 = vst.msk [vmem:[%s11 + $0xd0] sm:$0xff] %vm552, %v707
        %836 = vst.msk [vmem:[%s11 + $0xd8] sm:$0xff] %vm552, %v708
        %837 = vst.msk [vmem:[%s11 + $0xe0] sm:$0xff] %vm552, %v709
        %838 = vst.msk [vmem:[%s11 + $0xe8] sm:$0xff] %vm552, %v710
        %839 = vst.msk [vmem:[%s11 + $0xf0] sm:$0xff] %vm552, %v711
        %840 = vst.msk [vmem:[%s11 + $0xf8] sm:$0xff] %vm552, %v712
        %841 = vst.msk [vmem:[%s11 + $0x100] sm:$0xff] %vm552, %v713
        %842 = vst.msk [vmem:[%s11 + $0x108] sm:$0xff] %vm552, %v714
        %843 = vst.msk [vmem:[%s11 + $0x110] sm:$0xff] %vm552, %v715
        %844 = vst.msk [vmem:[%s11 + $0x118] sm:$0xff] %vm552, %v716
        %845 = vst.msk [vmem:[%s11 + $0x120] sm:$0xff] %vm552, %v717
        %846 = vst.msk [vmem:[%s11 + $0x128] sm:$0xff] %vm552, %v718
        %847 = vst.msk [vmem:[%s11 + $0x130] sm:$0xff] %vm552, %v719
        %848 = vst.msk [vmem:[%s11 + $0x138] sm:$0xff] %vm552, %v720
        %849 = vst.msk [vmem:[%s11 + $0x140] sm:$0xff] %vm552, %v721
        %850 = vst.msk [vmem:[%s11 + $0x148] sm:$0xff] %vm552, %v722
        %851 = vst.msk [vmem:[%s11 + $0x150] sm:$0xff] %vm552, %v723
        %852 = vst.msk [vmem:[%s11 + $0x158] sm:$0xff] %vm552, %v724
        %853 = vst.msk [vmem:[%s11 + $0x160] sm:$0xff] %vm552, %v725
        %854 = vst.msk [vmem:[%s11 + $0x168] sm:$0xff] %vm552, %v726
        %855 = vst.msk [vmem:[%s11 + $0x170] sm:$0xff] %vm552, %v727
        %856 = vst.msk [vmem:[%s11 + $0x178] sm:$0xff] %vm552, %v728
        %857 = vst.msk [vmem:[%s11 + $0x180] sm:$0xff] %vm552, %v729
        %858 = vst.msk [vmem:[%s11 + $0x188] sm:$0xff] %vm552, %v730
        %859 = vst.msk [vmem:[%s11 + $0x190] sm:$0xff] %vm552, %v731
        %860 = vst.msk [vmem:[%s11 + $0x198] sm:$0xff] %vm552, %v732
        %861 = vst.msk [vmem:[%s11 + $0x1a0] sm:$0xff] %vm552, %v733
        %862 = vst.msk [vmem:[%s11 + $0x1a8] sm:$0xff] %vm552, %v734
        %863 = vst.msk [vmem:[%s11 + $0x1b0] sm:$0xff] %vm552, %v735
        %864 = vst.msk [vmem:[%s11 + $0x1b8] sm:$0xff] %vm552, %v736
        %865 = vst.msk [vmem:[%s11 + $0x1c0] sm:$0xff] %vm552, %v737
        %866 = vst.msk [vmem:[%s11 + $0x1c8] sm:$0xff] %vm552, %v738
        %867 = vst.msk [vmem:[%s11 + $0x1d0] sm:$0xff] %vm552, %v739
        %868 = vst.msk [vmem:[%s11 + $0x1d8] sm:$0xff] %vm552, %v740
        %869 = vst.msk [vmem:[%s11 + $0x1e0] sm:$0xff] %vm552, %v741
        %870 = vst.msk [vmem:[%s11 + $0x1e8] sm:$0xff] %vm552, %v742
        %871 = vst.msk [vmem:[%s11 + $0x1f0] sm:$0xff] %vm552, %v743
        %872 = vst.msk [vmem:[%s11 + $0x1f8] sm:$0xff] %vm552, %v744
        %873 = vst.msk [vmem:[%s11 + $0x200] sm:$0xff] %vm552, %v745
        %874 = vst.msk [vmem:[%s11 + $0x208] sm:$0xff] %vm552, %v746
        %875 = vst.msk [vmem:[%s11 + $0x210] sm:$0xff] %vm552, %v747
        %876 = vst.msk [vmem:[%s11 + $0x218] sm:$0xff] %vm552, %v748
        %877 = vst.msk [vmem:[%s11 + $0x220] sm:$0xff] %vm552, %v749
        %878 = vst.msk [vmem:[%s11 + $0x228] sm:$0xff] %vm552, %v750
        %879 = vst.msk [vmem:[%s11 + $0x230] sm:$0xff] %vm552, %v751
        %880 = vst.msk [vmem:[%s11 + $0x238] sm:$0xff] %vm552, %v752
        %881 = vst.msk [vmem:[%s11 + $0x240] sm:$0xff] %vm552, %v753
        %882 = vst.msk [vmem:[%s11 + $0x248] sm:$0xff] %vm552, %v754
        %883 = vst.msk [vmem:[%s11 + $0x250] sm:$0xff] %vm552, %v755
        %884 = vst.msk [vmem:[%s11 + $0x258] sm:$0xff] %vm552, %v756
        %885 = vst.msk [vmem:[%s11 + $0x260] sm:$0xff] %vm552, %v757
        %886 = vst.msk [vmem:[%s11 + $0x268] sm:$0xff] %vm552, %v758
        %887 = vst.msk [vmem:[%s11 + $0x270] sm:$0xff] %vm552, %v759
        %888 = vst.msk [vmem:[%s11 + $0x278] sm:$0xff] %vm552, %v760
        %889 = vst.msk [vmem:[%s11 + $0x280] sm:$0xff] %vm552, %v761
        %890 = vst.msk [vmem:[%s11 + $0x288] sm:$0xff] %vm552, %v762
        %891 = vst.msk [vmem:[%s11 + $0x290] sm:$0xff] %vm552, %v763
        %892 = vst.msk [vmem:[%s11 + $0x298] sm:$0xff] %vm552, %v764
        %893 = vst.msk [vmem:[%s11 + $0x2a0] sm:$0xff] %vm552, %v765
        %894 = vst.msk [vmem:[%s11 + $0x2a8] sm:$0xff] %vm552, %v766
        %895 = vst.msk [vmem:[%s11 + $0x2b0] sm:$0xff] %vm552, %v767
        %896 = vst.msk [vmem:[%s11 + $0x2b8] sm:$0xff] %vm552, %v768
        %897 = vst.msk [vmem:[%s11 + $0x2c0] sm:$0xff] %vm552, %v769
        %898 = vst.msk [vmem:[%s11 + $0x2c8] sm:$0xff] %vm552, %v770
        %899 = vst.msk [vmem:[%s11 + $0x2d0] sm:$0xff] %vm552, %v771
        %900 = vst.msk [vmem:[%s11 + $0x2d8] sm:$0xff] %vm552, %v772
        %901 = vst.msk [vmem:[%s11 + $0x2e0] sm:$0xff] %vm552, %v773
        %902 = vst.msk [vmem:[%s11 + $0x2e8] sm:$0xff] %vm552, %v774
        %903 = vst.msk [vmem:[%s11 + $0x2f0] sm:$0xff] %vm552, %v775
        %904 = vst.msk [vmem:[%s11 + $0x2f8] sm:$0xff] %vm552, %v776
        %905 = vst.msk [vmem:[%s11 + $0x300] sm:$0xff] %vm552, %v777
        %906 = vst.msk [vmem:[%s11 + $0x308] sm:$0xff] %vm552, %v778
        %907 = vst.msk [vmem:[%s11 + $0x310] sm:$0xff] %vm552, %v779
        %908 = vst.msk [vmem:[%s11 + $0x318] sm:$0xff] %vm552, %v780
        %909 = vst.msk [vmem:[%s11 + $0x320] sm:$0xff] %vm552, %v781
        %910 = vst.msk [vmem:[%s11 + $0x328] sm:$0xff] %vm552, %v782
        %911 = vst.msk [vmem:[%s11 + $0x330] sm:$0xff] %vm552, %v783
        %912 = vst.msk [vmem:[%s11 + $0x338] sm:$0xff] %vm552, %v784
        %913 = vst.msk [vmem:[%s11 + $0x340] sm:$0xff] %vm552, %v785
        %914 = vst.msk [vmem:[%s11 + $0x348] sm:$0xff] %vm552, %v786
        %915 = vst.msk [vmem:[%s11 + $0x350] sm:$0xff] %vm552, %v787
        %916 = vst.msk [vmem:[%s11 + $0x358] sm:$0xff] %vm552, %v788
        %917 = vst.msk [vmem:[%s11 + $0x360] sm:$0xff] %vm552, %v789
        %918 = vst.msk [vmem:[%s11 + $0x368] sm:$0xff] %vm552, %v790
        %919 = vst.msk [vmem:[%s11 + $0x370] sm:$0xff] %vm552, %v791
        %920 = vst.msk [vmem:[%s11 + $0x378] sm:$0xff] %vm552, %v792
        %921 = vst.msk [vmem:[%s11 + $0x380] sm:$0xff] %vm552, %v793
        %922 = vst.msk [vmem:[%s11 + $0x388] sm:$0xff] %vm552, %v794
        %923 = vst.msk [vmem:[%s11 + $0x390] sm:$0xff] %vm552, %v795
        %924 = vst.msk [vmem:[%s11 + $0x398] sm:$0xff] %vm552, %v796
        %925 = vst.msk [vmem:[%s11 + $0x3a0] sm:$0xff] %vm552, %v797
        %926 = vst.msk [vmem:[%s11 + $0x3a8] sm:$0xff] %vm552, %v798
        %927 = vst.msk [vmem:[%s11 + $0x3b0] sm:$0xff] %vm552, %v799
        %928 = vst.msk [vmem:[%s11 + $0x3b8] sm:$0xff] %vm552, %v800
        %929 = vst.msk [vmem:[%s11 + $0x3c0] sm:$0xff] %vm552, %v801
        %930 = vst.msk [vmem:[%s11 + $0x3c8] sm:$0xff] %vm552, %v802
        %931 = vst.msk [vmem:[%s11 + $0x3d0] sm:$0xff] %vm552, %v803
        %932 = vst.msk [vmem:[%s11 + $0x3d8] sm:$0xff] %vm552, %v804
        %933 = vst.msk [vmem:[%s11 + $0x3e0] sm:$0xff] %vm552, %v805
        %934 = vst.msk [vmem:[%s11 + $0x3e8] sm:$0xff] %vm552, %v806
        %935 = vst.msk [vmem:[%s11 + $0x3f0] sm:$0xff] %vm552, %v807
        %936 = vst.msk [vmem:[%s11 + $0x3f8] sm:$0xff] %vm552, %v808
        %v937 = vld [vmem:[%s9] sm:$0xff]
        %v938 = vld [vmem:[%s9 + $0x8] sm:$0xff]
        %v939 = vld [vmem:[%s9 + $0x10] sm:$0xff]
        %v940 = vld [vmem:[%s9 + $0x18] sm:$0xff]
        %v941 = vld [vmem:[%s9 + $0x20] sm:$0xff]
        %v942 = vld [vmem:[%s9 + $0x28] sm:$0xff]
        %v943 = vld [vmem:[%s9 + $0x30] sm:$0xff]
        %v944 = vld [vmem:[%s9 + $0x38] sm:$0xff]
        %v945 = vld [vmem:[%s9 + $0x40] sm:$0xff]
        %v946 = vld [vmem:[%s9 + $0x48] sm:$0xff]
        %v947 = vld [vmem:[%s9 + $0x50] sm:$0xff]
        %v948 = vld [vmem:[%s9 + $0x58] sm:$0xff]
        %v949 = vld [vmem:[%s9 + $0x60] sm:$0xff]
        %v950 = vld [vmem:[%s9 + $0x68] sm:$0xff]
        %v951 = vld [vmem:[%s9 + $0x70] sm:$0xff]
        %v952 = vld [vmem:[%s9 + $0x78] sm:$0xff]
        %v953 = vld [vmem:[%s9 + $0x80] sm:$0xff]
        %v954 = vld [vmem:[%s9 + $0x88] sm:$0xff]
        %v955 = vld [vmem:[%s9 + $0x90] sm:$0xff]
        %v956 = vld [vmem:[%s9 + $0x98] sm:$0xff]
        %v957 = vld [vmem:[%s9 + $0xa0] sm:$0xff]
        %v958 = vld [vmem:[%s9 + $0xa8] sm:$0xff]
        %v959 = vld [vmem:[%s9 + $0xb0] sm:$0xff]
        %v960 = vld [vmem:[%s9 + $0xb8] sm:$0xff]
        %v961 = vld [vmem:[%s9 + $0xc0] sm:$0xff]
        %v962 = vld [vmem:[%s9 + $0xc8] sm:$0xff]
        %v963 = vld [vmem:[%s9 + $0xd0] sm:$0xff]
        %v964 = vld [vmem:[%s9 + $0xd8] sm:$0xff]
        %v965 = vld [vmem:[%s9 + $0xe0] sm:$0xff]
        %v966 = vld [vmem:[%s9 + $0xe8] sm:$0xff]
        %v967 = vld [vmem:[%s9 + $0xf0] sm:$0xff]
        %v968 = vld [vmem:[%s9 + $0xf8] sm:$0xff]
        %v969 = vld [vmem:[%s9 + $0x100] sm:$0xff]
        %v970 = vld [vmem:[%s9 + $0x108] sm:$0xff]
        %v971 = vld [vmem:[%s9 + $0x110] sm:$0xff]
        %v972 = vld [vmem:[%s9 + $0x118] sm:$0xff]
        %v973 = vld [vmem:[%s9 + $0x120] sm:$0xff]
        %v974 = vld [vmem:[%s9 + $0x128] sm:$0xff]
        %v975 = vld [vmem:[%s9 + $0x130] sm:$0xff]
        %v976 = vld [vmem:[%s9 + $0x138] sm:$0xff]
        %v977 = vld [vmem:[%s9 + $0x140] sm:$0xff]
        %v978 = vld [vmem:[%s9 + $0x148] sm:$0xff]
        %v979 = vld [vmem:[%s9 + $0x150] sm:$0xff]
        %v980 = vld [vmem:[%s9 + $0x158] sm:$0xff]
        %v981 = vld [vmem:[%s9 + $0x160] sm:$0xff]
        %v982 = vld [vmem:[%s9 + $0x168] sm:$0xff]
        %v983 = vld [vmem:[%s9 + $0x170] sm:$0xff]
        %v984 = vld [vmem:[%s9 + $0x178] sm:$0xff]
        %v985 = vld [vmem:[%s9 + $0x180] sm:$0xff]
        %v986 = vld [vmem:[%s9 + $0x188] sm:$0xff]
        %v987 = vld [vmem:[%s9 + $0x190] sm:$0xff]
        %v988 = vld [vmem:[%s9 + $0x198] sm:$0xff]
        %v989 = vld [vmem:[%s9 + $0x1a0] sm:$0xff]
        %v990 = vld [vmem:[%s9 + $0x1a8] sm:$0xff]
        %v991 = vld [vmem:[%s9 + $0x1b0] sm:$0xff]
        %v992 = vld [vmem:[%s9 + $0x1b8] sm:$0xff]
        %v993 = vld [vmem:[%s9 + $0x1c0] sm:$0xff]
        %v994 = vld [vmem:[%s9 + $0x1c8] sm:$0xff]
        %v995 = vld [vmem:[%s9 + $0x1d0] sm:$0xff]
        %v996 = vld [vmem:[%s9 + $0x1d8] sm:$0xff]
        %v997 = vld [vmem:[%s9 + $0x1e0] sm:$0xff]
        %v998 = vld [vmem:[%s9 + $0x1e8] sm:$0xff]
        %v999 = vld [vmem:[%s9 + $0x1f0] sm:$0xff]
        %v1000 = vld [vmem:[%s9 + $0x1f8] sm:$0xff]
        %v1001 = vld [vmem:[%s9 + $0x200] sm:$0xff]
        %v1002 = vld [vmem:[%s9 + $0x208] sm:$0xff]
        %v1003 = vld [vmem:[%s9 + $0x210] sm:$0xff]
        %v1004 = vld [vmem:[%s9 + $0x218] sm:$0xff]
        %v1005 = vld [vmem:[%s9 + $0x220] sm:$0xff]
        %v1006 = vld [vmem:[%s9 + $0x228] sm:$0xff]
        %v1007 = vld [vmem:[%s9 + $0x230] sm:$0xff]
        %v1008 = vld [vmem:[%s9 + $0x238] sm:$0xff]
        %v1009 = vld [vmem:[%s9 + $0x240] sm:$0xff]
        %v1010 = vld [vmem:[%s9 + $0x248] sm:$0xff]
        %v1011 = vld [vmem:[%s9 + $0x250] sm:$0xff]
        %v1012 = vld [vmem:[%s9 + $0x258] sm:$0xff]
        %v1013 = vld [vmem:[%s9 + $0x260] sm:$0xff]
        %v1014 = vld [vmem:[%s9 + $0x268] sm:$0xff]
        %v1015 = vld [vmem:[%s9 + $0x270] sm:$0xff]
        %v1016 = vld [vmem:[%s9 + $0x278] sm:$0xff]
        %v1017 = vld [vmem:[%s9 + $0x280] sm:$0xff]
        %v1018 = vld [vmem:[%s9 + $0x288] sm:$0xff]
        %v1019 = vld [vmem:[%s9 + $0x290] sm:$0xff]
        %v1020 = vld [vmem:[%s9 + $0x298] sm:$0xff]
        %v1021 = vld [vmem:[%s9 + $0x2a0] sm:$0xff]
        %v1022 = vld [vmem:[%s9 + $0x2a8] sm:$0xff]
        %v1023 = vld [vmem:[%s9 + $0x2b0] sm:$0xff]
        %v1024 = vld [vmem:[%s9 + $0x2b8] sm:$0xff]
        %v1025 = vld [vmem:[%s9 + $0x2c0] sm:$0xff]
        %v1026 = vld [vmem:[%s9 + $0x2c8] sm:$0xff]
        %v1027 = vld [vmem:[%s9 + $0x2d0] sm:$0xff]
        %v1028 = vld [vmem:[%s9 + $0x2d8] sm:$0xff]
        %v1029 = vld [vmem:[%s9 + $0x2e0] sm:$0xff]
        %v1030 = vld [vmem:[%s9 + $0x2e8] sm:$0xff]
        %v1031 = vld [vmem:[%s9 + $0x2f0] sm:$0xff]
        %v1032 = vld [vmem:[%s9 + $0x2f8] sm:$0xff]
        %v1033 = vld [vmem:[%s9 + $0x300] sm:$0xff]
        %v1034 = vld [vmem:[%s9 + $0x308] sm:$0xff]
        %v1035 = vld [vmem:[%s9 + $0x310] sm:$0xff]
        %v1036 = vld [vmem:[%s9 + $0x318] sm:$0xff]
        %v1037 = vld [vmem:[%s9 + $0x320] sm:$0xff]
        %v1038 = vld [vmem:[%s9 + $0x328] sm:$0xff]
        %v1039 = vld [vmem:[%s9 + $0x330] sm:$0xff]
        %v1040 = vld [vmem:[%s9 + $0x338] sm:$0xff]
        %v1041 = vld [vmem:[%s9 + $0x340] sm:$0xff]
        %v1042 = vld [vmem:[%s9 + $0x348] sm:$0xff]
        %v1043 = vld [vmem:[%s9 + $0x350] sm:$0xff]
        %v1044 = vld [vmem:[%s9 + $0x358] sm:$0xff]
        %v1045 = vld [vmem:[%s9 + $0x360] sm:$0xff]
        %v1046 = vld [vmem:[%s9 + $0x368] sm:$0xff]
        %v1047 = vld [vmem:[%s9 + $0x370] sm:$0xff]
        %v1048 = vld [vmem:[%s9 + $0x378] sm:$0xff]
        %v1049 = vld [vmem:[%s9 + $0x380] sm:$0xff]
        %v1050 = vld [vmem:[%s9 + $0x388] sm:$0xff]
        %v1051 = vld [vmem:[%s9 + $0x390] sm:$0xff]
        %v1052 = vld [vmem:[%s9 + $0x398] sm:$0xff]
        %v1053 = vld [vmem:[%s9 + $0x3a0] sm:$0xff]
        %v1054 = vld [vmem:[%s9 + $0x3a8] sm:$0xff]
        %v1055 = vld [vmem:[%s9 + $0x3b0] sm:$0xff]
        %v1056 = vld [vmem:[%s9 + $0x3b8] sm:$0xff]
        %v1057 = vld [vmem:[%s9 + $0x3c0] sm:$0xff]
        %v1058 = vld [vmem:[%s9 + $0x3c8] sm:$0xff]
        %v1059 = vld [vmem:[%s9 + $0x3d0] sm:$0xff]
        %v1060 = vld [vmem:[%s9 + $0x3d8] sm:$0xff]
        %v1061 = vld [vmem:[%s9 + $0x3e0] sm:$0xff]
        %v1062 = vld [vmem:[%s9 + $0x3e8] sm:$0xff]
        %v1063 = vld [vmem:[%s9 + $0x3f0] sm:$0xff]
        %v1064 = vld [vmem:[%s9 + $0x3f8] sm:$0xff]
        %vm1065 = vcmask 7168
        %1066 = vst.msk [vmem:[%s12] sm:$0xff] %vm1065, %v937
        %1067 = vst.msk [vmem:[%s12 + $0x8] sm:$0xff] %vm1065, %v938
        %1068 = vst.msk [vmem:[%s12 + $0x10] sm:$0xff] %vm1065, %v939
        %1069 = vst.msk [vmem:[%s12 + $0x18] sm:$0xff] %vm1065, %v940
        %1070 = vst.msk [vmem:[%s12 + $0x20] sm:$0xff] %vm1065, %v941
        %1071 = vst.msk [vmem:[%s12 + $0x28] sm:$0xff] %vm1065, %v942
        %1072 = vst.msk [vmem:[%s12 + $0x30] sm:$0xff] %vm1065, %v943
        %1073 = vst.msk [vmem:[%s12 + $0x38] sm:$0xff] %vm1065, %v944
        %1074 = vst.msk [vmem:[%s12 + $0x40] sm:$0xff] %vm1065, %v945
        %1075 = vst.msk [vmem:[%s12 + $0x48] sm:$0xff] %vm1065, %v946
        %1076 = vst.msk [vmem:[%s12 + $0x50] sm:$0xff] %vm1065, %v947
        %1077 = vst.msk [vmem:[%s12 + $0x58] sm:$0xff] %vm1065, %v948
        %1078 = vst.msk [vmem:[%s12 + $0x60] sm:$0xff] %vm1065, %v949
        %1079 = vst.msk [vmem:[%s12 + $0x68] sm:$0xff] %vm1065, %v950
        %1080 = vst.msk [vmem:[%s12 + $0x70] sm:$0xff] %vm1065, %v951
        %1081 = vst.msk [vmem:[%s12 + $0x78] sm:$0xff] %vm1065, %v952
        %1082 = vst.msk [vmem:[%s12 + $0x80] sm:$0xff] %vm1065, %v953
        %1083 = vst.msk [vmem:[%s12 + $0x88] sm:$0xff] %vm1065, %v954
        %1084 = vst.msk [vmem:[%s12 + $0x90] sm:$0xff] %vm1065, %v955
        %1085 = vst.msk [vmem:[%s12 + $0x98] sm:$0xff] %vm1065, %v956
        %1086 = vst.msk [vmem:[%s12 + $0xa0] sm:$0xff] %vm1065, %v957
        %1087 = vst.msk [vmem:[%s12 + $0xa8] sm:$0xff] %vm1065, %v958
        %1088 = vst.msk [vmem:[%s12 + $0xb0] sm:$0xff] %vm1065, %v959
        %1089 = vst.msk [vmem:[%s12 + $0xb8] sm:$0xff] %vm1065, %v960
        %1090 = vst.msk [vmem:[%s12 + $0xc0] sm:$0xff] %vm1065, %v961
        %1091 = vst.msk [vmem:[%s12 + $0xc8] sm:$0xff] %vm1065, %v962
        %1092 = vst.msk [vmem:[%s12 + $0xd0] sm:$0xff] %vm1065, %v963
        %1093 = vst.msk [vmem:[%s12 + $0xd8] sm:$0xff] %vm1065, %v964
        %1094 = vst.msk [vmem:[%s12 + $0xe0] sm:$0xff] %vm1065, %v965
        %1095 = vst.msk [vmem:[%s12 + $0xe8] sm:$0xff] %vm1065, %v966
        %1096 = vst.msk [vmem:[%s12 + $0xf0] sm:$0xff] %vm1065, %v967
        %1097 = vst.msk [vmem:[%s12 + $0xf8] sm:$0xff] %vm1065, %v968
        %1098 = vst.msk [vmem:[%s12 + $0x100] sm:$0xff] %vm1065, %v969
        %1099 = vst.msk [vmem:[%s12 + $0x108] sm:$0xff] %vm1065, %v970
        %1100 = vst.msk [vmem:[%s12 + $0x110] sm:$0xff] %vm1065, %v971
        %1101 = vst.msk [vmem:[%s12 + $0x118] sm:$0xff] %vm1065, %v972
        %1102 = vst.msk [vmem:[%s12 + $0x120] sm:$0xff] %vm1065, %v973
        %1103 = vst.msk [vmem:[%s12 + $0x128] sm:$0xff] %vm1065, %v974
        %1104 = vst.msk [vmem:[%s12 + $0x130] sm:$0xff] %vm1065, %v975
        %1105 = vst.msk [vmem:[%s12 + $0x138] sm:$0xff] %vm1065, %v976
        %1106 = vst.msk [vmem:[%s12 + $0x140] sm:$0xff] %vm1065, %v977
        %1107 = vst.msk [vmem:[%s12 + $0x148] sm:$0xff] %vm1065, %v978
        %1108 = vst.msk [vmem:[%s12 + $0x150] sm:$0xff] %vm1065, %v979
        %1109 = vst.msk [vmem:[%s12 + $0x158] sm:$0xff] %vm1065, %v980
        %1110 = vst.msk [vmem:[%s12 + $0x160] sm:$0xff] %vm1065, %v981
        %1111 = vst.msk [vmem:[%s12 + $0x168] sm:$0xff] %vm1065, %v982
        %1112 = vst.msk [vmem:[%s12 + $0x170] sm:$0xff] %vm1065, %v983
        %1113 = vst.msk [vmem:[%s12 + $0x178] sm:$0xff] %vm1065, %v984
        %1114 = vst.msk [vmem:[%s12 + $0x180] sm:$0xff] %vm1065, %v985
        %1115 = vst.msk [vmem:[%s12 + $0x188] sm:$0xff] %vm1065, %v986
        %1116 = vst.msk [vmem:[%s12 + $0x190] sm:$0xff] %vm1065, %v987
        %1117 = vst.msk [vmem:[%s12 + $0x198] sm:$0xff] %vm1065, %v988
        %1118 = vst.msk [vmem:[%s12 + $0x1a0] sm:$0xff] %vm1065, %v989
        %1119 = vst.msk [vmem:[%s12 + $0x1a8] sm:$0xff] %vm1065, %v990
        %1120 = vst.msk [vmem:[%s12 + $0x1b0] sm:$0xff] %vm1065, %v991
        %1121 = vst.msk [vmem:[%s12 + $0x1b8] sm:$0xff] %vm1065, %v992
        %1122 = vst.msk [vmem:[%s12 + $0x1c0] sm:$0xff] %vm1065, %v993
        %1123 = vst.msk [vmem:[%s12 + $0x1c8] sm:$0xff] %vm1065, %v994
        %1124 = vst.msk [vmem:[%s12 + $0x1d0] sm:$0xff] %vm1065, %v995
        %1125 = vst.msk [vmem:[%s12 + $0x1d8] sm:$0xff] %vm1065, %v996
        %1126 = vst.msk [vmem:[%s12 + $0x1e0] sm:$0xff] %vm1065, %v997
        %1127 = vst.msk [vmem:[%s12 + $0x1e8] sm:$0xff] %vm1065, %v998
        %1128 = vst.msk [vmem:[%s12 + $0x1f0] sm:$0xff] %vm1065, %v999
        %1129 = vst.msk [vmem:[%s12 + $0x1f8] sm:$0xff] %vm1065, %v1000
        %1130 = vst.msk [vmem:[%s12 + $0x200] sm:$0xff] %vm1065, %v1001
        %1131 = vst.msk [vmem:[%s12 + $0x208] sm:$0xff] %vm1065, %v1002
        %1132 = vst.msk [vmem:[%s12 + $0x210] sm:$0xff] %vm1065, %v1003
        %1133 = vst.msk [vmem:[%s12 + $0x218] sm:$0xff] %vm1065, %v1004
        %1134 = vst.msk [vmem:[%s12 + $0x220] sm:$0xff] %vm1065, %v1005
        %1135 = vst.msk [vmem:[%s12 + $0x228] sm:$0xff] %vm1065, %v1006
        %1136 = vst.msk [vmem:[%s12 + $0x230] sm:$0xff] %vm1065, %v1007
        %1137 = vst.msk [vmem:[%s12 + $0x238] sm:$0xff] %vm1065, %v1008
        %1138 = vst.msk [vmem:[%s12 + $0x240] sm:$0xff] %vm1065, %v1009
        %1139 = vst.msk [vmem:[%s12 + $0x248] sm:$0xff] %vm1065, %v1010
        %1140 = vst.msk [vmem:[%s12 + $0x250] sm:$0xff] %vm1065, %v1011
        %1141 = vst.msk [vmem:[%s12 + $0x258] sm:$0xff] %vm1065, %v1012
        %1142 = vst.msk [vmem:[%s12 + $0x260] sm:$0xff] %vm1065, %v1013
        %1143 = vst.msk [vmem:[%s12 + $0x268] sm:$0xff] %vm1065, %v1014
        %1144 = vst.msk [vmem:[%s12 + $0x270] sm:$0xff] %vm1065, %v1015
        %1145 = vst.msk [vmem:[%s12 + $0x278] sm:$0xff] %vm1065, %v1016
        %1146 = vst.msk [vmem:[%s12 + $0x280] sm:$0xff] %vm1065, %v1017
        %1147 = vst.msk [vmem:[%s12 + $0x288] sm:$0xff] %vm1065, %v1018
        %1148 = vst.msk [vmem:[%s12 + $0x290] sm:$0xff] %vm1065, %v1019
        %1149 = vst.msk [vmem:[%s12 + $0x298] sm:$0xff] %vm1065, %v1020
        %1150 = vst.msk [vmem:[%s12 + $0x2a0] sm:$0xff] %vm1065, %v1021
        %1151 = vst.msk [vmem:[%s12 + $0x2a8] sm:$0xff] %vm1065, %v1022
        %1152 = vst.msk [vmem:[%s12 + $0x2b0] sm:$0xff] %vm1065, %v1023
        %1153 = vst.msk [vmem:[%s12 + $0x2b8] sm:$0xff] %vm1065, %v1024
        %1154 = vst.msk [vmem:[%s12 + $0x2c0] sm:$0xff] %vm1065, %v1025
        %1155 = vst.msk [vmem:[%s12 + $0x2c8] sm:$0xff] %vm1065, %v1026
        %1156 = vst.msk [vmem:[%s12 + $0x2d0] sm:$0xff] %vm1065, %v1027
        %1157 = vst.msk [vmem:[%s12 + $0x2d8] sm:$0xff] %vm1065, %v1028
        %1158 = vst.msk [vmem:[%s12 + $0x2e0] sm:$0xff] %vm1065, %v1029
        %1159 = vst.msk [vmem:[%s12 + $0x2e8] sm:$0xff] %vm1065, %v1030
        %1160 = vst.msk [vmem:[%s12 + $0x2f0] sm:$0xff] %vm1065, %v1031
        %1161 = vst.msk [vmem:[%s12 + $0x2f8] sm:$0xff] %vm1065, %v1032
        %1162 = vst.msk [vmem:[%s12 + $0x300] sm:$0xff] %vm1065, %v1033
        %1163 = vst.msk [vmem:[%s12 + $0x308] sm:$0xff] %vm1065, %v1034
        %1164 = vst.msk [vmem:[%s12 + $0x310] sm:$0xff] %vm1065, %v1035
        %1165 = vst.msk [vmem:[%s12 + $0x318] sm:$0xff] %vm1065, %v1036
        %1166 = vst.msk [vmem:[%s12 + $0x320] sm:$0xff] %vm1065, %v1037
        %1167 = vst.msk [vmem:[%s12 + $0x328] sm:$0xff] %vm1065, %v1038
        %1168 = vst.msk [vmem:[%s12 + $0x330] sm:$0xff] %vm1065, %v1039
        %1169 = vst.msk [vmem:[%s12 + $0x338] sm:$0xff] %vm1065, %v1040
        %1170 = vst.msk [vmem:[%s12 + $0x340] sm:$0xff] %vm1065, %v1041
        %1171 = vst.msk [vmem:[%s12 + $0x348] sm:$0xff] %vm1065, %v1042
        %1172 = vst.msk [vmem:[%s12 + $0x350] sm:$0xff] %vm1065, %v1043
        %1173 = vst.msk [vmem:[%s12 + $0x358] sm:$0xff] %vm1065, %v1044
        %1174 = vst.msk [vmem:[%s12 + $0x360] sm:$0xff] %vm1065, %v1045
        %1175 = vst.msk [vmem:[%s12 + $0x368] sm:$0xff] %vm1065, %v1046
        %1176 = vst.msk [vmem:[%s12 + $0x370] sm:$0xff] %vm1065, %v1047
        %1177 = vst.msk [vmem:[%s12 + $0x378] sm:$0xff] %vm1065, %v1048
        %1178 = vst.msk [vmem:[%s12 + $0x380] sm:$0xff] %vm1065, %v1049
        %1179 = vst.msk [vmem:[%s12 + $0x388] sm:$0xff] %vm1065, %v1050
        %1180 = vst.msk [vmem:[%s12 + $0x390] sm:$0xff] %vm1065, %v1051
        %1181 = vst.msk [vmem:[%s12 + $0x398] sm:$0xff] %vm1065, %v1052
        %1182 = vst.msk [vmem:[%s12 + $0x3a0] sm:$0xff] %vm1065, %v1053
        %1183 = vst.msk [vmem:[%s12 + $0x3a8] sm:$0xff] %vm1065, %v1054
        %1184 = vst.msk [vmem:[%s12 + $0x3b0] sm:$0xff] %vm1065, %v1055
        %1185 = vst.msk [vmem:[%s12 + $0x3b8] sm:$0xff] %vm1065, %v1056
        %1186 = vst.msk [vmem:[%s12 + $0x3c0] sm:$0xff] %vm1065, %v1057
        %1187 = vst.msk [vmem:[%s12 + $0x3c8] sm:$0xff] %vm1065, %v1058
        %1188 = vst.msk [vmem:[%s12 + $0x3d0] sm:$0xff] %vm1065, %v1059
        %1189 = vst.msk [vmem:[%s12 + $0x3d8] sm:$0xff] %vm1065, %v1060
        %1190 = vst.msk [vmem:[%s12 + $0x3e0] sm:$0xff] %vm1065, %v1061
        %1191 = vst.msk [vmem:[%s12 + $0x3e8] sm:$0xff] %vm1065, %v1062
        %1192 = vst.msk [vmem:[%s12 + $0x3f0] sm:$0xff] %vm1065, %v1063
        %1193 = vst.msk [vmem:[%s12 + $0x3f8] sm:$0xff] %vm1065, %v1064
        %v1194 = vld [vmem:[%s10] sm:$0xff]
        %v1195 = vld [vmem:[%s10 + $0x8] sm:$0xff]
        %v1196 = vld [vmem:[%s10 + $0x10] sm:$0xff]
        %v1197 = vld [vmem:[%s10 + $0x18] sm:$0xff]
        %v1198 = vld [vmem:[%s10 + $0x20] sm:$0xff]
        %v1199 = vld [vmem:[%s10 + $0x28] sm:$0xff]
        %v1200 = vld [vmem:[%s10 + $0x30] sm:$0xff]
        %v1201 = vld [vmem:[%s10 + $0x38] sm:$0xff]
        %v1202 = vld [vmem:[%s10 + $0x40] sm:$0xff]
        %v1203 = vld [vmem:[%s10 + $0x48] sm:$0xff]
        %v1204 = vld [vmem:[%s10 + $0x50] sm:$0xff]
        %v1205 = vld [vmem:[%s10 + $0x58] sm:$0xff]
        %v1206 = vld [vmem:[%s10 + $0x60] sm:$0xff]
        %v1207 = vld [vmem:[%s10 + $0x68] sm:$0xff]
        %v1208 = vld [vmem:[%s10 + $0x70] sm:$0xff]
        %v1209 = vld [vmem:[%s10 + $0x78] sm:$0xff]
        %v1210 = vld [vmem:[%s10 + $0x80] sm:$0xff]
        %v1211 = vld [vmem:[%s10 + $0x88] sm:$0xff]
        %v1212 = vld [vmem:[%s10 + $0x90] sm:$0xff]
        %v1213 = vld [vmem:[%s10 + $0x98] sm:$0xff]
        %v1214 = vld [vmem:[%s10 + $0xa0] sm:$0xff]
        %v1215 = vld [vmem:[%s10 + $0xa8] sm:$0xff]
        %v1216 = vld [vmem:[%s10 + $0xb0] sm:$0xff]
        %v1217 = vld [vmem:[%s10 + $0xb8] sm:$0xff]
        %v1218 = vld [vmem:[%s10 + $0xc0] sm:$0xff]
        %v1219 = vld [vmem:[%s10 + $0xc8] sm:$0xff]
        %v1220 = vld [vmem:[%s10 + $0xd0] sm:$0xff]
        %v1221 = vld [vmem:[%s10 + $0xd8] sm:$0xff]
        %v1222 = vld [vmem:[%s10 + $0xe0] sm:$0xff]
        %v1223 = vld [vmem:[%s10 + $0xe8] sm:$0xff]
        %v1224 = vld [vmem:[%s10 + $0xf0] sm:$0xff]
        %v1225 = vld [vmem:[%s10 + $0xf8] sm:$0xff]
        %v1226 = vld [vmem:[%s10 + $0x100] sm:$0xff]
        %v1227 = vld [vmem:[%s10 + $0x108] sm:$0xff]
        %v1228 = vld [vmem:[%s10 + $0x110] sm:$0xff]
        %v1229 = vld [vmem:[%s10 + $0x118] sm:$0xff]
        %v1230 = vld [vmem:[%s10 + $0x120] sm:$0xff]
        %v1231 = vld [vmem:[%s10 + $0x128] sm:$0xff]
        %v1232 = vld [vmem:[%s10 + $0x130] sm:$0xff]
        %v1233 = vld [vmem:[%s10 + $0x138] sm:$0xff]
        %v1234 = vld [vmem:[%s10 + $0x140] sm:$0xff]
        %v1235 = vld [vmem:[%s10 + $0x148] sm:$0xff]
        %v1236 = vld [vmem:[%s10 + $0x150] sm:$0xff]
        %v1237 = vld [vmem:[%s10 + $0x158] sm:$0xff]
        %v1238 = vld [vmem:[%s10 + $0x160] sm:$0xff]
        %v1239 = vld [vmem:[%s10 + $0x168] sm:$0xff]
        %v1240 = vld [vmem:[%s10 + $0x170] sm:$0xff]
        %v1241 = vld [vmem:[%s10 + $0x178] sm:$0xff]
        %v1242 = vld [vmem:[%s10 + $0x180] sm:$0xff]
        %v1243 = vld [vmem:[%s10 + $0x188] sm:$0xff]
        %v1244 = vld [vmem:[%s10 + $0x190] sm:$0xff]
        %v1245 = vld [vmem:[%s10 + $0x198] sm:$0xff]
        %v1246 = vld [vmem:[%s10 + $0x1a0] sm:$0xff]
        %v1247 = vld [vmem:[%s10 + $0x1a8] sm:$0xff]
        %v1248 = vld [vmem:[%s10 + $0x1b0] sm:$0xff]
        %v1249 = vld [vmem:[%s10 + $0x1b8] sm:$0xff]
        %v1250 = vld [vmem:[%s10 + $0x1c0] sm:$0xff]
        %v1251 = vld [vmem:[%s10 + $0x1c8] sm:$0xff]
        %v1252 = vld [vmem:[%s10 + $0x1d0] sm:$0xff]
        %v1253 = vld [vmem:[%s10 + $0x1d8] sm:$0xff]
        %v1254 = vld [vmem:[%s10 + $0x1e0] sm:$0xff]
        %v1255 = vld [vmem:[%s10 + $0x1e8] sm:$0xff]
        %v1256 = vld [vmem:[%s10 + $0x1f0] sm:$0xff]
        %v1257 = vld [vmem:[%s10 + $0x1f8] sm:$0xff]
        %v1258 = vld [vmem:[%s10 + $0x200] sm:$0xff]
        %v1259 = vld [vmem:[%s10 + $0x208] sm:$0xff]
        %v1260 = vld [vmem:[%s10 + $0x210] sm:$0xff]
        %v1261 = vld [vmem:[%s10 + $0x218] sm:$0xff]
        %v1262 = vld [vmem:[%s10 + $0x220] sm:$0xff]
        %v1263 = vld [vmem:[%s10 + $0x228] sm:$0xff]
        %v1264 = vld [vmem:[%s10 + $0x230] sm:$0xff]
        %v1265 = vld [vmem:[%s10 + $0x238] sm:$0xff]
        %v1266 = vld [vmem:[%s10 + $0x240] sm:$0xff]
        %v1267 = vld [vmem:[%s10 + $0x248] sm:$0xff]
        %v1268 = vld [vmem:[%s10 + $0x250] sm:$0xff]
        %v1269 = vld [vmem:[%s10 + $0x258] sm:$0xff]
        %v1270 = vld [vmem:[%s10 + $0x260] sm:$0xff]
        %v1271 = vld [vmem:[%s10 + $0x268] sm:$0xff]
        %v1272 = vld [vmem:[%s10 + $0x270] sm:$0xff]
        %v1273 = vld [vmem:[%s10 + $0x278] sm:$0xff]
        %v1274 = vld [vmem:[%s10 + $0x280] sm:$0xff]
        %v1275 = vld [vmem:[%s10 + $0x288] sm:$0xff]
        %v1276 = vld [vmem:[%s10 + $0x290] sm:$0xff]
        %v1277 = vld [vmem:[%s10 + $0x298] sm:$0xff]
        %v1278 = vld [vmem:[%s10 + $0x2a0] sm:$0xff]
        %v1279 = vld [vmem:[%s10 + $0x2a8] sm:$0xff]
        %v1280 = vld [vmem:[%s10 + $0x2b0] sm:$0xff]
        %v1281 = vld [vmem:[%s10 + $0x2b8] sm:$0xff]
        %v1282 = vld [vmem:[%s10 + $0x2c0] sm:$0xff]
        %v1283 = vld [vmem:[%s10 + $0x2c8] sm:$0xff]
        %v1284 = vld [vmem:[%s10 + $0x2d0] sm:$0xff]
        %v1285 = vld [vmem:[%s10 + $0x2d8] sm:$0xff]
        %v1286 = vld [vmem:[%s10 + $0x2e0] sm:$0xff]
        %v1287 = vld [vmem:[%s10 + $0x2e8] sm:$0xff]
        %v1288 = vld [vmem:[%s10 + $0x2f0] sm:$0xff]
        %v1289 = vld [vmem:[%s10 + $0x2f8] sm:$0xff]
        %v1290 = vld [vmem:[%s10 + $0x300] sm:$0xff]
        %v1291 = vld [vmem:[%s10 + $0x308] sm:$0xff]
        %v1292 = vld [vmem:[%s10 + $0x310] sm:$0xff]
        %v1293 = vld [vmem:[%s10 + $0x318] sm:$0xff]
        %v1294 = vld [vmem:[%s10 + $0x320] sm:$0xff]
        %v1295 = vld [vmem:[%s10 + $0x328] sm:$0xff]
        %v1296 = vld [vmem:[%s10 + $0x330] sm:$0xff]
        %v1297 = vld [vmem:[%s10 + $0x338] sm:$0xff]
        %v1298 = vld [vmem:[%s10 + $0x340] sm:$0xff]
        %v1299 = vld [vmem:[%s10 + $0x348] sm:$0xff]
        %v1300 = vld [vmem:[%s10 + $0x350] sm:$0xff]
        %v1301 = vld [vmem:[%s10 + $0x358] sm:$0xff]
        %v1302 = vld [vmem:[%s10 + $0x360] sm:$0xff]
        %v1303 = vld [vmem:[%s10 + $0x368] sm:$0xff]
        %v1304 = vld [vmem:[%s10 + $0x370] sm:$0xff]
        %v1305 = vld [vmem:[%s10 + $0x378] sm:$0xff]
        %v1306 = vld [vmem:[%s10 + $0x380] sm:$0xff]
        %v1307 = vld [vmem:[%s10 + $0x388] sm:$0xff]
        %v1308 = vld [vmem:[%s10 + $0x390] sm:$0xff]
        %v1309 = vld [vmem:[%s10 + $0x398] sm:$0xff]
        %v1310 = vld [vmem:[%s10 + $0x3a0] sm:$0xff]
        %v1311 = vld [vmem:[%s10 + $0x3a8] sm:$0xff]
        %v1312 = vld [vmem:[%s10 + $0x3b0] sm:$0xff]
        %v1313 = vld [vmem:[%s10 + $0x3b8] sm:$0xff]
        %v1314 = vld [vmem:[%s10 + $0x3c0] sm:$0xff]
        %v1315 = vld [vmem:[%s10 + $0x3c8] sm:$0xff]
        %v1316 = vld [vmem:[%s10 + $0x3d0] sm:$0xff]
        %v1317 = vld [vmem:[%s10 + $0x3d8] sm:$0xff]
        %v1318 = vld [vmem:[%s10 + $0x3e0] sm:$0xff]
        %v1319 = vld [vmem:[%s10 + $0x3e8] sm:$0xff]
        %v1320 = vld [vmem:[%s10 + $0x3f0] sm:$0xff]
        %v1321 = vld [vmem:[%s10 + $0x3f8] sm:$0xff]
        %v1322 = vmul.f32 %v1194, %v1194
        %v1323 = vmul.f32 %v1195, %v1195
        %v1324 = vmul.f32 %v1196, %v1196
        %v1325 = vmul.f32 %v1197, %v1197
        %v1326 = vmul.f32 %v1198, %v1198
        %v1327 = vmul.f32 %v1199, %v1199
        %v1328 = vmul.f32 %v1200, %v1200
        %v1329 = vmul.f32 %v1201, %v1201
        %v1330 = vmul.f32 %v1202, %v1202
        %v1331 = vmul.f32 %v1203, %v1203
        %v1332 = vmul.f32 %v1204, %v1204
        %v1333 = vmul.f32 %v1205, %v1205
        %v1334 = vmul.f32 %v1206, %v1206
        %v1335 = vmul.f32 %v1207, %v1207
        %v1336 = vmul.f32 %v1208, %v1208
        %v1337 = vmul.f32 %v1209, %v1209
        %v1338 = vmul.f32 %v1210, %v1210
        %v1339 = vmul.f32 %v1211, %v1211
        %v1340 = vmul.f32 %v1212, %v1212
        %v1341 = vmul.f32 %v1213, %v1213
        %v1342 = vmul.f32 %v1214, %v1214
        %v1343 = vmul.f32 %v1215, %v1215
        %v1344 = vmul.f32 %v1216, %v1216
        %v1345 = vmul.f32 %v1217, %v1217
        %v1346 = vmul.f32 %v1218, %v1218
        %v1347 = vmul.f32 %v1219, %v1219
        %v1348 = vmul.f32 %v1220, %v1220
        %v1349 = vmul.f32 %v1221, %v1221
        %v1350 = vmul.f32 %v1222, %v1222
        %v1351 = vmul.f32 %v1223, %v1223
        %v1352 = vmul.f32 %v1224, %v1224
        %v1353 = vmul.f32 %v1225, %v1225
        %v1354 = vmul.f32 %v1226, %v1226
        %v1355 = vmul.f32 %v1227, %v1227
        %v1356 = vmul.f32 %v1228, %v1228
        %v1357 = vmul.f32 %v1229, %v1229
        %v1358 = vmul.f32 %v1230, %v1230
        %v1359 = vmul.f32 %v1231, %v1231
        %v1360 = vmul.f32 %v1232, %v1232
        %v1361 = vmul.f32 %v1233, %v1233
        %v1362 = vmul.f32 %v1234, %v1234
        %v1363 = vmul.f32 %v1235, %v1235
        %v1364 = vmul.f32 %v1236, %v1236
        %v1365 = vmul.f32 %v1237, %v1237
        %v1366 = vmul.f32 %v1238, %v1238
        %v1367 = vmul.f32 %v1239, %v1239
        %v1368 = vmul.f32 %v1240, %v1240
        %v1369 = vmul.f32 %v1241, %v1241
        %v1370 = vmul.f32 %v1242, %v1242
        %v1371 = vmul.f32 %v1243, %v1243
        %v1372 = vmul.f32 %v1244, %v1244
        %v1373 = vmul.f32 %v1245, %v1245
        %v1374 = vmul.f32 %v1246, %v1246
        %v1375 = vmul.f32 %v1247, %v1247
        %v1376 = vmul.f32 %v1248, %v1248
        %v1377 = vmul.f32 %v1249, %v1249
        %v1378 = vmul.f32 %v1250, %v1250
        %v1379 = vmul.f32 %v1251, %v1251
        %v1380 = vmul.f32 %v1252, %v1252
        %v1381 = vmul.f32 %v1253, %v1253
        %v1382 = vmul.f32 %v1254, %v1254
        %v1383 = vmul.f32 %v1255, %v1255
        %v1384 = vmul.f32 %v1256, %v1256
        %v1385 = vmul.f32 %v1257, %v1257
        %v1386 = vmul.f32 %v1258, %v1258
        %v1387 = vmul.f32 %v1259, %v1259
        %v1388 = vmul.f32 %v1260, %v1260
        %v1389 = vmul.f32 %v1261, %v1261
        %v1390 = vmul.f32 %v1262, %v1262
        %v1391 = vmul.f32 %v1263, %v1263
        %v1392 = vmul.f32 %v1264, %v1264
        %v1393 = vmul.f32 %v1265, %v1265
        %v1394 = vmul.f32 %v1266, %v1266
        %v1395 = vmul.f32 %v1267, %v1267
        %v1396 = vmul.f32 %v1268, %v1268
        %v1397 = vmul.f32 %v1269, %v1269
        %v1398 = vmul.f32 %v1270, %v1270
        %v1399 = vmul.f32 %v1271, %v1271
        %v1400 = vmul.f32 %v1272, %v1272
        %v1401 = vmul.f32 %v1273, %v1273
        %v1402 = vmul.f32 %v1274, %v1274
        %v1403 = vmul.f32 %v1275, %v1275
        %v1404 = vmul.f32 %v1276, %v1276
        %v1405 = vmul.f32 %v1277, %v1277
        %v1406 = vmul.f32 %v1278, %v1278
        %v1407 = vmul.f32 %v1279, %v1279
        %v1408 = vmul.f32 %v1280, %v1280
        %v1409 = vmul.f32 %v1281, %v1281
        %v1410 = vmul.f32 %v1282, %v1282
        %v1411 = vmul.f32 %v1283, %v1283
        %v1412 = vmul.f32 %v1284, %v1284
        %v1413 = vmul.f32 %v1285, %v1285
        %v1414 = vmul.f32 %v1286, %v1286
        %v1415 = vmul.f32 %v1287, %v1287
        %v1416 = vmul.f32 %v1288, %v1288
        %v1417 = vmul.f32 %v1289, %v1289
        %v1418 = vmul.f32 %v1290, %v1290
        %v1419 = vmul.f32 %v1291, %v1291
        %v1420 = vmul.f32 %v1292, %v1292
        %v1421 = vmul.f32 %v1293, %v1293
        %v1422 = vmul.f32 %v1294, %v1294
        %v1423 = vmul.f32 %v1295, %v1295
        %v1424 = vmul.f32 %v1296, %v1296
        %v1425 = vmul.f32 %v1297, %v1297
        %v1426 = vmul.f32 %v1298, %v1298
        %v1427 = vmul.f32 %v1299, %v1299
        %v1428 = vmul.f32 %v1300, %v1300
        %v1429 = vmul.f32 %v1301, %v1301
        %v1430 = vmul.f32 %v1302, %v1302
        %v1431 = vmul.f32 %v1303, %v1303
        %v1432 = vmul.f32 %v1304, %v1304
        %v1433 = vmul.f32 %v1305, %v1305
        %v1434 = vmul.f32 %v1306, %v1306
        %v1435 = vmul.f32 %v1307, %v1307
        %v1436 = vmul.f32 %v1308, %v1308
        %v1437 = vmul.f32 %v1309, %v1309
        %v1438 = vmul.f32 %v1310, %v1310
        %v1439 = vmul.f32 %v1311, %v1311
        %v1440 = vmul.f32 %v1312, %v1312
        %v1441 = vmul.f32 %v1313, %v1313
        %v1442 = vmul.f32 %v1314, %v1314
        %v1443 = vmul.f32 %v1315, %v1315
        %v1444 = vmul.f32 %v1316, %v1316
        %v1445 = vmul.f32 %v1317, %v1317
        %v1446 = vmul.f32 %v1318, %v1318
        %v1447 = vmul.f32 %v1319, %v1319
        %v1448 = vmul.f32 %v1320, %v1320
        %v1449 = vmul.f32 %v1321, %v1321
        %v1450 = vsel %vm552, %v1322, 0.0
        %1451 = vadd.xlane.f32.xlu0 %v1450
        %v1452 = vpop.xlane.xlu0 %1451
        %v1453 = vsel %vm552, %v1323, 0.0
        %1454 = vadd.xlane.f32.xlu0 %v1453
        %v1455 = vpop.xlane.xlu0 %1454
        %v1456 = vsel %vm552, %v1324, 0.0
        %1457 = vadd.xlane.f32.xlu0 %v1456
        %v1458 = vpop.xlane.xlu0 %1457
        %v1459 = vsel %vm552, %v1325, 0.0
        %1460 = vadd.xlane.f32.xlu0 %v1459
        %v1461 = vpop.xlane.xlu0 %1460
        %v1462 = vsel %vm552, %v1326, 0.0
        %1463 = vadd.xlane.f32.xlu0 %v1462
        %v1464 = vpop.xlane.xlu0 %1463
        %v1465 = vsel %vm552, %v1327, 0.0
        %1466 = vadd.xlane.f32.xlu0 %v1465
        %v1467 = vpop.xlane.xlu0 %1466
        %v1468 = vsel %vm552, %v1328, 0.0
        %1469 = vadd.xlane.f32.xlu0 %v1468
        %v1470 = vpop.xlane.xlu0 %1469
        %v1471 = vsel %vm552, %v1329, 0.0
        %1472 = vadd.xlane.f32.xlu0 %v1471
        %v1473 = vpop.xlane.xlu0 %1472
        %v1474 = vsel %vm552, %v1330, 0.0
        %1475 = vadd.xlane.f32.xlu0 %v1474
        %v1476 = vpop.xlane.xlu0 %1475
        %v1477 = vsel %vm552, %v1331, 0.0
        %1478 = vadd.xlane.f32.xlu0 %v1477
        %v1479 = vpop.xlane.xlu0 %1478
        %v1480 = vsel %vm552, %v1332, 0.0
        %1481 = vadd.xlane.f32.xlu0 %v1480
        %v1482 = vpop.xlane.xlu0 %1481
        %v1483 = vsel %vm552, %v1333, 0.0
        %1484 = vadd.xlane.f32.xlu0 %v1483
        %v1485 = vpop.xlane.xlu0 %1484
        %v1486 = vsel %vm552, %v1334, 0.0
        %1487 = vadd.xlane.f32.xlu0 %v1486
        %v1488 = vpop.xlane.xlu0 %1487
        %v1489 = vsel %vm552, %v1335, 0.0
        %1490 = vadd.xlane.f32.xlu0 %v1489
        %v1491 = vpop.xlane.xlu0 %1490
        %v1492 = vsel %vm552, %v1336, 0.0
        %1493 = vadd.xlane.f32.xlu0 %v1492
        %v1494 = vpop.xlane.xlu0 %1493
        %v1495 = vsel %vm552, %v1337, 0.0
        %1496 = vadd.xlane.f32.xlu0 %v1495
        %v1497 = vpop.xlane.xlu0 %1496
        %v1498 = vsel %vm552, %v1338, 0.0
        %1499 = vadd.xlane.f32.xlu0 %v1498
        %v1500 = vpop.xlane.xlu0 %1499
        %v1501 = vsel %vm552, %v1339, 0.0
        %1502 = vadd.xlane.f32.xlu0 %v1501
        %v1503 = vpop.xlane.xlu0 %1502
        %v1504 = vsel %vm552, %v1340, 0.0
        %1505 = vadd.xlane.f32.xlu0 %v1504
        %v1506 = vpop.xlane.xlu0 %1505
        %v1507 = vsel %vm552, %v1341, 0.0
        %1508 = vadd.xlane.f32.xlu0 %v1507
        %v1509 = vpop.xlane.xlu0 %1508
        %v1510 = vsel %vm552, %v1342, 0.0
        %1511 = vadd.xlane.f32.xlu0 %v1510
        %v1512 = vpop.xlane.xlu0 %1511
        %v1513 = vsel %vm552, %v1343, 0.0
        %1514 = vadd.xlane.f32.xlu0 %v1513
        %v1515 = vpop.xlane.xlu0 %1514
        %v1516 = vsel %vm552, %v1344, 0.0
        %1517 = vadd.xlane.f32.xlu0 %v1516
        %v1518 = vpop.xlane.xlu0 %1517
        %v1519 = vsel %vm552, %v1345, 0.0
        %1520 = vadd.xlane.f32.xlu0 %v1519
        %v1521 = vpop.xlane.xlu0 %1520
        %v1522 = vsel %vm552, %v1346, 0.0
        %1523 = vadd.xlane.f32.xlu0 %v1522
        %v1524 = vpop.xlane.xlu0 %1523
        %v1525 = vsel %vm552, %v1347, 0.0
        %1526 = vadd.xlane.f32.xlu0 %v1525
        %v1527 = vpop.xlane.xlu0 %1526
        %v1528 = vsel %vm552, %v1348, 0.0
        %1529 = vadd.xlane.f32.xlu0 %v1528
        %v1530 = vpop.xlane.xlu0 %1529
        %v1531 = vsel %vm552, %v1349, 0.0
        %1532 = vadd.xlane.f32.xlu0 %v1531
        %v1533 = vpop.xlane.xlu0 %1532
        %v1534 = vsel %vm552, %v1350, 0.0
        %1535 = vadd.xlane.f32.xlu0 %v1534
        %v1536 = vpop.xlane.xlu0 %1535
        %v1537 = vsel %vm552, %v1351, 0.0
        %1538 = vadd.xlane.f32.xlu0 %v1537
        %v1539 = vpop.xlane.xlu0 %1538
        %v1540 = vsel %vm552, %v1352, 0.0
        %1541 = vadd.xlane.f32.xlu0 %v1540
        %v1542 = vpop.xlane.xlu0 %1541
        %v1543 = vsel %vm552, %v1353, 0.0
        %1544 = vadd.xlane.f32.xlu0 %v1543
        %v1545 = vpop.xlane.xlu0 %1544
        %v1546 = vsel %vm552, %v1354, 0.0
        %1547 = vadd.xlane.f32.xlu0 %v1546
        %v1548 = vpop.xlane.xlu0 %1547
        %v1549 = vsel %vm552, %v1355, 0.0
        %1550 = vadd.xlane.f32.xlu0 %v1549
        %v1551 = vpop.xlane.xlu0 %1550
        %v1552 = vsel %vm552, %v1356, 0.0
        %1553 = vadd.xlane.f32.xlu0 %v1552
        %v1554 = vpop.xlane.xlu0 %1553
        %v1555 = vsel %vm552, %v1357, 0.0
        %1556 = vadd.xlane.f32.xlu0 %v1555
        %v1557 = vpop.xlane.xlu0 %1556
        %v1558 = vsel %vm552, %v1358, 0.0
        %1559 = vadd.xlane.f32.xlu0 %v1558
        %v1560 = vpop.xlane.xlu0 %1559
        %v1561 = vsel %vm552, %v1359, 0.0
        %1562 = vadd.xlane.f32.xlu0 %v1561
        %v1563 = vpop.xlane.xlu0 %1562
        %v1564 = vsel %vm552, %v1360, 0.0
        %1565 = vadd.xlane.f32.xlu0 %v1564
        %v1566 = vpop.xlane.xlu0 %1565
        %v1567 = vsel %vm552, %v1361, 0.0
        %1568 = vadd.xlane.f32.xlu0 %v1567
        %v1569 = vpop.xlane.xlu0 %1568
        %v1570 = vsel %vm552, %v1362, 0.0
        %1571 = vadd.xlane.f32.xlu0 %v1570
        %v1572 = vpop.xlane.xlu0 %1571
        %v1573 = vsel %vm552, %v1363, 0.0
        %1574 = vadd.xlane.f32.xlu0 %v1573
        %v1575 = vpop.xlane.xlu0 %1574
        %v1576 = vsel %vm552, %v1364, 0.0
        %1577 = vadd.xlane.f32.xlu0 %v1576
        %v1578 = vpop.xlane.xlu0 %1577
        %v1579 = vsel %vm552, %v1365, 0.0
        %1580 = vadd.xlane.f32.xlu0 %v1579
        %v1581 = vpop.xlane.xlu0 %1580
        %v1582 = vsel %vm552, %v1366, 0.0
        %1583 = vadd.xlane.f32.xlu0 %v1582
        %v1584 = vpop.xlane.xlu0 %1583
        %v1585 = vsel %vm552, %v1367, 0.0
        %1586 = vadd.xlane.f32.xlu0 %v1585
        %v1587 = vpop.xlane.xlu0 %1586
        %v1588 = vsel %vm552, %v1368, 0.0
        %1589 = vadd.xlane.f32.xlu0 %v1588
        %v1590 = vpop.xlane.xlu0 %1589
        %v1591 = vsel %vm552, %v1369, 0.0
        %1592 = vadd.xlane.f32.xlu0 %v1591
        %v1593 = vpop.xlane.xlu0 %1592
        %v1594 = vsel %vm552, %v1370, 0.0
        %1595 = vadd.xlane.f32.xlu0 %v1594
        %v1596 = vpop.xlane.xlu0 %1595
        %v1597 = vsel %vm552, %v1371, 0.0
        %1598 = vadd.xlane.f32.xlu0 %v1597
        %v1599 = vpop.xlane.xlu0 %1598
        %v1600 = vsel %vm552, %v1372, 0.0
        %1601 = vadd.xlane.f32.xlu0 %v1600
        %v1602 = vpop.xlane.xlu0 %1601
        %v1603 = vsel %vm552, %v1373, 0.0
        %1604 = vadd.xlane.f32.xlu0 %v1603
        %v1605 = vpop.xlane.xlu0 %1604
        %v1606 = vsel %vm552, %v1374, 0.0
        %1607 = vadd.xlane.f32.xlu0 %v1606
        %v1608 = vpop.xlane.xlu0 %1607
        %v1609 = vsel %vm552, %v1375, 0.0
        %1610 = vadd.xlane.f32.xlu0 %v1609
        %v1611 = vpop.xlane.xlu0 %1610
        %v1612 = vsel %vm552, %v1376, 0.0
        %1613 = vadd.xlane.f32.xlu0 %v1612
        %v1614 = vpop.xlane.xlu0 %1613
        %v1615 = vsel %vm552, %v1377, 0.0
        %1616 = vadd.xlane.f32.xlu0 %v1615
        %v1617 = vpop.xlane.xlu0 %1616
        %v1618 = vsel %vm552, %v1378, 0.0
        %1619 = vadd.xlane.f32.xlu0 %v1618
        %v1620 = vpop.xlane.xlu0 %1619
        %v1621 = vsel %vm552, %v1379, 0.0
        %1622 = vadd.xlane.f32.xlu0 %v1621
        %v1623 = vpop.xlane.xlu0 %1622
        %v1624 = vsel %vm552, %v1380, 0.0
        %1625 = vadd.xlane.f32.xlu0 %v1624
        %v1626 = vpop.xlane.xlu0 %1625
        %v1627 = vsel %vm552, %v1381, 0.0
        %1628 = vadd.xlane.f32.xlu0 %v1627
        %v1629 = vpop.xlane.xlu0 %1628
        %v1630 = vsel %vm552, %v1382, 0.0
        %1631 = vadd.xlane.f32.xlu0 %v1630
        %v1632 = vpop.xlane.xlu0 %1631
        %v1633 = vsel %vm552, %v1383, 0.0
        %1634 = vadd.xlane.f32.xlu0 %v1633
        %v1635 = vpop.xlane.xlu0 %1634
        %v1636 = vsel %vm552, %v1384, 0.0
        %1637 = vadd.xlane.f32.xlu0 %v1636
        %v1638 = vpop.xlane.xlu0 %1637
        %v1639 = vsel %vm552, %v1385, 0.0
        %1640 = vadd.xlane.f32.xlu0 %v1639
        %v1641 = vpop.xlane.xlu0 %1640
        %v1642 = vsel %vm552, %v1386, 0.0
        %1643 = vadd.xlane.f32.xlu0 %v1642
        %v1644 = vpop.xlane.xlu0 %1643
        %v1645 = vsel %vm552, %v1387, 0.0
        %1646 = vadd.xlane.f32.xlu0 %v1645
        %v1647 = vpop.xlane.xlu0 %1646
        %v1648 = vsel %vm552, %v1388, 0.0
        %1649 = vadd.xlane.f32.xlu0 %v1648
        %v1650 = vpop.xlane.xlu0 %1649
        %v1651 = vsel %vm552, %v1389, 0.0
        %1652 = vadd.xlane.f32.xlu0 %v1651
        %v1653 = vpop.xlane.xlu0 %1652
        %v1654 = vsel %vm552, %v1390, 0.0
        %1655 = vadd.xlane.f32.xlu0 %v1654
        %v1656 = vpop.xlane.xlu0 %1655
        %v1657 = vsel %vm552, %v1391, 0.0
        %1658 = vadd.xlane.f32.xlu0 %v1657
        %v1659 = vpop.xlane.xlu0 %1658
        %v1660 = vsel %vm552, %v1392, 0.0
        %1661 = vadd.xlane.f32.xlu0 %v1660
        %v1662 = vpop.xlane.xlu0 %1661
        %v1663 = vsel %vm552, %v1393, 0.0
        %1664 = vadd.xlane.f32.xlu0 %v1663
        %v1665 = vpop.xlane.xlu0 %1664
        %v1666 = vsel %vm552, %v1394, 0.0
        %1667 = vadd.xlane.f32.xlu0 %v1666
        %v1668 = vpop.xlane.xlu0 %1667
        %v1669 = vsel %vm552, %v1395, 0.0
        %1670 = vadd.xlane.f32.xlu0 %v1669
        %v1671 = vpop.xlane.xlu0 %1670
        %v1672 = vsel %vm552, %v1396, 0.0
        %1673 = vadd.xlane.f32.xlu0 %v1672
        %v1674 = vpop.xlane.xlu0 %1673
        %v1675 = vsel %vm552, %v1397, 0.0
        %1676 = vadd.xlane.f32.xlu0 %v1675
        %v1677 = vpop.xlane.xlu0 %1676
        %v1678 = vsel %vm552, %v1398, 0.0
        %1679 = vadd.xlane.f32.xlu0 %v1678
        %v1680 = vpop.xlane.xlu0 %1679
        %v1681 = vsel %vm552, %v1399, 0.0
        %1682 = vadd.xlane.f32.xlu0 %v1681
        %v1683 = vpop.xlane.xlu0 %1682
        %v1684 = vsel %vm552, %v1400, 0.0
        %1685 = vadd.xlane.f32.xlu0 %v1684
        %v1686 = vpop.xlane.xlu0 %1685
        %v1687 = vsel %vm552, %v1401, 0.0
        %1688 = vadd.xlane.f32.xlu0 %v1687
        %v1689 = vpop.xlane.xlu0 %1688
        %v1690 = vsel %vm552, %v1402, 0.0
        %1691 = vadd.xlane.f32.xlu0 %v1690
        %v1692 = vpop.xlane.xlu0 %1691
        %v1693 = vsel %vm552, %v1403, 0.0
        %1694 = vadd.xlane.f32.xlu0 %v1693
        %v1695 = vpop.xlane.xlu0 %1694
        %v1696 = vsel %vm552, %v1404, 0.0
        %1697 = vadd.xlane.f32.xlu0 %v1696
        %v1698 = vpop.xlane.xlu0 %1697
        %v1699 = vsel %vm552, %v1405, 0.0
        %1700 = vadd.xlane.f32.xlu0 %v1699
        %v1701 = vpop.xlane.xlu0 %1700
        %v1702 = vsel %vm552, %v1406, 0.0
        %1703 = vadd.xlane.f32.xlu0 %v1702
        %v1704 = vpop.xlane.xlu0 %1703
        %v1705 = vsel %vm552, %v1407, 0.0
        %1706 = vadd.xlane.f32.xlu0 %v1705
        %v1707 = vpop.xlane.xlu0 %1706
        %v1708 = vsel %vm552, %v1408, 0.0
        %1709 = vadd.xlane.f32.xlu0 %v1708
        %v1710 = vpop.xlane.xlu0 %1709
        %v1711 = vsel %vm552, %v1409, 0.0
        %1712 = vadd.xlane.f32.xlu0 %v1711
        %v1713 = vpop.xlane.xlu0 %1712
        %v1714 = vsel %vm552, %v1410, 0.0
        %1715 = vadd.xlane.f32.xlu0 %v1714
        %v1716 = vpop.xlane.xlu0 %1715
        %v1717 = vsel %vm552, %v1411, 0.0
        %1718 = vadd.xlane.f32.xlu0 %v1717
        %v1719 = vpop.xlane.xlu0 %1718
        %v1720 = vsel %vm552, %v1412, 0.0
        %1721 = vadd.xlane.f32.xlu0 %v1720
        %v1722 = vpop.xlane.xlu0 %1721
        %v1723 = vsel %vm552, %v1413, 0.0
        %1724 = vadd.xlane.f32.xlu0 %v1723
        %v1725 = vpop.xlane.xlu0 %1724
        %v1726 = vsel %vm552, %v1414, 0.0
        %1727 = vadd.xlane.f32.xlu0 %v1726
        %v1728 = vpop.xlane.xlu0 %1727
        %v1729 = vsel %vm552, %v1415, 0.0
        %1730 = vadd.xlane.f32.xlu0 %v1729
        %v1731 = vpop.xlane.xlu0 %1730
        %v1732 = vsel %vm552, %v1416, 0.0
        %1733 = vadd.xlane.f32.xlu0 %v1732
        %v1734 = vpop.xlane.xlu0 %1733
        %v1735 = vsel %vm552, %v1417, 0.0
        %1736 = vadd.xlane.f32.xlu0 %v1735
        %v1737 = vpop.xlane.xlu0 %1736
        %v1738 = vsel %vm552, %v1418, 0.0
        %1739 = vadd.xlane.f32.xlu0 %v1738
        %v1740 = vpop.xlane.xlu0 %1739
        %v1741 = vsel %vm552, %v1419, 0.0
        %1742 = vadd.xlane.f32.xlu0 %v1741
        %v1743 = vpop.xlane.xlu0 %1742
        %v1744 = vsel %vm552, %v1420, 0.0
        %1745 = vadd.xlane.f32.xlu0 %v1744
        %v1746 = vpop.xlane.xlu0 %1745
        %v1747 = vsel %vm552, %v1421, 0.0
        %1748 = vadd.xlane.f32.xlu0 %v1747
        %v1749 = vpop.xlane.xlu0 %1748
        %v1750 = vsel %vm552, %v1422, 0.0
        %1751 = vadd.xlane.f32.xlu0 %v1750
        %v1752 = vpop.xlane.xlu0 %1751
        %v1753 = vsel %vm552, %v1423, 0.0
        %1754 = vadd.xlane.f32.xlu0 %v1753
        %v1755 = vpop.xlane.xlu0 %1754
        %v1756 = vsel %vm552, %v1424, 0.0
        %1757 = vadd.xlane.f32.xlu0 %v1756
        %v1758 = vpop.xlane.xlu0 %1757
        %v1759 = vsel %vm552, %v1425, 0.0
        %1760 = vadd.xlane.f32.xlu0 %v1759
        %v1761 = vpop.xlane.xlu0 %1760
        %v1762 = vsel %vm552, %v1426, 0.0
        %1763 = vadd.xlane.f32.xlu0 %v1762
        %v1764 = vpop.xlane.xlu0 %1763
        %v1765 = vsel %vm552, %v1427, 0.0
        %1766 = vadd.xlane.f32.xlu0 %v1765
        %v1767 = vpop.xlane.xlu0 %1766
        %v1768 = vsel %vm552, %v1428, 0.0
        %1769 = vadd.xlane.f32.xlu0 %v1768
        %v1770 = vpop.xlane.xlu0 %1769
        %v1771 = vsel %vm552, %v1429, 0.0
        %1772 = vadd.xlane.f32.xlu0 %v1771
        %v1773 = vpop.xlane.xlu0 %1772
        %v1774 = vsel %vm552, %v1430, 0.0
        %1775 = vadd.xlane.f32.xlu0 %v1774
        %v1776 = vpop.xlane.xlu0 %1775
        %v1777 = vsel %vm552, %v1431, 0.0
        %1778 = vadd.xlane.f32.xlu0 %v1777
        %v1779 = vpop.xlane.xlu0 %1778
        %v1780 = vsel %vm552, %v1432, 0.0
        %1781 = vadd.xlane.f32.xlu0 %v1780
        %v1782 = vpop.xlane.xlu0 %1781
        %v1783 = vsel %vm552, %v1433, 0.0
        %1784 = vadd.xlane.f32.xlu0 %v1783
        %v1785 = vpop.xlane.xlu0 %1784
        %v1786 = vsel %vm552, %v1434, 0.0
        %1787 = vadd.xlane.f32.xlu0 %v1786
        %v1788 = vpop.xlane.xlu0 %1787
        %v1789 = vsel %vm552, %v1435, 0.0
        %1790 = vadd.xlane.f32.xlu0 %v1789
        %v1791 = vpop.xlane.xlu0 %1790
        %v1792 = vsel %vm552, %v1436, 0.0
        %1793 = vadd.xlane.f32.xlu0 %v1792
        %v1794 = vpop.xlane.xlu0 %1793
        %v1795 = vsel %vm552, %v1437, 0.0
        %1796 = vadd.xlane.f32.xlu0 %v1795
        %v1797 = vpop.xlane.xlu0 %1796
        %v1798 = vsel %vm552, %v1438, 0.0
        %1799 = vadd.xlane.f32.xlu0 %v1798
        %v1800 = vpop.xlane.xlu0 %1799
        %v1801 = vsel %vm552, %v1439, 0.0
        %1802 = vadd.xlane.f32.xlu0 %v1801
        %v1803 = vpop.xlane.xlu0 %1802
        %v1804 = vsel %vm552, %v1440, 0.0
        %1805 = vadd.xlane.f32.xlu0 %v1804
        %v1806 = vpop.xlane.xlu0 %1805
        %v1807 = vsel %vm552, %v1441, 0.0
        %1808 = vadd.xlane.f32.xlu0 %v1807
        %v1809 = vpop.xlane.xlu0 %1808
        %v1810 = vsel %vm552, %v1442, 0.0
        %1811 = vadd.xlane.f32.xlu0 %v1810
        %v1812 = vpop.xlane.xlu0 %1811
        %v1813 = vsel %vm552, %v1443, 0.0
        %1814 = vadd.xlane.f32.xlu0 %v1813
        %v1815 = vpop.xlane.xlu0 %1814
        %v1816 = vsel %vm552, %v1444, 0.0
        %1817 = vadd.xlane.f32.xlu0 %v1816
        %v1818 = vpop.xlane.xlu0 %1817
        %v1819 = vsel %vm552, %v1445, 0.0
        %1820 = vadd.xlane.f32.xlu0 %v1819
        %v1821 = vpop.xlane.xlu0 %1820
        %v1822 = vsel %vm552, %v1446, 0.0
        %1823 = vadd.xlane.f32.xlu0 %v1822
        %v1824 = vpop.xlane.xlu0 %1823
        %v1825 = vsel %vm552, %v1447, 0.0
        %1826 = vadd.xlane.f32.xlu0 %v1825
        %v1827 = vpop.xlane.xlu0 %1826
        %v1828 = vsel %vm552, %v1448, 0.0
        %1829 = vadd.xlane.f32.xlu0 %v1828
        %v1830 = vpop.xlane.xlu0 %1829
        %v1831 = vsel %vm552, %v1449, 0.0
        %1832 = vadd.xlane.f32.xlu0 %v1831
        %v1833 = vpop.xlane.xlu0 %1832
        %v1834 = vrsqrt.pop %v1452
        %v1835 = vmul.f32 %v1452, %v1834
        %vm1836 = vcmp.eq.f32.partialorder %v1452, inf
        %v1837 = vsel %vm1836, %v1452, %v1835
        %vm1838 = vcmp.eq.f32.partialorder %v1452, 0.0
        %v1839 = vand.u32 %v1452, 2147483648
        %v1840 = vsel %vm1838, %v1839, %v1837
        %v1841 = vrsqrt.pop %v1455
        %v1842 = vmul.f32 %v1455, %v1841
        %vm1843 = vcmp.eq.f32.partialorder %v1455, inf
        %v1844 = vsel %vm1843, %v1455, %v1842
        %vm1845 = vcmp.eq.f32.partialorder %v1455, 0.0
        %v1846 = vand.u32 %v1455, 2147483648
        %v1847 = vsel %vm1845, %v1846, %v1844
        %v1848 = vrsqrt.pop %v1458
        %v1849 = vmul.f32 %v1458, %v1848
        %vm1850 = vcmp.eq.f32.partialorder %v1458, inf
        %v1851 = vsel %vm1850, %v1458, %v1849
        %vm1852 = vcmp.eq.f32.partialorder %v1458, 0.0
        %v1853 = vand.u32 %v1458, 2147483648
        %v1854 = vsel %vm1852, %v1853, %v1851
        %v1855 = vrsqrt.pop %v1461
        %v1856 = vmul.f32 %v1461, %v1855
        %vm1857 = vcmp.eq.f32.partialorder %v1461, inf
        %v1858 = vsel %vm1857, %v1461, %v1856
        %vm1859 = vcmp.eq.f32.partialorder %v1461, 0.0
        %v1860 = vand.u32 %v1461, 2147483648
        %v1861 = vsel %vm1859, %v1860, %v1858
        %v1862 = vrsqrt.pop %v1464
        %v1863 = vmul.f32 %v1464, %v1862
        %vm1864 = vcmp.eq.f32.partialorder %v1464, inf
        %v1865 = vsel %vm1864, %v1464, %v1863
        %vm1866 = vcmp.eq.f32.partialorder %v1464, 0.0
        %v1867 = vand.u32 %v1464, 2147483648
        %v1868 = vsel %vm1866, %v1867, %v1865
        %v1869 = vrsqrt.pop %v1467
        %v1870 = vmul.f32 %v1467, %v1869
        %vm1871 = vcmp.eq.f32.partialorder %v1467, inf
        %v1872 = vsel %vm1871, %v1467, %v1870
        %vm1873 = vcmp.eq.f32.partialorder %v1467, 0.0
        %v1874 = vand.u32 %v1467, 2147483648
        %v1875 = vsel %vm1873, %v1874, %v1872
        %v1876 = vrsqrt.pop %v1470
        %v1877 = vmul.f32 %v1470, %v1876
        %vm1878 = vcmp.eq.f32.partialorder %v1470, inf
        %v1879 = vsel %vm1878, %v1470, %v1877
        %vm1880 = vcmp.eq.f32.partialorder %v1470, 0.0
        %v1881 = vand.u32 %v1470, 2147483648
        %v1882 = vsel %vm1880, %v1881, %v1879
        %v1883 = vrsqrt.pop %v1473
        %v1884 = vmul.f32 %v1473, %v1883
        %vm1885 = vcmp.eq.f32.partialorder %v1473, inf
        %v1886 = vsel %vm1885, %v1473, %v1884
        %vm1887 = vcmp.eq.f32.partialorder %v1473, 0.0
        %v1888 = vand.u32 %v1473, 2147483648
        %v1889 = vsel %vm1887, %v1888, %v1886
        %v1890 = vrsqrt.pop %v1476
        %v1891 = vmul.f32 %v1476, %v1890
        %vm1892 = vcmp.eq.f32.partialorder %v1476, inf
        %v1893 = vsel %vm1892, %v1476, %v1891
        %vm1894 = vcmp.eq.f32.partialorder %v1476, 0.0
        %v1895 = vand.u32 %v1476, 2147483648
        %v1896 = vsel %vm1894, %v1895, %v1893
        %v1897 = vrsqrt.pop %v1479
        %v1898 = vmul.f32 %v1479, %v1897
        %vm1899 = vcmp.eq.f32.partialorder %v1479, inf
        %v1900 = vsel %vm1899, %v1479, %v1898
        %vm1901 = vcmp.eq.f32.partialorder %v1479, 0.0
        %v1902 = vand.u32 %v1479, 2147483648
        %v1903 = vsel %vm1901, %v1902, %v1900
        %v1904 = vrsqrt.pop %v1482
        %v1905 = vmul.f32 %v1482, %v1904
        %vm1906 = vcmp.eq.f32.partialorder %v1482, inf
        %v1907 = vsel %vm1906, %v1482, %v1905
        %vm1908 = vcmp.eq.f32.partialorder %v1482, 0.0
        %v1909 = vand.u32 %v1482, 2147483648
        %v1910 = vsel %vm1908, %v1909, %v1907
        %v1911 = vrsqrt.pop %v1485
        %v1912 = vmul.f32 %v1485, %v1911
        %vm1913 = vcmp.eq.f32.partialorder %v1485, inf
        %v1914 = vsel %vm1913, %v1485, %v1912
        %vm1915 = vcmp.eq.f32.partialorder %v1485, 0.0
        %v1916 = vand.u32 %v1485, 2147483648
        %v1917 = vsel %vm1915, %v1916, %v1914
        %v1918 = vrsqrt.pop %v1488
        %v1919 = vmul.f32 %v1488, %v1918
        %vm1920 = vcmp.eq.f32.partialorder %v1488, inf
        %v1921 = vsel %vm1920, %v1488, %v1919
        %vm1922 = vcmp.eq.f32.partialorder %v1488, 0.0
        %v1923 = vand.u32 %v1488, 2147483648
        %v1924 = vsel %vm1922, %v1923, %v1921
        %v1925 = vrsqrt.pop %v1491
        %v1926 = vmul.f32 %v1491, %v1925
        %vm1927 = vcmp.eq.f32.partialorder %v1491, inf
        %v1928 = vsel %vm1927, %v1491, %v1926
        %vm1929 = vcmp.eq.f32.partialorder %v1491, 0.0
        %v1930 = vand.u32 %v1491, 2147483648
        %v1931 = vsel %vm1929, %v1930, %v1928
        %v1932 = vrsqrt.pop %v1494
        %v1933 = vmul.f32 %v1494, %v1932
        %vm1934 = vcmp.eq.f32.partialorder %v1494, inf
        %v1935 = vsel %vm1934, %v1494, %v1933
        %vm1936 = vcmp.eq.f32.partialorder %v1494, 0.0
        %v1937 = vand.u32 %v1494, 2147483648
        %v1938 = vsel %vm1936, %v1937, %v1935
        %v1939 = vrsqrt.pop %v1497
        %v1940 = vmul.f32 %v1497, %v1939
        %vm1941 = vcmp.eq.f32.partialorder %v1497, inf
        %v1942 = vsel %vm1941, %v1497, %v1940
        %vm1943 = vcmp.eq.f32.partialorder %v1497, 0.0
        %v1944 = vand.u32 %v1497, 2147483648
        %v1945 = vsel %vm1943, %v1944, %v1942
        %v1946 = vrsqrt.pop %v1500
        %v1947 = vmul.f32 %v1500, %v1946
        %vm1948 = vcmp.eq.f32.partialorder %v1500, inf
        %v1949 = vsel %vm1948, %v1500, %v1947
        %vm1950 = vcmp.eq.f32.partialorder %v1500, 0.0
        %v1951 = vand.u32 %v1500, 2147483648
        %v1952 = vsel %vm1950, %v1951, %v1949
        %v1953 = vrsqrt.pop %v1503
        %v1954 = vmul.f32 %v1503, %v1953
        %vm1955 = vcmp.eq.f32.partialorder %v1503, inf
        %v1956 = vsel %vm1955, %v1503, %v1954
        %vm1957 = vcmp.eq.f32.partialorder %v1503, 0.0
        %v1958 = vand.u32 %v1503, 2147483648
        %v1959 = vsel %vm1957, %v1958, %v1956
        %v1960 = vrsqrt.pop %v1506
        %v1961 = vmul.f32 %v1506, %v1960
        %vm1962 = vcmp.eq.f32.partialorder %v1506, inf
        %v1963 = vsel %vm1962, %v1506, %v1961
        %vm1964 = vcmp.eq.f32.partialorder %v1506, 0.0
        %v1965 = vand.u32 %v1506, 2147483648
        %v1966 = vsel %vm1964, %v1965, %v1963
        %v1967 = vrsqrt.pop %v1509
        %v1968 = vmul.f32 %v1509, %v1967
        %vm1969 = vcmp.eq.f32.partialorder %v1509, inf
        %v1970 = vsel %vm1969, %v1509, %v1968
        %vm1971 = vcmp.eq.f32.partialorder %v1509, 0.0
        %v1972 = vand.u32 %v1509, 2147483648
        %v1973 = vsel %vm1971, %v1972, %v1970
        %v1974 = vrsqrt.pop %v1512
        %v1975 = vmul.f32 %v1512, %v1974
        %vm1976 = vcmp.eq.f32.partialorder %v1512, inf
        %v1977 = vsel %vm1976, %v1512, %v1975
        %vm1978 = vcmp.eq.f32.partialorder %v1512, 0.0
        %v1979 = vand.u32 %v1512, 2147483648
        %v1980 = vsel %vm1978, %v1979, %v1977
        %v1981 = vrsqrt.pop %v1515
        %v1982 = vmul.f32 %v1515, %v1981
        %vm1983 = vcmp.eq.f32.partialorder %v1515, inf
        %v1984 = vsel %vm1983, %v1515, %v1982
        %vm1985 = vcmp.eq.f32.partialorder %v1515, 0.0
        %v1986 = vand.u32 %v1515, 2147483648
        %v1987 = vsel %vm1985, %v1986, %v1984
        %v1988 = vrsqrt.pop %v1518
        %v1989 = vmul.f32 %v1518, %v1988
        %vm1990 = vcmp.eq.f32.partialorder %v1518, inf
        %v1991 = vsel %vm1990, %v1518, %v1989
        %vm1992 = vcmp.eq.f32.partialorder %v1518, 0.0
        %v1993 = vand.u32 %v1518, 2147483648
        %v1994 = vsel %vm1992, %v1993, %v1991
        %v1995 = vrsqrt.pop %v1521
        %v1996 = vmul.f32 %v1521, %v1995
        %vm1997 = vcmp.eq.f32.partialorder %v1521, inf
        %v1998 = vsel %vm1997, %v1521, %v1996
        %vm1999 = vcmp.eq.f32.partialorder %v1521, 0.0
        %v2000 = vand.u32 %v1521, 2147483648
        %v2001 = vsel %vm1999, %v2000, %v1998
        %v2002 = vrsqrt.pop %v1524
        %v2003 = vmul.f32 %v1524, %v2002
        %vm2004 = vcmp.eq.f32.partialorder %v1524, inf
        %v2005 = vsel %vm2004, %v1524, %v2003
        %vm2006 = vcmp.eq.f32.partialorder %v1524, 0.0
        %v2007 = vand.u32 %v1524, 2147483648
        %v2008 = vsel %vm2006, %v2007, %v2005
        %v2009 = vrsqrt.pop %v1527
        %v2010 = vmul.f32 %v1527, %v2009
        %vm2011 = vcmp.eq.f32.partialorder %v1527, inf
        %v2012 = vsel %vm2011, %v1527, %v2010
        %vm2013 = vcmp.eq.f32.partialorder %v1527, 0.0
        %v2014 = vand.u32 %v1527, 2147483648
        %v2015 = vsel %vm2013, %v2014, %v2012
        %v2016 = vrsqrt.pop %v1530
        %v2017 = vmul.f32 %v1530, %v2016
        %vm2018 = vcmp.eq.f32.partialorder %v1530, inf
        %v2019 = vsel %vm2018, %v1530, %v2017
        %vm2020 = vcmp.eq.f32.partialorder %v1530, 0.0
        %v2021 = vand.u32 %v1530, 2147483648
        %v2022 = vsel %vm2020, %v2021, %v2019
        %v2023 = vrsqrt.pop %v1533
        %v2024 = vmul.f32 %v1533, %v2023
        %vm2025 = vcmp.eq.f32.partialorder %v1533, inf
        %v2026 = vsel %vm2025, %v1533, %v2024
        %vm2027 = vcmp.eq.f32.partialorder %v1533, 0.0
        %v2028 = vand.u32 %v1533, 2147483648
        %v2029 = vsel %vm2027, %v2028, %v2026
        %v2030 = vrsqrt.pop %v1536
        %v2031 = vmul.f32 %v1536, %v2030
        %vm2032 = vcmp.eq.f32.partialorder %v1536, inf
        %v2033 = vsel %vm2032, %v1536, %v2031
        %vm2034 = vcmp.eq.f32.partialorder %v1536, 0.0
        %v2035 = vand.u32 %v1536, 2147483648
        %v2036 = vsel %vm2034, %v2035, %v2033
        %v2037 = vrsqrt.pop %v1539
        %v2038 = vmul.f32 %v1539, %v2037
        %vm2039 = vcmp.eq.f32.partialorder %v1539, inf
        %v2040 = vsel %vm2039, %v1539, %v2038
        %vm2041 = vcmp.eq.f32.partialorder %v1539, 0.0
        %v2042 = vand.u32 %v1539, 2147483648
        %v2043 = vsel %vm2041, %v2042, %v2040
        %v2044 = vrsqrt.pop %v1542
        %v2045 = vmul.f32 %v1542, %v2044
        %vm2046 = vcmp.eq.f32.partialorder %v1542, inf
        %v2047 = vsel %vm2046, %v1542, %v2045
        %vm2048 = vcmp.eq.f32.partialorder %v1542, 0.0
        %v2049 = vand.u32 %v1542, 2147483648
        %v2050 = vsel %vm2048, %v2049, %v2047
        %v2051 = vrsqrt.pop %v1545
        %v2052 = vmul.f32 %v1545, %v2051
        %vm2053 = vcmp.eq.f32.partialorder %v1545, inf
        %v2054 = vsel %vm2053, %v1545, %v2052
        %vm2055 = vcmp.eq.f32.partialorder %v1545, 0.0
        %v2056 = vand.u32 %v1545, 2147483648
        %v2057 = vsel %vm2055, %v2056, %v2054
        %v2058 = vrsqrt.pop %v1548
        %v2059 = vmul.f32 %v1548, %v2058
        %vm2060 = vcmp.eq.f32.partialorder %v1548, inf
        %v2061 = vsel %vm2060, %v1548, %v2059
        %vm2062 = vcmp.eq.f32.partialorder %v1548, 0.0
        %v2063 = vand.u32 %v1548, 2147483648
        %v2064 = vsel %vm2062, %v2063, %v2061
        %v2065 = vrsqrt.pop %v1551
        %v2066 = vmul.f32 %v1551, %v2065
        %vm2067 = vcmp.eq.f32.partialorder %v1551, inf
        %v2068 = vsel %vm2067, %v1551, %v2066
        %vm2069 = vcmp.eq.f32.partialorder %v1551, 0.0
        %v2070 = vand.u32 %v1551, 2147483648
        %v2071 = vsel %vm2069, %v2070, %v2068
        %v2072 = vrsqrt.pop %v1554
        %v2073 = vmul.f32 %v1554, %v2072
        %vm2074 = vcmp.eq.f32.partialorder %v1554, inf
        %v2075 = vsel %vm2074, %v1554, %v2073
        %vm2076 = vcmp.eq.f32.partialorder %v1554, 0.0
        %v2077 = vand.u32 %v1554, 2147483648
        %v2078 = vsel %vm2076, %v2077, %v2075
        %v2079 = vrsqrt.pop %v1557
        %v2080 = vmul.f32 %v1557, %v2079
        %vm2081 = vcmp.eq.f32.partialorder %v1557, inf
        %v2082 = vsel %vm2081, %v1557, %v2080
        %vm2083 = vcmp.eq.f32.partialorder %v1557, 0.0
        %v2084 = vand.u32 %v1557, 2147483648
        %v2085 = vsel %vm2083, %v2084, %v2082
        %v2086 = vrsqrt.pop %v1560
        %v2087 = vmul.f32 %v1560, %v2086
        %vm2088 = vcmp.eq.f32.partialorder %v1560, inf
        %v2089 = vsel %vm2088, %v1560, %v2087
        %vm2090 = vcmp.eq.f32.partialorder %v1560, 0.0
        %v2091 = vand.u32 %v1560, 2147483648
        %v2092 = vsel %vm2090, %v2091, %v2089
        %v2093 = vrsqrt.pop %v1563
        %v2094 = vmul.f32 %v1563, %v2093
        %vm2095 = vcmp.eq.f32.partialorder %v1563, inf
        %v2096 = vsel %vm2095, %v1563, %v2094
        %vm2097 = vcmp.eq.f32.partialorder %v1563, 0.0
        %v2098 = vand.u32 %v1563, 2147483648
        %v2099 = vsel %vm2097, %v2098, %v2096
        %v2100 = vrsqrt.pop %v1566
        %v2101 = vmul.f32 %v1566, %v2100
        %vm2102 = vcmp.eq.f32.partialorder %v1566, inf
        %v2103 = vsel %vm2102, %v1566, %v2101
        %vm2104 = vcmp.eq.f32.partialorder %v1566, 0.0
        %v2105 = vand.u32 %v1566, 2147483648
        %v2106 = vsel %vm2104, %v2105, %v2103
        %v2107 = vrsqrt.pop %v1569
        %v2108 = vmul.f32 %v1569, %v2107
        %vm2109 = vcmp.eq.f32.partialorder %v1569, inf
        %v2110 = vsel %vm2109, %v1569, %v2108
        %vm2111 = vcmp.eq.f32.partialorder %v1569, 0.0
        %v2112 = vand.u32 %v1569, 2147483648
        %v2113 = vsel %vm2111, %v2112, %v2110
        %v2114 = vrsqrt.pop %v1572
        %v2115 = vmul.f32 %v1572, %v2114
        %vm2116 = vcmp.eq.f32.partialorder %v1572, inf
        %v2117 = vsel %vm2116, %v1572, %v2115
        %vm2118 = vcmp.eq.f32.partialorder %v1572, 0.0
        %v2119 = vand.u32 %v1572, 2147483648
        %v2120 = vsel %vm2118, %v2119, %v2117
        %v2121 = vrsqrt.pop %v1575
        %v2122 = vmul.f32 %v1575, %v2121
        %vm2123 = vcmp.eq.f32.partialorder %v1575, inf
        %v2124 = vsel %vm2123, %v1575, %v2122
        %vm2125 = vcmp.eq.f32.partialorder %v1575, 0.0
        %v2126 = vand.u32 %v1575, 2147483648
        %v2127 = vsel %vm2125, %v2126, %v2124
        %v2128 = vrsqrt.pop %v1578
        %v2129 = vmul.f32 %v1578, %v2128
        %vm2130 = vcmp.eq.f32.partialorder %v1578, inf
        %v2131 = vsel %vm2130, %v1578, %v2129
        %vm2132 = vcmp.eq.f32.partialorder %v1578, 0.0
        %v2133 = vand.u32 %v1578, 2147483648
        %v2134 = vsel %vm2132, %v2133, %v2131
        %v2135 = vrsqrt.pop %v1581
        %v2136 = vmul.f32 %v1581, %v2135
        %vm2137 = vcmp.eq.f32.partialorder %v1581, inf
        %v2138 = vsel %vm2137, %v1581, %v2136
        %vm2139 = vcmp.eq.f32.partialorder %v1581, 0.0
        %v2140 = vand.u32 %v1581, 2147483648
        %v2141 = vsel %vm2139, %v2140, %v2138
        %v2142 = vrsqrt.pop %v1584
        %v2143 = vmul.f32 %v1584, %v2142
        %vm2144 = vcmp.eq.f32.partialorder %v1584, inf
        %v2145 = vsel %vm2144, %v1584, %v2143
        %vm2146 = vcmp.eq.f32.partialorder %v1584, 0.0
        %v2147 = vand.u32 %v1584, 2147483648
        %v2148 = vsel %vm2146, %v2147, %v2145
        %v2149 = vrsqrt.pop %v1587
        %v2150 = vmul.f32 %v1587, %v2149
        %vm2151 = vcmp.eq.f32.partialorder %v1587, inf
        %v2152 = vsel %vm2151, %v1587, %v2150
        %vm2153 = vcmp.eq.f32.partialorder %v1587, 0.0
        %v2154 = vand.u32 %v1587, 2147483648
        %v2155 = vsel %vm2153, %v2154, %v2152
        %v2156 = vrsqrt.pop %v1590
        %v2157 = vmul.f32 %v1590, %v2156
        %vm2158 = vcmp.eq.f32.partialorder %v1590, inf
        %v2159 = vsel %vm2158, %v1590, %v2157
        %vm2160 = vcmp.eq.f32.partialorder %v1590, 0.0
        %v2161 = vand.u32 %v1590, 2147483648
        %v2162 = vsel %vm2160, %v2161, %v2159
        %v2163 = vrsqrt.pop %v1593
        %v2164 = vmul.f32 %v1593, %v2163
        %vm2165 = vcmp.eq.f32.partialorder %v1593, inf
        %v2166 = vsel %vm2165, %v1593, %v2164
        %vm2167 = vcmp.eq.f32.partialorder %v1593, 0.0
        %v2168 = vand.u32 %v1593, 2147483648
        %v2169 = vsel %vm2167, %v2168, %v2166
        %v2170 = vrsqrt.pop %v1596
        %v2171 = vmul.f32 %v1596, %v2170
        %vm2172 = vcmp.eq.f32.partialorder %v1596, inf
        %v2173 = vsel %vm2172, %v1596, %v2171
        %vm2174 = vcmp.eq.f32.partialorder %v1596, 0.0
        %v2175 = vand.u32 %v1596, 2147483648
        %v2176 = vsel %vm2174, %v2175, %v2173
        %v2177 = vrsqrt.pop %v1599
        %v2178 = vmul.f32 %v1599, %v2177
        %vm2179 = vcmp.eq.f32.partialorder %v1599, inf
        %v2180 = vsel %vm2179, %v1599, %v2178
        %vm2181 = vcmp.eq.f32.partialorder %v1599, 0.0
        %v2182 = vand.u32 %v1599, 2147483648
        %v2183 = vsel %vm2181, %v2182, %v2180
        %v2184 = vrsqrt.pop %v1602
        %v2185 = vmul.f32 %v1602, %v2184
        %vm2186 = vcmp.eq.f32.partialorder %v1602, inf
        %v2187 = vsel %vm2186, %v1602, %v2185
        %vm2188 = vcmp.eq.f32.partialorder %v1602, 0.0
        %v2189 = vand.u32 %v1602, 2147483648
        %v2190 = vsel %vm2188, %v2189, %v2187
        %v2191 = vrsqrt.pop %v1605
        %v2192 = vmul.f32 %v1605, %v2191
        %vm2193 = vcmp.eq.f32.partialorder %v1605, inf
        %v2194 = vsel %vm2193, %v1605, %v2192
        %vm2195 = vcmp.eq.f32.partialorder %v1605, 0.0
        %v2196 = vand.u32 %v1605, 2147483648
        %v2197 = vsel %vm2195, %v2196, %v2194
        %v2198 = vrsqrt.pop %v1608
        %v2199 = vmul.f32 %v1608, %v2198
        %vm2200 = vcmp.eq.f32.partialorder %v1608, inf
        %v2201 = vsel %vm2200, %v1608, %v2199
        %vm2202 = vcmp.eq.f32.partialorder %v1608, 0.0
        %v2203 = vand.u32 %v1608, 2147483648
        %v2204 = vsel %vm2202, %v2203, %v2201
        %v2205 = vrsqrt.pop %v1611
        %v2206 = vmul.f32 %v1611, %v2205
        %vm2207 = vcmp.eq.f32.partialorder %v1611, inf
        %v2208 = vsel %vm2207, %v1611, %v2206
        %vm2209 = vcmp.eq.f32.partialorder %v1611, 0.0
        %v2210 = vand.u32 %v1611, 2147483648
        %v2211 = vsel %vm2209, %v2210, %v2208
        %v2212 = vrsqrt.pop %v1614
        %v2213 = vmul.f32 %v1614, %v2212
        %vm2214 = vcmp.eq.f32.partialorder %v1614, inf
        %v2215 = vsel %vm2214, %v1614, %v2213
        %vm2216 = vcmp.eq.f32.partialorder %v1614, 0.0
        %v2217 = vand.u32 %v1614, 2147483648
        %v2218 = vsel %vm2216, %v2217, %v2215
        %v2219 = vrsqrt.pop %v1617
        %v2220 = vmul.f32 %v1617, %v2219
        %vm2221 = vcmp.eq.f32.partialorder %v1617, inf
        %v2222 = vsel %vm2221, %v1617, %v2220
        %vm2223 = vcmp.eq.f32.partialorder %v1617, 0.0
        %v2224 = vand.u32 %v1617, 2147483648
        %v2225 = vsel %vm2223, %v2224, %v2222
        %v2226 = vrsqrt.pop %v1620
        %v2227 = vmul.f32 %v1620, %v2226
        %vm2228 = vcmp.eq.f32.partialorder %v1620, inf
        %v2229 = vsel %vm2228, %v1620, %v2227
        %vm2230 = vcmp.eq.f32.partialorder %v1620, 0.0
        %v2231 = vand.u32 %v1620, 2147483648
        %v2232 = vsel %vm2230, %v2231, %v2229
        %v2233 = vrsqrt.pop %v1623
        %v2234 = vmul.f32 %v1623, %v2233
        %vm2235 = vcmp.eq.f32.partialorder %v1623, inf
        %v2236 = vsel %vm2235, %v1623, %v2234
        %vm2237 = vcmp.eq.f32.partialorder %v1623, 0.0
        %v2238 = vand.u32 %v1623, 2147483648
        %v2239 = vsel %vm2237, %v2238, %v2236
        %v2240 = vrsqrt.pop %v1626
        %v2241 = vmul.f32 %v1626, %v2240
        %vm2242 = vcmp.eq.f32.partialorder %v1626, inf
        %v2243 = vsel %vm2242, %v1626, %v2241
        %vm2244 = vcmp.eq.f32.partialorder %v1626, 0.0
        %v2245 = vand.u32 %v1626, 2147483648
        %v2246 = vsel %vm2244, %v2245, %v2243
        %v2247 = vrsqrt.pop %v1629
        %v2248 = vmul.f32 %v1629, %v2247
        %vm2249 = vcmp.eq.f32.partialorder %v1629, inf
        %v2250 = vsel %vm2249, %v1629, %v2248
        %vm2251 = vcmp.eq.f32.partialorder %v1629, 0.0
        %v2252 = vand.u32 %v1629, 2147483648
        %v2253 = vsel %vm2251, %v2252, %v2250
        %v2254 = vrsqrt.pop %v1632
        %v2255 = vmul.f32 %v1632, %v2254
        %vm2256 = vcmp.eq.f32.partialorder %v1632, inf
        %v2257 = vsel %vm2256, %v1632, %v2255
        %vm2258 = vcmp.eq.f32.partialorder %v1632, 0.0
        %v2259 = vand.u32 %v1632, 2147483648
        %v2260 = vsel %vm2258, %v2259, %v2257
        %v2261 = vrsqrt.pop %v1635
        %v2262 = vmul.f32 %v1635, %v2261
        %vm2263 = vcmp.eq.f32.partialorder %v1635, inf
        %v2264 = vsel %vm2263, %v1635, %v2262
        %vm2265 = vcmp.eq.f32.partialorder %v1635, 0.0
        %v2266 = vand.u32 %v1635, 2147483648
        %v2267 = vsel %vm2265, %v2266, %v2264
        %v2268 = vrsqrt.pop %v1638
        %v2269 = vmul.f32 %v1638, %v2268
        %vm2270 = vcmp.eq.f32.partialorder %v1638, inf
        %v2271 = vsel %vm2270, %v1638, %v2269
        %vm2272 = vcmp.eq.f32.partialorder %v1638, 0.0
        %v2273 = vand.u32 %v1638, 2147483648
        %v2274 = vsel %vm2272, %v2273, %v2271
        %v2275 = vrsqrt.pop %v1641
        %v2276 = vmul.f32 %v1641, %v2275
        %vm2277 = vcmp.eq.f32.partialorder %v1641, inf
        %v2278 = vsel %vm2277, %v1641, %v2276
        %vm2279 = vcmp.eq.f32.partialorder %v1641, 0.0
        %v2280 = vand.u32 %v1641, 2147483648
        %v2281 = vsel %vm2279, %v2280, %v2278
        %v2282 = vrsqrt.pop %v1644
        %v2283 = vmul.f32 %v1644, %v2282
        %vm2284 = vcmp.eq.f32.partialorder %v1644, inf
        %v2285 = vsel %vm2284, %v1644, %v2283
        %vm2286 = vcmp.eq.f32.partialorder %v1644, 0.0
        %v2287 = vand.u32 %v1644, 2147483648
        %v2288 = vsel %vm2286, %v2287, %v2285
        %v2289 = vrsqrt.pop %v1647
        %v2290 = vmul.f32 %v1647, %v2289
        %vm2291 = vcmp.eq.f32.partialorder %v1647, inf
        %v2292 = vsel %vm2291, %v1647, %v2290
        %vm2293 = vcmp.eq.f32.partialorder %v1647, 0.0
        %v2294 = vand.u32 %v1647, 2147483648
        %v2295 = vsel %vm2293, %v2294, %v2292
        %v2296 = vrsqrt.pop %v1650
        %v2297 = vmul.f32 %v1650, %v2296
        %vm2298 = vcmp.eq.f32.partialorder %v1650, inf
        %v2299 = vsel %vm2298, %v1650, %v2297
        %vm2300 = vcmp.eq.f32.partialorder %v1650, 0.0
        %v2301 = vand.u32 %v1650, 2147483648
        %v2302 = vsel %vm2300, %v2301, %v2299
        %v2303 = vrsqrt.pop %v1653
        %v2304 = vmul.f32 %v1653, %v2303
        %vm2305 = vcmp.eq.f32.partialorder %v1653, inf
        %v2306 = vsel %vm2305, %v1653, %v2304
        %vm2307 = vcmp.eq.f32.partialorder %v1653, 0.0
        %v2308 = vand.u32 %v1653, 2147483648
        %v2309 = vsel %vm2307, %v2308, %v2306
        %v2310 = vrsqrt.pop %v1656
        %v2311 = vmul.f32 %v1656, %v2310
        %vm2312 = vcmp.eq.f32.partialorder %v1656, inf
        %v2313 = vsel %vm2312, %v1656, %v2311
        %vm2314 = vcmp.eq.f32.partialorder %v1656, 0.0
        %v2315 = vand.u32 %v1656, 2147483648
        %v2316 = vsel %vm2314, %v2315, %v2313
        %v2317 = vrsqrt.pop %v1659
        %v2318 = vmul.f32 %v1659, %v2317
        %vm2319 = vcmp.eq.f32.partialorder %v1659, inf
        %v2320 = vsel %vm2319, %v1659, %v2318
        %vm2321 = vcmp.eq.f32.partialorder %v1659, 0.0
        %v2322 = vand.u32 %v1659, 2147483648
        %v2323 = vsel %vm2321, %v2322, %v2320
        %v2324 = vrsqrt.pop %v1662
        %v2325 = vmul.f32 %v1662, %v2324
        %vm2326 = vcmp.eq.f32.partialorder %v1662, inf
        %v2327 = vsel %vm2326, %v1662, %v2325
        %vm2328 = vcmp.eq.f32.partialorder %v1662, 0.0
        %v2329 = vand.u32 %v1662, 2147483648
        %v2330 = vsel %vm2328, %v2329, %v2327
        %v2331 = vrsqrt.pop %v1665
        %v2332 = vmul.f32 %v1665, %v2331
        %vm2333 = vcmp.eq.f32.partialorder %v1665, inf
        %v2334 = vsel %vm2333, %v1665, %v2332
        %vm2335 = vcmp.eq.f32.partialorder %v1665, 0.0
        %v2336 = vand.u32 %v1665, 2147483648
        %v2337 = vsel %vm2335, %v2336, %v2334
        %v2338 = vrsqrt.pop %v1668
        %v2339 = vmul.f32 %v1668, %v2338
        %vm2340 = vcmp.eq.f32.partialorder %v1668, inf
        %v2341 = vsel %vm2340, %v1668, %v2339
        %vm2342 = vcmp.eq.f32.partialorder %v1668, 0.0
        %v2343 = vand.u32 %v1668, 2147483648
        %v2344 = vsel %vm2342, %v2343, %v2341
        %v2345 = vrsqrt.pop %v1671
        %v2346 = vmul.f32 %v1671, %v2345
        %vm2347 = vcmp.eq.f32.partialorder %v1671, inf
        %v2348 = vsel %vm2347, %v1671, %v2346
        %vm2349 = vcmp.eq.f32.partialorder %v1671, 0.0
        %v2350 = vand.u32 %v1671, 2147483648
        %v2351 = vsel %vm2349, %v2350, %v2348
        %v2352 = vrsqrt.pop %v1674
        %v2353 = vmul.f32 %v1674, %v2352
        %vm2354 = vcmp.eq.f32.partialorder %v1674, inf
        %v2355 = vsel %vm2354, %v1674, %v2353
        %vm2356 = vcmp.eq.f32.partialorder %v1674, 0.0
        %v2357 = vand.u32 %v1674, 2147483648
        %v2358 = vsel %vm2356, %v2357, %v2355
        %v2359 = vrsqrt.pop %v1677
        %v2360 = vmul.f32 %v1677, %v2359
        %vm2361 = vcmp.eq.f32.partialorder %v1677, inf
        %v2362 = vsel %vm2361, %v1677, %v2360
        %vm2363 = vcmp.eq.f32.partialorder %v1677, 0.0
        %v2364 = vand.u32 %v1677, 2147483648
        %v2365 = vsel %vm2363, %v2364, %v2362
        %v2366 = vrsqrt.pop %v1680
        %v2367 = vmul.f32 %v1680, %v2366
        %vm2368 = vcmp.eq.f32.partialorder %v1680, inf
        %v2369 = vsel %vm2368, %v1680, %v2367
        %vm2370 = vcmp.eq.f32.partialorder %v1680, 0.0
        %v2371 = vand.u32 %v1680, 2147483648
        %v2372 = vsel %vm2370, %v2371, %v2369
        %v2373 = vrsqrt.pop %v1683
        %v2374 = vmul.f32 %v1683, %v2373
        %vm2375 = vcmp.eq.f32.partialorder %v1683, inf
        %v2376 = vsel %vm2375, %v1683, %v2374
        %vm2377 = vcmp.eq.f32.partialorder %v1683, 0.0
        %v2378 = vand.u32 %v1683, 2147483648
        %v2379 = vsel %vm2377, %v2378, %v2376
        %v2380 = vrsqrt.pop %v1686
        %v2381 = vmul.f32 %v1686, %v2380
        %vm2382 = vcmp.eq.f32.partialorder %v1686, inf
        %v2383 = vsel %vm2382, %v1686, %v2381
        %vm2384 = vcmp.eq.f32.partialorder %v1686, 0.0
        %v2385 = vand.u32 %v1686, 2147483648
        %v2386 = vsel %vm2384, %v2385, %v2383
        %v2387 = vrsqrt.pop %v1689
        %v2388 = vmul.f32 %v1689, %v2387
        %vm2389 = vcmp.eq.f32.partialorder %v1689, inf
        %v2390 = vsel %vm2389, %v1689, %v2388
        %vm2391 = vcmp.eq.f32.partialorder %v1689, 0.0
        %v2392 = vand.u32 %v1689, 2147483648
        %v2393 = vsel %vm2391, %v2392, %v2390
        %v2394 = vrsqrt.pop %v1692
        %v2395 = vmul.f32 %v1692, %v2394
        %vm2396 = vcmp.eq.f32.partialorder %v1692, inf
        %v2397 = vsel %vm2396, %v1692, %v2395
        %vm2398 = vcmp.eq.f32.partialorder %v1692, 0.0
        %v2399 = vand.u32 %v1692, 2147483648
        %v2400 = vsel %vm2398, %v2399, %v2397
        %v2401 = vrsqrt.pop %v1695
        %v2402 = vmul.f32 %v1695, %v2401
        %vm2403 = vcmp.eq.f32.partialorder %v1695, inf
        %v2404 = vsel %vm2403, %v1695, %v2402
        %vm2405 = vcmp.eq.f32.partialorder %v1695, 0.0
        %v2406 = vand.u32 %v1695, 2147483648
        %v2407 = vsel %vm2405, %v2406, %v2404
        %v2408 = vrsqrt.pop %v1698
        %v2409 = vmul.f32 %v1698, %v2408
        %vm2410 = vcmp.eq.f32.partialorder %v1698, inf
        %v2411 = vsel %vm2410, %v1698, %v2409
        %vm2412 = vcmp.eq.f32.partialorder %v1698, 0.0
        %v2413 = vand.u32 %v1698, 2147483648
        %v2414 = vsel %vm2412, %v2413, %v2411
        %v2415 = vrsqrt.pop %v1701
        %v2416 = vmul.f32 %v1701, %v2415
        %vm2417 = vcmp.eq.f32.partialorder %v1701, inf
        %v2418 = vsel %vm2417, %v1701, %v2416
        %vm2419 = vcmp.eq.f32.partialorder %v1701, 0.0
        %v2420 = vand.u32 %v1701, 2147483648
        %v2421 = vsel %vm2419, %v2420, %v2418
        %v2422 = vrsqrt.pop %v1704
        %v2423 = vmul.f32 %v1704, %v2422
        %vm2424 = vcmp.eq.f32.partialorder %v1704, inf
        %v2425 = vsel %vm2424, %v1704, %v2423
        %vm2426 = vcmp.eq.f32.partialorder %v1704, 0.0
        %v2427 = vand.u32 %v1704, 2147483648
        %v2428 = vsel %vm2426, %v2427, %v2425
        %v2429 = vrsqrt.pop %v1707
        %v2430 = vmul.f32 %v1707, %v2429
        %vm2431 = vcmp.eq.f32.partialorder %v1707, inf
        %v2432 = vsel %vm2431, %v1707, %v2430
        %vm2433 = vcmp.eq.f32.partialorder %v1707, 0.0
        %v2434 = vand.u32 %v1707, 2147483648
        %v2435 = vsel %vm2433, %v2434, %v2432
        %v2436 = vrsqrt.pop %v1710
        %v2437 = vmul.f32 %v1710, %v2436
        %vm2438 = vcmp.eq.f32.partialorder %v1710, inf
        %v2439 = vsel %vm2438, %v1710, %v2437
        %vm2440 = vcmp.eq.f32.partialorder %v1710, 0.0
        %v2441 = vand.u32 %v1710, 2147483648
        %v2442 = vsel %vm2440, %v2441, %v2439
        %v2443 = vrsqrt.pop %v1713
        %v2444 = vmul.f32 %v1713, %v2443
        %vm2445 = vcmp.eq.f32.partialorder %v1713, inf
        %v2446 = vsel %vm2445, %v1713, %v2444
        %vm2447 = vcmp.eq.f32.partialorder %v1713, 0.0
        %v2448 = vand.u32 %v1713, 2147483648
        %v2449 = vsel %vm2447, %v2448, %v2446
        %v2450 = vrsqrt.pop %v1716
        %v2451 = vmul.f32 %v1716, %v2450
        %vm2452 = vcmp.eq.f32.partialorder %v1716, inf
        %v2453 = vsel %vm2452, %v1716, %v2451
        %vm2454 = vcmp.eq.f32.partialorder %v1716, 0.0
        %v2455 = vand.u32 %v1716, 2147483648
        %v2456 = vsel %vm2454, %v2455, %v2453
        %v2457 = vrsqrt.pop %v1719
        %v2458 = vmul.f32 %v1719, %v2457
        %vm2459 = vcmp.eq.f32.partialorder %v1719, inf
        %v2460 = vsel %vm2459, %v1719, %v2458
        %vm2461 = vcmp.eq.f32.partialorder %v1719, 0.0
        %v2462 = vand.u32 %v1719, 2147483648
        %v2463 = vsel %vm2461, %v2462, %v2460
        %v2464 = vrsqrt.pop %v1722
        %v2465 = vmul.f32 %v1722, %v2464
        %vm2466 = vcmp.eq.f32.partialorder %v1722, inf
        %v2467 = vsel %vm2466, %v1722, %v2465
        %vm2468 = vcmp.eq.f32.partialorder %v1722, 0.0
        %v2469 = vand.u32 %v1722, 2147483648
        %v2470 = vsel %vm2468, %v2469, %v2467
        %v2471 = vrsqrt.pop %v1725
        %v2472 = vmul.f32 %v1725, %v2471
        %vm2473 = vcmp.eq.f32.partialorder %v1725, inf
        %v2474 = vsel %vm2473, %v1725, %v2472
        %vm2475 = vcmp.eq.f32.partialorder %v1725, 0.0
        %v2476 = vand.u32 %v1725, 2147483648
        %v2477 = vsel %vm2475, %v2476, %v2474
        %v2478 = vrsqrt.pop %v1728
        %v2479 = vmul.f32 %v1728, %v2478
        %vm2480 = vcmp.eq.f32.partialorder %v1728, inf
        %v2481 = vsel %vm2480, %v1728, %v2479
        %vm2482 = vcmp.eq.f32.partialorder %v1728, 0.0
        %v2483 = vand.u32 %v1728, 2147483648
        %v2484 = vsel %vm2482, %v2483, %v2481
        %v2485 = vrsqrt.pop %v1731
        %v2486 = vmul.f32 %v1731, %v2485
        %vm2487 = vcmp.eq.f32.partialorder %v1731, inf
        %v2488 = vsel %vm2487, %v1731, %v2486
        %vm2489 = vcmp.eq.f32.partialorder %v1731, 0.0
        %v2490 = vand.u32 %v1731, 2147483648
        %v2491 = vsel %vm2489, %v2490, %v2488
        %v2492 = vrsqrt.pop %v1734
        %v2493 = vmul.f32 %v1734, %v2492
        %vm2494 = vcmp.eq.f32.partialorder %v1734, inf
        %v2495 = vsel %vm2494, %v1734, %v2493
        %vm2496 = vcmp.eq.f32.partialorder %v1734, 0.0
        %v2497 = vand.u32 %v1734, 2147483648
        %v2498 = vsel %vm2496, %v2497, %v2495
        %v2499 = vrsqrt.pop %v1737
        %v2500 = vmul.f32 %v1737, %v2499
        %vm2501 = vcmp.eq.f32.partialorder %v1737, inf
        %v2502 = vsel %vm2501, %v1737, %v2500
        %vm2503 = vcmp.eq.f32.partialorder %v1737, 0.0
        %v2504 = vand.u32 %v1737, 2147483648
        %v2505 = vsel %vm2503, %v2504, %v2502
        %v2506 = vrsqrt.pop %v1740
        %v2507 = vmul.f32 %v1740, %v2506
        %vm2508 = vcmp.eq.f32.partialorder %v1740, inf
        %v2509 = vsel %vm2508, %v1740, %v2507
        %vm2510 = vcmp.eq.f32.partialorder %v1740, 0.0
        %v2511 = vand.u32 %v1740, 2147483648
        %v2512 = vsel %vm2510, %v2511, %v2509
        %v2513 = vrsqrt.pop %v1743
        %v2514 = vmul.f32 %v1743, %v2513
        %vm2515 = vcmp.eq.f32.partialorder %v1743, inf
        %v2516 = vsel %vm2515, %v1743, %v2514
        %vm2517 = vcmp.eq.f32.partialorder %v1743, 0.0
        %v2518 = vand.u32 %v1743, 2147483648
        %v2519 = vsel %vm2517, %v2518, %v2516
        %v2520 = vrsqrt.pop %v1746
        %v2521 = vmul.f32 %v1746, %v2520
        %vm2522 = vcmp.eq.f32.partialorder %v1746, inf
        %v2523 = vsel %vm2522, %v1746, %v2521
        %vm2524 = vcmp.eq.f32.partialorder %v1746, 0.0
        %v2525 = vand.u32 %v1746, 2147483648
        %v2526 = vsel %vm2524, %v2525, %v2523
        %v2527 = vrsqrt.pop %v1749
        %v2528 = vmul.f32 %v1749, %v2527
        %vm2529 = vcmp.eq.f32.partialorder %v1749, inf
        %v2530 = vsel %vm2529, %v1749, %v2528
        %vm2531 = vcmp.eq.f32.partialorder %v1749, 0.0
        %v2532 = vand.u32 %v1749, 2147483648
        %v2533 = vsel %vm2531, %v2532, %v2530
        %v2534 = vrsqrt.pop %v1752
        %v2535 = vmul.f32 %v1752, %v2534
        %vm2536 = vcmp.eq.f32.partialorder %v1752, inf
        %v2537 = vsel %vm2536, %v1752, %v2535
        %vm2538 = vcmp.eq.f32.partialorder %v1752, 0.0
        %v2539 = vand.u32 %v1752, 2147483648
        %v2540 = vsel %vm2538, %v2539, %v2537
        %v2541 = vrsqrt.pop %v1755
        %v2542 = vmul.f32 %v1755, %v2541
        %vm2543 = vcmp.eq.f32.partialorder %v1755, inf
        %v2544 = vsel %vm2543, %v1755, %v2542
        %vm2545 = vcmp.eq.f32.partialorder %v1755, 0.0
        %v2546 = vand.u32 %v1755, 2147483648
        %v2547 = vsel %vm2545, %v2546, %v2544
        %v2548 = vrsqrt.pop %v1758
        %v2549 = vmul.f32 %v1758, %v2548
        %vm2550 = vcmp.eq.f32.partialorder %v1758, inf
        %v2551 = vsel %vm2550, %v1758, %v2549
        %vm2552 = vcmp.eq.f32.partialorder %v1758, 0.0
        %v2553 = vand.u32 %v1758, 2147483648
        %v2554 = vsel %vm2552, %v2553, %v2551
        %v2555 = vrsqrt.pop %v1761
        %v2556 = vmul.f32 %v1761, %v2555
        %vm2557 = vcmp.eq.f32.partialorder %v1761, inf
        %v2558 = vsel %vm2557, %v1761, %v2556
        %vm2559 = vcmp.eq.f32.partialorder %v1761, 0.0
        %v2560 = vand.u32 %v1761, 2147483648
        %v2561 = vsel %vm2559, %v2560, %v2558
        %v2562 = vrsqrt.pop %v1764
        %v2563 = vmul.f32 %v1764, %v2562
        %vm2564 = vcmp.eq.f32.partialorder %v1764, inf
        %v2565 = vsel %vm2564, %v1764, %v2563
        %vm2566 = vcmp.eq.f32.partialorder %v1764, 0.0
        %v2567 = vand.u32 %v1764, 2147483648
        %v2568 = vsel %vm2566, %v2567, %v2565
        %v2569 = vrsqrt.pop %v1767
        %v2570 = vmul.f32 %v1767, %v2569
        %vm2571 = vcmp.eq.f32.partialorder %v1767, inf
        %v2572 = vsel %vm2571, %v1767, %v2570
        %vm2573 = vcmp.eq.f32.partialorder %v1767, 0.0
        %v2574 = vand.u32 %v1767, 2147483648
        %v2575 = vsel %vm2573, %v2574, %v2572
        %v2576 = vrsqrt.pop %v1770
        %v2577 = vmul.f32 %v1770, %v2576
        %vm2578 = vcmp.eq.f32.partialorder %v1770, inf
        %v2579 = vsel %vm2578, %v1770, %v2577
        %vm2580 = vcmp.eq.f32.partialorder %v1770, 0.0
        %v2581 = vand.u32 %v1770, 2147483648
        %v2582 = vsel %vm2580, %v2581, %v2579
        %v2583 = vrsqrt.pop %v1773
        %v2584 = vmul.f32 %v1773, %v2583
        %vm2585 = vcmp.eq.f32.partialorder %v1773, inf
        %v2586 = vsel %vm2585, %v1773, %v2584
        %vm2587 = vcmp.eq.f32.partialorder %v1773, 0.0
        %v2588 = vand.u32 %v1773, 2147483648
        %v2589 = vsel %vm2587, %v2588, %v2586
        %v2590 = vrsqrt.pop %v1776
        %v2591 = vmul.f32 %v1776, %v2590
        %vm2592 = vcmp.eq.f32.partialorder %v1776, inf
        %v2593 = vsel %vm2592, %v1776, %v2591
        %vm2594 = vcmp.eq.f32.partialorder %v1776, 0.0
        %v2595 = vand.u32 %v1776, 2147483648
        %v2596 = vsel %vm2594, %v2595, %v2593
        %v2597 = vrsqrt.pop %v1779
        %v2598 = vmul.f32 %v1779, %v2597
        %vm2599 = vcmp.eq.f32.partialorder %v1779, inf
        %v2600 = vsel %vm2599, %v1779, %v2598
        %vm2601 = vcmp.eq.f32.partialorder %v1779, 0.0
        %v2602 = vand.u32 %v1779, 2147483648
        %v2603 = vsel %vm2601, %v2602, %v2600
        %v2604 = vrsqrt.pop %v1782
        %v2605 = vmul.f32 %v1782, %v2604
        %vm2606 = vcmp.eq.f32.partialorder %v1782, inf
        %v2607 = vsel %vm2606, %v1782, %v2605
        %vm2608 = vcmp.eq.f32.partialorder %v1782, 0.0
        %v2609 = vand.u32 %v1782, 2147483648
        %v2610 = vsel %vm2608, %v2609, %v2607
        %v2611 = vrsqrt.pop %v1785
        %v2612 = vmul.f32 %v1785, %v2611
        %vm2613 = vcmp.eq.f32.partialorder %v1785, inf
        %v2614 = vsel %vm2613, %v1785, %v2612
        %vm2615 = vcmp.eq.f32.partialorder %v1785, 0.0
        %v2616 = vand.u32 %v1785, 2147483648
        %v2617 = vsel %vm2615, %v2616, %v2614
        %v2618 = vrsqrt.pop %v1788
        %v2619 = vmul.f32 %v1788, %v2618
        %vm2620 = vcmp.eq.f32.partialorder %v1788, inf
        %v2621 = vsel %vm2620, %v1788, %v2619
        %vm2622 = vcmp.eq.f32.partialorder %v1788, 0.0
        %v2623 = vand.u32 %v1788, 2147483648
        %v2624 = vsel %vm2622, %v2623, %v2621
        %v2625 = vrsqrt.pop %v1791
        %v2626 = vmul.f32 %v1791, %v2625
        %vm2627 = vcmp.eq.f32.partialorder %v1791, inf
        %v2628 = vsel %vm2627, %v1791, %v2626
        %vm2629 = vcmp.eq.f32.partialorder %v1791, 0.0
        %v2630 = vand.u32 %v1791, 2147483648
        %v2631 = vsel %vm2629, %v2630, %v2628
        %v2632 = vrsqrt.pop %v1794
        %v2633 = vmul.f32 %v1794, %v2632
        %vm2634 = vcmp.eq.f32.partialorder %v1794, inf
        %v2635 = vsel %vm2634, %v1794, %v2633
        %vm2636 = vcmp.eq.f32.partialorder %v1794, 0.0
        %v2637 = vand.u32 %v1794, 2147483648
        %v2638 = vsel %vm2636, %v2637, %v2635
        %v2639 = vrsqrt.pop %v1797
        %v2640 = vmul.f32 %v1797, %v2639
        %vm2641 = vcmp.eq.f32.partialorder %v1797, inf
        %v2642 = vsel %vm2641, %v1797, %v2640
        %vm2643 = vcmp.eq.f32.partialorder %v1797, 0.0
        %v2644 = vand.u32 %v1797, 2147483648
        %v2645 = vsel %vm2643, %v2644, %v2642
        %v2646 = vrsqrt.pop %v1800
        %v2647 = vmul.f32 %v1800, %v2646
        %vm2648 = vcmp.eq.f32.partialorder %v1800, inf
        %v2649 = vsel %vm2648, %v1800, %v2647
        %vm2650 = vcmp.eq.f32.partialorder %v1800, 0.0
        %v2651 = vand.u32 %v1800, 2147483648
        %v2652 = vsel %vm2650, %v2651, %v2649
        %v2653 = vrsqrt.pop %v1803
        %v2654 = vmul.f32 %v1803, %v2653
        %vm2655 = vcmp.eq.f32.partialorder %v1803, inf
        %v2656 = vsel %vm2655, %v1803, %v2654
        %vm2657 = vcmp.eq.f32.partialorder %v1803, 0.0
        %v2658 = vand.u32 %v1803, 2147483648
        %v2659 = vsel %vm2657, %v2658, %v2656
        %v2660 = vrsqrt.pop %v1806
        %v2661 = vmul.f32 %v1806, %v2660
        %vm2662 = vcmp.eq.f32.partialorder %v1806, inf
        %v2663 = vsel %vm2662, %v1806, %v2661
        %vm2664 = vcmp.eq.f32.partialorder %v1806, 0.0
        %v2665 = vand.u32 %v1806, 2147483648
        %v2666 = vsel %vm2664, %v2665, %v2663
        %v2667 = vrsqrt.pop %v1809
        %v2668 = vmul.f32 %v1809, %v2667
        %vm2669 = vcmp.eq.f32.partialorder %v1809, inf
        %v2670 = vsel %vm2669, %v1809, %v2668
        %vm2671 = vcmp.eq.f32.partialorder %v1809, 0.0
        %v2672 = vand.u32 %v1809, 2147483648
        %v2673 = vsel %vm2671, %v2672, %v2670
        %v2674 = vrsqrt.pop %v1812
        %v2675 = vmul.f32 %v1812, %v2674
        %vm2676 = vcmp.eq.f32.partialorder %v1812, inf
        %v2677 = vsel %vm2676, %v1812, %v2675
        %vm2678 = vcmp.eq.f32.partialorder %v1812, 0.0
        %v2679 = vand.u32 %v1812, 2147483648
        %v2680 = vsel %vm2678, %v2679, %v2677
        %v2681 = vrsqrt.pop %v1815
        %v2682 = vmul.f32 %v1815, %v2681
        %vm2683 = vcmp.eq.f32.partialorder %v1815, inf
        %v2684 = vsel %vm2683, %v1815, %v2682
        %vm2685 = vcmp.eq.f32.partialorder %v1815, 0.0
        %v2686 = vand.u32 %v1815, 2147483648
        %v2687 = vsel %vm2685, %v2686, %v2684
        %v2688 = vrsqrt.pop %v1818
        %v2689 = vmul.f32 %v1818, %v2688
        %vm2690 = vcmp.eq.f32.partialorder %v1818, inf
        %v2691 = vsel %vm2690, %v1818, %v2689
        %vm2692 = vcmp.eq.f32.partialorder %v1818, 0.0
        %v2693 = vand.u32 %v1818, 2147483648
        %v2694 = vsel %vm2692, %v2693, %v2691
        %v2695 = vrsqrt.pop %v1821
        %v2696 = vmul.f32 %v1821, %v2695
        %vm2697 = vcmp.eq.f32.partialorder %v1821, inf
        %v2698 = vsel %vm2697, %v1821, %v2696
        %vm2699 = vcmp.eq.f32.partialorder %v1821, 0.0
        %v2700 = vand.u32 %v1821, 2147483648
        %v2701 = vsel %vm2699, %v2700, %v2698
        %v2702 = vrsqrt.pop %v1824
        %v2703 = vmul.f32 %v1824, %v2702
        %vm2704 = vcmp.eq.f32.partialorder %v1824, inf
        %v2705 = vsel %vm2704, %v1824, %v2703
        %vm2706 = vcmp.eq.f32.partialorder %v1824, 0.0
        %v2707 = vand.u32 %v1824, 2147483648
        %v2708 = vsel %vm2706, %v2707, %v2705
        %v2709 = vrsqrt.pop %v1827
        %v2710 = vmul.f32 %v1827, %v2709
        %vm2711 = vcmp.eq.f32.partialorder %v1827, inf
        %v2712 = vsel %vm2711, %v1827, %v2710
        %vm2713 = vcmp.eq.f32.partialorder %v1827, 0.0
        %v2714 = vand.u32 %v1827, 2147483648
        %v2715 = vsel %vm2713, %v2714, %v2712
        %v2716 = vrsqrt.pop %v1830
        %v2717 = vmul.f32 %v1830, %v2716
        %vm2718 = vcmp.eq.f32.partialorder %v1830, inf
        %v2719 = vsel %vm2718, %v1830, %v2717
        %vm2720 = vcmp.eq.f32.partialorder %v1830, 0.0
        %v2721 = vand.u32 %v1830, 2147483648
        %v2722 = vsel %vm2720, %v2721, %v2719
        %v2723 = vrsqrt.pop %v1833
        %v2724 = vmul.f32 %v1833, %v2723
        %vm2725 = vcmp.eq.f32.partialorder %v1833, inf
        %v2726 = vsel %vm2725, %v1833, %v2724
        %vm2727 = vcmp.eq.f32.partialorder %v1833, 0.0
        %v2728 = vand.u32 %v1833, 2147483648
        %v2729 = vsel %vm2727, %v2728, %v2726
        %2730 = vst.msk [vmem:[#allocation2] sm:$0xff] %vm1065, %v1840
        %2731 = vst.msk [vmem:[#allocation2 + $0x8] sm:$0xff] %vm1065, %v1847
        %2732 = vst.msk [vmem:[#allocation2 + $0x10] sm:$0xff] %vm1065, %v1854
        %2733 = vst.msk [vmem:[#allocation2 + $0x18] sm:$0xff] %vm1065, %v1861
        %2734 = vst.msk [vmem:[#allocation2 + $0x20] sm:$0xff] %vm1065, %v1868
        %2735 = vst.msk [vmem:[#allocation2 + $0x28] sm:$0xff] %vm1065, %v1875
        %2736 = vst.msk [vmem:[#allocation2 + $0x30] sm:$0xff] %vm1065, %v1882
        %2737 = vst.msk [vmem:[#allocation2 + $0x38] sm:$0xff] %vm1065, %v1889
        %2738 = vst.msk [vmem:[#allocation2 + $0x40] sm:$0xff] %vm1065, %v1896
        %2739 = vst.msk [vmem:[#allocation2 + $0x48] sm:$0xff] %vm1065, %v1903
        %2740 = vst.msk [vmem:[#allocation2 + $0x50] sm:$0xff] %vm1065, %v1910
        %2741 = vst.msk [vmem:[#allocation2 + $0x58] sm:$0xff] %vm1065, %v1917
        %2742 = vst.msk [vmem:[#allocation2 + $0x60] sm:$0xff] %vm1065, %v1924
        %2743 = vst.msk [vmem:[#allocation2 + $0x68] sm:$0xff] %vm1065, %v1931
        %2744 = vst.msk [vmem:[#allocation2 + $0x70] sm:$0xff] %vm1065, %v1938
        %2745 = vst.msk [vmem:[#allocation2 + $0x78] sm:$0xff] %vm1065, %v1945
        %2746 = vst.msk [vmem:[#allocation2 + $0x80] sm:$0xff] %vm1065, %v1952
        %2747 = vst.msk [vmem:[#allocation2 + $0x88] sm:$0xff] %vm1065, %v1959
        %2748 = vst.msk [vmem:[#allocation2 + $0x90] sm:$0xff] %vm1065, %v1966
        %2749 = vst.msk [vmem:[#allocation2 + $0x98] sm:$0xff] %vm1065, %v1973
        %2750 = vst.msk [vmem:[#allocation2 + $0xa0] sm:$0xff] %vm1065, %v1980
        %2751 = vst.msk [vmem:[#allocation2 + $0xa8] sm:$0xff] %vm1065, %v1987
        %2752 = vst.msk [vmem:[#allocation2 + $0xb0] sm:$0xff] %vm1065, %v1994
        %2753 = vst.msk [vmem:[#allocation2 + $0xb8] sm:$0xff] %vm1065, %v2001
        %2754 = vst.msk [vmem:[#allocation2 + $0xc0] sm:$0xff] %vm1065, %v2008
        %2755 = vst.msk [vmem:[#allocation2 + $0xc8] sm:$0xff] %vm1065, %v2015
        %2756 = vst.msk [vmem:[#allocation2 + $0xd0] sm:$0xff] %vm1065, %v2022
        %2757 = vst.msk [vmem:[#allocation2 + $0xd8] sm:$0xff] %vm1065, %v2029
        %2758 = vst.msk [vmem:[#allocation2 + $0xe0] sm:$0xff] %vm1065, %v2036
        %2759 = vst.msk [vmem:[#allocation2 + $0xe8] sm:$0xff] %vm1065, %v2043
        %2760 = vst.msk [vmem:[#allocation2 + $0xf0] sm:$0xff] %vm1065, %v2050
        %2761 = vst.msk [vmem:[#allocation2 + $0xf8] sm:$0xff] %vm1065, %v2057
        %2762 = vst.msk [vmem:[#allocation2 + $0x100] sm:$0xff] %vm1065, %v2064
        %2763 = vst.msk [vmem:[#allocation2 + $0x108] sm:$0xff] %vm1065, %v2071
        %2764 = vst.msk [vmem:[#allocation2 + $0x110] sm:$0xff] %vm1065, %v2078
        %2765 = vst.msk [vmem:[#allocation2 + $0x118] sm:$0xff] %vm1065, %v2085
        %2766 = vst.msk [vmem:[#allocation2 + $0x120] sm:$0xff] %vm1065, %v2092
        %2767 = vst.msk [vmem:[#allocation2 + $0x128] sm:$0xff] %vm1065, %v2099
        %2768 = vst.msk [vmem:[#allocation2 + $0x130] sm:$0xff] %vm1065, %v2106
        %2769 = vst.msk [vmem:[#allocation2 + $0x138] sm:$0xff] %vm1065, %v2113
        %2770 = vst.msk [vmem:[#allocation2 + $0x140] sm:$0xff] %vm1065, %v2120
        %2771 = vst.msk [vmem:[#allocation2 + $0x148] sm:$0xff] %vm1065, %v2127
        %2772 = vst.msk [vmem:[#allocation2 + $0x150] sm:$0xff] %vm1065, %v2134
        %2773 = vst.msk [vmem:[#allocation2 + $0x158] sm:$0xff] %vm1065, %v2141
        %2774 = vst.msk [vmem:[#allocation2 + $0x160] sm:$0xff] %vm1065, %v2148
        %2775 = vst.msk [vmem:[#allocation2 + $0x168] sm:$0xff] %vm1065, %v2155
        %2776 = vst.msk [vmem:[#allocation2 + $0x170] sm:$0xff] %vm1065, %v2162
        %2777 = vst.msk [vmem:[#allocation2 + $0x178] sm:$0xff] %vm1065, %v2169
        %2778 = vst.msk [vmem:[#allocation2 + $0x180] sm:$0xff] %vm1065, %v2176
        %2779 = vst.msk [vmem:[#allocation2 + $0x188] sm:$0xff] %vm1065, %v2183
        %2780 = vst.msk [vmem:[#allocation2 + $0x190] sm:$0xff] %vm1065, %v2190
        %2781 = vst.msk [vmem:[#allocation2 + $0x198] sm:$0xff] %vm1065, %v2197
        %2782 = vst.msk [vmem:[#allocation2 + $0x1a0] sm:$0xff] %vm1065, %v2204
        %2783 = vst.msk [vmem:[#allocation2 + $0x1a8] sm:$0xff] %vm1065, %v2211
        %2784 = vst.msk [vmem:[#allocation2 + $0x1b0] sm:$0xff] %vm1065, %v2218
        %2785 = vst.msk [vmem:[#allocation2 + $0x1b8] sm:$0xff] %vm1065, %v2225
        %2786 = vst.msk [vmem:[#allocation2 + $0x1c0] sm:$0xff] %vm1065, %v2232
        %2787 = vst.msk [vmem:[#allocation2 + $0x1c8] sm:$0xff] %vm1065, %v2239
        %2788 = vst.msk [vmem:[#allocation2 + $0x1d0] sm:$0xff] %vm1065, %v2246
        %2789 = vst.msk [vmem:[#allocation2 + $0x1d8] sm:$0xff] %vm1065, %v2253
        %2790 = vst.msk [vmem:[#allocation2 + $0x1e0] sm:$0xff] %vm1065, %v2260
        %2791 = vst.msk [vmem:[#allocation2 + $0x1e8] sm:$0xff] %vm1065, %v2267
        %2792 = vst.msk [vmem:[#allocation2 + $0x1f0] sm:$0xff] %vm1065, %v2274
        %2793 = vst.msk [vmem:[#allocation2 + $0x1f8] sm:$0xff] %vm1065, %v2281
        %2794 = vst.msk [vmem:[#allocation2 + $0x200] sm:$0xff] %vm1065, %v2288
        %2795 = vst.msk [vmem:[#allocation2 + $0x208] sm:$0xff] %vm1065, %v2295
        %2796 = vst.msk [vmem:[#allocation2 + $0x210] sm:$0xff] %vm1065, %v2302
        %2797 = vst.msk [vmem:[#allocation2 + $0x218] sm:$0xff] %vm1065, %v2309
        %2798 = vst.msk [vmem:[#allocation2 + $0x220] sm:$0xff] %vm1065, %v2316
        %2799 = vst.msk [vmem:[#allocation2 + $0x228] sm:$0xff] %vm1065, %v2323
        %2800 = vst.msk [vmem:[#allocation2 + $0x230] sm:$0xff] %vm1065, %v2330
        %2801 = vst.msk [vmem:[#allocation2 + $0x238] sm:$0xff] %vm1065, %v2337
        %2802 = vst.msk [vmem:[#allocation2 + $0x240] sm:$0xff] %vm1065, %v2344
        %2803 = vst.msk [vmem:[#allocation2 + $0x248] sm:$0xff] %vm1065, %v2351
        %2804 = vst.msk [vmem:[#allocation2 + $0x250] sm:$0xff] %vm1065, %v2358
        %2805 = vst.msk [vmem:[#allocation2 + $0x258] sm:$0xff] %vm1065, %v2365
        %2806 = vst.msk [vmem:[#allocation2 + $0x260] sm:$0xff] %vm1065, %v2372
        %2807 = vst.msk [vmem:[#allocation2 + $0x268] sm:$0xff] %vm1065, %v2379
        %2808 = vst.msk [vmem:[#allocation2 + $0x270] sm:$0xff] %vm1065, %v2386
        %2809 = vst.msk [vmem:[#allocation2 + $0x278] sm:$0xff] %vm1065, %v2393
        %2810 = vst.msk [vmem:[#allocation2 + $0x280] sm:$0xff] %vm1065, %v2400
        %2811 = vst.msk [vmem:[#allocation2 + $0x288] sm:$0xff] %vm1065, %v2407
        %2812 = vst.msk [vmem:[#allocation2 + $0x290] sm:$0xff] %vm1065, %v2414
        %2813 = vst.msk [vmem:[#allocation2 + $0x298] sm:$0xff] %vm1065, %v2421
        %2814 = vst.msk [vmem:[#allocation2 + $0x2a0] sm:$0xff] %vm1065, %v2428
        %2815 = vst.msk [vmem:[#allocation2 + $0x2a8] sm:$0xff] %vm1065, %v2435
        %2816 = vst.msk [vmem:[#allocation2 + $0x2b0] sm:$0xff] %vm1065, %v2442
        %2817 = vst.msk [vmem:[#allocation2 + $0x2b8] sm:$0xff] %vm1065, %v2449
        %2818 = vst.msk [vmem:[#allocation2 + $0x2c0] sm:$0xff] %vm1065, %v2456
        %2819 = vst.msk [vmem:[#allocation2 + $0x2c8] sm:$0xff] %vm1065, %v2463
        %2820 = vst.msk [vmem:[#allocation2 + $0x2d0] sm:$0xff] %vm1065, %v2470
        %2821 = vst.msk [vmem:[#allocation2 + $0x2d8] sm:$0xff] %vm1065, %v2477
        %2822 = vst.msk [vmem:[#allocation2 + $0x2e0] sm:$0xff] %vm1065, %v2484
        %2823 = vst.msk [vmem:[#allocation2 + $0x2e8] sm:$0xff] %vm1065, %v2491
        %2824 = vst.msk [vmem:[#allocation2 + $0x2f0] sm:$0xff] %vm1065, %v2498
        %2825 = vst.msk [vmem:[#allocation2 + $0x2f8] sm:$0xff] %vm1065, %v2505
        %2826 = vst.msk [vmem:[#allocation2 + $0x300] sm:$0xff] %vm1065, %v2512
        %2827 = vst.msk [vmem:[#allocation2 + $0x308] sm:$0xff] %vm1065, %v2519
        %2828 = vst.msk [vmem:[#allocation2 + $0x310] sm:$0xff] %vm1065, %v2526
        %2829 = vst.msk [vmem:[#allocation2 + $0x318] sm:$0xff] %vm1065, %v2533
        %2830 = vst.msk [vmem:[#allocation2 + $0x320] sm:$0xff] %vm1065, %v2540
        %2831 = vst.msk [vmem:[#allocation2 + $0x328] sm:$0xff] %vm1065, %v2547
        %2832 = vst.msk [vmem:[#allocation2 + $0x330] sm:$0xff] %vm1065, %v2554
        %2833 = vst.msk [vmem:[#allocation2 + $0x338] sm:$0xff] %vm1065, %v2561
        %2834 = vst.msk [vmem:[#allocation2 + $0x340] sm:$0xff] %vm1065, %v2568
        %2835 = vst.msk [vmem:[#allocation2 + $0x348] sm:$0xff] %vm1065, %v2575
        %2836 = vst.msk [vmem:[#allocation2 + $0x350] sm:$0xff] %vm1065, %v2582
        %2837 = vst.msk [vmem:[#allocation2 + $0x358] sm:$0xff] %vm1065, %v2589
        %2838 = vst.msk [vmem:[#allocation2 + $0x360] sm:$0xff] %vm1065, %v2596
        %2839 = vst.msk [vmem:[#allocation2 + $0x368] sm:$0xff] %vm1065, %v2603
        %2840 = vst.msk [vmem:[#allocation2 + $0x370] sm:$0xff] %vm1065, %v2610
        %2841 = vst.msk [vmem:[#allocation2 + $0x378] sm:$0xff] %vm1065, %v2617
        %2842 = vst.msk [vmem:[#allocation2 + $0x380] sm:$0xff] %vm1065, %v2624
        %2843 = vst.msk [vmem:[#allocation2 + $0x388] sm:$0xff] %vm1065, %v2631
        %2844 = vst.msk [vmem:[#allocation2 + $0x390] sm:$0xff] %vm1065, %v2638
        %2845 = vst.msk [vmem:[#allocation2 + $0x398] sm:$0xff] %vm1065, %v2645
        %2846 = vst.msk [vmem:[#allocation2 + $0x3a0] sm:$0xff] %vm1065, %v2652
        %2847 = vst.msk [vmem:[#allocation2 + $0x3a8] sm:$0xff] %vm1065, %v2659
        %2848 = vst.msk [vmem:[#allocation2 + $0x3b0] sm:$0xff] %vm1065, %v2666
        %2849 = vst.msk [vmem:[#allocation2 + $0x3b8] sm:$0xff] %vm1065, %v2673
        %2850 = vst.msk [vmem:[#allocation2 + $0x3c0] sm:$0xff] %vm1065, %v2680
        %2851 = vst.msk [vmem:[#allocation2 + $0x3c8] sm:$0xff] %vm1065, %v2687
        %2852 = vst.msk [vmem:[#allocation2 + $0x3d0] sm:$0xff] %vm1065, %v2694
        %2853 = vst.msk [vmem:[#allocation2 + $0x3d8] sm:$0xff] %vm1065, %v2701
        %2854 = vst.msk [vmem:[#allocation2 + $0x3e0] sm:$0xff] %vm1065, %v2708
        %2855 = vst.msk [vmem:[#allocation2 + $0x3e8] sm:$0xff] %vm1065, %v2715
        %2856 = vst.msk [vmem:[#allocation2 + $0x3f0] sm:$0xff] %vm1065, %v2722
        %2857 = vst.msk [vmem:[#allocation2 + $0x3f8] sm:$0xff] %vm1065, %v2729
      $region52: #{core.5} parent=47 // pred_fallthru
        _
      %s2858 = sld [smem:[#allocation4 + %s39]]
      %s2859 = sld [smem:[#allocation5 + %s39]]
      %s2860 = sld [smem:[#allocation6 + %s39]]
      %p2861 = scmp.gt.s32.totalorder %s2859, 0
      // Predicated region
      $region53: #{core.5} parent=47 // pred_check
        %p2862 = pneg %p2861
      $region54: #{core.5} parent=47 // pred_check_branch
        %2864 = sbr.rel (%p2862) target = $region56
      $region55: #{core.5} parent=47 // pred_region
        %p2865 = scmp.lt.s32.totalorder %s2858, 0
        %s2866 = ssub.s32 0, %s2858
        %s2867 = scalar_select %p2865, %s2866, %s2858
        %s2868 = sdiv.u32.pop %s2867, 1000
        %s2869 = srem.u32.pop %s2867, 1000
        %s2870 = ssub.s32 0, %s2869
        %s2871 = scalar_select %p2865, %s2870, %s2869
        %p2872 = scmp.ne.s32.totalorder %s2871, 0
        %p2873 = scmp.lt.s32.totalorder %s2871, 0
        %p2874 = pnand %p2873, %p2872
        %p2875 = pneg %p2874
        %s2876 = sadd.s32 %s2871, 1000
        %s2877 = scalar_select %p2875, %s2876, %s2871
        %v2878 = vld [vmem:[%s401] sm:$0x1]
        %s2879 = scalar_lea.vmem %s10, %s2877
        %vm2880 = vcmask 253952
        %2881 = vst.msk [vmem:[%s2879] sm:$0x1] %vm2880, %v2878
        %v2882 = vld [vmem:[%s405] sm:$0x1]
        %s2883 = scalar_lea.vmem %s11, %s2877
        %2884 = vst.msk [vmem:[%s2883] sm:$0x1] %vm2880, %v2882
        %v2885 = vld [vmem:[%s409] sm:$0x1]
        %s2886 = scalar_lea.vmem %s12, %s2877
        %vm2887 = vcmask 0
        %2888 = vst.msk [vmem:[%s2886] sm:$0x1] %vm2887, %v2885
        %v2889 = vmul.f32 %v2878, %v2878
        %v2890 = vsel %vm2880, %v2889, 0.0
        %2891 = vadd.xlane.f32.xlu0 %v2890
        %v2892 = vpop.xlane.xlu0 %2891
        %v2893 = vrsqrt.pop %v2892
        %v2894 = vmul.f32 %v2892, %v2893
        %vm2895 = vcmp.eq.f32.partialorder %v2892, inf
        %v2896 = vsel %vm2895, %v2892, %v2894
        %vm2897 = vcmp.eq.f32.partialorder %v2892, 0.0
        %v2898 = vand.u32 %v2892, 2147483648
        %v2899 = vsel %vm2897, %v2898, %v2896
        %s2900 = scalar_lea.vmem [#allocation2], %s2877
        %2901 = vst.msk [vmem:[%s2900] sm:$0x1] %vm2887, %v2899
      $region56: #{core.5} parent=47 // pred_fallthru
        _
      %p2902 = scmp.gt.s32.totalorder %s2859, 1
      // Predicated region
      $region57: #{core.5} parent=47 // pred_check
        %p2903 = pneg %p2902
      $region58: #{core.5} parent=47 // pred_check_branch
        %2905 = sbr.rel (%p2903) target = $region60
      $region59: #{core.5} parent=47 // pred_region
        %s2906 = sadd.s32 %s2858, 1
        %p2907 = scmp.lt.s32.totalorder %s2906, 0
        %s2908 = ssub.s32 0, %s2906
        %s2909 = scalar_select %p2907, %s2908, %s2906
        %s2910 = sdiv.u32.pop %s2909, 1000
        %s2911 = srem.u32.pop %s2909, 1000
        %s2912 = ssub.s32 0, %s2911
        %s2913 = scalar_select %p2907, %s2912, %s2911
        %p2914 = scmp.ne.s32.totalorder %s2913, 0
        %p2915 = scmp.lt.s32.totalorder %s2913, 0
        %p2916 = pnand %p2915, %p2914
        %p2917 = pneg %p2916
        %s2918 = sadd.s32 %s2913, 1000
        %s2919 = scalar_select %p2917, %s2918, %s2913
        %v2920 = vld [vmem:[%s401 + $0x1] sm:$0x1]
        %s2921 = scalar_lea.vmem %s10, %s2919
        %vm2922 = vcmask 253952
        %2923 = vst.msk [vmem:[%s2921] sm:$0x1] %vm2922, %v2920
        %v2924 = vld [vmem:[%s405 + $0x1] sm:$0x1]
        %s2925 = scalar_lea.vmem %s11, %s2919
        %2926 = vst.msk [vmem:[%s2925] sm:$0x1] %vm2922, %v2924
        %v2927 = vld [vmem:[%s409 + $0x1] sm:$0x1]
        %s2928 = scalar_lea.vmem %s12, %s2919
        %vm2929 = vcmask 0
        %2930 = vst.msk [vmem:[%s2928] sm:$0x1] %vm2929, %v2927
        %v2931 = vmul.f32 %v2920, %v2920
        %v2932 = vsel %vm2922, %v2931, 0.0
        %2933 = vadd.xlane.f32.xlu0 %v2932
        %v2934 = vpop.xlane.xlu0 %2933
        %v2935 = vrsqrt.pop %v2934
        %v2936 = vmul.f32 %v2934, %v2935
        %vm2937 = vcmp.eq.f32.partialorder %v2934, inf
        %v2938 = vsel %vm2937, %v2934, %v2936
        %vm2939 = vcmp.eq.f32.partialorder %v2934, 0.0
        %v2940 = vand.u32 %v2934, 2147483648
        %v2941 = vsel %vm2939, %v2940, %v2938
        %s2942 = scalar_lea.vmem [#allocation2], %s2919
        %2943 = vst.msk [vmem:[%s2942] sm:$0x1] %vm2929, %v2941
      $region60: #{core.5} parent=47 // pred_fallthru
        _
      %p2944 = scmp.gt.s32.totalorder %s2859, 2
      // Predicated region
      $region61: #{core.5} parent=47 // pred_check
        %p2945 = pneg %p2944
      $region62: #{core.5} parent=47 // pred_check_branch
        %2947 = sbr.rel (%p2945) target = $region64
      $region63: #{core.5} parent=47 // pred_region
        %s2948 = sadd.s32 %s2858, 2
        %p2949 = scmp.lt.s32.totalorder %s2948, 0
        %s2950 = ssub.s32 0, %s2948
        %s2951 = scalar_select %p2949, %s2950, %s2948
        %s2952 = sdiv.u32.pop %s2951, 1000
        %s2953 = srem.u32.pop %s2951, 1000
        %s2954 = ssub.s32 0, %s2953
        %s2955 = scalar_select %p2949, %s2954, %s2953
        %p2956 = scmp.ne.s32.totalorder %s2955, 0
        %p2957 = scmp.lt.s32.totalorder %s2955, 0
        %p2958 = pnand %p2957, %p2956
        %p2959 = pneg %p2958
        %s2960 = sadd.s32 %s2955, 1000
        %s2961 = scalar_select %p2959, %s2960, %s2955
        %v2962 = vld [vmem:[%s401 + $0x2] sm:$0x1]
        %s2963 = scalar_lea.vmem %s10, %s2961
        %vm2964 = vcmask 253952
        %2965 = vst.msk [vmem:[%s2963] sm:$0x1] %vm2964, %v2962
        %v2966 = vld [vmem:[%s405 + $0x2] sm:$0x1]
        %s2967 = scalar_lea.vmem %s11, %s2961
        %2968 = vst.msk [vmem:[%s2967] sm:$0x1] %vm2964, %v2966
        %v2969 = vld [vmem:[%s409 + $0x2] sm:$0x1]
        %s2970 = scalar_lea.vmem %s12, %s2961
        %vm2971 = vcmask 0
        %2972 = vst.msk [vmem:[%s2970] sm:$0x1] %vm2971, %v2969
        %v2973 = vmul.f32 %v2962, %v2962
        %v2974 = vsel %vm2964, %v2973, 0.0
        %2975 = vadd.xlane.f32.xlu0 %v2974
        %v2976 = vpop.xlane.xlu0 %2975
        %v2977 = vrsqrt.pop %v2976
        %v2978 = vmul.f32 %v2976, %v2977
        %vm2979 = vcmp.eq.f32.partialorder %v2976, inf
        %v2980 = vsel %vm2979, %v2976, %v2978
        %vm2981 = vcmp.eq.f32.partialorder %v2976, 0.0
        %v2982 = vand.u32 %v2976, 2147483648
        %v2983 = vsel %vm2981, %v2982, %v2980
        %s2984 = scalar_lea.vmem [#allocation2], %s2961
        %2985 = vst.msk [vmem:[%s2984] sm:$0x1] %vm2971, %v2983
      $region64: #{core.5} parent=47 // pred_fallthru
        _
      %p2986 = scmp.gt.s32.totalorder %s2859, 3
      // Predicated region
      $region65: #{core.5} parent=47 // pred_check
        %p2987 = pneg %p2986
      $region66: #{core.5} parent=47 // pred_check_branch
        %2989 = sbr.rel (%p2987) target = $region68
      $region67: #{core.5} parent=47 // pred_region
        %s2990 = sadd.s32 %s2858, 3
        %p2991 = scmp.lt.s32.totalorder %s2990, 0
        %s2992 = ssub.s32 0, %s2990
        %s2993 = scalar_select %p2991, %s2992, %s2990
        %s2994 = sdiv.u32.pop %s2993, 1000
        %s2995 = srem.u32.pop %s2993, 1000
        %s2996 = ssub.s32 0, %s2995
        %s2997 = scalar_select %p2991, %s2996, %s2995
        %p2998 = scmp.ne.s32.totalorder %s2997, 0
        %p2999 = scmp.lt.s32.totalorder %s2997, 0
        %p3000 = pnand %p2999, %p2998
        %p3001 = pneg %p3000
        %s3002 = sadd.s32 %s2997, 1000
        %s3003 = scalar_select %p3001, %s3002, %s2997
        %v3004 = vld [vmem:[%s401 + $0x3] sm:$0x1]
        %s3005 = scalar_lea.vmem %s10, %s3003
        %vm3006 = vcmask 253952
        %3007 = vst.msk [vmem:[%s3005] sm:$0x1] %vm3006, %v3004
        %v3008 = vld [vmem:[%s405 + $0x3] sm:$0x1]
        %s3009 = scalar_lea.vmem %s11, %s3003
        %3010 = vst.msk [vmem:[%s3009] sm:$0x1] %vm3006, %v3008
        %v3011 = vld [vmem:[%s409 + $0x3] sm:$0x1]
        %s3012 = scalar_lea.vmem %s12, %s3003
        %vm3013 = vcmask 0
        %3014 = vst.msk [vmem:[%s3012] sm:$0x1] %vm3013, %v3011
        %v3015 = vmul.f32 %v3004, %v3004
        %v3016 = vsel %vm3006, %v3015, 0.0
        %3017 = vadd.xlane.f32.xlu0 %v3016
        %v3018 = vpop.xlane.xlu0 %3017
        %v3019 = vrsqrt.pop %v3018
        %v3020 = vmul.f32 %v3018, %v3019
        %vm3021 = vcmp.eq.f32.partialorder %v3018, inf
        %v3022 = vsel %vm3021, %v3018, %v3020
        %vm3023 = vcmp.eq.f32.partialorder %v3018, 0.0
        %v3024 = vand.u32 %v3018, 2147483648
        %v3025 = vsel %vm3023, %v3024, %v3022
        %s3026 = scalar_lea.vmem [#allocation2], %s3003
        %3027 = vst.msk [vmem:[%s3026] sm:$0x1] %vm3013, %v3025
      $region68: #{core.5} parent=47 // pred_fallthru
        _
      %p3028 = scmp.gt.s32.totalorder %s2859, 4
      // Predicated region
      $region69: #{core.5} parent=47 // pred_check
        %p3029 = pneg %p3028
      $region70: #{core.5} parent=47 // pred_check_branch
        %3031 = sbr.rel (%p3029) target = $region72
      $region71: #{core.5} parent=47 // pred_region
        %s3032 = sadd.s32 %s2858, 4
        %p3033 = scmp.lt.s32.totalorder %s3032, 0
        %s3034 = ssub.s32 0, %s3032
        %s3035 = scalar_select %p3033, %s3034, %s3032
        %s3036 = sdiv.u32.pop %s3035, 1000
        %s3037 = srem.u32.pop %s3035, 1000
        %s3038 = ssub.s32 0, %s3037
        %s3039 = scalar_select %p3033, %s3038, %s3037
        %p3040 = scmp.ne.s32.totalorder %s3039, 0
        %p3041 = scmp.lt.s32.totalorder %s3039, 0
        %p3042 = pnand %p3041, %p3040
        %p3043 = pneg %p3042
        %s3044 = sadd.s32 %s3039, 1000
        %s3045 = scalar_select %p3043, %s3044, %s3039
        %v3046 = vld [vmem:[%s401 + $0x4] sm:$0x1]
        %s3047 = scalar_lea.vmem %s10, %s3045
        %vm3048 = vcmask 253952
        %3049 = vst.msk [vmem:[%s3047] sm:$0x1] %vm3048, %v3046
        %v3050 = vld [vmem:[%s405 + $0x4] sm:$0x1]
        %s3051 = scalar_lea.vmem %s11, %s3045
        %3052 = vst.msk [vmem:[%s3051] sm:$0x1] %vm3048, %v3050
        %v3053 = vld [vmem:[%s409 + $0x4] sm:$0x1]
        %s3054 = scalar_lea.vmem %s12, %s3045
        %vm3055 = vcmask 0
        %3056 = vst.msk [vmem:[%s3054] sm:$0x1] %vm3055, %v3053
        %v3057 = vmul.f32 %v3046, %v3046
        %v3058 = vsel %vm3048, %v3057, 0.0
        %3059 = vadd.xlane.f32.xlu0 %v3058
        %v3060 = vpop.xlane.xlu0 %3059
        %v3061 = vrsqrt.pop %v3060
        %v3062 = vmul.f32 %v3060, %v3061
        %vm3063 = vcmp.eq.f32.partialorder %v3060, inf
        %v3064 = vsel %vm3063, %v3060, %v3062
        %vm3065 = vcmp.eq.f32.partialorder %v3060, 0.0
        %v3066 = vand.u32 %v3060, 2147483648
        %v3067 = vsel %vm3065, %v3066, %v3064
        %s3068 = scalar_lea.vmem [#allocation2], %s3045
        %3069 = vst.msk [vmem:[%s3068] sm:$0x1] %vm3055, %v3067
      $region72: #{core.5} parent=47 // pred_fallthru
        _
      %p3070 = scmp.gt.s32.totalorder %s2859, 5
      // Predicated region
      $region73: #{core.5} parent=47 // pred_check
        %p3071 = pneg %p3070
      $region74: #{core.5} parent=47 // pred_check_branch
        %3073 = sbr.rel (%p3071) target = $region76
      $region75: #{core.5} parent=47 // pred_region
        %s3074 = sadd.s32 %s2858, 5
        %p3075 = scmp.lt.s32.totalorder %s3074, 0
        %s3076 = ssub.s32 0, %s3074
        %s3077 = scalar_select %p3075, %s3076, %s3074
        %s3078 = sdiv.u32.pop %s3077, 1000
        %s3079 = srem.u32.pop %s3077, 1000
        %s3080 = ssub.s32 0, %s3079
        %s3081 = scalar_select %p3075, %s3080, %s3079
        %p3082 = scmp.ne.s32.totalorder %s3081, 0
        %p3083 = scmp.lt.s32.totalorder %s3081, 0
        %p3084 = pnand %p3083, %p3082
        %p3085 = pneg %p3084
        %s3086 = sadd.s32 %s3081, 1000
        %s3087 = scalar_select %p3085, %s3086, %s3081
        %v3088 = vld [vmem:[%s401 + $0x5] sm:$0x1]
        %s3089 = scalar_lea.vmem %s10, %s3087
        %vm3090 = vcmask 253952
        %3091 = vst.msk [vmem:[%s3089] sm:$0x1] %vm3090, %v3088
        %v3092 = vld [vmem:[%s405 + $0x5] sm:$0x1]
        %s3093 = scalar_lea.vmem %s11, %s3087
        %3094 = vst.msk [vmem:[%s3093] sm:$0x1] %vm3090, %v3092
        %v3095 = vld [vmem:[%s409 + $0x5] sm:$0x1]
        %s3096 = scalar_lea.vmem %s12, %s3087
        %vm3097 = vcmask 0
        %3098 = vst.msk [vmem:[%s3096] sm:$0x1] %vm3097, %v3095
        %v3099 = vmul.f32 %v3088, %v3088
        %v3100 = vsel %vm3090, %v3099, 0.0
        %3101 = vadd.xlane.f32.xlu0 %v3100
        %v3102 = vpop.xlane.xlu0 %3101
        %v3103 = vrsqrt.pop %v3102
        %v3104 = vmul.f32 %v3102, %v3103
        %vm3105 = vcmp.eq.f32.partialorder %v3102, inf
        %v3106 = vsel %vm3105, %v3102, %v3104
        %vm3107 = vcmp.eq.f32.partialorder %v3102, 0.0
        %v3108 = vand.u32 %v3102, 2147483648
        %v3109 = vsel %vm3107, %v3108, %v3106
        %s3110 = scalar_lea.vmem [#allocation2], %s3087
        %3111 = vst.msk [vmem:[%s3110] sm:$0x1] %vm3097, %v3109
      $region76: #{core.5} parent=47 // pred_fallthru
        _
      %p3112 = scmp.gt.s32.totalorder %s2859, 6
      // Predicated region
      $region77: #{core.5} parent=47 // pred_check
        %p3113 = pneg %p3112
      $region78: #{core.5} parent=47 // pred_check_branch
        %3115 = sbr.rel (%p3113) target = $region80
      $region79: #{core.5} parent=47 // pred_region
        %s3116 = sadd.s32 %s2858, 6
        %p3117 = scmp.lt.s32.totalorder %s3116, 0
        %s3118 = ssub.s32 0, %s3116
        %s3119 = scalar_select %p3117, %s3118, %s3116
        %s3120 = sdiv.u32.pop %s3119, 1000
        %s3121 = srem.u32.pop %s3119, 1000
        %s3122 = ssub.s32 0, %s3121
        %s3123 = scalar_select %p3117, %s3122, %s3121
        %p3124 = scmp.ne.s32.totalorder %s3123, 0
        %p3125 = scmp.lt.s32.totalorder %s3123, 0
        %p3126 = pnand %p3125, %p3124
        %p3127 = pneg %p3126
        %s3128 = sadd.s32 %s3123, 1000
        %s3129 = scalar_select %p3127, %s3128, %s3123
        %v3130 = vld [vmem:[%s401 + $0x6] sm:$0x1]
        %s3131 = scalar_lea.vmem %s10, %s3129
        %vm3132 = vcmask 253952
        %3133 = vst.msk [vmem:[%s3131] sm:$0x1] %vm3132, %v3130
        %v3134 = vld [vmem:[%s405 + $0x6] sm:$0x1]
        %s3135 = scalar_lea.vmem %s11, %s3129
        %3136 = vst.msk [vmem:[%s3135] sm:$0x1] %vm3132, %v3134
        %v3137 = vld [vmem:[%s409 + $0x6] sm:$0x1]
        %s3138 = scalar_lea.vmem %s12, %s3129
        %vm3139 = vcmask 0
        %3140 = vst.msk [vmem:[%s3138] sm:$0x1] %vm3139, %v3137
        %v3141 = vmul.f32 %v3130, %v3130
        %v3142 = vsel %vm3132, %v3141, 0.0
        %3143 = vadd.xlane.f32.xlu0 %v3142
        %v3144 = vpop.xlane.xlu0 %3143
        %v3145 = vrsqrt.pop %v3144
        %v3146 = vmul.f32 %v3144, %v3145
        %vm3147 = vcmp.eq.f32.partialorder %v3144, inf
        %v3148 = vsel %vm3147, %v3144, %v3146
        %vm3149 = vcmp.eq.f32.partialorder %v3144, 0.0
        %v3150 = vand.u32 %v3144, 2147483648
        %v3151 = vsel %vm3149, %v3150, %v3148
        %s3152 = scalar_lea.vmem [#allocation2], %s3129
        %3153 = vst.msk [vmem:[%s3152] sm:$0x1] %vm3139, %v3151
      $region80: #{core.5} parent=47 // pred_fallthru
        _
      %p3154 = scmp.gt.s32.totalorder %s2859, 7
      // Predicated region
      $region81: #{core.5} parent=47 // pred_check
        %p3155 = pneg %p3154
      $region82: #{core.5} parent=47 // pred_check_branch
        %3157 = sbr.rel (%p3155) target = $region84
      $region83: #{core.5} parent=47 // pred_region
        %s3158 = sadd.s32 %s2858, 7
        %p3159 = scmp.lt.s32.totalorder %s3158, 0
        %s3160 = ssub.s32 0, %s3158
        %s3161 = scalar_select %p3159, %s3160, %s3158
        %s3162 = sdiv.u32.pop %s3161, 1000
        %s3163 = srem.u32.pop %s3161, 1000
        %s3164 = ssub.s32 0, %s3163
        %s3165 = scalar_select %p3159, %s3164, %s3163
        %p3166 = scmp.ne.s32.totalorder %s3165, 0
        %p3167 = scmp.lt.s32.totalorder %s3165, 0
        %p3168 = pnand %p3167, %p3166
        %p3169 = pneg %p3168
        %s3170 = sadd.s32 %s3165, 1000
        %s3171 = scalar_select %p3169, %s3170, %s3165
        %v3172 = vld [vmem:[%s401 + $0x7] sm:$0x1]
        %s3173 = scalar_lea.vmem %s10, %s3171
        %vm3174 = vcmask 253952
        %3175 = vst.msk [vmem:[%s3173] sm:$0x1] %vm3174, %v3172
        %v3176 = vld [vmem:[%s405 + $0x7] sm:$0x1]
        %s3177 = scalar_lea.vmem %s11, %s3171
        %3178 = vst.msk [vmem:[%s3177] sm:$0x1] %vm3174, %v3176
        %v3179 = vld [vmem:[%s409 + $0x7] sm:$0x1]
        %s3180 = scalar_lea.vmem %s12, %s3171
        %vm3181 = vcmask 0
        %3182 = vst.msk [vmem:[%s3180] sm:$0x1] %vm3181, %v3179
        %v3183 = vmul.f32 %v3172, %v3172
        %v3184 = vsel %vm3174, %v3183, 0.0
        %3185 = vadd.xlane.f32.xlu0 %v3184
        %v3186 = vpop.xlane.xlu0 %3185
        %v3187 = vrsqrt.pop %v3186
        %v3188 = vmul.f32 %v3186, %v3187
        %vm3189 = vcmp.eq.f32.partialorder %v3186, inf
        %v3190 = vsel %vm3189, %v3186, %v3188
        %vm3191 = vcmp.eq.f32.partialorder %v3186, 0.0
        %v3192 = vand.u32 %v3186, 2147483648
        %v3193 = vsel %vm3191, %v3192, %v3190
        %s3194 = scalar_lea.vmem [#allocation2], %s3171
        %3195 = vst.msk [vmem:[%s3194] sm:$0x1] %vm3181, %v3193
      $region84: #{core.5} parent=47 // pred_fallthru
        _
      %v3196 = vld [vmem:[%s414] sm:$0xff]
      %v3197 = vld [vmem:[%s414 + $0x8] sm:$0xff]
      %v3198 = vld [vmem:[%s414 + $0x10] sm:$0xff]
      %v3199 = vld [vmem:[%s414 + $0x18] sm:$0xff]
      %v3200 = vmul.f32 %v3196, %v3196
      %v3201 = vmul.f32 %v3197, %v3197
      %v3202 = vmul.f32 %v3198, %v3198
      %v3203 = vmul.f32 %v3199, %v3199
      %vm3204 = vcmask 7168
      %v3205 = vsel %vm3204, %v3200, 0.0
      %v3206 = vsel %vm3204, %v3201, 0.0
      %v3207 = vadd.f32 %v3205, %v3206
      %v3208 = vsel %vm3204, %v3202, 0.0
      %v3209 = vadd.f32 %v3207, %v3208
      %v3210 = vsel %vm3204, %v3203, 0.0
      %v3211 = vadd.f32 %v3209, %v3210
      %3212 = vadd.xlane.f32.xlu0 %v3211
      %v3213 = vpop.xlane.xlu0 %3212
      %v3214 = vrot.slane %v3213, 4
      %v3215 = vadd.f32 %v3213, %v3214
      %v3216 = vrot.slane %v3215, 2
      %v3217 = vadd.f32 %v3215, %v3216
      %v3218 = vrot.slane %v3217, 1
      %v3219 = vadd.f32 %v3217, %v3218
      %s3220 = vtos %v3219
      %v3221 = vstv %s3220
      %v3222 = vrsqrt.pop %v3221
      %v3223 = vmul.f32 %v3221, %v3222
      %vm3224 = vcmp.eq.f32.partialorder %v3221, inf
      %v3225 = vsel %vm3224, %v3221, %v3223
      %vm3226 = vcmp.eq.f32.partialorder %v3221, 0.0
      %v3227 = vand.u32 %v3221, 2147483648
      %v3228 = vsel %vm3226, %v3227, %v3225
      %s3229 = vtos %v3228
      %v3230 = vld [vmem:[%s10] sm:$0xff]
      %v3231 = vld [vmem:[%s10 + $0x8] sm:$0xff]
      %v3232 = vld [vmem:[%s10 + $0x10] sm:$0xff]
      %v3233 = vld [vmem:[%s10 + $0x18] sm:$0xff]
      %v3234 = vld [vmem:[%s10 + $0x20] sm:$0xff]
      %v3235 = vld [vmem:[%s10 + $0x28] sm:$0xff]
      %v3236 = vld [vmem:[%s10 + $0x30] sm:$0xff]
      %v3237 = vld [vmem:[%s10 + $0x38] sm:$0xff]
      %v3238 = vld [vmem:[%s10 + $0x40] sm:$0xff]
      %v3239 = vld [vmem:[%s10 + $0x48] sm:$0xff]
      %v3240 = vld [vmem:[%s10 + $0x50] sm:$0xff]
      %v3241 = vld [vmem:[%s10 + $0x58] sm:$0xff]
      %v3242 = vld [vmem:[%s10 + $0x60] sm:$0xff]
      %v3243 = vld [vmem:[%s10 + $0x68] sm:$0xff]
      %v3244 = vld [vmem:[%s10 + $0x70] sm:$0xff]
      %v3245 = vld [vmem:[%s10 + $0x78] sm:$0xff]
      %v3246 = vld [vmem:[%s10 + $0x80] sm:$0xff]
      %v3247 = vld [vmem:[%s10 + $0x88] sm:$0xff]
      %v3248 = vld [vmem:[%s10 + $0x90] sm:$0xff]
      %v3249 = vld [vmem:[%s10 + $0x98] sm:$0xff]
      %v3250 = vld [vmem:[%s10 + $0xa0] sm:$0xff]
      %v3251 = vld [vmem:[%s10 + $0xa8] sm:$0xff]
      %v3252 = vld [vmem:[%s10 + $0xb0] sm:$0xff]
      %v3253 = vld [vmem:[%s10 + $0xb8] sm:$0xff]
      %v3254 = vld [vmem:[%s10 + $0xc0] sm:$0xff]
      %v3255 = vld [vmem:[%s10 + $0xc8] sm:$0xff]
      %v3256 = vld [vmem:[%s10 + $0xd0] sm:$0xff]
      %v3257 = vld [vmem:[%s10 + $0xd8] sm:$0xff]
      %v3258 = vld [vmem:[%s10 + $0xe0] sm:$0xff]
      %v3259 = vld [vmem:[%s10 + $0xe8] sm:$0xff]
      %v3260 = vld [vmem:[%s10 + $0xf0] sm:$0xff]
      %v3261 = vld [vmem:[%s10 + $0xf8] sm:$0xff]
      %v3262 = vld [vmem:[%s10 + $0x100] sm:$0xff]
      %v3263 = vld [vmem:[%s10 + $0x108] sm:$0xff]
      %v3264 = vld [vmem:[%s10 + $0x110] sm:$0xff]
      %v3265 = vld [vmem:[%s10 + $0x118] sm:$0xff]
      %v3266 = vld [vmem:[%s10 + $0x120] sm:$0xff]
      %v3267 = vld [vmem:[%s10 + $0x128] sm:$0xff]
      %v3268 = vld [vmem:[%s10 + $0x130] sm:$0xff]
      %v3269 = vld [vmem:[%s10 + $0x138] sm:$0xff]
      %v3270 = vld [vmem:[%s10 + $0x140] sm:$0xff]
      %v3271 = vld [vmem:[%s10 + $0x148] sm:$0xff]
      %v3272 = vld [vmem:[%s10 + $0x150] sm:$0xff]
      %v3273 = vld [vmem:[%s10 + $0x158] sm:$0xff]
      %v3274 = vld [vmem:[%s10 + $0x160] sm:$0xff]
      %v3275 = vld [vmem:[%s10 + $0x168] sm:$0xff]
      %v3276 = vld [vmem:[%s10 + $0x170] sm:$0xff]
      %v3277 = vld [vmem:[%s10 + $0x178] sm:$0xff]
      %v3278 = vld [vmem:[%s10 + $0x180] sm:$0xff]
      %v3279 = vld [vmem:[%s10 + $0x188] sm:$0xff]
      %v3280 = vld [vmem:[%s10 + $0x190] sm:$0xff]
      %v3281 = vld [vmem:[%s10 + $0x198] sm:$0xff]
      %v3282 = vld [vmem:[%s10 + $0x1a0] sm:$0xff]
      %v3283 = vld [vmem:[%s10 + $0x1a8] sm:$0xff]
      %v3284 = vld [vmem:[%s10 + $0x1b0] sm:$0xff]
      %v3285 = vld [vmem:[%s10 + $0x1b8] sm:$0xff]
      %v3286 = vld [vmem:[%s10 + $0x1c0] sm:$0xff]
      %v3287 = vld [vmem:[%s10 + $0x1c8] sm:$0xff]
      %v3288 = vld [vmem:[%s10 + $0x1d0] sm:$0xff]
      %v3289 = vld [vmem:[%s10 + $0x1d8] sm:$0xff]
      %v3290 = vld [vmem:[%s10 + $0x1e0] sm:$0xff]
      %v3291 = vld [vmem:[%s10 + $0x1e8] sm:$0xff]
      %v3292 = vld [vmem:[%s10 + $0x1f0] sm:$0xff]
      %v3293 = vld [vmem:[%s10 + $0x1f8] sm:$0xff]
      %v3294 = vld [vmem:[%s10 + $0x200] sm:$0xff]
      %v3295 = vld [vmem:[%s10 + $0x208] sm:$0xff]
      %v3296 = vld [vmem:[%s10 + $0x210] sm:$0xff]
      %v3297 = vld [vmem:[%s10 + $0x218] sm:$0xff]
      %v3298 = vld [vmem:[%s10 + $0x220] sm:$0xff]
      %v3299 = vld [vmem:[%s10 + $0x228] sm:$0xff]
      %v3300 = vld [vmem:[%s10 + $0x230] sm:$0xff]
      %v3301 = vld [vmem:[%s10 + $0x238] sm:$0xff]
      %v3302 = vld [vmem:[%s10 + $0x240] sm:$0xff]
      %v3303 = vld [vmem:[%s10 + $0x248] sm:$0xff]
      %v3304 = vld [vmem:[%s10 + $0x250] sm:$0xff]
      %v3305 = vld [vmem:[%s10 + $0x258] sm:$0xff]
      %v3306 = vld [vmem:[%s10 + $0x260] sm:$0xff]
      %v3307 = vld [vmem:[%s10 + $0x268] sm:$0xff]
      %v3308 = vld [vmem:[%s10 + $0x270] sm:$0xff]
      %v3309 = vld [vmem:[%s10 + $0x278] sm:$0xff]
      %v3310 = vld [vmem:[%s10 + $0x280] sm:$0xff]
      %v3311 = vld [vmem:[%s10 + $0x288] sm:$0xff]
      %v3312 = vld [vmem:[%s10 + $0x290] sm:$0xff]
      %v3313 = vld [vmem:[%s10 + $0x298] sm:$0xff]
      %v3314 = vld [vmem:[%s10 + $0x2a0] sm:$0xff]
      %v3315 = vld [vmem:[%s10 + $0x2a8] sm:$0xff]
      %v3316 = vld [vmem:[%s10 + $0x2b0] sm:$0xff]
      %v3317 = vld [vmem:[%s10 + $0x2b8] sm:$0xff]
      %v3318 = vld [vmem:[%s10 + $0x2c0] sm:$0xff]
      %v3319 = vld [vmem:[%s10 + $0x2c8] sm:$0xff]
      %v3320 = vld [vmem:[%s10 + $0x2d0] sm:$0xff]
      %v3321 = vld [vmem:[%s10 + $0x2d8] sm:$0xff]
      %v3322 = vld [vmem:[%s10 + $0x2e0] sm:$0xff]
      %v3323 = vld [vmem:[%s10 + $0x2e8] sm:$0xff]
      %v3324 = vld [vmem:[%s10 + $0x2f0] sm:$0xff]
      %v3325 = vld [vmem:[%s10 + $0x2f8] sm:$0xff]
      %v3326 = vld [vmem:[%s10 + $0x300] sm:$0xff]
      %v3327 = vld [vmem:[%s10 + $0x308] sm:$0xff]
      %v3328 = vld [vmem:[%s10 + $0x310] sm:$0xff]
      %v3329 = vld [vmem:[%s10 + $0x318] sm:$0xff]
      %v3330 = vld [vmem:[%s10 + $0x320] sm:$0xff]
      %v3331 = vld [vmem:[%s10 + $0x328] sm:$0xff]
      %v3332 = vld [vmem:[%s10 + $0x330] sm:$0xff]
      %v3333 = vld [vmem:[%s10 + $0x338] sm:$0xff]
      %v3334 = vld [vmem:[%s10 + $0x340] sm:$0xff]
      %v3335 = vld [vmem:[%s10 + $0x348] sm:$0xff]
      %v3336 = vld [vmem:[%s10 + $0x350] sm:$0xff]
      %v3337 = vld [vmem:[%s10 + $0x358] sm:$0xff]
      %v3338 = vld [vmem:[%s10 + $0x360] sm:$0xff]
      %v3339 = vld [vmem:[%s10 + $0x368] sm:$0xff]
      %v3340 = vld [vmem:[%s10 + $0x370] sm:$0xff]
      %v3341 = vld [vmem:[%s10 + $0x378] sm:$0xff]
      %v3342 = vld [vmem:[%s10 + $0x380] sm:$0xff]
      %v3343 = vld [vmem:[%s10 + $0x388] sm:$0xff]
      %v3344 = vld [vmem:[%s10 + $0x390] sm:$0xff]
      %v3345 = vld [vmem:[%s10 + $0x398] sm:$0xff]
      %v3346 = vld [vmem:[%s10 + $0x3a0] sm:$0xff]
      %v3347 = vld [vmem:[%s10 + $0x3a8] sm:$0xff]
      %v3348 = vld [vmem:[%s10 + $0x3b0] sm:$0xff]
      %v3349 = vld [vmem:[%s10 + $0x3b8] sm:$0xff]
      %v3350 = vld [vmem:[%s10 + $0x3c0] sm:$0xff]
      %v3351 = vld [vmem:[%s10 + $0x3c8] sm:$0xff]
      %v3352 = vld [vmem:[%s10 + $0x3d0] sm:$0xff]
      %v3353 = vld [vmem:[%s10 + $0x3d8] sm:$0xff]
      %v3354 = vld [vmem:[%s10 + $0x3e0] sm:$0xff]
      %v3355 = vld [vmem:[%s10 + $0x3e8] sm:$0xff]
      %v3356 = vld [vmem:[%s10 + $0x3f0] sm:$0xff]
      %v3357 = vld [vmem:[%s10 + $0x3f8] sm:$0xff]
      %vm3358 = vcmask 261120
      %v3360 = vsel %vm3358, %v3230, 0
      %v3363 = vsel %vm3358, %v3231, 0
      %v3366 = vsel %vm3358, %v3232, 0
      %v3369 = vsel %vm3358, %v3233, 0
      %v3372 = vsel %vm3358, %v3234, 0
      %v3375 = vsel %vm3358, %v3235, 0
      %v3378 = vsel %vm3358, %v3236, 0
      %v3381 = vsel %vm3358, %v3237, 0
      %v3384 = vsel %vm3358, %v3238, 0
      %v3387 = vsel %vm3358, %v3239, 0
      %v3390 = vsel %vm3358, %v3240, 0
      %v3393 = vsel %vm3358, %v3241, 0
      %v3396 = vsel %vm3358, %v3242, 0
      %v3399 = vsel %vm3358, %v3243, 0
      %v3402 = vsel %vm3358, %v3244, 0
      %v3405 = vsel %vm3358, %v3245, 0
      %v3408 = vsel %vm3358, %v3246, 0
      %v3411 = vsel %vm3358, %v3247, 0
      %v3414 = vsel %vm3358, %v3248, 0
      %v3417 = vsel %vm3358, %v3249, 0
      %v3420 = vsel %vm3358, %v3250, 0
      %v3423 = vsel %vm3358, %v3251, 0
      %v3426 = vsel %vm3358, %v3252, 0
      %v3429 = vsel %vm3358, %v3253, 0
      %v3432 = vsel %vm3358, %v3254, 0
      %v3435 = vsel %vm3358, %v3255, 0
      %v3438 = vsel %vm3358, %v3256, 0
      %v3441 = vsel %vm3358, %v3257, 0
      %v3444 = vsel %vm3358, %v3258, 0
      %v3447 = vsel %vm3358, %v3259, 0
      %v3450 = vsel %vm3358, %v3260, 0
      %v3453 = vsel %vm3358, %v3261, 0
      %v3456 = vsel %vm3358, %v3262, 0
      %v3459 = vsel %vm3358, %v3263, 0
      %v3462 = vsel %vm3358, %v3264, 0
      %v3465 = vsel %vm3358, %v3265, 0
      %v3468 = vsel %vm3358, %v3266, 0
      %v3471 = vsel %vm3358, %v3267, 0
      %v3474 = vsel %vm3358, %v3268, 0
      %v3477 = vsel %vm3358, %v3269, 0
      %v3480 = vsel %vm3358, %v3270, 0
      %v3483 = vsel %vm3358, %v3271, 0
      %v3486 = vsel %vm3358, %v3272, 0
      %v3489 = vsel %vm3358, %v3273, 0
      %v3492 = vsel %vm3358, %v3274, 0
      %v3495 = vsel %vm3358, %v3275, 0
      %v3498 = vsel %vm3358, %v3276, 0
      %v3501 = vsel %vm3358, %v3277, 0
      %v3504 = vsel %vm3358, %v3278, 0
      %v3507 = vsel %vm3358, %v3279, 0
      %v3510 = vsel %vm3358, %v3280, 0
      %v3513 = vsel %vm3358, %v3281, 0
      %v3516 = vsel %vm3358, %v3282, 0
      %v3519 = vsel %vm3358, %v3283, 0
      %v3522 = vsel %vm3358, %v3284, 0
      %v3525 = vsel %vm3358, %v3285, 0
      %v3528 = vsel %vm3358, %v3286, 0
      %v3531 = vsel %vm3358, %v3287, 0
      %v3534 = vsel %vm3358, %v3288, 0
      %v3537 = vsel %vm3358, %v3289, 0
      %v3540 = vsel %vm3358, %v3290, 0
      %v3543 = vsel %vm3358, %v3291, 0
      %v3546 = vsel %vm3358, %v3292, 0
      %v3549 = vsel %vm3358, %v3293, 0
      %v3552 = vsel %vm3358, %v3294, 0
      %v3555 = vsel %vm3358, %v3295, 0
      %v3558 = vsel %vm3358, %v3296, 0
      %v3561 = vsel %vm3358, %v3297, 0
      %v3564 = vsel %vm3358, %v3298, 0
      %v3567 = vsel %vm3358, %v3299, 0
      %v3570 = vsel %vm3358, %v3300, 0
      %v3573 = vsel %vm3358, %v3301, 0
      %v3576 = vsel %vm3358, %v3302, 0
      %v3579 = vsel %vm3358, %v3303, 0
      %v3582 = vsel %vm3358, %v3304, 0
      %v3585 = vsel %vm3358, %v3305, 0
      %v3588 = vsel %vm3358, %v3306, 0
      %v3591 = vsel %vm3358, %v3307, 0
      %v3594 = vsel %vm3358, %v3308, 0
      %v3597 = vsel %vm3358, %v3309, 0
      %v3600 = vsel %vm3358, %v3310, 0
      %v3603 = vsel %vm3358, %v3311, 0
      %v3606 = vsel %vm3358, %v3312, 0
      %v3609 = vsel %vm3358, %v3313, 0
      %v3612 = vsel %vm3358, %v3314, 0
      %v3615 = vsel %vm3358, %v3315, 0
      %v3618 = vsel %vm3358, %v3316, 0
      %v3621 = vsel %vm3358, %v3317, 0
      %v3624 = vsel %vm3358, %v3318, 0
      %v3627 = vsel %vm3358, %v3319, 0
      %v3630 = vsel %vm3358, %v3320, 0
      %v3633 = vsel %vm3358, %v3321, 0
      %v3636 = vsel %vm3358, %v3322, 0
      %v3639 = vsel %vm3358, %v3323, 0
      %v3642 = vsel %vm3358, %v3324, 0
      %v3645 = vsel %vm3358, %v3325, 0
      %v3648 = vsel %vm3358, %v3326, 0
      %v3651 = vsel %vm3358, %v3327, 0
      %v3654 = vsel %vm3358, %v3328, 0
      %v3657 = vsel %vm3358, %v3329, 0
      %v3660 = vsel %vm3358, %v3330, 0
      %v3663 = vsel %vm3358, %v3331, 0
      %v3666 = vsel %vm3358, %v3332, 0
      %v3669 = vsel %vm3358, %v3333, 0
      %v3672 = vsel %vm3358, %v3334, 0
      %v3675 = vsel %vm3358, %v3335, 0
      %v3678 = vsel %vm3358, %v3336, 0
      %v3681 = vsel %vm3358, %v3337, 0
      %v3684 = vsel %vm3358, %v3338, 0
      %v3687 = vsel %vm3358, %v3339, 0
      %v3690 = vsel %vm3358, %v3340, 0
      %v3693 = vsel %vm3358, %v3341, 0
      %v3696 = vsel %vm3358, %v3342, 0
      %v3699 = vsel %vm3358, %v3343, 0
      %v3702 = vsel %vm3358, %v3344, 0
      %v3705 = vsel %vm3358, %v3345, 0
      %v3708 = vsel %vm3358, %v3346, 0
      %v3711 = vsel %vm3358, %v3347, 0
      %v3714 = vsel %vm3358, %v3348, 0
      %v3717 = vsel %vm3358, %v3349, 0
      %v3720 = vsel %vm3358, %v3350, 0
      %v3723 = vsel %vm3358, %v3351, 0
      %v3726 = vsel %vm3358, %v3352, 0
      %v3729 = vsel %vm3358, %v3353, 0
      %v3732 = vsel %vm3358, %v3354, 0
      %v3735 = vsel %vm3358, %v3355, 0
      %v3738 = vsel %vm3358, %v3356, 0
      %v3741 = vsel %vm3358, %v3357, 0
      %3743 = vmatprep.subr.mxu0 0.0
      %3744 = vmatpush1.msra.mxu0 %v3196
      %3745 = vmatprep.subr.mxu0 0.0
      %3746 = vmatpush1.msra.mxu0 %v3197
      %3747 = vmatprep.subr.mxu0 0.0
      %3748 = vmatpush1.msra.mxu0 %v3198
      %3749 = vmatprep.subr.mxu0 0.0
      %3750 = vmatpush1.msra.mxu0 %v3199
      %3751 = vmatprep.subr.mxu0 0.0
      %3752 = vmatpush1.msra.mxu0 0.0
      %3753 = vmatprep.subr.mxu0 0.0
      %3754 = vmatpush1.msra.mxu0 0.0
      %3755 = vmatprep.subr.mxu0 0.0
      %3756 = vmatpush1.msra.mxu0 0.0
      %3757 = vmatprep.subr.mxu0 0.0
      %3758 = vmatpush1.msra.mxu0 0.0
      %3759 = vmatprep.subr.mxu0 0.0
      %3760 = vmatpush1.msra.mxu0 0.0
      %3761 = vmatprep.subr.mxu0 0.0
      %3762 = vmatpush1.msra.mxu0 0.0
      %3763 = vmatprep.subr.mxu0 0.0
      %3764 = vmatpush1.msra.mxu0 0.0
      %3765 = vmatprep.subr.mxu0 0.0
      %3766 = vmatpush1.msra.mxu0 0.0
      %3767 = vmatprep.subr.mxu0 0.0
      %3768 = vmatpush1.msra.mxu0 0.0
      %3769 = vmatprep.subr.mxu0 0.0
      %3770 = vmatpush1.msra.mxu0 0.0
      %3771 = vmatprep.subr.mxu0 0.0
      %3772 = vmatpush1.msra.mxu0 0.0
      %3773 = vmatprep.subr.mxu0 0.0
      %3774 = vmatpush1.msra.mxu0 0.0
      %3775 = vmatprep.subr.mxu0 0.0
      %3776 = vmatpush1.msra.mxu0 0.0
      %3777 = vmatprep.subr.mxu0 0.0
      %3778 = vmatpush1.msra.mxu0 0.0
      %3779 = vmatprep.subr.mxu0 0.0
      %3780 = vmatpush1.msra.mxu0 0.0
      %3781 = vmatprep.subr.mxu0 0.0
      %3782 = vmatpush1.msra.mxu0 0.0
      %3783 = vmatprep.subr.mxu0 0.0
      %3784 = vmatpush1.msra.mxu0 0.0
      %3785 = vmatprep.subr.mxu0 0.0
      %3786 = vmatpush1.msra.mxu0 0.0
      %3787 = vmatprep.subr.mxu0 0.0
      %3788 = vmatpush1.msra.mxu0 0.0
      %3789 = vmatprep.subr.mxu0 0.0
      %3790 = vmatpush1.msra.mxu0 0.0
      %3791 = vmatprep.subr.mxu0 0.0
      %3792 = vmatpush1.msra.mxu0 0.0
      %3793 = vmatprep.subr.mxu0 0.0
      %3794 = vmatpush1.msra.mxu0 0.0
      %3795 = vmatprep.subr.mxu0 0.0
      %3796 = vmatpush1.msra.mxu0 0.0
      %3797 = vmatprep.subr.mxu0 0.0
      %3798 = vmatpush1.msra.mxu0 0.0
      %3799 = vmatprep.subr.mxu0 0.0
      %3800 = vmatpush1.msra.mxu0 0.0
      %3801 = vmatprep.subr.mxu0 0.0
      %3802 = vmatpush1.msra.mxu0 0.0
      %3803 = vmatprep.subr.mxu0 0.0
      %3804 = vmatpush1.msra.mxu0 0.0
      %3805 = vmatprep.subr.mxu0 0.0
      %3806 = vmatpush1.msra.mxu0 0.0
      %3807 = vmatprep.mubr.f32.mxu0 0.0
      %3808 = vmatmul.mubr.f32.gmra.mrb[0].mxu0 %v3360
      %v3809 = vpop.f32.mrb[0].mxu0
      %v3810 = vadd.f32 0.0, %v3809
      %v3811 = vpop.f32.mrb[0].mxu0
      %3812 = vmatprep.mubr.f32.mxu0 0.0
      %3813 = vmatmul.mubr.f32.gmra.mrb[0].mxu0 %v3363
      %v3814 = vpop.f32.mrb[0].mxu0
      %v3815 = vadd.f32 0.0, %v3814
      %v3816 = vpop.f32.mrb[0].mxu0
      %3817 = vmatprep.mubr.f32.mxu0 0.0
      %3818 = vmatmul.mubr.f32.gmra.mrb[0].mxu0 %v3366
      %v3819 = vpop.f32.mrb[0].mxu0
      %v3820 = vadd.f32 0.0, %v3819
      %v3821 = vpop.f32.mrb[0].mxu0
      %3822 = vmatprep.mubr.f32.mxu0 0.0
      %3823 = vmatmul.mubr.f32.gmra.mrb[0].mxu0 %v3369
      %v3824 = vpop.f32.mrb[0].mxu0
      %v3825 = vadd.f32 0.0, %v3824
      %v3826 = vpop.f32.mrb[0].mxu0
      %3827 = vmatprep.mubr.f32.mxu0 0.0
      %3828 = vmatmul.mubr.f32.gmra.mrb[0].mxu0 %v3372
      %v3829 = vpop.f32.mrb[0].mxu0
      %v3830 = vadd.f32 0.0, %v3829
      %v3831 = vpop.f32.mrb[0].mxu0
      %3832 = vmatprep.mubr.f32.mxu0 0.0
      %3833 = vmatmul.mubr.f32.gmra.mrb[0].mxu0 %v3375
      %v3834 = vpop.f32.mrb[0].mxu0
      %v3835 = vadd.f32 0.0, %v3834
      %v3836 = vpop.f32.mrb[0].mxu0
      %3837 = vmatprep.mubr.f32.mxu0 0.0
      %3838 = vmatmul.mubr.f32.gmra.mrb[0].mxu0 %v3378
      %v3839 = vpop.f32.mrb[0].mxu0
      %v3840 = vadd.f32 0.0, %v3839
      %v3841 = vpop.f32.mrb[0].mxu0
      %3842 = vmatprep.mubr.f32.mxu0 0.0
      %3843 = vmatmul.mubr.f32.gmra.mrb[0].mxu0 %v3381
      %v3844 = vpop.f32.mrb[0].mxu0
      %v3845 = vadd.f32 0.0, %v3844
      %v3846 = vpop.f32.mrb[0].mxu0
      %3847 = vmatprep.mubr.f32.mxu0 0.0
      %3848 = vmatmul.mubr.f32.gmra.mrb[0].mxu0 %v3384
      %v3849 = vpop.f32.mrb[0].mxu0
      %v3850 = vadd.f32 0.0, %v3849
      %v3851 = vpop.f32.mrb[0].mxu0
      %3852 = vmatprep.mubr.f32.mxu0 0.0
      %3853 = vmatmul.mubr.f32.gmra.mrb[0].mxu0 %v3387
      %v3854 = vpop.f32.mrb[0].mxu0
      %v3855 = vadd.f32 0.0, %v3854
      %v3856 = vpop.f32.mrb[0].mxu0
      %3857 = vmatprep.mubr.f32.mxu0 0.0
      %3858 = vmatmul.mubr.f32.gmra.mrb[0].mxu0 %v3390
      %v3859 = vpop.f32.mrb[0].mxu0
      %v3860 = vadd.f32 0.0, %v3859
      %v3861 = vpop.f32.mrb[0].mxu0
      %3862 = vmatprep.mubr.f32.mxu0 0.0
      %3863 = vmatmul.mubr.f32.gmra.mrb[0].mxu0 %v3393
      %v3864 = vpop.f32.mrb[0].mxu0
      %v3865 = vadd.f32 0.0, %v3864
      %v3866 = vpop.f32.mrb[0].mxu0
      %3867 = vmatprep.mubr.f32.mxu0 0.0
      %3868 = vmatmul.mubr.f32.gmra.mrb[0].mxu0 %v3396
      %v3869 = vpop.f32.mrb[0].mxu0
      %v3870 = vadd.f32 0.0, %v3869
      %v3871 = vpop.f32.mrb[0].mxu0
      %3872 = vmatprep.mubr.f32.mxu0 0.0
      %3873 = vmatmul.mubr.f32.gmra.mrb[0].mxu0 %v3399
      %v3874 = vpop.f32.mrb[0].mxu0
      %v3875 = vadd.f32 0.0, %v3874
      %v3876 = vpop.f32.mrb[0].mxu0
      %3877 = vmatprep.mubr.f32.mxu0 0.0
      %3878 = vmatmul.mubr.f32.gmra.mrb[0].mxu0 %v3402
      %v3879 = vpop.f32.mrb[0].mxu0
      %v3880 = vadd.f32 0.0, %v3879
      %v3881 = vpop.f32.mrb[0].mxu0
      %3882 = vmatprep.mubr.f32.mxu0 0.0
      %3883 = vmatmul.mubr.f32.gmra.mrb[0].mxu0 %v3405
      %v3884 = vpop.f32.mrb[0].mxu0
      %v3885 = vadd.f32 0.0, %v3884
      %v3886 = vpop.f32.mrb[0].mxu0
      %3887 = vmatprep.mubr.f32.mxu0 0.0
      %3888 = vmatmul.mubr.f32.gmra.mrb[0].mxu0 %v3408
      %v3889 = vpop.f32.mrb[0].mxu0
      %v3890 = vadd.f32 0.0, %v3889
      %v3891 = vpop.f32.mrb[0].mxu0
      %3892 = vmatprep.mubr.f32.mxu0 0.0
      %3893 = vmatmul.mubr.f32.gmra.mrb[0].mxu0 %v3411
      %v3894 = vpop.f32.mrb[0].mxu0
      %v3895 = vadd.f32 0.0, %v3894
      %v3896 = vpop.f32.mrb[0].mxu0
      %3897 = vmatprep.mubr.f32.mxu0 0.0
      %3898 = vmatmul.mubr.f32.gmra.mrb[0].mxu0 %v3414
      %v3899 = vpop.f32.mrb[0].mxu0
      %v3900 = vadd.f32 0.0, %v3899
      %v3901 = vpop.f32.mrb[0].mxu0
      %3902 = vmatprep.mubr.f32.mxu0 0.0
      %3903 = vmatmul.mubr.f32.gmra.mrb[0].mxu0 %v3417
      %v3904 = vpop.f32.mrb[0].mxu0
      %v3905 = vadd.f32 0.0, %v3904
      %v3906 = vpop.f32.mrb[0].mxu0
      %3907 = vmatprep.mubr.f32.mxu0 0.0
      %3908 = vmatmul.mubr.f32.gmra.mrb[0].mxu0 %v3420
      %v3909 = vpop.f32.mrb[0].mxu0
      %v3910 = vadd.f32 0.0, %v3909
      %v3911 = vpop.f32.mrb[0].mxu0
      %3912 = vmatprep.mubr.f32.mxu0 0.0
      %3913 = vmatmul.mubr.f32.gmra.mrb[0].mxu0 %v3423
      %v3914 = vpop.f32.mrb[0].mxu0
      %v3915 = vadd.f32 0.0, %v3914
      %v3916 = vpop.f32.mrb[0].mxu0
      %3917 = vmatprep.mubr.f32.mxu0 0.0
      %3918 = vmatmul.mubr.f32.gmra.mrb[0].mxu0 %v3426
      %v3919 = vpop.f32.mrb[0].mxu0
      %v3920 = vadd.f32 0.0, %v3919
      %v3921 = vpop.f32.mrb[0].mxu0
      %3922 = vmatprep.mubr.f32.mxu0 0.0
      %3923 = vmatmul.mubr.f32.gmra.mrb[0].mxu0 %v3429
      %v3924 = vpop.f32.mrb[0].mxu0
      %v3925 = vadd.f32 0.0, %v3924
      %v3926 = vpop.f32.mrb[0].mxu0
      %3927 = vmatprep.mubr.f32.mxu0 0.0
      %3928 = vmatmul.mubr.f32.gmra.mrb[0].mxu0 %v3432
      %v3929 = vpop.f32.mrb[0].mxu0
      %v3930 = vadd.f32 0.0, %v3929
      %v3931 = vpop.f32.mrb[0].mxu0
      %3932 = vmatprep.mubr.f32.mxu0 0.0
      %3933 = vmatmul.mubr.f32.gmra.mrb[0].mxu0 %v3435
      %v3934 = vpop.f32.mrb[0].mxu0
      %v3935 = vadd.f32 0.0, %v3934
      %v3936 = vpop.f32.mrb[0].mxu0
      %3937 = vmatprep.mubr.f32.mxu0 0.0
      %3938 = vmatmul.mubr.f32.gmra.mrb[0].mxu0 %v3438
      %v3939 = vpop.f32.mrb[0].mxu0
      %v3940 = vadd.f32 0.0, %v3939
      %v3941 = vpop.f32.mrb[0].mxu0
      %3942 = vmatprep.mubr.f32.mxu0 0.0
      %3943 = vmatmul.mubr.f32.gmra.mrb[0].mxu0 %v3441
      %v3944 = vpop.f32.mrb[0].mxu0
      %v3945 = vadd.f32 0.0, %v3944
      %v3946 = vpop.f32.mrb[0].mxu0
      %3947 = vmatprep.mubr.f32.mxu0 0.0
      %3948 = vmatmul.mubr.f32.gmra.mrb[0].mxu0 %v3444
      %v3949 = vpop.f32.mrb[0].mxu0
      %v3950 = vadd.f32 0.0, %v3949
      %v3951 = vpop.f32.mrb[0].mxu0
      %3952 = vmatprep.mubr.f32.mxu0 0.0
      %3953 = vmatmul.mubr.f32.gmra.mrb[0].mxu0 %v3447
      %v3954 = vpop.f32.mrb[0].mxu0
      %v3955 = vadd.f32 0.0, %v3954
      %v3956 = vpop.f32.mrb[0].mxu0
      %3957 = vmatprep.mubr.f32.mxu0 0.0
      %3958 = vmatmul.mubr.f32.gmra.mrb[0].mxu0 %v3450
      %v3959 = vpop.f32.mrb[0].mxu0
      %v3960 = vadd.f32 0.0, %v3959
      %v3961 = vpop.f32.mrb[0].mxu0
      %3962 = vmatprep.mubr.f32.mxu0 0.0
      %3963 = vmatmul.mubr.f32.gmra.mrb[0].mxu0 %v3453
      %v3964 = vpop.f32.mrb[0].mxu0
      %v3965 = vadd.f32 0.0, %v3964
      %v3966 = vpop.f32.mrb[0].mxu0
      %3967 = vmatprep.mubr.f32.mxu0 0.0
      %3968 = vmatmul.mubr.f32.gmra.mrb[0].mxu0 %v3456
      %v3969 = vpop.f32.mrb[0].mxu0
      %v3970 = vadd.f32 0.0, %v3969
      %v3971 = vpop.f32.mrb[0].mxu0
      %3972 = vmatprep.mubr.f32.mxu0 0.0
      %3973 = vmatmul.mubr.f32.gmra.mrb[0].mxu0 %v3459
      %v3974 = vpop.f32.mrb[0].mxu0
      %v3975 = vadd.f32 0.0, %v3974
      %v3976 = vpop.f32.mrb[0].mxu0
      %3977 = vmatprep.mubr.f32.mxu0 0.0
      %3978 = vmatmul.mubr.f32.gmra.mrb[0].mxu0 %v3462
      %v3979 = vpop.f32.mrb[0].mxu0
      %v3980 = vadd.f32 0.0, %v3979
      %v3981 = vpop.f32.mrb[0].mxu0
      %3982 = vmatprep.mubr.f32.mxu0 0.0
      %3983 = vmatmul.mubr.f32.gmra.mrb[0].mxu0 %v3465
      %v3984 = vpop.f32.mrb[0].mxu0
      %v3985 = vadd.f32 0.0, %v3984
      %v3986 = vpop.f32.mrb[0].mxu0
      %3987 = vmatprep.mubr.f32.mxu0 0.0
      %3988 = vmatmul.mubr.f32.gmra.mrb[0].mxu0 %v3468
      %v3989 = vpop.f32.mrb[0].mxu0
      %v3990 = vadd.f32 0.0, %v3989
      %v3991 = vpop.f32.mrb[0].mxu0
      %3992 = vmatprep.mubr.f32.mxu0 0.0
      %3993 = vmatmul.mubr.f32.gmra.mrb[0].mxu0 %v3471
      %v3994 = vpop.f32.mrb[0].mxu0
      %v3995 = vadd.f32 0.0, %v3994
      %v3996 = vpop.f32.mrb[0].mxu0
      %3997 = vmatprep.mubr.f32.mxu0 0.0
      %3998 = vmatmul.mubr.f32.gmra.mrb[0].mxu0 %v3474
      %v3999 = vpop.f32.mrb[0].mxu0
      %v4000 = vadd.f32 0.0, %v3999
      %v4001 = vpop.f32.mrb[0].mxu0
      %4002 = vmatprep.mubr.f32.mxu0 0.0
      %4003 = vmatmul.mubr.f32.gmra.mrb[0].mxu0 %v3477
      %v4004 = vpop.f32.mrb[0].mxu0
      %v4005 = vadd.f32 0.0, %v4004
      %v4006 = vpop.f32.mrb[0].mxu0
      %4007 = vmatprep.mubr.f32.mxu0 0.0
      %4008 = vmatmul.mubr.f32.gmra.mrb[0].mxu0 %v3480
      %v4009 = vpop.f32.mrb[0].mxu0
      %v4010 = vadd.f32 0.0, %v4009
      %v4011 = vpop.f32.mrb[0].mxu0
      %4012 = vmatprep.mubr.f32.mxu0 0.0
      %4013 = vmatmul.mubr.f32.gmra.mrb[0].mxu0 %v3483
      %v4014 = vpop.f32.mrb[0].mxu0
      %v4015 = vadd.f32 0.0, %v4014
      %v4016 = vpop.f32.mrb[0].mxu0
      %4017 = vmatprep.mubr.f32.mxu0 0.0
      %4018 = vmatmul.mubr.f32.gmra.mrb[0].mxu0 %v3486
      %v4019 = vpop.f32.mrb[0].mxu0
      %v4020 = vadd.f32 0.0, %v4019
      %v4021 = vpop.f32.mrb[0].mxu0
      %4022 = vmatprep.mubr.f32.mxu0 0.0
      %4023 = vmatmul.mubr.f32.gmra.mrb[0].mxu0 %v3489
      %v4024 = vpop.f32.mrb[0].mxu0
      %v4025 = vadd.f32 0.0, %v4024
      %v4026 = vpop.f32.mrb[0].mxu0
      %4027 = vmatprep.mubr.f32.mxu0 0.0
      %4028 = vmatmul.mubr.f32.gmra.mrb[0].mxu0 %v3492
      %v4029 = vpop.f32.mrb[0].mxu0
      %v4030 = vadd.f32 0.0, %v4029
      %v4031 = vpop.f32.mrb[0].mxu0
      %4032 = vmatprep.mubr.f32.mxu0 0.0
      %4033 = vmatmul.mubr.f32.gmra.mrb[0].mxu0 %v3495
      %v4034 = vpop.f32.mrb[0].mxu0
      %v4035 = vadd.f32 0.0, %v4034
      %v4036 = vpop.f32.mrb[0].mxu0
      %4037 = vmatprep.mubr.f32.mxu0 0.0
      %4038 = vmatmul.mubr.f32.gmra.mrb[0].mxu0 %v3498
      %v4039 = vpop.f32.mrb[0].mxu0
      %v4040 = vadd.f32 0.0, %v4039
      %v4041 = vpop.f32.mrb[0].mxu0
      %4042 = vmatprep.mubr.f32.mxu0 0.0
      %4043 = vmatmul.mubr.f32.gmra.mrb[0].mxu0 %v3501
      %v4044 = vpop.f32.mrb[0].mxu0
      %v4045 = vadd.f32 0.0, %v4044
      %v4046 = vpop.f32.mrb[0].mxu0
      %4047 = vmatprep.mubr.f32.mxu0 0.0
      %4048 = vmatmul.mubr.f32.gmra.mrb[0].mxu0 %v3504
      %v4049 = vpop.f32.mrb[0].mxu0
      %v4050 = vadd.f32 0.0, %v4049
      %v4051 = vpop.f32.mrb[0].mxu0
      %4052 = vmatprep.mubr.f32.mxu0 0.0
      %4053 = vmatmul.mubr.f32.gmra.mrb[0].mxu0 %v3507
      %v4054 = vpop.f32.mrb[0].mxu0
      %v4055 = vadd.f32 0.0, %v4054
      %v4056 = vpop.f32.mrb[0].mxu0
      %4057 = vmatprep.mubr.f32.mxu0 0.0
      %4058 = vmatmul.mubr.f32.gmra.mrb[0].mxu0 %v3510
      %v4059 = vpop.f32.mrb[0].mxu0
      %v4060 = vadd.f32 0.0, %v4059
      %v4061 = vpop.f32.mrb[0].mxu0
      %4062 = vmatprep.mubr.f32.mxu0 0.0
      %4063 = vmatmul.mubr.f32.gmra.mrb[0].mxu0 %v3513
      %v4064 = vpop.f32.mrb[0].mxu0
      %v4065 = vadd.f32 0.0, %v4064
      %v4066 = vpop.f32.mrb[0].mxu0
      %4067 = vmatprep.mubr.f32.mxu0 0.0
      %4068 = vmatmul.mubr.f32.gmra.mrb[0].mxu0 %v3516
      %v4069 = vpop.f32.mrb[0].mxu0
      %v4070 = vadd.f32 0.0, %v4069
      %v4071 = vpop.f32.mrb[0].mxu0
      %4072 = vmatprep.mubr.f32.mxu0 0.0
      %4073 = vmatmul.mubr.f32.gmra.mrb[0].mxu0 %v3519
      %v4074 = vpop.f32.mrb[0].mxu0
      %v4075 = vadd.f32 0.0, %v4074
      %v4076 = vpop.f32.mrb[0].mxu0
      %4077 = vmatprep.mubr.f32.mxu0 0.0
      %4078 = vmatmul.mubr.f32.gmra.mrb[0].mxu0 %v3522
      %v4079 = vpop.f32.mrb[0].mxu0
      %v4080 = vadd.f32 0.0, %v4079
      %v4081 = vpop.f32.mrb[0].mxu0
      %4082 = vmatprep.mubr.f32.mxu0 0.0
      %4083 = vmatmul.mubr.f32.gmra.mrb[0].mxu0 %v3525
      %v4084 = vpop.f32.mrb[0].mxu0
      %v4085 = vadd.f32 0.0, %v4084
      %v4086 = vpop.f32.mrb[0].mxu0
      %4087 = vmatprep.mubr.f32.mxu0 0.0
      %4088 = vmatmul.mubr.f32.gmra.mrb[0].mxu0 %v3528
      %v4089 = vpop.f32.mrb[0].mxu0
      %v4090 = vadd.f32 0.0, %v4089
      %v4091 = vpop.f32.mrb[0].mxu0
      %4092 = vmatprep.mubr.f32.mxu0 0.0
      %4093 = vmatmul.mubr.f32.gmra.mrb[0].mxu0 %v3531
      %v4094 = vpop.f32.mrb[0].mxu0
      %v4095 = vadd.f32 0.0, %v4094
      %v4096 = vpop.f32.mrb[0].mxu0
      %4097 = vmatprep.mubr.f32.mxu0 0.0
      %4098 = vmatmul.mubr.f32.gmra.mrb[0].mxu0 %v3534
      %v4099 = vpop.f32.mrb[0].mxu0
      %v4100 = vadd.f32 0.0, %v4099
      %v4101 = vpop.f32.mrb[0].mxu0
      %4102 = vmatprep.mubr.f32.mxu0 0.0
      %4103 = vmatmul.mubr.f32.gmra.mrb[0].mxu0 %v3537
      %v4104 = vpop.f32.mrb[0].mxu0
      %v4105 = vadd.f32 0.0, %v4104
      %v4106 = vpop.f32.mrb[0].mxu0
      %4107 = vmatprep.mubr.f32.mxu0 0.0
      %4108 = vmatmul.mubr.f32.gmra.mrb[0].mxu0 %v3540
      %v4109 = vpop.f32.mrb[0].mxu0
      %v4110 = vadd.f32 0.0, %v4109
      %v4111 = vpop.f32.mrb[0].mxu0
      %4112 = vmatprep.mubr.f32.mxu0 0.0
      %4113 = vmatmul.mubr.f32.gmra.mrb[0].mxu0 %v3543
      %v4114 = vpop.f32.mrb[0].mxu0
      %v4115 = vadd.f32 0.0, %v4114
      %v4116 = vpop.f32.mrb[0].mxu0
      %4117 = vmatprep.mubr.f32.mxu0 0.0
      %4118 = vmatmul.mubr.f32.gmra.mrb[0].mxu0 %v3546
      %v4119 = vpop.f32.mrb[0].mxu0
      %v4120 = vadd.f32 0.0, %v4119
      %v4121 = vpop.f32.mrb[0].mxu0
      %4122 = vmatprep.mubr.f32.mxu0 0.0
      %4123 = vmatmul.mubr.f32.gmra.mrb[0].mxu0 %v3549
      %v4124 = vpop.f32.mrb[0].mxu0
      %v4125 = vadd.f32 0.0, %v4124
      %v4126 = vpop.f32.mrb[0].mxu0
      %4127 = vmatprep.mubr.f32.mxu0 0.0
      %4128 = vmatmul.mubr.f32.gmra.mrb[0].mxu0 %v3552
      %v4129 = vpop.f32.mrb[0].mxu0
      %v4130 = vadd.f32 0.0, %v4129
      %v4131 = vpop.f32.mrb[0].mxu0
      %4132 = vmatprep.mubr.f32.mxu0 0.0
      %4133 = vmatmul.mubr.f32.gmra.mrb[0].mxu0 %v3555
      %v4134 = vpop.f32.mrb[0].mxu0
      %v4135 = vadd.f32 0.0, %v4134
      %v4136 = vpop.f32.mrb[0].mxu0
      %4137 = vmatprep.mubr.f32.mxu0 0.0
      %4138 = vmatmul.mubr.f32.gmra.mrb[0].mxu0 %v3558
      %v4139 = vpop.f32.mrb[0].mxu0
      %v4140 = vadd.f32 0.0, %v4139
      %v4141 = vpop.f32.mrb[0].mxu0
      %4142 = vmatprep.mubr.f32.mxu0 0.0
      %4143 = vmatmul.mubr.f32.gmra.mrb[0].mxu0 %v3561
      %v4144 = vpop.f32.mrb[0].mxu0
      %v4145 = vadd.f32 0.0, %v4144
      %v4146 = vpop.f32.mrb[0].mxu0
      %4147 = vmatprep.mubr.f32.mxu0 0.0
      %4148 = vmatmul.mubr.f32.gmra.mrb[0].mxu0 %v3564
      %v4149 = vpop.f32.mrb[0].mxu0
      %v4150 = vadd.f32 0.0, %v4149
      %v4151 = vpop.f32.mrb[0].mxu0
      %4152 = vmatprep.mubr.f32.mxu0 0.0
      %4153 = vmatmul.mubr.f32.gmra.mrb[0].mxu0 %v3567
      %v4154 = vpop.f32.mrb[0].mxu0
      %v4155 = vadd.f32 0.0, %v4154
      %v4156 = vpop.f32.mrb[0].mxu0
      %4157 = vmatprep.mubr.f32.mxu0 0.0
      %4158 = vmatmul.mubr.f32.gmra.mrb[0].mxu0 %v3570
      %v4159 = vpop.f32.mrb[0].mxu0
      %v4160 = vadd.f32 0.0, %v4159
      %v4161 = vpop.f32.mrb[0].mxu0
      %4162 = vmatprep.mubr.f32.mxu0 0.0
      %4163 = vmatmul.mubr.f32.gmra.mrb[0].mxu0 %v3573
      %v4164 = vpop.f32.mrb[0].mxu0
      %v4165 = vadd.f32 0.0, %v4164
      %v4166 = vpop.f32.mrb[0].mxu0
      %4167 = vmatprep.mubr.f32.mxu0 0.0
      %4168 = vmatmul.mubr.f32.gmra.mrb[0].mxu0 %v3576
      %v4169 = vpop.f32.mrb[0].mxu0
      %v4170 = vadd.f32 0.0, %v4169
      %v4171 = vpop.f32.mrb[0].mxu0
      %4172 = vmatprep.mubr.f32.mxu0 0.0
      %4173 = vmatmul.mubr.f32.gmra.mrb[0].mxu0 %v3579
      %v4174 = vpop.f32.mrb[0].mxu0
      %v4175 = vadd.f32 0.0, %v4174
      %v4176 = vpop.f32.mrb[0].mxu0
      %4177 = vmatprep.mubr.f32.mxu0 0.0
      %4178 = vmatmul.mubr.f32.gmra.mrb[0].mxu0 %v3582
      %v4179 = vpop.f32.mrb[0].mxu0
      %v4180 = vadd.f32 0.0, %v4179
      %v4181 = vpop.f32.mrb[0].mxu0
      %4182 = vmatprep.mubr.f32.mxu0 0.0
      %4183 = vmatmul.mubr.f32.gmra.mrb[0].mxu0 %v3585
      %v4184 = vpop.f32.mrb[0].mxu0
      %v4185 = vadd.f32 0.0, %v4184
      %v4186 = vpop.f32.mrb[0].mxu0
      %4187 = vmatprep.mubr.f32.mxu0 0.0
      %4188 = vmatmul.mubr.f32.gmra.mrb[0].mxu0 %v3588
      %v4189 = vpop.f32.mrb[0].mxu0
      %v4190 = vadd.f32 0.0, %v4189
      %v4191 = vpop.f32.mrb[0].mxu0
      %4192 = vmatprep.mubr.f32.mxu0 0.0
      %4193 = vmatmul.mubr.f32.gmra.mrb[0].mxu0 %v3591
      %v4194 = vpop.f32.mrb[0].mxu0
      %v4195 = vadd.f32 0.0, %v4194
      %v4196 = vpop.f32.mrb[0].mxu0
      %4197 = vmatprep.mubr.f32.mxu0 0.0
      %4198 = vmatmul.mubr.f32.gmra.mrb[0].mxu0 %v3594
      %v4199 = vpop.f32.mrb[0].mxu0
      %v4200 = vadd.f32 0.0, %v4199
      %v4201 = vpop.f32.mrb[0].mxu0
      %4202 = vmatprep.mubr.f32.mxu0 0.0
      %4203 = vmatmul.mubr.f32.gmra.mrb[0].mxu0 %v3597
      %v4204 = vpop.f32.mrb[0].mxu0
      %v4205 = vadd.f32 0.0, %v4204
      %v4206 = vpop.f32.mrb[0].mxu0
      %4207 = vmatprep.mubr.f32.mxu0 0.0
      %4208 = vmatmul.mubr.f32.gmra.mrb[0].mxu0 %v3600
      %v4209 = vpop.f32.mrb[0].mxu0
      %v4210 = vadd.f32 0.0, %v4209
      %v4211 = vpop.f32.mrb[0].mxu0
      %4212 = vmatprep.mubr.f32.mxu0 0.0
      %4213 = vmatmul.mubr.f32.gmra.mrb[0].mxu0 %v3603
      %v4214 = vpop.f32.mrb[0].mxu0
      %v4215 = vadd.f32 0.0, %v4214
      %v4216 = vpop.f32.mrb[0].mxu0
      %4217 = vmatprep.mubr.f32.mxu0 0.0
      %4218 = vmatmul.mubr.f32.gmra.mrb[0].mxu0 %v3606
      %v4219 = vpop.f32.mrb[0].mxu0
      %v4220 = vadd.f32 0.0, %v4219
      %v4221 = vpop.f32.mrb[0].mxu0
      %4222 = vmatprep.mubr.f32.mxu0 0.0
      %4223 = vmatmul.mubr.f32.gmra.mrb[0].mxu0 %v3609
      %v4224 = vpop.f32.mrb[0].mxu0
      %v4225 = vadd.f32 0.0, %v4224
      %v4226 = vpop.f32.mrb[0].mxu0
      %4227 = vmatprep.mubr.f32.mxu0 0.0
      %4228 = vmatmul.mubr.f32.gmra.mrb[0].mxu0 %v3612
      %v4229 = vpop.f32.mrb[0].mxu0
      %v4230 = vadd.f32 0.0, %v4229
      %v4231 = vpop.f32.mrb[0].mxu0
      %4232 = vmatprep.mubr.f32.mxu0 0.0
      %4233 = vmatmul.mubr.f32.gmra.mrb[0].mxu0 %v3615
      %v4234 = vpop.f32.mrb[0].mxu0
      %v4235 = vadd.f32 0.0, %v4234
      %v4236 = vpop.f32.mrb[0].mxu0
      %4237 = vmatprep.mubr.f32.mxu0 0.0
      %4238 = vmatmul.mubr.f32.gmra.mrb[0].mxu0 %v3618
      %v4239 = vpop.f32.mrb[0].mxu0
      %v4240 = vadd.f32 0.0, %v4239
      %v4241 = vpop.f32.mrb[0].mxu0
      %4242 = vmatprep.mubr.f32.mxu0 0.0
      %4243 = vmatmul.mubr.f32.gmra.mrb[0].mxu0 %v3621
      %v4244 = vpop.f32.mrb[0].mxu0
      %v4245 = vadd.f32 0.0, %v4244
      %v4246 = vpop.f32.mrb[0].mxu0
      %4247 = vmatprep.mubr.f32.mxu0 0.0
      %4248 = vmatmul.mubr.f32.gmra.mrb[0].mxu0 %v3624
      %v4249 = vpop.f32.mrb[0].mxu0
      %v4250 = vadd.f32 0.0, %v4249
      %v4251 = vpop.f32.mrb[0].mxu0
      %4252 = vmatprep.mubr.f32.mxu0 0.0
      %4253 = vmatmul.mubr.f32.gmra.mrb[0].mxu0 %v3627
      %v4254 = vpop.f32.mrb[0].mxu0
      %v4255 = vadd.f32 0.0, %v4254
      %v4256 = vpop.f32.mrb[0].mxu0
      %4257 = vmatprep.mubr.f32.mxu0 0.0
      %4258 = vmatmul.mubr.f32.gmra.mrb[0].mxu0 %v3630
      %v4259 = vpop.f32.mrb[0].mxu0
      %v4260 = vadd.f32 0.0, %v4259
      %v4261 = vpop.f32.mrb[0].mxu0
      %4262 = vmatprep.mubr.f32.mxu0 0.0
      %4263 = vmatmul.mubr.f32.gmra.mrb[0].mxu0 %v3633
      %v4264 = vpop.f32.mrb[0].mxu0
      %v4265 = vadd.f32 0.0, %v4264
      %v4266 = vpop.f32.mrb[0].mxu0
      %4267 = vmatprep.mubr.f32.mxu0 0.0
      %4268 = vmatmul.mubr.f32.gmra.mrb[0].mxu0 %v3636
      %v4269 = vpop.f32.mrb[0].mxu0
      %v4270 = vadd.f32 0.0, %v4269
      %v4271 = vpop.f32.mrb[0].mxu0
      %4272 = vmatprep.mubr.f32.mxu0 0.0
      %4273 = vmatmul.mubr.f32.gmra.mrb[0].mxu0 %v3639
      %v4274 = vpop.f32.mrb[0].mxu0
      %v4275 = vadd.f32 0.0, %v4274
      %v4276 = vpop.f32.mrb[0].mxu0
      %4277 = vmatprep.mubr.f32.mxu0 0.0
      %4278 = vmatmul.mubr.f32.gmra.mrb[0].mxu0 %v3642
      %v4279 = vpop.f32.mrb[0].mxu0
      %v4280 = vadd.f32 0.0, %v4279
      %v4281 = vpop.f32.mrb[0].mxu0
      %4282 = vmatprep.mubr.f32.mxu0 0.0
      %4283 = vmatmul.mubr.f32.gmra.mrb[0].mxu0 %v3645
      %v4284 = vpop.f32.mrb[0].mxu0
      %v4285 = vadd.f32 0.0, %v4284
      %v4286 = vpop.f32.mrb[0].mxu0
      %4287 = vmatprep.mubr.f32.mxu0 0.0
      %4288 = vmatmul.mubr.f32.gmra.mrb[0].mxu0 %v3648
      %v4289 = vpop.f32.mrb[0].mxu0
      %v4290 = vadd.f32 0.0, %v4289
      %v4291 = vpop.f32.mrb[0].mxu0
      %4292 = vmatprep.mubr.f32.mxu0 0.0
      %4293 = vmatmul.mubr.f32.gmra.mrb[0].mxu0 %v3651
      %v4294 = vpop.f32.mrb[0].mxu0
      %v4295 = vadd.f32 0.0, %v4294
      %v4296 = vpop.f32.mrb[0].mxu0
      %4297 = vmatprep.mubr.f32.mxu0 0.0
      %4298 = vmatmul.mubr.f32.gmra.mrb[0].mxu0 %v3654
      %v4299 = vpop.f32.mrb[0].mxu0
      %v4300 = vadd.f32 0.0, %v4299
      %v4301 = vpop.f32.mrb[0].mxu0
      %4302 = vmatprep.mubr.f32.mxu0 0.0
      %4303 = vmatmul.mubr.f32.gmra.mrb[0].mxu0 %v3657
      %v4304 = vpop.f32.mrb[0].mxu0
      %v4305 = vadd.f32 0.0, %v4304
      %v4306 = vpop.f32.mrb[0].mxu0
      %4307 = vmatprep.mubr.f32.mxu0 0.0
      %4308 = vmatmul.mubr.f32.gmra.mrb[0].mxu0 %v3660
      %v4309 = vpop.f32.mrb[0].mxu0
      %v4310 = vadd.f32 0.0, %v4309
      %v4311 = vpop.f32.mrb[0].mxu0
      %4312 = vmatprep.mubr.f32.mxu0 0.0
      %4313 = vmatmul.mubr.f32.gmra.mrb[0].mxu0 %v3663
      %v4314 = vpop.f32.mrb[0].mxu0
      %v4315 = vadd.f32 0.0, %v4314
      %v4316 = vpop.f32.mrb[0].mxu0
      %4317 = vmatprep.mubr.f32.mxu0 0.0
      %4318 = vmatmul.mubr.f32.gmra.mrb[0].mxu0 %v3666
      %v4319 = vpop.f32.mrb[0].mxu0
      %v4320 = vadd.f32 0.0, %v4319
      %v4321 = vpop.f32.mrb[0].mxu0
      %4322 = vmatprep.mubr.f32.mxu0 0.0
      %4323 = vmatmul.mubr.f32.gmra.mrb[0].mxu0 %v3669
      %v4324 = vpop.f32.mrb[0].mxu0
      %v4325 = vadd.f32 0.0, %v4324
      %v4326 = vpop.f32.mrb[0].mxu0
      %4327 = vmatprep.mubr.f32.mxu0 0.0
      %4328 = vmatmul.mubr.f32.gmra.mrb[0].mxu0 %v3672
      %v4329 = vpop.f32.mrb[0].mxu0
      %v4330 = vadd.f32 0.0, %v4329
      %v4331 = vpop.f32.mrb[0].mxu0
      %4332 = vmatprep.mubr.f32.mxu0 0.0
      %4333 = vmatmul.mubr.f32.gmra.mrb[0].mxu0 %v3675
      %v4334 = vpop.f32.mrb[0].mxu0
      %v4335 = vadd.f32 0.0, %v4334
      %v4336 = vpop.f32.mrb[0].mxu0
      %4337 = vmatprep.mubr.f32.mxu0 0.0
      %4338 = vmatmul.mubr.f32.gmra.mrb[0].mxu0 %v3678
      %v4339 = vpop.f32.mrb[0].mxu0
      %v4340 = vadd.f32 0.0, %v4339
      %v4341 = vpop.f32.mrb[0].mxu0
      %4342 = vmatprep.mubr.f32.mxu0 0.0
      %4343 = vmatmul.mubr.f32.gmra.mrb[0].mxu0 %v3681
      %v4344 = vpop.f32.mrb[0].mxu0
      %v4345 = vadd.f32 0.0, %v4344
      %v4346 = vpop.f32.mrb[0].mxu0
      %4347 = vmatprep.mubr.f32.mxu0 0.0
      %4348 = vmatmul.mubr.f32.gmra.mrb[0].mxu0 %v3684
      %v4349 = vpop.f32.mrb[0].mxu0
      %v4350 = vadd.f32 0.0, %v4349
      %v4351 = vpop.f32.mrb[0].mxu0
      %4352 = vmatprep.mubr.f32.mxu0 0.0
      %4353 = vmatmul.mubr.f32.gmra.mrb[0].mxu0 %v3687
      %v4354 = vpop.f32.mrb[0].mxu0
      %v4355 = vadd.f32 0.0, %v4354
      %v4356 = vpop.f32.mrb[0].mxu0
      %4357 = vmatprep.mubr.f32.mxu0 0.0
      %4358 = vmatmul.mubr.f32.gmra.mrb[0].mxu0 %v3690
      %v4359 = vpop.f32.mrb[0].mxu0
      %v4360 = vadd.f32 0.0, %v4359
      %v4361 = vpop.f32.mrb[0].mxu0
      %4362 = vmatprep.mubr.f32.mxu0 0.0
      %4363 = vmatmul.mubr.f32.gmra.mrb[0].mxu0 %v3693
      %v4364 = vpop.f32.mrb[0].mxu0
      %v4365 = vadd.f32 0.0, %v4364
      %v4366 = vpop.f32.mrb[0].mxu0
      %4367 = vmatprep.mubr.f32.mxu0 0.0
      %4368 = vmatmul.mubr.f32.gmra.mrb[0].mxu0 %v3696
      %v4369 = vpop.f32.mrb[0].mxu0
      %v4370 = vadd.f32 0.0, %v4369
      %v4371 = vpop.f32.mrb[0].mxu0
      %4372 = vmatprep.mubr.f32.mxu0 0.0
      %4373 = vmatmul.mubr.f32.gmra.mrb[0].mxu0 %v3699
      %v4374 = vpop.f32.mrb[0].mxu0
      %v4375 = vadd.f32 0.0, %v4374
      %v4376 = vpop.f32.mrb[0].mxu0
      %4377 = vmatprep.mubr.f32.mxu0 0.0
      %4378 = vmatmul.mubr.f32.gmra.mrb[0].mxu0 %v3702
      %v4379 = vpop.f32.mrb[0].mxu0
      %v4380 = vadd.f32 0.0, %v4379
      %v4381 = vpop.f32.mrb[0].mxu0
      %4382 = vmatprep.mubr.f32.mxu0 0.0
      %4383 = vmatmul.mubr.f32.gmra.mrb[0].mxu0 %v3705
      %v4384 = vpop.f32.mrb[0].mxu0
      %v4385 = vadd.f32 0.0, %v4384
      %v4386 = vpop.f32.mrb[0].mxu0
      %4387 = vmatprep.mubr.f32.mxu0 0.0
      %4388 = vmatmul.mubr.f32.gmra.mrb[0].mxu0 %v3708
      %v4389 = vpop.f32.mrb[0].mxu0
      %v4390 = vadd.f32 0.0, %v4389
      %v4391 = vpop.f32.mrb[0].mxu0
      %4392 = vmatprep.mubr.f32.mxu0 0.0
      %4393 = vmatmul.mubr.f32.gmra.mrb[0].mxu0 %v3711
      %v4394 = vpop.f32.mrb[0].mxu0
      %v4395 = vadd.f32 0.0, %v4394
      %v4396 = vpop.f32.mrb[0].mxu0
      %4397 = vmatprep.mubr.f32.mxu0 0.0
      %4398 = vmatmul.mubr.f32.gmra.mrb[0].mxu0 %v3714
      %v4399 = vpop.f32.mrb[0].mxu0
      %v4400 = vadd.f32 0.0, %v4399
      %v4401 = vpop.f32.mrb[0].mxu0
      %4402 = vmatprep.mubr.f32.mxu0 0.0
      %4403 = vmatmul.mubr.f32.gmra.mrb[0].mxu0 %v3717
      %v4404 = vpop.f32.mrb[0].mxu0
      %v4405 = vadd.f32 0.0, %v4404
      %v4406 = vpop.f32.mrb[0].mxu0
      %4407 = vmatprep.mubr.f32.mxu0 0.0
      %4408 = vmatmul.mubr.f32.gmra.mrb[0].mxu0 %v3720
      %v4409 = vpop.f32.mrb[0].mxu0
      %v4410 = vadd.f32 0.0, %v4409
      %v4411 = vpop.f32.mrb[0].mxu0
      %4412 = vmatprep.mubr.f32.mxu0 0.0
      %4413 = vmatmul.mubr.f32.gmra.mrb[0].mxu0 %v3723
      %v4414 = vpop.f32.mrb[0].mxu0
      %v4415 = vadd.f32 0.0, %v4414
      %v4416 = vpop.f32.mrb[0].mxu0
      %4417 = vmatprep.mubr.f32.mxu0 0.0
      %4418 = vmatmul.mubr.f32.gmra.mrb[0].mxu0 %v3726
      %v4419 = vpop.f32.mrb[0].mxu0
      %v4420 = vadd.f32 0.0, %v4419
      %v4421 = vpop.f32.mrb[0].mxu0
      %4422 = vmatprep.mubr.f32.mxu0 0.0
      %4423 = vmatmul.mubr.f32.gmra.mrb[0].mxu0 %v3729
      %v4424 = vpop.f32.mrb[0].mxu0
      %v4425 = vadd.f32 0.0, %v4424
      %v4426 = vpop.f32.mrb[0].mxu0
      %4427 = vmatprep.mubr.f32.mxu0 0.0
      %4428 = vmatmul.mubr.f32.gmra.mrb[0].mxu0 %v3732
      %v4429 = vpop.f32.mrb[0].mxu0
      %v4430 = vadd.f32 0.0, %v4429
      %v4431 = vpop.f32.mrb[0].mxu0
      %4432 = vmatprep.mubr.f32.mxu0 0.0
      %4433 = vmatmul.mubr.f32.gmra.mrb[0].mxu0 %v3735
      %v4434 = vpop.f32.mrb[0].mxu0
      %v4435 = vadd.f32 0.0, %v4434
      %v4436 = vpop.f32.mrb[0].mxu0
      %4437 = vmatprep.mubr.f32.mxu0 0.0
      %4438 = vmatmul.mubr.f32.gmra.mrb[0].mxu0 %v3738
      %v4439 = vpop.f32.mrb[0].mxu0
      %v4440 = vadd.f32 0.0, %v4439
      %v4441 = vpop.f32.mrb[0].mxu0
      %4442 = vmatprep.mubr.f32.mxu0 0.0
      %4443 = vmatmul.mubr.f32.gmra.mrb[0].mxu0 %v3741
      %v4444 = vpop.f32.mrb[0].mxu0
      %v4445 = vadd.f32 0.0, %v4444
      %v4446 = vpop.f32.mrb[0].mxu0
      %4447 = vdwg.mxu0
      %v4448 = vld [vmem:[#allocation2] sm:$0xff]
      %v4449 = vld [vmem:[#allocation2 + $0x8] sm:$0xff]
      %v4450 = vld [vmem:[#allocation2 + $0x10] sm:$0xff]
      %v4451 = vld [vmem:[#allocation2 + $0x18] sm:$0xff]
      %v4452 = vld [vmem:[#allocation2 + $0x20] sm:$0xff]
      %v4453 = vld [vmem:[#allocation2 + $0x28] sm:$0xff]
      %v4454 = vld [vmem:[#allocation2 + $0x30] sm:$0xff]
      %v4455 = vld [vmem:[#allocation2 + $0x38] sm:$0xff]
      %v4456 = vld [vmem:[#allocation2 + $0x40] sm:$0xff]
      %v4457 = vld [vmem:[#allocation2 + $0x48] sm:$0xff]
      %v4458 = vld [vmem:[#allocation2 + $0x50] sm:$0xff]
      %v4459 = vld [vmem:[#allocation2 + $0x58] sm:$0xff]
      %v4460 = vld [vmem:[#allocation2 + $0x60] sm:$0xff]
      %v4461 = vld [vmem:[#allocation2 + $0x68] sm:$0xff]
      %v4462 = vld [vmem:[#allocation2 + $0x70] sm:$0xff]
      %v4463 = vld [vmem:[#allocation2 + $0x78] sm:$0xff]
      %v4464 = vld [vmem:[#allocation2 + $0x80] sm:$0xff]
      %v4465 = vld [vmem:[#allocation2 + $0x88] sm:$0xff]
      %v4466 = vld [vmem:[#allocation2 + $0x90] sm:$0xff]
      %v4467 = vld [vmem:[#allocation2 + $0x98] sm:$0xff]
      %v4468 = vld [vmem:[#allocation2 + $0xa0] sm:$0xff]
      %v4469 = vld [vmem:[#allocation2 + $0xa8] sm:$0xff]
      %v4470 = vld [vmem:[#allocation2 + $0xb0] sm:$0xff]
      %v4471 = vld [vmem:[#allocation2 + $0xb8] sm:$0xff]
      %v4472 = vld [vmem:[#allocation2 + $0xc0] sm:$0xff]
      %v4473 = vld [vmem:[#allocation2 + $0xc8] sm:$0xff]
      %v4474 = vld [vmem:[#allocation2 + $0xd0] sm:$0xff]
      %v4475 = vld [vmem:[#allocation2 + $0xd8] sm:$0xff]
      %v4476 = vld [vmem:[#allocation2 + $0xe0] sm:$0xff]
      %v4477 = vld [vmem:[#allocation2 + $0xe8] sm:$0xff]
      %v4478 = vld [vmem:[#allocation2 + $0xf0] sm:$0xff]
      %v4479 = vld [vmem:[#allocation2 + $0xf8] sm:$0xff]
      %v4480 = vld [vmem:[#allocation2 + $0x100] sm:$0xff]
      %v4481 = vld [vmem:[#allocation2 + $0x108] sm:$0xff]
      %v4482 = vld [vmem:[#allocation2 + $0x110] sm:$0xff]
      %v4483 = vld [vmem:[#allocation2 + $0x118] sm:$0xff]
      %v4484 = vld [vmem:[#allocation2 + $0x120] sm:$0xff]
      %v4485 = vld [vmem:[#allocation2 + $0x128] sm:$0xff]
      %v4486 = vld [vmem:[#allocation2 + $0x130] sm:$0xff]
      %v4487 = vld [vmem:[#allocation2 + $0x138] sm:$0xff]
      %v4488 = vld [vmem:[#allocation2 + $0x140] sm:$0xff]
      %v4489 = vld [vmem:[#allocation2 + $0x148] sm:$0xff]
      %v4490 = vld [vmem:[#allocation2 + $0x150] sm:$0xff]
      %v4491 = vld [vmem:[#allocation2 + $0x158] sm:$0xff]
      %v4492 = vld [vmem:[#allocation2 + $0x160] sm:$0xff]
      %v4493 = vld [vmem:[#allocation2 + $0x168] sm:$0xff]
      %v4494 = vld [vmem:[#allocation2 + $0x170] sm:$0xff]
      %v4495 = vld [vmem:[#allocation2 + $0x178] sm:$0xff]
      %v4496 = vld [vmem:[#allocation2 + $0x180] sm:$0xff]
      %v4497 = vld [vmem:[#allocation2 + $0x188] sm:$0xff]
      %v4498 = vld [vmem:[#allocation2 + $0x190] sm:$0xff]
      %v4499 = vld [vmem:[#allocation2 + $0x198] sm:$0xff]
      %v4500 = vld [vmem:[#allocation2 + $0x1a0] sm:$0xff]
      %v4501 = vld [vmem:[#allocation2 + $0x1a8] sm:$0xff]
      %v4502 = vld [vmem:[#allocation2 + $0x1b0] sm:$0xff]
      %v4503 = vld [vmem:[#allocation2 + $0x1b8] sm:$0xff]
      %v4504 = vld [vmem:[#allocation2 + $0x1c0] sm:$0xff]
      %v4505 = vld [vmem:[#allocation2 + $0x1c8] sm:$0xff]
      %v4506 = vld [vmem:[#allocation2 + $0x1d0] sm:$0xff]
      %v4507 = vld [vmem:[#allocation2 + $0x1d8] sm:$0xff]
      %v4508 = vld [vmem:[#allocation2 + $0x1e0] sm:$0xff]
      %v4509 = vld [vmem:[#allocation2 + $0x1e8] sm:$0xff]
      %v4510 = vld [vmem:[#allocation2 + $0x1f0] sm:$0xff]
      %v4511 = vld [vmem:[#allocation2 + $0x1f8] sm:$0xff]
      %v4512 = vld [vmem:[#allocation2 + $0x200] sm:$0xff]
      %v4513 = vld [vmem:[#allocation2 + $0x208] sm:$0xff]
      %v4514 = vld [vmem:[#allocation2 + $0x210] sm:$0xff]
      %v4515 = vld [vmem:[#allocation2 + $0x218] sm:$0xff]
      %v4516 = vld [vmem:[#allocation2 + $0x220] sm:$0xff]
      %v4517 = vld [vmem:[#allocation2 + $0x228] sm:$0xff]
      %v4518 = vld [vmem:[#allocation2 + $0x230] sm:$0xff]
      %v4519 = vld [vmem:[#allocation2 + $0x238] sm:$0xff]
      %v4520 = vld [vmem:[#allocation2 + $0x240] sm:$0xff]
      %v4521 = vld [vmem:[#allocation2 + $0x248] sm:$0xff]
      %v4522 = vld [vmem:[#allocation2 + $0x250] sm:$0xff]
      %v4523 = vld [vmem:[#allocation2 + $0x258] sm:$0xff]
      %v4524 = vld [vmem:[#allocation2 + $0x260] sm:$0xff]
      %v4525 = vld [vmem:[#allocation2 + $0x268] sm:$0xff]
      %v4526 = vld [vmem:[#allocation2 + $0x270] sm:$0xff]
      %v4527 = vld [vmem:[#allocation2 + $0x278] sm:$0xff]
      %v4528 = vld [vmem:[#allocation2 + $0x280] sm:$0xff]
      %v4529 = vld [vmem:[#allocation2 + $0x288] sm:$0xff]
      %v4530 = vld [vmem:[#allocation2 + $0x290] sm:$0xff]
      %v4531 = vld [vmem:[#allocation2 + $0x298] sm:$0xff]
      %v4532 = vld [vmem:[#allocation2 + $0x2a0] sm:$0xff]
      %v4533 = vld [vmem:[#allocation2 + $0x2a8] sm:$0xff]
      %v4534 = vld [vmem:[#allocation2 + $0x2b0] sm:$0xff]
      %v4535 = vld [vmem:[#allocation2 + $0x2b8] sm:$0xff]
      %v4536 = vld [vmem:[#allocation2 + $0x2c0] sm:$0xff]
      %v4537 = vld [vmem:[#allocation2 + $0x2c8] sm:$0xff]
      %v4538 = vld [vmem:[#allocation2 + $0x2d0] sm:$0xff]
      %v4539 = vld [vmem:[#allocation2 + $0x2d8] sm:$0xff]
      %v4540 = vld [vmem:[#allocation2 + $0x2e0] sm:$0xff]
      %v4541 = vld [vmem:[#allocation2 + $0x2e8] sm:$0xff]
      %v4542 = vld [vmem:[#allocation2 + $0x2f0] sm:$0xff]
      %v4543 = vld [vmem:[#allocation2 + $0x2f8] sm:$0xff]
      %v4544 = vld [vmem:[#allocation2 + $0x300] sm:$0xff]
      %v4545 = vld [vmem:[#allocation2 + $0x308] sm:$0xff]
      %v4546 = vld [vmem:[#allocation2 + $0x310] sm:$0xff]
      %v4547 = vld [vmem:[#allocation2 + $0x318] sm:$0xff]
      %v4548 = vld [vmem:[#allocation2 + $0x320] sm:$0xff]
      %v4549 = vld [vmem:[#allocation2 + $0x328] sm:$0xff]
      %v4550 = vld [vmem:[#allocation2 + $0x330] sm:$0xff]
      %v4551 = vld [vmem:[#allocation2 + $0x338] sm:$0xff]
      %v4552 = vld [vmem:[#allocation2 + $0x340] sm:$0xff]
      %v4553 = vld [vmem:[#allocation2 + $0x348] sm:$0xff]
      %v4554 = vld [vmem:[#allocation2 + $0x350] sm:$0xff]
      %v4555 = vld [vmem:[#allocation2 + $0x358] sm:$0xff]
      %v4556 = vld [vmem:[#allocation2 + $0x360] sm:$0xff]
      %v4557 = vld [vmem:[#allocation2 + $0x368] sm:$0xff]
      %v4558 = vld [vmem:[#allocation2 + $0x370] sm:$0xff]
      %v4559 = vld [vmem:[#allocation2 + $0x378] sm:$0xff]
      %v4560 = vld [vmem:[#allocation2 + $0x380] sm:$0xff]
      %v4561 = vld [vmem:[#allocation2 + $0x388] sm:$0xff]
      %v4562 = vld [vmem:[#allocation2 + $0x390] sm:$0xff]
      %v4563 = vld [vmem:[#allocation2 + $0x398] sm:$0xff]
      %v4564 = vld [vmem:[#allocation2 + $0x3a0] sm:$0xff]
      %v4565 = vld [vmem:[#allocation2 + $0x3a8] sm:$0xff]
      %v4566 = vld [vmem:[#allocation2 + $0x3b0] sm:$0xff]
      %v4567 = vld [vmem:[#allocation2 + $0x3b8] sm:$0xff]
      %v4568 = vld [vmem:[#allocation2 + $0x3c0] sm:$0xff]
      %v4569 = vld [vmem:[#allocation2 + $0x3c8] sm:$0xff]
      %v4570 = vld [vmem:[#allocation2 + $0x3d0] sm:$0xff]
      %v4571 = vld [vmem:[#allocation2 + $0x3d8] sm:$0xff]
      %v4572 = vld [vmem:[#allocation2 + $0x3e0] sm:$0xff]
      %v4573 = vld [vmem:[#allocation2 + $0x3e8] sm:$0xff]
      %v4574 = vld [vmem:[#allocation2 + $0x3f0] sm:$0xff]
      %v4575 = vld [vmem:[#allocation2 + $0x3f8] sm:$0xff]
      %v4576 = vmax.f32 %v4448, 1e-08
      %v4577 = vmax.f32 %v4449, 1e-08
      %v4578 = vmax.f32 %v4450, 1e-08
      %v4579 = vmax.f32 %v4451, 1e-08
      %v4580 = vmax.f32 %v4452, 1e-08
      %v4581 = vmax.f32 %v4453, 1e-08
      %v4582 = vmax.f32 %v4454, 1e-08
      %v4583 = vmax.f32 %v4455, 1e-08
      %v4584 = vmax.f32 %v4456, 1e-08
      %v4585 = vmax.f32 %v4457, 1e-08
      %v4586 = vmax.f32 %v4458, 1e-08
      %v4587 = vmax.f32 %v4459, 1e-08
      %v4588 = vmax.f32 %v4460, 1e-08
      %v4589 = vmax.f32 %v4461, 1e-08
      %v4590 = vmax.f32 %v4462, 1e-08
      %v4591 = vmax.f32 %v4463, 1e-08
      %v4592 = vmax.f32 %v4464, 1e-08
      %v4593 = vmax.f32 %v4465, 1e-08
      %v4594 = vmax.f32 %v4466, 1e-08
      %v4595 = vmax.f32 %v4467, 1e-08
      %v4596 = vmax.f32 %v4468, 1e-08
      %v4597 = vmax.f32 %v4469, 1e-08
      %v4598 = vmax.f32 %v4470, 1e-08
      %v4599 = vmax.f32 %v4471, 1e-08
      %v4600 = vmax.f32 %v4472, 1e-08
      %v4601 = vmax.f32 %v4473, 1e-08
      %v4602 = vmax.f32 %v4474, 1e-08
      %v4603 = vmax.f32 %v4475, 1e-08
      %v4604 = vmax.f32 %v4476, 1e-08
      %v4605 = vmax.f32 %v4477, 1e-08
      %v4606 = vmax.f32 %v4478, 1e-08
      %v4607 = vmax.f32 %v4479, 1e-08
      %v4608 = vmax.f32 %v4480, 1e-08
      %v4609 = vmax.f32 %v4481, 1e-08
      %v4610 = vmax.f32 %v4482, 1e-08
      %v4611 = vmax.f32 %v4483, 1e-08
      %v4612 = vmax.f32 %v4484, 1e-08
      %v4613 = vmax.f32 %v4485, 1e-08
      %v4614 = vmax.f32 %v4486, 1e-08
      %v4615 = vmax.f32 %v4487, 1e-08
      %v4616 = vmax.f32 %v4488, 1e-08
      %v4617 = vmax.f32 %v4489, 1e-08
      %v4618 = vmax.f32 %v4490, 1e-08
      %v4619 = vmax.f32 %v4491, 1e-08
      %v4620 = vmax.f32 %v4492, 1e-08
      %v4621 = vmax.f32 %v4493, 1e-08
      %v4622 = vmax.f32 %v4494, 1e-08
      %v4623 = vmax.f32 %v4495, 1e-08
      %v4624 = vmax.f32 %v4496, 1e-08
      %v4625 = vmax.f32 %v4497, 1e-08
      %v4626 = vmax.f32 %v4498, 1e-08
      %v4627 = vmax.f32 %v4499, 1e-08
      %v4628 = vmax.f32 %v4500, 1e-08
      %v4629 = vmax.f32 %v4501, 1e-08
      %v4630 = vmax.f32 %v4502, 1e-08
      %v4631 = vmax.f32 %v4503, 1e-08
      %v4632 = vmax.f32 %v4504, 1e-08
      %v4633 = vmax.f32 %v4505, 1e-08
      %v4634 = vmax.f32 %v4506, 1e-08
      %v4635 = vmax.f32 %v4507, 1e-08
      %v4636 = vmax.f32 %v4508, 1e-08
      %v4637 = vmax.f32 %v4509, 1e-08
      %v4638 = vmax.f32 %v4510, 1e-08
      %v4639 = vmax.f32 %v4511, 1e-08
      %v4640 = vmax.f32 %v4512, 1e-08
      %v4641 = vmax.f32 %v4513, 1e-08
      %v4642 = vmax.f32 %v4514, 1e-08
      %v4643 = vmax.f32 %v4515, 1e-08
      %v4644 = vmax.f32 %v4516, 1e-08
      %v4645 = vmax.f32 %v4517, 1e-08
      %v4646 = vmax.f32 %v4518, 1e-08
      %v4647 = vmax.f32 %v4519, 1e-08
      %v4648 = vmax.f32 %v4520, 1e-08
      %v4649 = vmax.f32 %v4521, 1e-08
      %v4650 = vmax.f32 %v4522, 1e-08
      %v4651 = vmax.f32 %v4523, 1e-08
      %v4652 = vmax.f32 %v4524, 1e-08
      %v4653 = vmax.f32 %v4525, 1e-08
      %v4654 = vmax.f32 %v4526, 1e-08
      %v4655 = vmax.f32 %v4527, 1e-08
      %v4656 = vmax.f32 %v4528, 1e-08
      %v4657 = vmax.f32 %v4529, 1e-08
      %v4658 = vmax.f32 %v4530, 1e-08
      %v4659 = vmax.f32 %v4531, 1e-08
      %v4660 = vmax.f32 %v4532, 1e-08
      %v4661 = vmax.f32 %v4533, 1e-08
      %v4662 = vmax.f32 %v4534, 1e-08
      %v4663 = vmax.f32 %v4535, 1e-08
      %v4664 = vmax.f32 %v4536, 1e-08
      %v4665 = vmax.f32 %v4537, 1e-08
      %v4666 = vmax.f32 %v4538, 1e-08
      %v4667 = vmax.f32 %v4539, 1e-08
      %v4668 = vmax.f32 %v4540, 1e-08
      %v4669 = vmax.f32 %v4541, 1e-08
      %v4670 = vmax.f32 %v4542, 1e-08
      %v4671 = vmax.f32 %v4543, 1e-08
      %v4672 = vmax.f32 %v4544, 1e-08
      %v4673 = vmax.f32 %v4545, 1e-08
      %v4674 = vmax.f32 %v4546, 1e-08
      %v4675 = vmax.f32 %v4547, 1e-08
      %v4676 = vmax.f32 %v4548, 1e-08
      %v4677 = vmax.f32 %v4549, 1e-08
      %v4678 = vmax.f32 %v4550, 1e-08
      %v4679 = vmax.f32 %v4551, 1e-08
      %v4680 = vmax.f32 %v4552, 1e-08
      %v4681 = vmax.f32 %v4553, 1e-08
      %v4682 = vmax.f32 %v4554, 1e-08
      %v4683 = vmax.f32 %v4555, 1e-08
      %v4684 = vmax.f32 %v4556, 1e-08
      %v4685 = vmax.f32 %v4557, 1e-08
      %v4686 = vmax.f32 %v4558, 1e-08
      %v4687 = vmax.f32 %v4559, 1e-08
      %v4688 = vmax.f32 %v4560, 1e-08
      %v4689 = vmax.f32 %v4561, 1e-08
      %v4690 = vmax.f32 %v4562, 1e-08
      %v4691 = vmax.f32 %v4563, 1e-08
      %v4692 = vmax.f32 %v4564, 1e-08
      %v4693 = vmax.f32 %v4565, 1e-08
      %v4694 = vmax.f32 %v4566, 1e-08
      %v4695 = vmax.f32 %v4567, 1e-08
      %v4696 = vmax.f32 %v4568, 1e-08
      %v4697 = vmax.f32 %v4569, 1e-08
      %v4698 = vmax.f32 %v4570, 1e-08
      %v4699 = vmax.f32 %v4571, 1e-08
      %v4700 = vmax.f32 %v4572, 1e-08
      %v4701 = vmax.f32 %v4573, 1e-08
      %v4702 = vmax.f32 %v4574, 1e-08
      %v4703 = vmax.f32 %v4575, 1e-08
      %s4704 = smax.f32 %s3229, 1e-08
      %v4705 = vstv %s4704
      %v4706 = vmul.f32 %v4576, %v4705
      %v4707 = vmul.f32 %v4577, %v4705
      %v4708 = vmul.f32 %v4578, %v4705
      %v4709 = vmul.f32 %v4579, %v4705
      %v4710 = vmul.f32 %v4580, %v4705
      %v4711 = vmul.f32 %v4581, %v4705
      %v4712 = vmul.f32 %v4582, %v4705
      %v4713 = vmul.f32 %v4583, %v4705
      %v4714 = vmul.f32 %v4584, %v4705
      %v4715 = vmul.f32 %v4585, %v4705
      %v4716 = vmul.f32 %v4586, %v4705
      %v4717 = vmul.f32 %v4587, %v4705
      %v4718 = vmul.f32 %v4588, %v4705
      %v4719 = vmul.f32 %v4589, %v4705
      %v4720 = vmul.f32 %v4590, %v4705
      %v4721 = vmul.f32 %v4591, %v4705
      %v4722 = vmul.f32 %v4592, %v4705
      %v4723 = vmul.f32 %v4593, %v4705
      %v4724 = vmul.f32 %v4594, %v4705
      %v4725 = vmul.f32 %v4595, %v4705
      %v4726 = vmul.f32 %v4596, %v4705
      %v4727 = vmul.f32 %v4597, %v4705
      %v4728 = vmul.f32 %v4598, %v4705
      %v4729 = vmul.f32 %v4599, %v4705
      %v4730 = vmul.f32 %v4600, %v4705
      %v4731 = vmul.f32 %v4601, %v4705
      %v4732 = vmul.f32 %v4602, %v4705
      %v4733 = vmul.f32 %v4603, %v4705
      %v4734 = vmul.f32 %v4604, %v4705
      %v4735 = vmul.f32 %v4605, %v4705
      %v4736 = vmul.f32 %v4606, %v4705
      %v4737 = vmul.f32 %v4607, %v4705
      %v4738 = vmul.f32 %v4608, %v4705
      %v4739 = vmul.f32 %v4609, %v4705
      %v4740 = vmul.f32 %v4610, %v4705
      %v4741 = vmul.f32 %v4611, %v4705
      %v4742 = vmul.f32 %v4612, %v4705
      %v4743 = vmul.f32 %v4613, %v4705
      %v4744 = vmul.f32 %v4614, %v4705
      %v4745 = vmul.f32 %v4615, %v4705
      %v4746 = vmul.f32 %v4616, %v4705
      %v4747 = vmul.f32 %v4617, %v4705
      %v4748 = vmul.f32 %v4618, %v4705
      %v4749 = vmul.f32 %v4619, %v4705
      %v4750 = vmul.f32 %v4620, %v4705
      %v4751 = vmul.f32 %v4621, %v4705
      %v4752 = vmul.f32 %v4622, %v4705
      %v4753 = vmul.f32 %v4623, %v4705
      %v4754 = vmul.f32 %v4624, %v4705
      %v4755 = vmul.f32 %v4625, %v4705
      %v4756 = vmul.f32 %v4626, %v4705
      %v4757 = vmul.f32 %v4627, %v4705
      %v4758 = vmul.f32 %v4628, %v4705
      %v4759 = vmul.f32 %v4629, %v4705
      %v4760 = vmul.f32 %v4630, %v4705
      %v4761 = vmul.f32 %v4631, %v4705
      %v4762 = vmul.f32 %v4632, %v4705
      %v4763 = vmul.f32 %v4633, %v4705
      %v4764 = vmul.f32 %v4634, %v4705
      %v4765 = vmul.f32 %v4635, %v4705
      %v4766 = vmul.f32 %v4636, %v4705
      %v4767 = vmul.f32 %v4637, %v4705
      %v4768 = vmul.f32 %v4638, %v4705
      %v4769 = vmul.f32 %v4639, %v4705
      %v4770 = vmul.f32 %v4640, %v4705
      %v4771 = vmul.f32 %v4641, %v4705
      %v4772 = vmul.f32 %v4642, %v4705
      %v4773 = vmul.f32 %v4643, %v4705
      %v4774 = vmul.f32 %v4644, %v4705
      %v4775 = vmul.f32 %v4645, %v4705
      %v4776 = vmul.f32 %v4646, %v4705
      %v4777 = vmul.f32 %v4647, %v4705
      %v4778 = vmul.f32 %v4648, %v4705
      %v4779 = vmul.f32 %v4649, %v4705
      %v4780 = vmul.f32 %v4650, %v4705
      %v4781 = vmul.f32 %v4651, %v4705
      %v4782 = vmul.f32 %v4652, %v4705
      %v4783 = vmul.f32 %v4653, %v4705
      %v4784 = vmul.f32 %v4654, %v4705
      %v4785 = vmul.f32 %v4655, %v4705
      %v4786 = vmul.f32 %v4656, %v4705
      %v4787 = vmul.f32 %v4657, %v4705
      %v4788 = vmul.f32 %v4658, %v4705
      %v4789 = vmul.f32 %v4659, %v4705
      %v4790 = vmul.f32 %v4660, %v4705
      %v4791 = vmul.f32 %v4661, %v4705
      %v4792 = vmul.f32 %v4662, %v4705
      %v4793 = vmul.f32 %v4663, %v4705
      %v4794 = vmul.f32 %v4664, %v4705
      %v4795 = vmul.f32 %v4665, %v4705
      %v4796 = vmul.f32 %v4666, %v4705
      %v4797 = vmul.f32 %v4667, %v4705
      %v4798 = vmul.f32 %v4668, %v4705
      %v4799 = vmul.f32 %v4669, %v4705
      %v4800 = vmul.f32 %v4670, %v4705
      %v4801 = vmul.f32 %v4671, %v4705
      %v4802 = vmul.f32 %v4672, %v4705
      %v4803 = vmul.f32 %v4673, %v4705
      %v4804 = vmul.f32 %v4674, %v4705
      %v4805 = vmul.f32 %v4675, %v4705
      %v4806 = vmul.f32 %v4676, %v4705
      %v4807 = vmul.f32 %v4677, %v4705
      %v4808 = vmul.f32 %v4678, %v4705
      %v4809 = vmul.f32 %v4679, %v4705
      %v4810 = vmul.f32 %v4680, %v4705
      %v4811 = vmul.f32 %v4681, %v4705
      %v4812 = vmul.f32 %v4682, %v4705
      %v4813 = vmul.f32 %v4683, %v4705
      %v4814 = vmul.f32 %v4684, %v4705
      %v4815 = vmul.f32 %v4685, %v4705
      %v4816 = vmul.f32 %v4686, %v4705
      %v4817 = vmul.f32 %v4687, %v4705
      %v4818 = vmul.f32 %v4688, %v4705
      %v4819 = vmul.f32 %v4689, %v4705
      %v4820 = vmul.f32 %v4690, %v4705
      %v4821 = vmul.f32 %v4691, %v4705
      %v4822 = vmul.f32 %v4692, %v4705
      %v4823 = vmul.f32 %v4693, %v4705
      %v4824 = vmul.f32 %v4694, %v4705
      %v4825 = vmul.f32 %v4695, %v4705
      %v4826 = vmul.f32 %v4696, %v4705
      %v4827 = vmul.f32 %v4697, %v4705
      %v4828 = vmul.f32 %v4698, %v4705
      %v4829 = vmul.f32 %v4699, %v4705
      %v4830 = vmul.f32 %v4700, %v4705
      %v4831 = vmul.f32 %v4701, %v4705
      %v4832 = vmul.f32 %v4702, %v4705
      %v4833 = vmul.f32 %v4703, %v4705
      %v4834 = vrcp.pop %v4706
      %v4835 = vrcp.pop %v4707
      %v4836 = vrcp.pop %v4708
      %v4837 = vrcp.pop %v4709
      %v4838 = vrcp.pop %v4710
      %v4839 = vrcp.pop %v4711
      %v4840 = vrcp.pop %v4712
      %v4841 = vrcp.pop %v4713
      %v4842 = vrcp.pop %v4714
      %v4843 = vrcp.pop %v4715
      %v4844 = vrcp.pop %v4716
      %v4845 = vrcp.pop %v4717
      %v4846 = vrcp.pop %v4718
      %v4847 = vrcp.pop %v4719
      %v4848 = vrcp.pop %v4720
      %v4849 = vrcp.pop %v4721
      %v4850 = vrcp.pop %v4722
      %v4851 = vrcp.pop %v4723
      %v4852 = vrcp.pop %v4724
      %v4853 = vrcp.pop %v4725
      %v4854 = vrcp.pop %v4726
      %v4855 = vrcp.pop %v4727
      %v4856 = vrcp.pop %v4728
      %v4857 = vrcp.pop %v4729
      %v4858 = vrcp.pop %v4730
      %v4859 = vrcp.pop %v4731
      %v4860 = vrcp.pop %v4732
      %v4861 = vrcp.pop %v4733
      %v4862 = vrcp.pop %v4734
      %v4863 = vrcp.pop %v4735
      %v4864 = vrcp.pop %v4736
      %v4865 = vrcp.pop %v4737
      %v4866 = vrcp.pop %v4738
      %v4867 = vrcp.pop %v4739
      %v4868 = vrcp.pop %v4740
      %v4869 = vrcp.pop %v4741
      %v4870 = vrcp.pop %v4742
      %v4871 = vrcp.pop %v4743
      %v4872 = vrcp.pop %v4744
      %v4873 = vrcp.pop %v4745
      %v4874 = vrcp.pop %v4746
      %v4875 = vrcp.pop %v4747
      %v4876 = vrcp.pop %v4748
      %v4877 = vrcp.pop %v4749
      %v4878 = vrcp.pop %v4750
      %v4879 = vrcp.pop %v4751
      %v4880 = vrcp.pop %v4752
      %v4881 = vrcp.pop %v4753
      %v4882 = vrcp.pop %v4754
      %v4883 = vrcp.pop %v4755
      %v4884 = vrcp.pop %v4756
      %v4885 = vrcp.pop %v4757
      %v4886 = vrcp.pop %v4758
      %v4887 = vrcp.pop %v4759
      %v4888 = vrcp.pop %v4760
      %v4889 = vrcp.pop %v4761
      %v4890 = vrcp.pop %v4762
      %v4891 = vrcp.pop %v4763
      %v4892 = vrcp.pop %v4764
      %v4893 = vrcp.pop %v4765
      %v4894 = vrcp.pop %v4766
      %v4895 = vrcp.pop %v4767
      %v4896 = vrcp.pop %v4768
      %v4897 = vrcp.pop %v4769
      %v4898 = vrcp.pop %v4770
      %v4899 = vrcp.pop %v4771
      %v4900 = vrcp.pop %v4772
      %v4901 = vrcp.pop %v4773
      %v4902 = vrcp.pop %v4774
      %v4903 = vrcp.pop %v4775
      %v4904 = vrcp.pop %v4776
      %v4905 = vrcp.pop %v4777
      %v4906 = vrcp.pop %v4778
      %v4907 = vrcp.pop %v4779
      %v4908 = vrcp.pop %v4780
      %v4909 = vrcp.pop %v4781
      %v4910 = vrcp.pop %v4782
      %v4911 = vrcp.pop %v4783
      %v4912 = vrcp.pop %v4784
      %v4913 = vrcp.pop %v4785
      %v4914 = vrcp.pop %v4786
      %v4915 = vrcp.pop %v4787
      %v4916 = vrcp.pop %v4788
      %v4917 = vrcp.pop %v4789
      %v4918 = vrcp.pop %v4790
      %v4919 = vrcp.pop %v4791
      %v4920 = vrcp.pop %v4792
      %v4921 = vrcp.pop %v4793
      %v4922 = vrcp.pop %v4794
      %v4923 = vrcp.pop %v4795
      %v4924 = vrcp.pop %v4796
      %v4925 = vrcp.pop %v4797
      %v4926 = vrcp.pop %v4798
      %v4927 = vrcp.pop %v4799
      %v4928 = vrcp.pop %v4800
      %v4929 = vrcp.pop %v4801
      %v4930 = vrcp.pop %v4802
      %v4931 = vrcp.pop %v4803
      %v4932 = vrcp.pop %v4804
      %v4933 = vrcp.pop %v4805
      %v4934 = vrcp.pop %v4806
      %v4935 = vrcp.pop %v4807
      %v4936 = vrcp.pop %v4808
      %v4937 = vrcp.pop %v4809
      %v4938 = vrcp.pop %v4810
      %v4939 = vrcp.pop %v4811
      %v4940 = vrcp.pop %v4812
      %v4941 = vrcp.pop %v4813
      %v4942 = vrcp.pop %v4814
      %v4943 = vrcp.pop %v4815
      %v4944 = vrcp.pop %v4816
      %v4945 = vrcp.pop %v4817
      %v4946 = vrcp.pop %v4818
      %v4947 = vrcp.pop %v4819
      %v4948 = vrcp.pop %v4820
      %v4949 = vrcp.pop %v4821
      %v4950 = vrcp.pop %v4822
      %v4951 = vrcp.pop %v4823
      %v4952 = vrcp.pop %v4824
      %v4953 = vrcp.pop %v4825
      %v4954 = vrcp.pop %v4826
      %v4955 = vrcp.pop %v4827
      %v4956 = vrcp.pop %v4828
      %v4957 = vrcp.pop %v4829
      %v4958 = vrcp.pop %v4830
      %v4959 = vrcp.pop %v4831
      %v4960 = vrcp.pop %v4832
      %v4961 = vrcp.pop %v4833
      %v4962 = vmul.f32 %v3810, %v4834
      %v4963 = vmul.f32 %v3815, %v4835
      %v4964 = vmul.f32 %v3820, %v4836
      %v4965 = vmul.f32 %v3825, %v4837
      %v4966 = vmul.f32 %v3830, %v4838
      %v4967 = vmul.f32 %v3835, %v4839
      %v4968 = vmul.f32 %v3840, %v4840
      %v4969 = vmul.f32 %v3845, %v4841
      %v4970 = vmul.f32 %v3850, %v4842
      %v4971 = vmul.f32 %v3855, %v4843
      %v4972 = vmul.f32 %v3860, %v4844
      %v4973 = vmul.f32 %v3865, %v4845
      %v4974 = vmul.f32 %v3870, %v4846
      %v4975 = vmul.f32 %v3875, %v4847
      %v4976 = vmul.f32 %v3880, %v4848
      %v4977 = vmul.f32 %v3885, %v4849
      %v4978 = vmul.f32 %v3890, %v4850
      %v4979 = vmul.f32 %v3895, %v4851
      %v4980 = vmul.f32 %v3900, %v4852
      %v4981 = vmul.f32 %v3905, %v4853
      %v4982 = vmul.f32 %v3910, %v4854
      %v4983 = vmul.f32 %v3915, %v4855
      %v4984 = vmul.f32 %v3920, %v4856
      %v4985 = vmul.f32 %v3925, %v4857
      %v4986 = vmul.f32 %v3930, %v4858
      %v4987 = vmul.f32 %v3935, %v4859
      %v4988 = vmul.f32 %v3940, %v4860
      %v4989 = vmul.f32 %v3945, %v4861
      %v4990 = vmul.f32 %v3950, %v4862
      %v4991 = vmul.f32 %v3955, %v4863
      %v4992 = vmul.f32 %v3960, %v4864
      %v4993 = vmul.f32 %v3965, %v4865
      %v4994 = vmul.f32 %v3970, %v4866
      %v4995 = vmul.f32 %v3975, %v4867
      %v4996 = vmul.f32 %v3980, %v4868
      %v4997 = vmul.f32 %v3985, %v4869
      %v4998 = vmul.f32 %v3990, %v4870
      %v4999 = vmul.f32 %v3995, %v4871
      %v5000 = vmul.f32 %v4000, %v4872
      %v5001 = vmul.f32 %v4005, %v4873
      %v5002 = vmul.f32 %v4010, %v4874
      %v5003 = vmul.f32 %v4015, %v4875
      %v5004 = vmul.f32 %v4020, %v4876
      %v5005 = vmul.f32 %v4025, %v4877
      %v5006 = vmul.f32 %v4030, %v4878
      %v5007 = vmul.f32 %v4035, %v4879
      %v5008 = vmul.f32 %v4040, %v4880
      %v5009 = vmul.f32 %v4045, %v4881
      %v5010 = vmul.f32 %v4050, %v4882
      %v5011 = vmul.f32 %v4055, %v4883
      %v5012 = vmul.f32 %v4060, %v4884
      %v5013 = vmul.f32 %v4065, %v4885
      %v5014 = vmul.f32 %v4070, %v4886
      %v5015 = vmul.f32 %v4075, %v4887
      %v5016 = vmul.f32 %v4080, %v4888
      %v5017 = vmul.f32 %v4085, %v4889
      %v5018 = vmul.f32 %v4090, %v4890
      %v5019 = vmul.f32 %v4095, %v4891
      %v5020 = vmul.f32 %v4100, %v4892
      %v5021 = vmul.f32 %v4105, %v4893
      %v5022 = vmul.f32 %v4110, %v4894
      %v5023 = vmul.f32 %v4115, %v4895
      %v5024 = vmul.f32 %v4120, %v4896
      %v5025 = vmul.f32 %v4125, %v4897
      %v5026 = vmul.f32 %v4130, %v4898
      %v5027 = vmul.f32 %v4135, %v4899
      %v5028 = vmul.f32 %v4140, %v4900
      %v5029 = vmul.f32 %v4145, %v4901
      %v5030 = vmul.f32 %v4150, %v4902
      %v5031 = vmul.f32 %v4155, %v4903
      %v5032 = vmul.f32 %v4160, %v4904
      %v5033 = vmul.f32 %v4165, %v4905
      %v5034 = vmul.f32 %v4170, %v4906
      %v5035 = vmul.f32 %v4175, %v4907
      %v5036 = vmul.f32 %v4180, %v4908
      %v5037 = vmul.f32 %v4185, %v4909
      %v5038 = vmul.f32 %v4190, %v4910
      %v5039 = vmul.f32 %v4195, %v4911
      %v5040 = vmul.f32 %v4200, %v4912
      %v5041 = vmul.f32 %v4205, %v4913
      %v5042 = vmul.f32 %v4210, %v4914
      %v5043 = vmul.f32 %v4215, %v4915
      %v5044 = vmul.f32 %v4220, %v4916
      %v5045 = vmul.f32 %v4225, %v4917
      %v5046 = vmul.f32 %v4230, %v4918
      %v5047 = vmul.f32 %v4235, %v4919
      %v5048 = vmul.f32 %v4240, %v4920
      %v5049 = vmul.f32 %v4245, %v4921
      %v5050 = vmul.f32 %v4250, %v4922
      %v5051 = vmul.f32 %v4255, %v4923
      %v5052 = vmul.f32 %v4260, %v4924
      %v5053 = vmul.f32 %v4265, %v4925
      %v5054 = vmul.f32 %v4270, %v4926
      %v5055 = vmul.f32 %v4275, %v4927
      %v5056 = vmul.f32 %v4280, %v4928
      %v5057 = vmul.f32 %v4285, %v4929
      %v5058 = vmul.f32 %v4290, %v4930
      %v5059 = vmul.f32 %v4295, %v4931
      %v5060 = vmul.f32 %v4300, %v4932
      %v5061 = vmul.f32 %v4305, %v4933
      %v5062 = vmul.f32 %v4310, %v4934
      %v5063 = vmul.f32 %v4315, %v4935
      %v5064 = vmul.f32 %v4320, %v4936
      %v5065 = vmul.f32 %v4325, %v4937
      %v5066 = vmul.f32 %v4330, %v4938
      %v5067 = vmul.f32 %v4335, %v4939
      %v5068 = vmul.f32 %v4340, %v4940
      %v5069 = vmul.f32 %v4345, %v4941
      %v5070 = vmul.f32 %v4350, %v4942
      %v5071 = vmul.f32 %v4355, %v4943
      %v5072 = vmul.f32 %v4360, %v4944
      %v5073 = vmul.f32 %v4365, %v4945
      %v5074 = vmul.f32 %v4370, %v4946
      %v5075 = vmul.f32 %v4375, %v4947
      %v5076 = vmul.f32 %v4380, %v4948
      %v5077 = vmul.f32 %v4385, %v4949
      %v5078 = vmul.f32 %v4390, %v4950
      %v5079 = vmul.f32 %v4395, %v4951
      %v5080 = vmul.f32 %v4400, %v4952
      %v5081 = vmul.f32 %v4405, %v4953
      %v5082 = vmul.f32 %v4410, %v4954
      %v5083 = vmul.f32 %v4415, %v4955
      %v5084 = vmul.f32 %v4420, %v4956
      %v5085 = vmul.f32 %v4425, %v4957
      %v5086 = vmul.f32 %v4430, %v4958
      %v5087 = vmul.f32 %v4435, %v4959
      %v5088 = vmul.f32 %v4440, %v4960
      %v5089 = vmul.f32 %v4445, %v4961
      %v5090 = vlaneseq
      %v5091 = vshrl.u32 %v5090, 7
      %v5092 = vadd.s32 %v5091, 8
      %v5093 = vadd.s32 %v5091, 16
      %v5094 = vadd.s32 %v5091, 24
      %v5095 = vadd.s32 %v5091, 32
      %v5096 = vadd.s32 %v5091, 40
      %v5097 = vadd.s32 %v5091, 48
      %v5098 = vadd.s32 %v5091, 56
      %v5099 = vadd.s32 %v5091, 64
      %v5100 = vadd.s32 %v5091, 72
      %v5101 = vadd.s32 %v5091, 80
      %v5102 = vadd.s32 %v5091, 88
      %v5103 = vadd.s32 %v5091, 96
      %v5104 = vadd.s32 %v5091, 104
      %v5105 = vadd.s32 %v5091, 112
      %v5106 = vadd.s32 %v5091, 120
      %v5107 = vadd.s32 %v5091, 128
      %v5108 = vadd.s32 %v5091, 136
      %v5109 = vadd.s32 %v5091, 144
      %v5110 = vadd.s32 %v5091, 152
      %v5111 = vadd.s32 %v5091, 160
      %v5112 = vadd.s32 %v5091, 168
      %v5113 = vadd.s32 %v5091, 176
      %v5114 = vadd.s32 %v5091, 184
      %v5115 = vadd.s32 %v5091, 192
      %v5116 = vadd.s32 %v5091, 200
      %v5117 = vadd.s32 %v5091, 208
      %v5118 = vadd.s32 %v5091, 216
      %v5119 = vadd.s32 %v5091, 224
      %v5120 = vadd.s32 %v5091, 232
      %v5121 = vadd.s32 %v5091, 240
      %v5122 = vadd.s32 %v5091, 248
      %v5123 = vadd.s32 %v5091, 256
      %v5124 = vadd.s32 %v5091, 264
      %v5125 = vadd.s32 %v5091, 272
      %v5126 = vadd.s32 %v5091, 280
      %v5127 = vadd.s32 %v5091, 288
      %v5128 = vadd.s32 %v5091, 296
      %v5129 = vadd.s32 %v5091, 304
      %v5130 = vadd.s32 %v5091, 312
      %v5131 = vadd.s32 %v5091, 320
      %v5132 = vadd.s32 %v5091, 328
      %v5133 = vadd.s32 %v5091, 336
      %v5134 = vadd.s32 %v5091, 344
      %v5135 = vadd.s32 %v5091, 352
      %v5136 = vadd.s32 %v5091, 360
      %v5137 = vadd.s32 %v5091, 368
      %v5138 = vadd.s32 %v5091, 376
      %v5139 = vadd.s32 %v5091, 384
      %v5140 = vadd.s32 %v5091, 392
      %v5141 = vadd.s32 %v5091, 400
      %v5142 = vadd.s32 %v5091, 408
      %v5143 = vadd.s32 %v5091, 416
      %v5144 = vadd.s32 %v5091, 424
      %v5145 = vadd.s32 %v5091, 432
      %v5146 = vadd.s32 %v5091, 440
      %v5147 = vadd.s32 %v5091, 448
      %v5148 = vadd.s32 %v5091, 456
      %v5149 = vadd.s32 %v5091, 464
      %v5150 = vadd.s32 %v5091, 472
      %v5151 = vadd.s32 %v5091, 480
      %v5152 = vadd.s32 %v5091, 488
      %v5153 = vadd.s32 %v5091, 496
      %v5154 = vadd.s32 %v5091, 504
      %v5155 = vadd.s32 %v5091, 512
      %v5156 = vadd.s32 %v5091, 520
      %v5157 = vadd.s32 %v5091, 528
      %v5158 = vadd.s32 %v5091, 536
      %v5159 = vadd.s32 %v5091, 544
      %v5160 = vadd.s32 %v5091, 552
      %v5161 = vadd.s32 %v5091, 560
      %v5162 = vadd.s32 %v5091, 568
      %v5163 = vadd.s32 %v5091, 576
      %v5164 = vadd.s32 %v5091, 584
      %v5165 = vadd.s32 %v5091, 592
      %v5166 = vadd.s32 %v5091, 600
      %v5167 = vadd.s32 %v5091, 608
      %v5168 = vadd.s32 %v5091, 616
      %v5169 = vadd.s32 %v5091, 624
      %v5170 = vadd.s32 %v5091, 632
      %v5171 = vadd.s32 %v5091, 640
      %v5172 = vadd.s32 %v5091, 648
      %v5173 = vadd.s32 %v5091, 656
      %v5174 = vadd.s32 %v5091, 664
      %v5175 = vadd.s32 %v5091, 672
      %v5176 = vadd.s32 %v5091, 680
      %v5177 = vadd.s32 %v5091, 688
      %v5178 = vadd.s32 %v5091, 696
      %v5179 = vadd.s32 %v5091, 704
      %v5180 = vadd.s32 %v5091, 712
      %v5181 = vadd.s32 %v5091, 720
      %v5182 = vadd.s32 %v5091, 728
      %v5183 = vadd.s32 %v5091, 736
      %v5184 = vadd.s32 %v5091, 744
      %v5185 = vadd.s32 %v5091, 752
      %v5186 = vadd.s32 %v5091, 760
      %v5187 = vadd.s32 %v5091, 768
      %v5188 = vadd.s32 %v5091, 776
      %v5189 = vadd.s32 %v5091, 784
      %v5190 = vadd.s32 %v5091, 792
      %v5191 = vadd.s32 %v5091, 800
      %v5192 = vadd.s32 %v5091, 808
      %v5193 = vadd.s32 %v5091, 816
      %v5194 = vadd.s32 %v5091, 824
      %v5195 = vadd.s32 %v5091, 832
      %v5196 = vadd.s32 %v5091, 840
      %v5197 = vadd.s32 %v5091, 848
      %v5198 = vadd.s32 %v5091, 856
      %v5199 = vadd.s32 %v5091, 864
      %v5200 = vadd.s32 %v5091, 872
      %v5201 = vadd.s32 %v5091, 880
      %v5202 = vadd.s32 %v5091, 888
      %v5203 = vadd.s32 %v5091, 896
      %v5204 = vadd.s32 %v5091, 904
      %v5205 = vadd.s32 %v5091, 912
      %v5206 = vadd.s32 %v5091, 920
      %v5207 = vadd.s32 %v5091, 928
      %v5208 = vadd.s32 %v5091, 936
      %v5209 = vadd.s32 %v5091, 944
      %v5210 = vadd.s32 %v5091, 952
      %v5211 = vadd.s32 %v5091, 960
      %v5212 = vadd.s32 %v5091, 968
      %v5213 = vadd.s32 %v5091, 976
      %v5214 = vadd.s32 %v5091, 984
      %v5215 = vadd.s32 %v5091, 992
      %v5216 = vadd.s32 %v5091, 1000
      %v5217 = vadd.s32 %v5091, 1008
      %v5218 = vadd.s32 %v5091, 1016
      %v5219 = vstv %s2860
      %vm5220 = vcmp.lt.s32.totalorder %v5091, %v5219
      %vm5221 = vcmp.lt.s32.totalorder %v5092, %v5219
      %vm5222 = vcmp.lt.s32.totalorder %v5093, %v5219
      %vm5223 = vcmp.lt.s32.totalorder %v5094, %v5219
      %vm5224 = vcmp.lt.s32.totalorder %v5095, %v5219
      %vm5225 = vcmp.lt.s32.totalorder %v5096, %v5219
      %vm5226 = vcmp.lt.s32.totalorder %v5097, %v5219
      %vm5227 = vcmp.lt.s32.totalorder %v5098, %v5219
      %vm5228 = vcmp.lt.s32.totalorder %v5099, %v5219
      %vm5229 = vcmp.lt.s32.totalorder %v5100, %v5219
      %vm5230 = vcmp.lt.s32.totalorder %v5101, %v5219
      %vm5231 = vcmp.lt.s32.totalorder %v5102, %v5219
      %vm5232 = vcmp.lt.s32.totalorder %v5103, %v5219
      %vm5233 = vcmp.lt.s32.totalorder %v5104, %v5219
      %vm5234 = vcmp.lt.s32.totalorder %v5105, %v5219
      %vm5235 = vcmp.lt.s32.totalorder %v5106, %v5219
      %vm5236 = vcmp.lt.s32.totalorder %v5107, %v5219
      %vm5237 = vcmp.lt.s32.totalorder %v5108, %v5219
      %vm5238 = vcmp.lt.s32.totalorder %v5109, %v5219
      %vm5239 = vcmp.lt.s32.totalorder %v5110, %v5219
      %vm5240 = vcmp.lt.s32.totalorder %v5111, %v5219
      %vm5241 = vcmp.lt.s32.totalorder %v5112, %v5219
      %vm5242 = vcmp.lt.s32.totalorder %v5113, %v5219
      %vm5243 = vcmp.lt.s32.totalorder %v5114, %v5219
      %vm5244 = vcmp.lt.s32.totalorder %v5115, %v5219
      %vm5245 = vcmp.lt.s32.totalorder %v5116, %v5219
      %vm5246 = vcmp.lt.s32.totalorder %v5117, %v5219
      %vm5247 = vcmp.lt.s32.totalorder %v5118, %v5219
      %vm5248 = vcmp.lt.s32.totalorder %v5119, %v5219
      %vm5249 = vcmp.lt.s32.totalorder %v5120, %v5219
      %vm5250 = vcmp.lt.s32.totalorder %v5121, %v5219
      %vm5251 = vcmp.lt.s32.totalorder %v5122, %v5219
      %vm5252 = vcmp.lt.s32.totalorder %v5123, %v5219
      %vm5253 = vcmp.lt.s32.totalorder %v5124, %v5219
      %vm5254 = vcmp.lt.s32.totalorder %v5125, %v5219
      %vm5255 = vcmp.lt.s32.totalorder %v5126, %v5219
      %vm5256 = vcmp.lt.s32.totalorder %v5127, %v5219
      %vm5257 = vcmp.lt.s32.totalorder %v5128, %v5219
      %vm5258 = vcmp.lt.s32.totalorder %v5129, %v5219
      %vm5259 = vcmp.lt.s32.totalorder %v5130, %v5219
      %vm5260 = vcmp.lt.s32.totalorder %v5131, %v5219
      %vm5261 = vcmp.lt.s32.totalorder %v5132, %v5219
      %vm5262 = vcmp.lt.s32.totalorder %v5133, %v5219
      %vm5263 = vcmp.lt.s32.totalorder %v5134, %v5219
      %vm5264 = vcmp.lt.s32.totalorder %v5135, %v5219
      %vm5265 = vcmp.lt.s32.totalorder %v5136, %v5219
      %vm5266 = vcmp.lt.s32.totalorder %v5137, %v5219
      %vm5267 = vcmp.lt.s32.totalorder %v5138, %v5219
      %vm5268 = vcmp.lt.s32.totalorder %v5139, %v5219
      %vm5269 = vcmp.lt.s32.totalorder %v5140, %v5219
      %vm5270 = vcmp.lt.s32.totalorder %v5141, %v5219
      %vm5271 = vcmp.lt.s32.totalorder %v5142, %v5219
      %vm5272 = vcmp.lt.s32.totalorder %v5143, %v5219
      %vm5273 = vcmp.lt.s32.totalorder %v5144, %v5219
      %vm5274 = vcmp.lt.s32.totalorder %v5145, %v5219
      %vm5275 = vcmp.lt.s32.totalorder %v5146, %v5219
      %vm5276 = vcmp.lt.s32.totalorder %v5147, %v5219
      %vm5277 = vcmp.lt.s32.totalorder %v5148, %v5219
      %vm5278 = vcmp.lt.s32.totalorder %v5149, %v5219
      %vm5279 = vcmp.lt.s32.totalorder %v5150, %v5219
      %vm5280 = vcmp.lt.s32.totalorder %v5151, %v5219
      %vm5281 = vcmp.lt.s32.totalorder %v5152, %v5219
      %vm5282 = vcmp.lt.s32.totalorder %v5153, %v5219
      %vm5283 = vcmp.lt.s32.totalorder %v5154, %v5219
      %vm5284 = vcmp.lt.s32.totalorder %v5155, %v5219
      %vm5285 = vcmp.lt.s32.totalorder %v5156, %v5219
      %vm5286 = vcmp.lt.s32.totalorder %v5157, %v5219
      %vm5287 = vcmp.lt.s32.totalorder %v5158, %v5219
      %vm5288 = vcmp.lt.s32.totalorder %v5159, %v5219
      %vm5289 = vcmp.lt.s32.totalorder %v5160, %v5219
      %vm5290 = vcmp.lt.s32.totalorder %v5161, %v5219
      %vm5291 = vcmp.lt.s32.totalorder %v5162, %v5219
      %vm5292 = vcmp.lt.s32.totalorder %v5163, %v5219
      %vm5293 = vcmp.lt.s32.totalorder %v5164, %v5219
      %vm5294 = vcmp.lt.s32.totalorder %v5165, %v5219
      %vm5295 = vcmp.lt.s32.totalorder %v5166, %v5219
      %vm5296 = vcmp.lt.s32.totalorder %v5167, %v5219
      %vm5297 = vcmp.lt.s32.totalorder %v5168, %v5219
      %vm5298 = vcmp.lt.s32.totalorder %v5169, %v5219
      %vm5299 = vcmp.lt.s32.totalorder %v5170, %v5219
      %vm5300 = vcmp.lt.s32.totalorder %v5171, %v5219
      %vm5301 = vcmp.lt.s32.totalorder %v5172, %v5219
      %vm5302 = vcmp.lt.s32.totalorder %v5173, %v5219
      %vm5303 = vcmp.lt.s32.totalorder %v5174, %v5219
      %vm5304 = vcmp.lt.s32.totalorder %v5175, %v5219
      %vm5305 = vcmp.lt.s32.totalorder %v5176, %v5219
      %vm5306 = vcmp.lt.s32.totalorder %v5177, %v5219
      %vm5307 = vcmp.lt.s32.totalorder %v5178, %v5219
      %vm5308 = vcmp.lt.s32.totalorder %v5179, %v5219
      %vm5309 = vcmp.lt.s32.totalorder %v5180, %v5219
      %vm5310 = vcmp.lt.s32.totalorder %v5181, %v5219
      %vm5311 = vcmp.lt.s32.totalorder %v5182, %v5219
      %vm5312 = vcmp.lt.s32.totalorder %v5183, %v5219
      %vm5313 = vcmp.lt.s32.totalorder %v5184, %v5219
      %vm5314 = vcmp.lt.s32.totalorder %v5185, %v5219
      %vm5315 = vcmp.lt.s32.totalorder %v5186, %v5219
      %vm5316 = vcmp.lt.s32.totalorder %v5187, %v5219
      %vm5317 = vcmp.lt.s32.totalorder %v5188, %v5219
      %vm5318 = vcmp.lt.s32.totalorder %v5189, %v5219
      %vm5319 = vcmp.lt.s32.totalorder %v5190, %v5219
      %vm5320 = vcmp.lt.s32.totalorder %v5191, %v5219
      %vm5321 = vcmp.lt.s32.totalorder %v5192, %v5219
      %vm5322 = vcmp.lt.s32.totalorder %v5193, %v5219
      %vm5323 = vcmp.lt.s32.totalorder %v5194, %v5219
      %vm5324 = vcmp.lt.s32.totalorder %v5195, %v5219
      %vm5325 = vcmp.lt.s32.totalorder %v5196, %v5219
      %vm5326 = vcmp.lt.s32.totalorder %v5197, %v5219
      %vm5327 = vcmp.lt.s32.totalorder %v5198, %v5219
      %vm5328 = vcmp.lt.s32.totalorder %v5199, %v5219
      %vm5329 = vcmp.lt.s32.totalorder %v5200, %v5219
      %vm5330 = vcmp.lt.s32.totalorder %v5201, %v5219
      %vm5331 = vcmp.lt.s32.totalorder %v5202, %v5219
      %vm5332 = vcmp.lt.s32.totalorder %v5203, %v5219
      %vm5333 = vcmp.lt.s32.totalorder %v5204, %v5219
      %vm5334 = vcmp.lt.s32.totalorder %v5205, %v5219
      %vm5335 = vcmp.lt.s32.totalorder %v5206, %v5219
      %vm5336 = vcmp.lt.s32.totalorder %v5207, %v5219
      %vm5337 = vcmp.lt.s32.totalorder %v5208, %v5219
      %vm5338 = vcmp.lt.s32.totalorder %v5209, %v5219
      %vm5339 = vcmp.lt.s32.totalorder %v5210, %v5219
      %vm5340 = vcmp.lt.s32.totalorder %v5211, %v5219
      %vm5341 = vcmp.lt.s32.totalorder %v5212, %v5219
      %vm5342 = vcmp.lt.s32.totalorder %v5213, %v5219
      %vm5343 = vcmp.lt.s32.totalorder %v5214, %v5219
      %vm5344 = vcmp.lt.s32.totalorder %v5215, %v5219
      %vm5345 = vcmp.lt.s32.totalorder %v5216, %v5219
      %vm5346 = vcmp.lt.s32.totalorder %v5217, %v5219
      %vm5347 = vcmp.lt.s32.totalorder %v5218, %v5219
      %v5348 = vsel %vm5220, %v4962, -1e+30
      %v5349 = vsel %vm5221, %v4963, -1e+30
      %v5350 = vsel %vm5222, %v4964, -1e+30
      %v5351 = vsel %vm5223, %v4965, -1e+30
      %v5352 = vsel %vm5224, %v4966, -1e+30
      %v5353 = vsel %vm5225, %v4967, -1e+30
      %v5354 = vsel %vm5226, %v4968, -1e+30
      %v5355 = vsel %vm5227, %v4969, -1e+30
      %v5356 = vsel %vm5228, %v4970, -1e+30
      %v5357 = vsel %vm5229, %v4971, -1e+30
      %v5358 = vsel %vm5230, %v4972, -1e+30
      %v5359 = vsel %vm5231, %v4973, -1e+30
      %v5360 = vsel %vm5232, %v4974, -1e+30
      %v5361 = vsel %vm5233, %v4975, -1e+30
      %v5362 = vsel %vm5234, %v4976, -1e+30
      %v5363 = vsel %vm5235, %v4977, -1e+30
      %v5364 = vsel %vm5236, %v4978, -1e+30
      %v5365 = vsel %vm5237, %v4979, -1e+30
      %v5366 = vsel %vm5238, %v4980, -1e+30
      %v5367 = vsel %vm5239, %v4981, -1e+30
      %v5368 = vsel %vm5240, %v4982, -1e+30
      %v5369 = vsel %vm5241, %v4983, -1e+30
      %v5370 = vsel %vm5242, %v4984, -1e+30
      %v5371 = vsel %vm5243, %v4985, -1e+30
      %v5372 = vsel %vm5244, %v4986, -1e+30
      %v5373 = vsel %vm5245, %v4987, -1e+30
      %v5374 = vsel %vm5246, %v4988, -1e+30
      %v5375 = vsel %vm5247, %v4989, -1e+30
      %v5376 = vsel %vm5248, %v4990, -1e+30
      %v5377 = vsel %vm5249, %v4991, -1e+30
      %v5378 = vsel %vm5250, %v4992, -1e+30
      %v5379 = vsel %vm5251, %v4993, -1e+30
      %v5380 = vsel %vm5252, %v4994, -1e+30
      %v5381 = vsel %vm5253, %v4995, -1e+30
      %v5382 = vsel %vm5254, %v4996, -1e+30
      %v5383 = vsel %vm5255, %v4997, -1e+30
      %v5384 = vsel %vm5256, %v4998, -1e+30
      %v5385 = vsel %vm5257, %v4999, -1e+30
      %v5386 = vsel %vm5258, %v5000, -1e+30
      %v5387 = vsel %vm5259, %v5001, -1e+30
      %v5388 = vsel %vm5260, %v5002, -1e+30
      %v5389 = vsel %vm5261, %v5003, -1e+30
      %v5390 = vsel %vm5262, %v5004, -1e+30
      %v5391 = vsel %vm5263, %v5005, -1e+30
      %v5392 = vsel %vm5264, %v5006, -1e+30
      %v5393 = vsel %vm5265, %v5007, -1e+30
      %v5394 = vsel %vm5266, %v5008, -1e+30
      %v5395 = vsel %vm5267, %v5009, -1e+30
      %v5396 = vsel %vm5268, %v5010, -1e+30
      %v5397 = vsel %vm5269, %v5011, -1e+30
      %v5398 = vsel %vm5270, %v5012, -1e+30
      %v5399 = vsel %vm5271, %v5013, -1e+30
      %v5400 = vsel %vm5272, %v5014, -1e+30
      %v5401 = vsel %vm5273, %v5015, -1e+30
      %v5402 = vsel %vm5274, %v5016, -1e+30
      %v5403 = vsel %vm5275, %v5017, -1e+30
      %v5404 = vsel %vm5276, %v5018, -1e+30
      %v5405 = vsel %vm5277, %v5019, -1e+30
      %v5406 = vsel %vm5278, %v5020, -1e+30
      %v5407 = vsel %vm5279, %v5021, -1e+30
      %v5408 = vsel %vm5280, %v5022, -1e+30
      %v5409 = vsel %vm5281, %v5023, -1e+30
      %v5410 = vsel %vm5282, %v5024, -1e+30
      %v5411 = vsel %vm5283, %v5025, -1e+30
      %v5412 = vsel %vm5284, %v5026, -1e+30
      %v5413 = vsel %vm5285, %v5027, -1e+30
      %v5414 = vsel %vm5286, %v5028, -1e+30
      %v5415 = vsel %vm5287, %v5029, -1e+30
      %v5416 = vsel %vm5288, %v5030, -1e+30
      %v5417 = vsel %vm5289, %v5031, -1e+30
      %v5418 = vsel %vm5290, %v5032, -1e+30
      %v5419 = vsel %vm5291, %v5033, -1e+30
      %v5420 = vsel %vm5292, %v5034, -1e+30
      %v5421 = vsel %vm5293, %v5035, -1e+30
      %v5422 = vsel %vm5294, %v5036, -1e+30
      %v5423 = vsel %vm5295, %v5037, -1e+30
      %v5424 = vsel %vm5296, %v5038, -1e+30
      %v5425 = vsel %vm5297, %v5039, -1e+30
      %v5426 = vsel %vm5298, %v5040, -1e+30
      %v5427 = vsel %vm5299, %v5041, -1e+30
      %v5428 = vsel %vm5300, %v5042, -1e+30
      %v5429 = vsel %vm5301, %v5043, -1e+30
      %v5430 = vsel %vm5302, %v5044, -1e+30
      %v5431 = vsel %vm5303, %v5045, -1e+30
      %v5432 = vsel %vm5304, %v5046, -1e+30
      %v5433 = vsel %vm5305, %v5047, -1e+30
      %v5434 = vsel %vm5306, %v5048, -1e+30
      %v5435 = vsel %vm5307, %v5049, -1e+30
      %v5436 = vsel %vm5308, %v5050, -1e+30
      %v5437 = vsel %vm5309, %v5051, -1e+30
      %v5438 = vsel %vm5310, %v5052, -1e+30
      %v5439 = vsel %vm5311, %v5053, -1e+30
      %v5440 = vsel %vm5312, %v5054, -1e+30
      %v5441 = vsel %vm5313, %v5055, -1e+30
      %v5442 = vsel %vm5314, %v5056, -1e+30
      %v5443 = vsel %vm5315, %v5057, -1e+30
      %v5444 = vsel %vm5316, %v5058, -1e+30
      %v5445 = vsel %vm5317, %v5059, -1e+30
      %v5446 = vsel %vm5318, %v5060, -1e+30
      %v5447 = vsel %vm5319, %v5061, -1e+30
      %v5448 = vsel %vm5320, %v5062, -1e+30
      %v5449 = vsel %vm5321, %v5063, -1e+30
      %v5450 = vsel %vm5322, %v5064, -1e+30
      %v5451 = vsel %vm5323, %v5065, -1e+30
      %v5452 = vsel %vm5324, %v5066, -1e+30
      %v5453 = vsel %vm5325, %v5067, -1e+30
      %v5454 = vsel %vm5326, %v5068, -1e+30
      %v5455 = vsel %vm5327, %v5069, -1e+30
      %v5456 = vsel %vm5328, %v5070, -1e+30
      %v5457 = vsel %vm5329, %v5071, -1e+30
      %v5458 = vsel %vm5330, %v5072, -1e+30
      %v5459 = vsel %vm5331, %v5073, -1e+30
      %v5460 = vsel %vm5332, %v5074, -1e+30
      %v5461 = vsel %vm5333, %v5075, -1e+30
      %v5462 = vsel %vm5334, %v5076, -1e+30
      %v5463 = vsel %vm5335, %v5077, -1e+30
      %v5464 = vsel %vm5336, %v5078, -1e+30
      %v5465 = vsel %vm5337, %v5079, -1e+30
      %v5466 = vsel %vm5338, %v5080, -1e+30
      %v5467 = vsel %vm5339, %v5081, -1e+30
      %v5468 = vsel %vm5340, %v5082, -1e+30
      %v5469 = vsel %vm5341, %v5083, -1e+30
      %v5470 = vsel %vm5342, %v5084, -1e+30
      %v5471 = vsel %vm5343, %v5085, -1e+30
      %v5472 = vsel %vm5344, %v5086, -1e+30
      %v5473 = vsel %vm5345, %v5087, -1e+30
      %v5474 = vsel %vm5346, %v5088, -1e+30
      %v5475 = vsel %vm5347, %v5089, -1e+30
      %5476 = vst.msk [vmem:[%s419] sm:$0xff] %vm3204, %v5348
      %5477 = vst.msk [vmem:[%s419 + $0x8] sm:$0xff] %vm3204, %v5349
      %5478 = vst.msk [vmem:[%s419 + $0x10] sm:$0xff] %vm3204, %v5350
      %5479 = vst.msk [vmem:[%s419 + $0x18] sm:$0xff] %vm3204, %v5351
      %5480 = vst.msk [vmem:[%s419 + $0x20] sm:$0xff] %vm3204, %v5352
      %5481 = vst.msk [vmem:[%s419 + $0x28] sm:$0xff] %vm3204, %v5353
      %5482 = vst.msk [vmem:[%s419 + $0x30] sm:$0xff] %vm3204, %v5354
      %5483 = vst.msk [vmem:[%s419 + $0x38] sm:$0xff] %vm3204, %v5355
      %5484 = vst.msk [vmem:[%s419 + $0x40] sm:$0xff] %vm3204, %v5356
      %5485 = vst.msk [vmem:[%s419 + $0x48] sm:$0xff] %vm3204, %v5357
      %5486 = vst.msk [vmem:[%s419 + $0x50] sm:$0xff] %vm3204, %v5358
      %5487 = vst.msk [vmem:[%s419 + $0x58] sm:$0xff] %vm3204, %v5359
      %5488 = vst.msk [vmem:[%s419 + $0x60] sm:$0xff] %vm3204, %v5360
      %5489 = vst.msk [vmem:[%s419 + $0x68] sm:$0xff] %vm3204, %v5361
      %5490 = vst.msk [vmem:[%s419 + $0x70] sm:$0xff] %vm3204, %v5362
      %5491 = vst.msk [vmem:[%s419 + $0x78] sm:$0xff] %vm3204, %v5363
      %5492 = vst.msk [vmem:[%s419 + $0x80] sm:$0xff] %vm3204, %v5364
      %5493 = vst.msk [vmem:[%s419 + $0x88] sm:$0xff] %vm3204, %v5365
      %5494 = vst.msk [vmem:[%s419 + $0x90] sm:$0xff] %vm3204, %v5366
      %5495 = vst.msk [vmem:[%s419 + $0x98] sm:$0xff] %vm3204, %v5367
      %5496 = vst.msk [vmem:[%s419 + $0xa0] sm:$0xff] %vm3204, %v5368
      %5497 = vst.msk [vmem:[%s419 + $0xa8] sm:$0xff] %vm3204, %v5369
      %5498 = vst.msk [vmem:[%s419 + $0xb0] sm:$0xff] %vm3204, %v5370
      %5499 = vst.msk [vmem:[%s419 + $0xb8] sm:$0xff] %vm3204, %v5371
      %5500 = vst.msk [vmem:[%s419 + $0xc0] sm:$0xff] %vm3204, %v5372
      %5501 = vst.msk [vmem:[%s419 + $0xc8] sm:$0xff] %vm3204, %v5373
      %5502 = vst.msk [vmem:[%s419 + $0xd0] sm:$0xff] %vm3204, %v5374
      %5503 = vst.msk [vmem:[%s419 + $0xd8] sm:$0xff] %vm3204, %v5375
      %5504 = vst.msk [vmem:[%s419 + $0xe0] sm:$0xff] %vm3204, %v5376
      %5505 = vst.msk [vmem:[%s419 + $0xe8] sm:$0xff] %vm3204, %v5377
      %5506 = vst.msk [vmem:[%s419 + $0xf0] sm:$0xff] %vm3204, %v5378
      %5507 = vst.msk [vmem:[%s419 + $0xf8] sm:$0xff] %vm3204, %v5379
      %5508 = vst.msk [vmem:[%s419 + $0x100] sm:$0xff] %vm3204, %v5380
      %5509 = vst.msk [vmem:[%s419 + $0x108] sm:$0xff] %vm3204, %v5381
      %5510 = vst.msk [vmem:[%s419 + $0x110] sm:$0xff] %vm3204, %v5382
      %5511 = vst.msk [vmem:[%s419 + $0x118] sm:$0xff] %vm3204, %v5383
      %5512 = vst.msk [vmem:[%s419 + $0x120] sm:$0xff] %vm3204, %v5384
      %5513 = vst.msk [vmem:[%s419 + $0x128] sm:$0xff] %vm3204, %v5385
      %5514 = vst.msk [vmem:[%s419 + $0x130] sm:$0xff] %vm3204, %v5386
      %5515 = vst.msk [vmem:[%s419 + $0x138] sm:$0xff] %vm3204, %v5387
      %5516 = vst.msk [vmem:[%s419 + $0x140] sm:$0xff] %vm3204, %v5388
      %5517 = vst.msk [vmem:[%s419 + $0x148] sm:$0xff] %vm3204, %v5389
      %5518 = vst.msk [vmem:[%s419 + $0x150] sm:$0xff] %vm3204, %v5390
      %5519 = vst.msk [vmem:[%s419 + $0x158] sm:$0xff] %vm3204, %v5391
      %5520 = vst.msk [vmem:[%s419 + $0x160] sm:$0xff] %vm3204, %v5392
      %5521 = vst.msk [vmem:[%s419 + $0x168] sm:$0xff] %vm3204, %v5393
      %5522 = vst.msk [vmem:[%s419 + $0x170] sm:$0xff] %vm3204, %v5394
      %5523 = vst.msk [vmem:[%s419 + $0x178] sm:$0xff] %vm3204, %v5395
      %5524 = vst.msk [vmem:[%s419 + $0x180] sm:$0xff] %vm3204, %v5396
      %5525 = vst.msk [vmem:[%s419 + $0x188] sm:$0xff] %vm3204, %v5397
      %5526 = vst.msk [vmem:[%s419 + $0x190] sm:$0xff] %vm3204, %v5398
      %5527 = vst.msk [vmem:[%s419 + $0x198] sm:$0xff] %vm3204, %v5399
      %5528 = vst.msk [vmem:[%s419 + $0x1a0] sm:$0xff] %vm3204, %v5400
      %5529 = vst.msk [vmem:[%s419 + $0x1a8] sm:$0xff] %vm3204, %v5401
      %5530 = vst.msk [vmem:[%s419 + $0x1b0] sm:$0xff] %vm3204, %v5402
      %5531 = vst.msk [vmem:[%s419 + $0x1b8] sm:$0xff] %vm3204, %v5403
      %5532 = vst.msk [vmem:[%s419 + $0x1c0] sm:$0xff] %vm3204, %v5404
      %5533 = vst.msk [vmem:[%s419 + $0x1c8] sm:$0xff] %vm3204, %v5405
      %5534 = vst.msk [vmem:[%s419 + $0x1d0] sm:$0xff] %vm3204, %v5406
      %5535 = vst.msk [vmem:[%s419 + $0x1d8] sm:$0xff] %vm3204, %v5407
      %5536 = vst.msk [vmem:[%s419 + $0x1e0] sm:$0xff] %vm3204, %v5408
      %5537 = vst.msk [vmem:[%s419 + $0x1e8] sm:$0xff] %vm3204, %v5409
      %5538 = vst.msk [vmem:[%s419 + $0x1f0] sm:$0xff] %vm3204, %v5410
      %5539 = vst.msk [vmem:[%s419 + $0x1f8] sm:$0xff] %vm3204, %v5411
      %5540 = vst.msk [vmem:[%s419 + $0x200] sm:$0xff] %vm3204, %v5412
      %5541 = vst.msk [vmem:[%s419 + $0x208] sm:$0xff] %vm3204, %v5413
      %5542 = vst.msk [vmem:[%s419 + $0x210] sm:$0xff] %vm3204, %v5414
      %5543 = vst.msk [vmem:[%s419 + $0x218] sm:$0xff] %vm3204, %v5415
      %5544 = vst.msk [vmem:[%s419 + $0x220] sm:$0xff] %vm3204, %v5416
      %5545 = vst.msk [vmem:[%s419 + $0x228] sm:$0xff] %vm3204, %v5417
      %5546 = vst.msk [vmem:[%s419 + $0x230] sm:$0xff] %vm3204, %v5418
      %5547 = vst.msk [vmem:[%s419 + $0x238] sm:$0xff] %vm3204, %v5419
      %5548 = vst.msk [vmem:[%s419 + $0x240] sm:$0xff] %vm3204, %v5420
      %5549 = vst.msk [vmem:[%s419 + $0x248] sm:$0xff] %vm3204, %v5421
      %5550 = vst.msk [vmem:[%s419 + $0x250] sm:$0xff] %vm3204, %v5422
      %5551 = vst.msk [vmem:[%s419 + $0x258] sm:$0xff] %vm3204, %v5423
      %5552 = vst.msk [vmem:[%s419 + $0x260] sm:$0xff] %vm3204, %v5424
      %5553 = vst.msk [vmem:[%s419 + $0x268] sm:$0xff] %vm3204, %v5425
      %5554 = vst.msk [vmem:[%s419 + $0x270] sm:$0xff] %vm3204, %v5426
      %5555 = vst.msk [vmem:[%s419 + $0x278] sm:$0xff] %vm3204, %v5427
      %5556 = vst.msk [vmem:[%s419 + $0x280] sm:$0xff] %vm3204, %v5428
      %5557 = vst.msk [vmem:[%s419 + $0x288] sm:$0xff] %vm3204, %v5429
      %5558 = vst.msk [vmem:[%s419 + $0x290] sm:$0xff] %vm3204, %v5430
      %5559 = vst.msk [vmem:[%s419 + $0x298] sm:$0xff] %vm3204, %v5431
      %5560 = vst.msk [vmem:[%s419 + $0x2a0] sm:$0xff] %vm3204, %v5432
      %5561 = vst.msk [vmem:[%s419 + $0x2a8] sm:$0xff] %vm3204, %v5433
      %5562 = vst.msk [vmem:[%s419 + $0x2b0] sm:$0xff] %vm3204, %v5434
      %5563 = vst.msk [vmem:[%s419 + $0x2b8] sm:$0xff] %vm3204, %v5435
      %5564 = vst.msk [vmem:[%s419 + $0x2c0] sm:$0xff] %vm3204, %v5436
      %5565 = vst.msk [vmem:[%s419 + $0x2c8] sm:$0xff] %vm3204, %v5437
      %5566 = vst.msk [vmem:[%s419 + $0x2d0] sm:$0xff] %vm3204, %v5438
      %5567 = vst.msk [vmem:[%s419 + $0x2d8] sm:$0xff] %vm3204, %v5439
      %5568 = vst.msk [vmem:[%s419 + $0x2e0] sm:$0xff] %vm3204, %v5440
      %5569 = vst.msk [vmem:[%s419 + $0x2e8] sm:$0xff] %vm3204, %v5441
      %5570 = vst.msk [vmem:[%s419 + $0x2f0] sm:$0xff] %vm3204, %v5442
      %5571 = vst.msk [vmem:[%s419 + $0x2f8] sm:$0xff] %vm3204, %v5443
      %5572 = vst.msk [vmem:[%s419 + $0x300] sm:$0xff] %vm3204, %v5444
      %5573 = vst.msk [vmem:[%s419 + $0x308] sm:$0xff] %vm3204, %v5445
      %5574 = vst.msk [vmem:[%s419 + $0x310] sm:$0xff] %vm3204, %v5446
      %5575 = vst.msk [vmem:[%s419 + $0x318] sm:$0xff] %vm3204, %v5447
      %5576 = vst.msk [vmem:[%s419 + $0x320] sm:$0xff] %vm3204, %v5448
      %5577 = vst.msk [vmem:[%s419 + $0x328] sm:$0xff] %vm3204, %v5449
      %5578 = vst.msk [vmem:[%s419 + $0x330] sm:$0xff] %vm3204, %v5450
      %5579 = vst.msk [vmem:[%s419 + $0x338] sm:$0xff] %vm3204, %v5451
      %5580 = vst.msk [vmem:[%s419 + $0x340] sm:$0xff] %vm3204, %v5452
      %5581 = vst.msk [vmem:[%s419 + $0x348] sm:$0xff] %vm3204, %v5453
      %5582 = vst.msk [vmem:[%s419 + $0x350] sm:$0xff] %vm3204, %v5454
      %5583 = vst.msk [vmem:[%s419 + $0x358] sm:$0xff] %vm3204, %v5455
      %5584 = vst.msk [vmem:[%s419 + $0x360] sm:$0xff] %vm3204, %v5456
      %5585 = vst.msk [vmem:[%s419 + $0x368] sm:$0xff] %vm3204, %v5457
      %5586 = vst.msk [vmem:[%s419 + $0x370] sm:$0xff] %vm3204, %v5458
      %5587 = vst.msk [vmem:[%s419 + $0x378] sm:$0xff] %vm3204, %v5459
      %5588 = vst.msk [vmem:[%s419 + $0x380] sm:$0xff] %vm3204, %v5460
      %5589 = vst.msk [vmem:[%s419 + $0x388] sm:$0xff] %vm3204, %v5461
      %5590 = vst.msk [vmem:[%s419 + $0x390] sm:$0xff] %vm3204, %v5462
      %5591 = vst.msk [vmem:[%s419 + $0x398] sm:$0xff] %vm3204, %v5463
      %5592 = vst.msk [vmem:[%s419 + $0x3a0] sm:$0xff] %vm3204, %v5464
      %5593 = vst.msk [vmem:[%s419 + $0x3a8] sm:$0xff] %vm3204, %v5465
      %5594 = vst.msk [vmem:[%s419 + $0x3b0] sm:$0xff] %vm3204, %v5466
      %5595 = vst.msk [vmem:[%s419 + $0x3b8] sm:$0xff] %vm3204, %v5467
      %5596 = vst.msk [vmem:[%s419 + $0x3c0] sm:$0xff] %vm3204, %v5468
      %5597 = vst.msk [vmem:[%s419 + $0x3c8] sm:$0xff] %vm3204, %v5469
      %5598 = vst.msk [vmem:[%s419 + $0x3d0] sm:$0xff] %vm3204, %v5470
      %5599 = vst.msk [vmem:[%s419 + $0x3d8] sm:$0xff] %vm3204, %v5471
      %5600 = vst.msk [vmem:[%s419 + $0x3e0] sm:$0xff] %vm3204, %v5472
      %5601 = vst.msk [vmem:[%s419 + $0x3e8] sm:$0xff] %vm3204, %v5473
      %5602 = vst.msk [vmem:[%s419 + $0x3f0] sm:$0xff] %vm3204, %v5474
      %5603 = vst.msk [vmem:[%s419 + $0x3f8] sm:$0xff] %vm3204, %v5475
      %p5604 = scmp.lt.s32.totalorder %s39, 1
      %s5605 = scalar_select %p5604, %s39, 1
      %s5606 = smul.addr %s5605, 128
      %s5607 = smul.addr %s5606, 8
      %s5608 = scalar_lea.vmem %s13, %s5607
      // Predicated region
      $region85: #{core.5} parent=47 // pred_check
        %p5609 = pneg %p219
      $region86: #{core.5} parent=47 // pred_check_branch
        %5611 = sbr.rel (%p5609) target = $region88
      $region87: #{core.5} parent=47 // pred_region
        _
      $region88: #{core.5} parent=47 // pred_fallthru
        _
      // Predicated region
      $region89: #{core.5} parent=47 // pred_check
        %p5612 = pneg %p240
      $region90: #{core.5} parent=47 // pred_check_branch
        %5614 = sbr.rel (%p5612) target = $region92
      $region91: #{core.5} parent=47 // pred_region
        _
      $region92: #{core.5} parent=47 // pred_fallthru
        _
      // Predicated region
      $region93: #{core.5} parent=47 // pred_check
        %p5615 = pneg %p261
      $region94: #{core.5} parent=47 // pred_check_branch
        %5617 = sbr.rel (%p5615) target = $region96
      $region95: #{core.5} parent=47 // pred_region
        _
      $region96: #{core.5} parent=47 // pred_fallthru
        _
      // Predicated region
      $region97: #{core.5} parent=47 // pred_check
        %p5618 = pneg %p287
      $region98: #{core.5} parent=47 // pred_check_branch
        %5620 = sbr.rel (%p5618) target = $region100
      $region99: #{core.5} parent=47 // pred_region
        _
      $region100: #{core.5} parent=47 // pred_fallthru
        _
      // Predicated region
      $region101: #{core.5} parent=47 // pred_check
        %p5621 = pneg %p219
      $region102: #{core.5} parent=47 // pred_check_branch
        %5623 = sbr.rel (%p5621) target = $region104
      $region103: #{core.5} parent=47 // pred_region
        _
      $region104: #{core.5} parent=47 // pred_fallthru
        _
      // Predicated region
      $region105: #{core.5} parent=47 // pred_check
        %p5624 = pneg %p240
      $region106: #{core.5} parent=47 // pred_check_branch
        %5626 = sbr.rel (%p5624) target = $region108
      $region107: #{core.5} parent=47 // pred_region
        _
      $region108: #{core.5} parent=47 // pred_fallthru
        _
      // Predicated region
      $region109: #{core.5} parent=47 // pred_check
        %p5627 = pneg %p261
      $region110: #{core.5} parent=47 // pred_check_branch
        %5629 = sbr.rel (%p5627) target = $region112
      $region111: #{core.5} parent=47 // pred_region
        _
      $region112: #{core.5} parent=47 // pred_fallthru
        _
    $region48: #{core.5} parent=5 // pred_fallthru
      _
    %p5630 = scmp.le.s32.totalorder 2, %s34
    // Predicated region
    $region113: #{core.5} parent=5 // pred_check
      %p5631 = pneg %p5630
    $region114: #{core.5} parent=5 // pred_check_branch
      %5633 = sbr.rel (%p5631) target = $region116
    $region115: #{core.5} parent=5 // pred_region
      %s5634 = ssub.s32 %s34, 2
      // Predicated region
      $region117: #{core.5} parent=115 // pred_check
        %p5635 = pneg %p293
      $region118: #{core.5} parent=115 // pred_check_branch
        %5637 = sbr.rel (%p5635) target = $region120
      $region119: #{core.5} parent=115 // pred_region
        %p5638 = scmp.lt.s32.totalorder %s40, 1
        %s5639 = scalar_select %p5638, %s40, 1
        %s5640 = smul.addr %s5639, 128
        %s5641 = smul.addr %s5640, 8
        %s5642 = scalar_lea.vmem %s13, %s5641
      $region120: #{core.5} parent=115 // pred_fallthru
        _
    $region116: #{core.5} parent=5 // pred_fallthru
      _
  $region6: #{core.5} parent=0 // loop_footer
    %s38 = sadd.s32 1, %s34
  $region7: #{core.5} parent=0 // loop_footer_branch
    %33 = sbr.rel target = $region3
  $region8: #{core.5} parent=0 // loop_exit
    _

</llo_original>
